<compile_context>
chip_gen: v7x
topology: tpu7x:2x2x1
jax: 0.10.0
libtpu: 0.0.40
codegen_flags: <defaults>
</compile_context>

<pallas_src>
import jax
import jax.numpy as jnp
from jax.experimental import pallas as pl
from jax.experimental.pallas import tpu as pltpu


_INV_SQRT2 = 0.7071067811865476


def _ln_mlp_kernel(x_ref, g_ref, b_ref, w1_ref, b1_ref, w2_ref, b2_ref, o_ref):
    # LayerNorm (eps=1e-6, elementwise affine) in f32.
    x = x_ref[...].astype(jnp.float32)
    mean = jnp.mean(x, axis=-1, keepdims=True)
    xc = x - mean
    var = jnp.mean(xc * xc, axis=-1, keepdims=True)
    inv = jax.lax.rsqrt(var + jnp.float32(1e-6))
    xn = (xc * inv * g_ref[...] + b_ref[...]).astype(jnp.bfloat16)

    # Linear 384 -> 1536 (bf16 operands on MXU, f32 accumulation).
    h = jnp.dot(xn, w1_ref[...], preferred_element_type=jnp.float32) + b1_ref[...]
    # Exact erf GELU (matches torch GELU(approximate='none')).
    h = 0.5 * h * (1.0 + jax.lax.erf(h * jnp.float32(_INV_SQRT2)))
    # Linear 1536 -> 384.
    out = jnp.dot(h.astype(jnp.bfloat16), w2_ref[...],
                  preferred_element_type=jnp.float32) + b2_ref[...]
    o_ref[...] = out.astype(o_ref.dtype)


def layernorm_mlp(x, gamma, beta, w1, b1, w2, b2):
    """x: (N, H, W, C) with C=384. w1: (C, D), w2: (D, C). Returns (N, H, W, C)."""
    N, H, W, C = x.shape
    D_hidden = w1.shape[1]
    M = N * H * W

    x2 = x.reshape(M, C)
    # Pad rows to a multiple of 128 (196 -> 256) for clean MXU / vreg tiles.
    M_pad = pl.cdiv(M, 128) * 128
    if M_pad != M:
        x2 = jnp.pad(x2, ((0, M_pad - M), (0, 0)))

    # Weights should already be bf16 (pre-cast once at setup); cast defensively.
    w1_bf = w1 if w1.dtype == jnp.bfloat16 else w1.astype(jnp.bfloat16)
    w2_bf = w2 if w2.dtype == jnp.bfloat16 else w2.astype(jnp.bfloat16)

    # Single row block covering all padded rows -> grid of one step, every
    # operand DMA'd exactly once. Resident VMEM footprint < 8 MiB.
    tile_m = M_pad
    n_m = M_pad // tile_m

    cost = pl.CostEstimate(
        flops=2 * 2 * M * C * D_hidden,          # two matmuls
        transcendentals=M * D_hidden,            # erf
        bytes_accessed=(M * C * 4                # x in
                        + 2 * C * D_hidden * 2   # bf16 weights
                        + (C + D_hidden + 2 * C) * 4
                        + M * C * 4),            # output
    )

    out = pl.pallas_call(
        _ln_mlp_kernel,
        out_shape=jax.ShapeDtypeStruct((M_pad, C), x.dtype),
        grid_spec=pltpu.PrefetchScalarGridSpec(
            num_scalar_prefetch=0,
            grid=(n_m,),
            in_specs=[
                pl.BlockSpec((tile_m, C), lambda i: (i, 0)),     # x rows
                pl.BlockSpec((1, C), lambda i: (0, 0)),          # gamma
                pl.BlockSpec((1, C), lambda i: (0, 0)),          # beta
                pl.BlockSpec((C, D_hidden), lambda i: (0, 0)),   # w1
                pl.BlockSpec((1, D_hidden), lambda i: (0, 0)),   # b1
                pl.BlockSpec((D_hidden, C), lambda i: (0, 0)),   # w2
                pl.BlockSpec((1, C), lambda i: (0, 0)),          # b2
            ],
            out_specs=pl.BlockSpec((tile_m, C), lambda i: (i, 0)),
        ),
        compiler_params=pltpu.CompilerParams(
            dimension_semantics=("parallel",),
        ),
        cost_estimate=cost,
    )(x2, gamma.reshape(1, C), beta.reshape(1, C),
      w1_bf, b1.reshape(1, D_hidden), w2_bf, b2.reshape(1, C))

    return out[:M].reshape(N, H, W, C)


if __name__ == "__main__":
    C, D = 384, 1536
    key = jax.random.PRNGKey(0)
    kx, kw1, kb1, kw2, kb2 = jax.random.split(key, 5)

    # Input matching the module: [1, 14, 14, 384]
    x = jax.random.normal(kx, (1, 14, 14, C), dtype=jnp.float32)

    # Deterministic parameter init (synthetic, not a checkpoint).
    gamma = jnp.ones((C,), dtype=jnp.float32)
    beta = jnp.zeros((C,), dtype=jnp.float32)
    w1_f32 = jax.random.normal(kw1, (C, D), dtype=jnp.float32) * (1.0 / jnp.sqrt(C))
    b1 = jax.random.normal(kb1, (D,), dtype=jnp.float32) * 0.01
    w2_f32 = jax.random.normal(kw2, (D, C), dtype=jnp.float32) * (1.0 / jnp.sqrt(D))
    b2 = jax.random.normal(kb2, (C,), dtype=jnp.float32) * 0.01

    # Pre-cast weights to bf16 ONCE (hoisted out of the hot path).
    w1 = w1_f32.astype(jnp.bfloat16)
    w2 = w2_f32.astype(jnp.bfloat16)

    y = layernorm_mlp(x, gamma, beta, w1, b1, w2, b2)
    jax.block_until_ready(y)

    # Pure-JAX reference with the same bf16 matmul operands / f32 accumulation.
    x2 = x.reshape(-1, C)
    mean = jnp.mean(x2, axis=-1, keepdims=True)
    var = jnp.mean((x2 - mean) ** 2, axis=-1, keepdims=True)
    xn = (x2 - mean) * jax.lax.rsqrt(var + 1e-6) * gamma + beta
    h = jnp.dot(xn.astype(jnp.bfloat16), w1,
                preferred_element_type=jnp.float32) + b1
    h = 0.5 * h * (1.0 + jax.lax.erf(h * jnp.float32(_INV_SQRT2)))
    ref = (jnp.dot(h.astype(jnp.bfloat16), w2,
                   preferred_element_type=jnp.float32) + b2).reshape(x.shape)
    assert jnp.allclose(y, ref, atol=1e-2, rtol=1e-2), "mismatch vs reference"

    print("KERNEL_OK")
</pallas_src>

<mosaic_0001>
module attributes {stable_mosaic.version = 11 : i64} {
  func.func @_ln_mlp_kernel(%arg0: i32, %arg1: memref<256x384xf32, #tpu.memory_space<vmem>>, %arg2: memref<1x384xf32, #tpu.memory_space<vmem>>, %arg3: memref<1x384xf32, #tpu.memory_space<vmem>>, %arg4: memref<384x1536xbf16, #tpu.memory_space<vmem>>, %arg5: memref<1x1536xf32, #tpu.memory_space<vmem>>, %arg6: memref<1536x384xbf16, #tpu.memory_space<vmem>>, %arg7: memref<1x384xf32, #tpu.memory_space<vmem>>, %arg8: memref<256x384xf32, #tpu.memory_space<vmem>>) attributes {dimension_semantics = [#tpu.dimension_semantics<parallel>], iteration_bounds = array<i64: 1>, scalar_prefetch = 0 : i64, scratch_operands = 0 : i64, tpu.core_type = #tpu.core_type<tc>, window_params = [{transform_indices = @transform_0, window_bounds = array<i64: 256, 384>}, {pipeline_mode = #tpu.pipeline_mode<synchronous>, transform_indices = @transform_1, window_bounds = array<i64: 1, 384>}, {pipeline_mode = #tpu.pipeline_mode<synchronous>, transform_indices = @transform_2, window_bounds = array<i64: 1, 384>}, {pipeline_mode = #tpu.pipeline_mode<synchronous>, transform_indices = @transform_3, window_bounds = array<i64: 384, 1536>}, {pipeline_mode = #tpu.pipeline_mode<synchronous>, transform_indices = @transform_4, window_bounds = array<i64: 1, 1536>}, {pipeline_mode = #tpu.pipeline_mode<synchronous>, transform_indices = @transform_5, window_bounds = array<i64: 1536, 384>}, {pipeline_mode = #tpu.pipeline_mode<synchronous>, transform_indices = @transform_6, window_bounds = array<i64: 1, 384>}, {transform_indices = @transform_7, window_bounds = array<i64: 256, 384>}]} {
    %c0 = arith.constant 0 : index
    %c0_0 = arith.constant 0 : index
    %0 = vector.load %arg1[%c0, %c0_0] : memref<256x384xf32, #tpu.memory_space<vmem>>, vector<256x384xf32>
    %cst = arith.constant dense<0.000000e+00> : vector<256xf32>
    %1 = vector.multi_reduction <add>, %0, %cst [1] : vector<256x384xf32> to vector<256xf32>
    %2 = vector.shape_cast %1 : vector<256xf32> to vector<256x1xf32>
    %cst_1 = arith.constant 3.840000e+02 : f32
    %3 = vector.broadcast %cst_1 : f32 to vector<256x1xf32>
    %4 = arith.divf %2, %3 : vector<256x1xf32>
    %5 = vector.broadcast %4 : vector<256x1xf32> to vector<256x384xf32>
    %6 = arith.subf %0, %5 : vector<256x384xf32>
    %7 = arith.mulf %6, %6 : vector<256x384xf32>
    %cst_2 = arith.constant dense<0.000000e+00> : vector<256xf32>
    %8 = vector.multi_reduction <add>, %7, %cst_2 [1] : vector<256x384xf32> to vector<256xf32>
    %9 = vector.shape_cast %8 : vector<256xf32> to vector<256x1xf32>
    %cst_3 = arith.constant 3.840000e+02 : f32
    %10 = vector.broadcast %cst_3 : f32 to vector<256x1xf32>
    %11 = arith.divf %9, %10 : vector<256x1xf32>
    %cst_4 = arith.constant 9.99999997E-7 : f32
    %12 = vector.broadcast %cst_4 : f32 to vector<256x1xf32>
    %13 = arith.addf %11, %12 : vector<256x1xf32>
    %14 = math.rsqrt %13 : vector<256x1xf32>
    %15 = vector.broadcast %14 : vector<256x1xf32> to vector<256x384xf32>
    %16 = arith.mulf %6, %15 : vector<256x384xf32>
    %c0_5 = arith.constant 0 : index
    %c0_6 = arith.constant 0 : index
    %17 = vector.load %arg2[%c0_5, %c0_6] : memref<1x384xf32, #tpu.memory_space<vmem>>, vector<1x384xf32>
    %18 = vector.broadcast %17 : vector<1x384xf32> to vector<256x384xf32>
    %19 = arith.mulf %16, %18 : vector<256x384xf32>
    %c0_7 = arith.constant 0 : index
    %c0_8 = arith.constant 0 : index
    %20 = vector.load %arg3[%c0_7, %c0_8] : memref<1x384xf32, #tpu.memory_space<vmem>>, vector<1x384xf32>
    %21 = vector.broadcast %20 : vector<1x384xf32> to vector<256x384xf32>
    %22 = arith.addf %19, %21 : vector<256x384xf32>
    %23 = arith.truncf %22 : vector<256x384xf32> to vector<256x384xbf16>
    %c0_9 = arith.constant 0 : index
    %c0_10 = arith.constant 0 : index
    %24 = vector.load %arg4[%c0_9, %c0_10] : memref<384x1536xbf16, #tpu.memory_space<vmem>>, vector<384x1536xbf16>
    %cst_11 = arith.constant dense<0.000000e+00> : vector<256x1536xf32>
    %25 = tpu.matmul %23, %24, %cst_11 {dimension_numbers = #tpu.dot_dimension_numbers<[1], [0], [0], [1], [0, 0, 1, 1], [], []>} : vector<256x384xbf16>, vector<384x1536xbf16>, vector<256x1536xf32> -> vector<256x1536xf32>
    %c0_12 = arith.constant 0 : index
    %c0_13 = arith.constant 0 : index
    %26 = vector.load %arg5[%c0_12, %c0_13] : memref<1x1536xf32, #tpu.memory_space<vmem>>, vector<1x1536xf32>
    %27 = vector.broadcast %26 : vector<1x1536xf32> to vector<256x1536xf32>
    %28 = arith.addf %25, %27 : vector<256x1536xf32>
    %cst_14 = arith.constant 5.000000e-01 : f32
    %29 = vector.broadcast %cst_14 : f32 to vector<256x1536xf32>
    %30 = arith.mulf %29, %28 : vector<256x1536xf32>
    %cst_15 = arith.constant 0.707106769 : f32
    %31 = vector.broadcast %cst_15 : f32 to vector<256x1536xf32>
    %32 = arith.mulf %28, %31 : vector<256x1536xf32>
    %33 = math.erf %32 : vector<256x1536xf32>
    %cst_16 = arith.constant 1.000000e+00 : f32
    %34 = vector.broadcast %cst_16 : f32 to vector<256x1536xf32>
    %35 = arith.addf %34, %33 : vector<256x1536xf32>
    %36 = arith.mulf %30, %35 : vector<256x1536xf32>
    %37 = arith.truncf %36 : vector<256x1536xf32> to vector<256x1536xbf16>
    %c0_17 = arith.constant 0 : index
    %c0_18 = arith.constant 0 : index
    %38 = vector.load %arg6[%c0_17, %c0_18] : memref<1536x384xbf16, #tpu.memory_space<vmem>>, vector<1536x384xbf16>
    %cst_19 = arith.constant dense<0.000000e+00> : vector<256x384xf32>
    %39 = tpu.matmul %37, %38, %cst_19 {dimension_numbers = #tpu.dot_dimension_numbers<[1], [0], [0], [1], [0, 0, 1, 1], [], []>} : vector<256x1536xbf16>, vector<1536x384xbf16>, vector<256x384xf32> -> vector<256x384xf32>
    %c0_20 = arith.constant 0 : index
    %c0_21 = arith.constant 0 : index
    %40 = vector.load %arg7[%c0_20, %c0_21] : memref<1x384xf32, #tpu.memory_space<vmem>>, vector<1x384xf32>
    %41 = vector.broadcast %40 : vector<1x384xf32> to vector<256x384xf32>
    %42 = arith.addf %39, %41 : vector<256x384xf32>
    %c0_22 = arith.constant 0 : index
    %c0_23 = arith.constant 0 : index
    %43 = vector.load %arg8[%c0_22, %c0_23] : memref<256x384xf32, #tpu.memory_space<vmem>>, vector<256x384xf32>
    tpu.vector_store %arg8[%c0_22, %c0_23], %42 {strides = array<i32>} : memref<256x384xf32, #tpu.memory_space<vmem>>, vector<256x384xf32>,
    return
  }
  func.func @transform_0(%arg0: i32) -> (i32, i32) {
    %c0_i32 = arith.constant 0 : i32
    %c0_i32_0 = arith.constant 0 : i32
    return %arg0, %c0_i32 : i32, i32
  }
  func.func @transform_1(%arg0: i32) -> (i32, i32) {
    %c0_i32 = arith.constant 0 : i32
    %c0_i32_0 = arith.constant 0 : i32
    %c0_i32_1 = arith.constant 0 : i32
    return %c0_i32, %c0_i32_0 : i32, i32
  }
  func.func @transform_2(%arg0: i32) -> (i32, i32) {
    %c0_i32 = arith.constant 0 : i32
    %c0_i32_0 = arith.constant 0 : i32
    %c0_i32_1 = arith.constant 0 : i32
    return %c0_i32, %c0_i32_0 : i32, i32
  }
  func.func @transform_3(%arg0: i32) -> (i32, i32) {
    %c0_i32 = arith.constant 0 : i32
    %c0_i32_0 = arith.constant 0 : i32
    %c0_i32_1 = arith.constant 0 : i32
    return %c0_i32, %c0_i32_0 : i32, i32
  }
  func.func @transform_4(%arg0: i32) -> (i32, i32) {
    %c0_i32 = arith.constant 0 : i32
    %c0_i32_0 = arith.constant 0 : i32
    %c0_i32_1 = arith.constant 0 : i32
    return %c0_i32, %c0_i32_0 : i32, i32
  }
  func.func @transform_5(%arg0: i32) -> (i32, i32) {
    %c0_i32 = arith.constant 0 : i32
    %c0_i32_0 = arith.constant 0 : i32
    %c0_i32_1 = arith.constant 0 : i32
    return %c0_i32, %c0_i32_0 : i32, i32
  }
  func.func @transform_6(%arg0: i32) -> (i32, i32) {
    %c0_i32 = arith.constant 0 : i32
    %c0_i32_0 = arith.constant 0 : i32
    %c0_i32_1 = arith.constant 0 : i32
    return %c0_i32, %c0_i32_0 : i32, i32
  }
  func.func @transform_7(%arg0: i32) -> (i32, i32) {
    %c0_i32 = arith.constant 0 : i32
    %c0_i32_0 = arith.constant 0 : i32
    return %arg0, %c0_i32 : i32, i32
  }
}

</mosaic_0001>

<llo_original>
// kernel: tpu_custom_call.1
$region0: #{tpu_custom_call.1}
  #allocation0 [shape = 'u32[]', space=smem, size = 0x4, offset = 0x4, fixed_abs, tag = 'smem constant byte address 0x4 - core index']
  #allocation1 [shape = 'u32[144,128]{1,0:T(1,128)}', space=vmem, size = 0x12000, scoped, tag = 'internal scratch']
  %s0 = inlined_call_operand.hbm [shape: f32[256,384], index: 0, kind: input, shape index: {}]
  %s1 = inlined_call_operand.hbm [shape: f32[1,384], index: 1, kind: input, shape index: {}]
  %s2 = inlined_call_operand.hbm [shape: f32[1,384], index: 2, kind: input, shape index: {}]
  %s3 = inlined_call_operand.hbm [shape: bf16[384,1536], index: 3, kind: input, shape index: {}]
  %s4 = inlined_call_operand.hbm [shape: f32[1,1536], index: 4, kind: input, shape index: {}]
  %s5 = inlined_call_operand.hbm [shape: bf16[1536,384], index: 5, kind: input, shape index: {}]
  %s6 = inlined_call_operand.hbm [shape: f32[1,384], index: 6, kind: input, shape index: {}]
  %s7 = inlined_call_operand.hbm [shape: f32[256,384], index: 7, kind: output, shape index: {}]
  %s8 = sld [smem:[#allocation0]]
  $region66: #{tpu_custom_call.1} parent=0
    _
  %s10 = ssub.s32 1, %s8
  %s11 = scalar_select 0, %s10, %s8
  $region1: #{tpu_custom_call.1} parent=0
    #allocation2 [shape = 'u8[393216]{0}', space=vmem, size = 0x60000, scoped, tag = 'input window, operand 0, single buffered']
    #allocation3 [shape = 's32[1]{0}', space=sflag, size = 0x4, scoped, tag = 'scoped memory for tpu_custom_call.1']
    #allocation4 [shape = 's32[1]{0}', space=sflag, size = 0x4, scoped, tag = 'scoped memory for tpu_custom_call.1']
    #allocation5 [shape = 'u8[1536]{0}', space=vmem, size = 0x800, scoped, tag = 'input window, operand 1, single buffered']
    #allocation6 [shape = 's32[1]{0}', space=sflag, size = 0x4, scoped, tag = 'scoped memory for tpu_custom_call.1']
    #allocation7 [shape = 'u8[1536]{0}', space=vmem, size = 0x800, scoped, tag = 'input window, operand 2, single buffered']
    #allocation8 [shape = 'u8[1179648]{0}', space=vmem, size = 0x120000, scoped, tag = 'input window, operand 3, single buffered']
    #allocation9 [shape = 's32[1]{0}', space=sflag, size = 0x4, scoped, tag = 'scoped memory for tpu_custom_call.1']
    #allocation10 [shape = 'u8[6144]{0}', space=vmem, size = 0x1800, scoped, tag = 'input window, operand 4, single buffered']
    #allocation11 [shape = 'u8[1179648]{0}', space=vmem, size = 0x120000, scoped, tag = 'input window, operand 5, single buffered']
    #allocation12 [shape = 's32[1]{0}', space=sflag, size = 0x4, scoped, tag = 'scoped memory for tpu_custom_call.1']
    #allocation13 [shape = 'u8[1536]{0}', space=vmem, size = 0x800, scoped, tag = 'input window, operand 6, single buffered']
    #allocation14 [shape = 'u8[393216]{0}', space=vmem, size = 0x60000, scoped, tag = 'output window, operand 0, single buffered']
    %12 = vsyncpa [#allocation3], 0
    %13 = vsyncpa [#allocation6], 0
    %14 = vsyncpa [#allocation9], 0
    %15 = vsyncpa [#allocation12], 0
    %16 = vsyncpa [#allocation4], 0
    // Predicated region
    $region2: #{tpu_custom_call.1} parent=1 // pred_check
      _
    $region3: #{tpu_custom_call.1} parent=1 // pred_check_branch
      %18 = sbr.rel (0) target = $region5
    $region4: #{tpu_custom_call.1} parent=1 // pred_region
      %s20 = ssub.s32 12288, 12288
      %21 = vsyncadd [#allocation3], %s20
      %s22 = sshll.u32 [#allocation2], 4
      %s23 = int_to_ptr.vmem [resolvable:$true] %s22
      %28 = dma.hbm_to_vmem [thread:$0]  %s0, 12288, %s23, [#allocation3], 384, 384, 24
    $region5: #{tpu_custom_call.1} parent=1 // pred_fallthru
      _
    // Predicated region
    $region6: #{tpu_custom_call.1} parent=1 // pred_check
      _
    $region7: #{tpu_custom_call.1} parent=1 // pred_check_branch
      %30 = sbr.rel (0) target = $region9
    $region8: #{tpu_custom_call.1} parent=1 // pred_region
      %s32 = ssub.s32 48, 48
      %33 = vsyncadd [#allocation6], %s32
      %s35 = sshll.u32 [#allocation5], 4
      %s36 = int_to_ptr.vmem [resolvable:$true] %s35
      %38 = dma.hbm_to_vmem [thread:$0]  %s1, 48, %s36, [#allocation6]
    $region9: #{tpu_custom_call.1} parent=1 // pred_fallthru
      _
    // Predicated region
    $region10: #{tpu_custom_call.1} parent=1 // pred_check
      _
    $region11: #{tpu_custom_call.1} parent=1 // pred_check_branch
      %40 = sbr.rel (0) target = $region13
    $region12: #{tpu_custom_call.1} parent=1 // pred_region
      %s42 = ssub.s32 48, 48
      %43 = vsyncadd [#allocation6], %s42
      %s45 = sshll.u32 [#allocation7], 4
      %s46 = int_to_ptr.vmem [resolvable:$true] %s45
      %48 = dma.hbm_to_vmem [thread:$0]  %s2, 48, %s46, [#allocation6]
    $region13: #{tpu_custom_call.1} parent=1 // pred_fallthru
      _
    // Predicated region
    $region14: #{tpu_custom_call.1} parent=1 // pred_check
      _
    $region15: #{tpu_custom_call.1} parent=1 // pred_check_branch
      %50 = sbr.rel (0) target = $region17
    $region16: #{tpu_custom_call.1} parent=1 // pred_region
      %s52 = ssub.s32 36864, 36864
      %53 = vsyncadd [#allocation9], %s52
      %s54 = sshll.u32 [#allocation8], 4
      %s55 = int_to_ptr.vmem [resolvable:$true] %s54
      %60 = dma.hbm_to_vmem [thread:$0]  %s3, 36864, %s55, [#allocation9], 768, 768, 48
    $region17: #{tpu_custom_call.1} parent=1 // pred_fallthru
      _
    // Predicated region
    $region18: #{tpu_custom_call.1} parent=1 // pred_check
      _
    $region19: #{tpu_custom_call.1} parent=1 // pred_check_branch
      %62 = sbr.rel (0) target = $region21
    $region20: #{tpu_custom_call.1} parent=1 // pred_region
      %s64 = ssub.s32 192, 192
      %65 = vsyncadd [#allocation9], %s64
      %s67 = sshll.u32 [#allocation10], 4
      %s68 = int_to_ptr.vmem [resolvable:$true] %s67
      %70 = dma.hbm_to_vmem [thread:$0]  %s4, 192, %s68, [#allocation9]
    $region21: #{tpu_custom_call.1} parent=1 // pred_fallthru
      _
    // Predicated region
    $region22: #{tpu_custom_call.1} parent=1 // pred_check
      _
    $region23: #{tpu_custom_call.1} parent=1 // pred_check_branch
      %72 = sbr.rel (0) target = $region25
    $region24: #{tpu_custom_call.1} parent=1 // pred_region
      %s74 = ssub.s32 36864, 36864
      %75 = vsyncadd [#allocation12], %s74
      %s76 = sshll.u32 [#allocation11], 4
      %s77 = int_to_ptr.vmem [resolvable:$true] %s76
      %82 = dma.hbm_to_vmem [thread:$0]  %s5, 36864, %s77, [#allocation12], 192, 192, 12
    $region25: #{tpu_custom_call.1} parent=1 // pred_fallthru
      _
    // Predicated region
    $region26: #{tpu_custom_call.1} parent=1 // pred_check
      _
    $region27: #{tpu_custom_call.1} parent=1 // pred_check_branch
      %84 = sbr.rel (0) target = $region29
    $region28: #{tpu_custom_call.1} parent=1 // pred_region
      %s86 = ssub.s32 48, 48
      %87 = vsyncadd [#allocation12], %s86
      %s89 = sshll.u32 [#allocation13], 4
      %s90 = int_to_ptr.vmem [resolvable:$true] %s89
      %92 = dma.hbm_to_vmem [thread:$0]  %s6, 48, %s90, [#allocation12]
    $region29: #{tpu_custom_call.1} parent=1 // pred_fallthru
      _
    // Predicated region
    $region30: #{tpu_custom_call.1} parent=1 // pred_check
      _
    $region31: #{tpu_custom_call.1} parent=1 // pred_check_branch
      %94 = sbr.rel (0) target = $region33
    $region32: #{tpu_custom_call.1} parent=1 // pred_region
      %95 = dma.done [#allocation3], 12288
    $region33: #{tpu_custom_call.1} parent=1 // pred_fallthru
      _
    // Predicated region
    $region34: #{tpu_custom_call.1} parent=1 // pred_check
      _
    $region35: #{tpu_custom_call.1} parent=1 // pred_check_branch
      %97 = sbr.rel (0) target = $region37
    $region36: #{tpu_custom_call.1} parent=1 // pred_region
      %98 = dma.done [#allocation6], 48
    $region37: #{tpu_custom_call.1} parent=1 // pred_fallthru
      _
    // Predicated region
    $region38: #{tpu_custom_call.1} parent=1 // pred_check
      _
    $region39: #{tpu_custom_call.1} parent=1 // pred_check_branch
      %100 = sbr.rel (0) target = $region41
    $region40: #{tpu_custom_call.1} parent=1 // pred_region
      %101 = dma.done [#allocation6], 48
    $region41: #{tpu_custom_call.1} parent=1 // pred_fallthru
      _
    // Predicated region
    $region42: #{tpu_custom_call.1} parent=1 // pred_check
      _
    $region43: #{tpu_custom_call.1} parent=1 // pred_check_branch
      %103 = sbr.rel (0) target = $region45
    $region44: #{tpu_custom_call.1} parent=1 // pred_region
      %104 = dma.done [#allocation9], 36864
    $region45: #{tpu_custom_call.1} parent=1 // pred_fallthru
      _
    // Predicated region
    $region46: #{tpu_custom_call.1} parent=1 // pred_check
      _
    $region47: #{tpu_custom_call.1} parent=1 // pred_check_branch
      %106 = sbr.rel (0) target = $region49
    $region48: #{tpu_custom_call.1} parent=1 // pred_region
      %107 = dma.done [#allocation9], 192
    $region49: #{tpu_custom_call.1} parent=1 // pred_fallthru
      _
    // Predicated region
    $region50: #{tpu_custom_call.1} parent=1 // pred_check
      _
    $region51: #{tpu_custom_call.1} parent=1 // pred_check_branch
      %109 = sbr.rel (0) target = $region53
    $region52: #{tpu_custom_call.1} parent=1 // pred_region
      %110 = dma.done [#allocation12], 36864
    $region53: #{tpu_custom_call.1} parent=1 // pred_fallthru
      _
    // Predicated region
    $region54: #{tpu_custom_call.1} parent=1 // pred_check
      _
    $region55: #{tpu_custom_call.1} parent=1 // pred_check_branch
      %112 = sbr.rel (0) target = $region57
    $region56: #{tpu_custom_call.1} parent=1 // pred_region
      %113 = dma.done [#allocation12], 48
    $region57: #{tpu_custom_call.1} parent=1 // pred_fallthru
      _
    %v115 = vld [vmem:[#allocation2] sm:$0xff]
    %v116 = vld [vmem:[#allocation2 + $0x8] sm:$0xff]
    %v117 = vld [vmem:[#allocation2 + $0x10] sm:$0xff]
    %v118 = vld [vmem:[#allocation2 + $0x18] sm:$0xff]
    %v119 = vld [vmem:[#allocation2 + $0x20] sm:$0xff]
    %v120 = vld [vmem:[#allocation2 + $0x28] sm:$0xff]
    %v121 = vld [vmem:[#allocation2 + $0x30] sm:$0xff]
    %v122 = vld [vmem:[#allocation2 + $0x38] sm:$0xff]
    %v123 = vld [vmem:[#allocation2 + $0x40] sm:$0xff]
    %v124 = vld [vmem:[#allocation2 + $0x48] sm:$0xff]
    %v125 = vld [vmem:[#allocation2 + $0x50] sm:$0xff]
    %v126 = vld [vmem:[#allocation2 + $0x58] sm:$0xff]
    %v127 = vld [vmem:[#allocation2 + $0x60] sm:$0xff]
    %v128 = vld [vmem:[#allocation2 + $0x68] sm:$0xff]
    %v129 = vld [vmem:[#allocation2 + $0x70] sm:$0xff]
    %v130 = vld [vmem:[#allocation2 + $0x78] sm:$0xff]
    %v131 = vld [vmem:[#allocation2 + $0x80] sm:$0xff]
    %v132 = vld [vmem:[#allocation2 + $0x88] sm:$0xff]
    %v133 = vld [vmem:[#allocation2 + $0x90] sm:$0xff]
    %v134 = vld [vmem:[#allocation2 + $0x98] sm:$0xff]
    %v135 = vld [vmem:[#allocation2 + $0xa0] sm:$0xff]
    %v136 = vld [vmem:[#allocation2 + $0xa8] sm:$0xff]
    %v137 = vld [vmem:[#allocation2 + $0xb0] sm:$0xff]
    %v138 = vld [vmem:[#allocation2 + $0xb8] sm:$0xff]
    %v139 = vld [vmem:[#allocation2 + $0xc0] sm:$0xff]
    %v140 = vld [vmem:[#allocation2 + $0xc8] sm:$0xff]
    %v141 = vld [vmem:[#allocation2 + $0xd0] sm:$0xff]
    %v142 = vld [vmem:[#allocation2 + $0xd8] sm:$0xff]
    %v143 = vld [vmem:[#allocation2 + $0xe0] sm:$0xff]
    %v144 = vld [vmem:[#allocation2 + $0xe8] sm:$0xff]
    %v145 = vld [vmem:[#allocation2 + $0xf0] sm:$0xff]
    %v146 = vld [vmem:[#allocation2 + $0xf8] sm:$0xff]
    %v147 = vld [vmem:[#allocation2 + $0x100] sm:$0xff]
    %v148 = vld [vmem:[#allocation2 + $0x108] sm:$0xff]
    %v149 = vld [vmem:[#allocation2 + $0x110] sm:$0xff]
    %v150 = vld [vmem:[#allocation2 + $0x118] sm:$0xff]
    %v151 = vld [vmem:[#allocation2 + $0x120] sm:$0xff]
    %v152 = vld [vmem:[#allocation2 + $0x128] sm:$0xff]
    %v153 = vld [vmem:[#allocation2 + $0x130] sm:$0xff]
    %v154 = vld [vmem:[#allocation2 + $0x138] sm:$0xff]
    %v155 = vld [vmem:[#allocation2 + $0x140] sm:$0xff]
    %v156 = vld [vmem:[#allocation2 + $0x148] sm:$0xff]
    %v157 = vld [vmem:[#allocation2 + $0x150] sm:$0xff]
    %v158 = vld [vmem:[#allocation2 + $0x158] sm:$0xff]
    %v159 = vld [vmem:[#allocation2 + $0x160] sm:$0xff]
    %v160 = vld [vmem:[#allocation2 + $0x168] sm:$0xff]
    %v161 = vld [vmem:[#allocation2 + $0x170] sm:$0xff]
    %v162 = vld [vmem:[#allocation2 + $0x178] sm:$0xff]
    %v163 = vld [vmem:[#allocation2 + $0x180] sm:$0xff]
    %v164 = vld [vmem:[#allocation2 + $0x188] sm:$0xff]
    %v165 = vld [vmem:[#allocation2 + $0x190] sm:$0xff]
    %v166 = vld [vmem:[#allocation2 + $0x198] sm:$0xff]
    %v167 = vld [vmem:[#allocation2 + $0x1a0] sm:$0xff]
    %v168 = vld [vmem:[#allocation2 + $0x1a8] sm:$0xff]
    %v169 = vld [vmem:[#allocation2 + $0x1b0] sm:$0xff]
    %v170 = vld [vmem:[#allocation2 + $0x1b8] sm:$0xff]
    %v171 = vld [vmem:[#allocation2 + $0x1c0] sm:$0xff]
    %v172 = vld [vmem:[#allocation2 + $0x1c8] sm:$0xff]
    %v173 = vld [vmem:[#allocation2 + $0x1d0] sm:$0xff]
    %v174 = vld [vmem:[#allocation2 + $0x1d8] sm:$0xff]
    %v175 = vld [vmem:[#allocation2 + $0x1e0] sm:$0xff]
    %v176 = vld [vmem:[#allocation2 + $0x1e8] sm:$0xff]
    %v177 = vld [vmem:[#allocation2 + $0x1f0] sm:$0xff]
    %v178 = vld [vmem:[#allocation2 + $0x1f8] sm:$0xff]
    %v179 = vld [vmem:[#allocation2 + $0x200] sm:$0xff]
    %v180 = vld [vmem:[#allocation2 + $0x208] sm:$0xff]
    %v181 = vld [vmem:[#allocation2 + $0x210] sm:$0xff]
    %v182 = vld [vmem:[#allocation2 + $0x218] sm:$0xff]
    %v183 = vld [vmem:[#allocation2 + $0x220] sm:$0xff]
    %v184 = vld [vmem:[#allocation2 + $0x228] sm:$0xff]
    %v185 = vld [vmem:[#allocation2 + $0x230] sm:$0xff]
    %v186 = vld [vmem:[#allocation2 + $0x238] sm:$0xff]
    %v187 = vld [vmem:[#allocation2 + $0x240] sm:$0xff]
    %v188 = vld [vmem:[#allocation2 + $0x248] sm:$0xff]
    %v189 = vld [vmem:[#allocation2 + $0x250] sm:$0xff]
    %v190 = vld [vmem:[#allocation2 + $0x258] sm:$0xff]
    %v191 = vld [vmem:[#allocation2 + $0x260] sm:$0xff]
    %v192 = vld [vmem:[#allocation2 + $0x268] sm:$0xff]
    %v193 = vld [vmem:[#allocation2 + $0x270] sm:$0xff]
    %v194 = vld [vmem:[#allocation2 + $0x278] sm:$0xff]
    %v195 = vld [vmem:[#allocation2 + $0x280] sm:$0xff]
    %v196 = vld [vmem:[#allocation2 + $0x288] sm:$0xff]
    %v197 = vld [vmem:[#allocation2 + $0x290] sm:$0xff]
    %v198 = vld [vmem:[#allocation2 + $0x298] sm:$0xff]
    %v199 = vld [vmem:[#allocation2 + $0x2a0] sm:$0xff]
    %v200 = vld [vmem:[#allocation2 + $0x2a8] sm:$0xff]
    %v201 = vld [vmem:[#allocation2 + $0x2b0] sm:$0xff]
    %v202 = vld [vmem:[#allocation2 + $0x2b8] sm:$0xff]
    %v203 = vld [vmem:[#allocation2 + $0x2c0] sm:$0xff]
    %v204 = vld [vmem:[#allocation2 + $0x2c8] sm:$0xff]
    %v205 = vld [vmem:[#allocation2 + $0x2d0] sm:$0xff]
    %v206 = vld [vmem:[#allocation2 + $0x2d8] sm:$0xff]
    %v207 = vld [vmem:[#allocation2 + $0x2e0] sm:$0xff]
    %v208 = vld [vmem:[#allocation2 + $0x2e8] sm:$0xff]
    %v209 = vld [vmem:[#allocation2 + $0x2f0] sm:$0xff]
    %v210 = vld [vmem:[#allocation2 + $0x2f8] sm:$0xff]
    %v211 = vadd.f32 %v115, %v116
    %v212 = vadd.f32 %v211, %v117
    %213 = vadd.xlane.f32.xlu0 %v212
    %v214 = vpop.xlane.xlu0 %213
    %v215 = vadd.f32 %v118, %v119
    %v216 = vadd.f32 %v215, %v120
    %217 = vadd.xlane.f32.xlu0 %v216
    %v218 = vpop.xlane.xlu0 %217
    %v219 = vadd.f32 %v121, %v122
    %v220 = vadd.f32 %v219, %v123
    %221 = vadd.xlane.f32.xlu0 %v220
    %v222 = vpop.xlane.xlu0 %221
    %v223 = vadd.f32 %v124, %v125
    %v224 = vadd.f32 %v223, %v126
    %225 = vadd.xlane.f32.xlu0 %v224
    %v226 = vpop.xlane.xlu0 %225
    %v227 = vadd.f32 %v127, %v128
    %v228 = vadd.f32 %v227, %v129
    %229 = vadd.xlane.f32.xlu0 %v228
    %v230 = vpop.xlane.xlu0 %229
    %v231 = vadd.f32 %v130, %v131
    %v232 = vadd.f32 %v231, %v132
    %233 = vadd.xlane.f32.xlu0 %v232
    %v234 = vpop.xlane.xlu0 %233
    %v235 = vadd.f32 %v133, %v134
    %v236 = vadd.f32 %v235, %v135
    %237 = vadd.xlane.f32.xlu0 %v236
    %v238 = vpop.xlane.xlu0 %237
    %v239 = vadd.f32 %v136, %v137
    %v240 = vadd.f32 %v239, %v138
    %241 = vadd.xlane.f32.xlu0 %v240
    %v242 = vpop.xlane.xlu0 %241
    %v243 = vadd.f32 %v139, %v140
    %v244 = vadd.f32 %v243, %v141
    %245 = vadd.xlane.f32.xlu0 %v244
    %v246 = vpop.xlane.xlu0 %245
    %v247 = vadd.f32 %v142, %v143
    %v248 = vadd.f32 %v247, %v144
    %249 = vadd.xlane.f32.xlu0 %v248
    %v250 = vpop.xlane.xlu0 %249
    %v251 = vadd.f32 %v145, %v146
    %v252 = vadd.f32 %v251, %v147
    %253 = vadd.xlane.f32.xlu0 %v252
    %v254 = vpop.xlane.xlu0 %253
    %v255 = vadd.f32 %v148, %v149
    %v256 = vadd.f32 %v255, %v150
    %257 = vadd.xlane.f32.xlu0 %v256
    %v258 = vpop.xlane.xlu0 %257
    %v259 = vadd.f32 %v151, %v152
    %v260 = vadd.f32 %v259, %v153
    %261 = vadd.xlane.f32.xlu0 %v260
    %v262 = vpop.xlane.xlu0 %261
    %v263 = vadd.f32 %v154, %v155
    %v264 = vadd.f32 %v263, %v156
    %265 = vadd.xlane.f32.xlu0 %v264
    %v266 = vpop.xlane.xlu0 %265
    %v267 = vadd.f32 %v157, %v158
    %v268 = vadd.f32 %v267, %v159
    %269 = vadd.xlane.f32.xlu0 %v268
    %v270 = vpop.xlane.xlu0 %269
    %v271 = vadd.f32 %v160, %v161
    %v272 = vadd.f32 %v271, %v162
    %273 = vadd.xlane.f32.xlu0 %v272
    %v274 = vpop.xlane.xlu0 %273
    %v275 = vadd.f32 %v163, %v164
    %v276 = vadd.f32 %v275, %v165
    %277 = vadd.xlane.f32.xlu0 %v276
    %v278 = vpop.xlane.xlu0 %277
    %v279 = vadd.f32 %v166, %v167
    %v280 = vadd.f32 %v279, %v168
    %281 = vadd.xlane.f32.xlu0 %v280
    %v282 = vpop.xlane.xlu0 %281
    %v283 = vadd.f32 %v169, %v170
    %v284 = vadd.f32 %v283, %v171
    %285 = vadd.xlane.f32.xlu0 %v284
    %v286 = vpop.xlane.xlu0 %285
    %v287 = vadd.f32 %v172, %v173
    %v288 = vadd.f32 %v287, %v174
    %289 = vadd.xlane.f32.xlu0 %v288
    %v290 = vpop.xlane.xlu0 %289
    %v291 = vadd.f32 %v175, %v176
    %v292 = vadd.f32 %v291, %v177
    %293 = vadd.xlane.f32.xlu0 %v292
    %v294 = vpop.xlane.xlu0 %293
    %v295 = vadd.f32 %v178, %v179
    %v296 = vadd.f32 %v295, %v180
    %297 = vadd.xlane.f32.xlu0 %v296
    %v298 = vpop.xlane.xlu0 %297
    %v299 = vadd.f32 %v181, %v182
    %v300 = vadd.f32 %v299, %v183
    %301 = vadd.xlane.f32.xlu0 %v300
    %v302 = vpop.xlane.xlu0 %301
    %v303 = vadd.f32 %v184, %v185
    %v304 = vadd.f32 %v303, %v186
    %305 = vadd.xlane.f32.xlu0 %v304
    %v306 = vpop.xlane.xlu0 %305
    %v307 = vadd.f32 %v187, %v188
    %v308 = vadd.f32 %v307, %v189
    %309 = vadd.xlane.f32.xlu0 %v308
    %v310 = vpop.xlane.xlu0 %309
    %v311 = vadd.f32 %v190, %v191
    %v312 = vadd.f32 %v311, %v192
    %313 = vadd.xlane.f32.xlu0 %v312
    %v314 = vpop.xlane.xlu0 %313
    %v315 = vadd.f32 %v193, %v194
    %v316 = vadd.f32 %v315, %v195
    %317 = vadd.xlane.f32.xlu0 %v316
    %v318 = vpop.xlane.xlu0 %317
    %v319 = vadd.f32 %v196, %v197
    %v320 = vadd.f32 %v319, %v198
    %321 = vadd.xlane.f32.xlu0 %v320
    %v322 = vpop.xlane.xlu0 %321
    %v323 = vadd.f32 %v199, %v200
    %v324 = vadd.f32 %v323, %v201
    %325 = vadd.xlane.f32.xlu0 %v324
    %v326 = vpop.xlane.xlu0 %325
    %v327 = vadd.f32 %v202, %v203
    %v328 = vadd.f32 %v327, %v204
    %329 = vadd.xlane.f32.xlu0 %v328
    %v330 = vpop.xlane.xlu0 %329
    %v331 = vadd.f32 %v205, %v206
    %v332 = vadd.f32 %v331, %v207
    %333 = vadd.xlane.f32.xlu0 %v332
    %v334 = vpop.xlane.xlu0 %333
    %v335 = vadd.f32 %v208, %v209
    %v336 = vadd.f32 %v335, %v210
    %337 = vadd.xlane.f32.xlu0 %v336
    %v338 = vpop.xlane.xlu0 %337
    %v339 = vrcp.pop 384.0
    %v340 = vmul.f32 %v214, %v339
    %v341 = vmul.f32 %v218, %v339
    %v342 = vmul.f32 %v222, %v339
    %v343 = vmul.f32 %v226, %v339
    %v344 = vmul.f32 %v230, %v339
    %v345 = vmul.f32 %v234, %v339
    %v346 = vmul.f32 %v238, %v339
    %v347 = vmul.f32 %v242, %v339
    %v348 = vmul.f32 %v246, %v339
    %v349 = vmul.f32 %v250, %v339
    %v350 = vmul.f32 %v254, %v339
    %v351 = vmul.f32 %v258, %v339
    %v352 = vmul.f32 %v262, %v339
    %v353 = vmul.f32 %v266, %v339
    %v354 = vmul.f32 %v270, %v339
    %v355 = vmul.f32 %v274, %v339
    %v356 = vmul.f32 %v278, %v339
    %v357 = vmul.f32 %v282, %v339
    %v358 = vmul.f32 %v286, %v339
    %v359 = vmul.f32 %v290, %v339
    %v360 = vmul.f32 %v294, %v339
    %v361 = vmul.f32 %v298, %v339
    %v362 = vmul.f32 %v302, %v339
    %v363 = vmul.f32 %v306, %v339
    %v364 = vmul.f32 %v310, %v339
    %v365 = vmul.f32 %v314, %v339
    %v366 = vmul.f32 %v318, %v339
    %v367 = vmul.f32 %v322, %v339
    %v368 = vmul.f32 %v326, %v339
    %v369 = vmul.f32 %v330, %v339
    %v370 = vmul.f32 %v334, %v339
    %v371 = vmul.f32 %v338, %v339
    %v372 = vsub.f32 %v115, %v340
    %v373 = vsub.f32 %v116, %v340
    %v374 = vsub.f32 %v117, %v340
    %v375 = vsub.f32 %v118, %v341
    %v376 = vsub.f32 %v119, %v341
    %v377 = vsub.f32 %v120, %v341
    %v378 = vsub.f32 %v121, %v342
    %v379 = vsub.f32 %v122, %v342
    %v380 = vsub.f32 %v123, %v342
    %v381 = vsub.f32 %v124, %v343
    %v382 = vsub.f32 %v125, %v343
    %v383 = vsub.f32 %v126, %v343
    %v384 = vsub.f32 %v127, %v344
    %v385 = vsub.f32 %v128, %v344
    %v386 = vsub.f32 %v129, %v344
    %v387 = vsub.f32 %v130, %v345
    %v388 = vsub.f32 %v131, %v345
    %v389 = vsub.f32 %v132, %v345
    %v390 = vsub.f32 %v133, %v346
    %v391 = vsub.f32 %v134, %v346
    %v392 = vsub.f32 %v135, %v346
    %v393 = vsub.f32 %v136, %v347
    %v394 = vsub.f32 %v137, %v347
    %v395 = vsub.f32 %v138, %v347
    %v396 = vsub.f32 %v139, %v348
    %v397 = vsub.f32 %v140, %v348
    %v398 = vsub.f32 %v141, %v348
    %v399 = vsub.f32 %v142, %v349
    %v400 = vsub.f32 %v143, %v349
    %v401 = vsub.f32 %v144, %v349
    %v402 = vsub.f32 %v145, %v350
    %v403 = vsub.f32 %v146, %v350
    %v404 = vsub.f32 %v147, %v350
    %v405 = vsub.f32 %v148, %v351
    %v406 = vsub.f32 %v149, %v351
    %v407 = vsub.f32 %v150, %v351
    %v408 = vsub.f32 %v151, %v352
    %v409 = vsub.f32 %v152, %v352
    %v410 = vsub.f32 %v153, %v352
    %v411 = vsub.f32 %v154, %v353
    %v412 = vsub.f32 %v155, %v353
    %v413 = vsub.f32 %v156, %v353
    %v414 = vsub.f32 %v157, %v354
    %v415 = vsub.f32 %v158, %v354
    %v416 = vsub.f32 %v159, %v354
    %v417 = vsub.f32 %v160, %v355
    %v418 = vsub.f32 %v161, %v355
    %v419 = vsub.f32 %v162, %v355
    %v420 = vsub.f32 %v163, %v356
    %v421 = vsub.f32 %v164, %v356
    %v422 = vsub.f32 %v165, %v356
    %v423 = vsub.f32 %v166, %v357
    %v424 = vsub.f32 %v167, %v357
    %v425 = vsub.f32 %v168, %v357
    %v426 = vsub.f32 %v169, %v358
    %v427 = vsub.f32 %v170, %v358
    %v428 = vsub.f32 %v171, %v358
    %v429 = vsub.f32 %v172, %v359
    %v430 = vsub.f32 %v173, %v359
    %v431 = vsub.f32 %v174, %v359
    %v432 = vsub.f32 %v175, %v360
    %v433 = vsub.f32 %v176, %v360
    %v434 = vsub.f32 %v177, %v360
    %v435 = vsub.f32 %v178, %v361
    %v436 = vsub.f32 %v179, %v361
    %v437 = vsub.f32 %v180, %v361
    %v438 = vsub.f32 %v181, %v362
    %v439 = vsub.f32 %v182, %v362
    %v440 = vsub.f32 %v183, %v362
    %v441 = vsub.f32 %v184, %v363
    %v442 = vsub.f32 %v185, %v363
    %v443 = vsub.f32 %v186, %v363
    %v444 = vsub.f32 %v187, %v364
    %v445 = vsub.f32 %v188, %v364
    %v446 = vsub.f32 %v189, %v364
    %v447 = vsub.f32 %v190, %v365
    %v448 = vsub.f32 %v191, %v365
    %v449 = vsub.f32 %v192, %v365
    %v450 = vsub.f32 %v193, %v366
    %v451 = vsub.f32 %v194, %v366
    %v452 = vsub.f32 %v195, %v366
    %v453 = vsub.f32 %v196, %v367
    %v454 = vsub.f32 %v197, %v367
    %v455 = vsub.f32 %v198, %v367
    %v456 = vsub.f32 %v199, %v368
    %v457 = vsub.f32 %v200, %v368
    %v458 = vsub.f32 %v201, %v368
    %v459 = vsub.f32 %v202, %v369
    %v460 = vsub.f32 %v203, %v369
    %v461 = vsub.f32 %v204, %v369
    %v462 = vsub.f32 %v205, %v370
    %v463 = vsub.f32 %v206, %v370
    %v464 = vsub.f32 %v207, %v370
    %v465 = vsub.f32 %v208, %v371
    %v466 = vsub.f32 %v209, %v371
    %v467 = vsub.f32 %v210, %v371
    %v468 = vmul.f32 %v372, %v372
    %v469 = vmul.f32 %v373, %v373
    %v470 = vmul.f32 %v374, %v374
    %v471 = vmul.f32 %v375, %v375
    %v472 = vmul.f32 %v376, %v376
    %v473 = vmul.f32 %v377, %v377
    %v474 = vmul.f32 %v378, %v378
    %v475 = vmul.f32 %v379, %v379
    %v476 = vmul.f32 %v380, %v380
    %v477 = vmul.f32 %v381, %v381
    %v478 = vmul.f32 %v382, %v382
    %v479 = vmul.f32 %v383, %v383
    %v480 = vmul.f32 %v384, %v384
    %v481 = vmul.f32 %v385, %v385
    %v482 = vmul.f32 %v386, %v386
    %v483 = vmul.f32 %v387, %v387
    %v484 = vmul.f32 %v388, %v388
    %v485 = vmul.f32 %v389, %v389
    %v486 = vmul.f32 %v390, %v390
    %v487 = vmul.f32 %v391, %v391
    %v488 = vmul.f32 %v392, %v392
    %v489 = vmul.f32 %v393, %v393
    %v490 = vmul.f32 %v394, %v394
    %v491 = vmul.f32 %v395, %v395
    %v492 = vmul.f32 %v396, %v396
    %v493 = vmul.f32 %v397, %v397
    %v494 = vmul.f32 %v398, %v398
    %v495 = vmul.f32 %v399, %v399
    %v496 = vmul.f32 %v400, %v400
    %v497 = vmul.f32 %v401, %v401
    %v498 = vmul.f32 %v402, %v402
    %v499 = vmul.f32 %v403, %v403
    %v500 = vmul.f32 %v404, %v404
    %v501 = vmul.f32 %v405, %v405
    %v502 = vmul.f32 %v406, %v406
    %v503 = vmul.f32 %v407, %v407
    %v504 = vmul.f32 %v408, %v408
    %v505 = vmul.f32 %v409, %v409
    %v506 = vmul.f32 %v410, %v410
    %v507 = vmul.f32 %v411, %v411
    %v508 = vmul.f32 %v412, %v412
    %v509 = vmul.f32 %v413, %v413
    %v510 = vmul.f32 %v414, %v414
    %v511 = vmul.f32 %v415, %v415
    %v512 = vmul.f32 %v416, %v416
    %v513 = vmul.f32 %v417, %v417
    %v514 = vmul.f32 %v418, %v418
    %v515 = vmul.f32 %v419, %v419
    %v516 = vmul.f32 %v420, %v420
    %v517 = vmul.f32 %v421, %v421
    %v518 = vmul.f32 %v422, %v422
    %v519 = vmul.f32 %v423, %v423
    %v520 = vmul.f32 %v424, %v424
    %v521 = vmul.f32 %v425, %v425
    %v522 = vmul.f32 %v426, %v426
    %v523 = vmul.f32 %v427, %v427
    %v524 = vmul.f32 %v428, %v428
    %v525 = vmul.f32 %v429, %v429
    %v526 = vmul.f32 %v430, %v430
    %v527 = vmul.f32 %v431, %v431
    %v528 = vmul.f32 %v432, %v432
    %v529 = vmul.f32 %v433, %v433
    %v530 = vmul.f32 %v434, %v434
    %v531 = vmul.f32 %v435, %v435
    %v532 = vmul.f32 %v436, %v436
    %v533 = vmul.f32 %v437, %v437
    %v534 = vmul.f32 %v438, %v438
    %v535 = vmul.f32 %v439, %v439
    %v536 = vmul.f32 %v440, %v440
    %v537 = vmul.f32 %v441, %v441
    %v538 = vmul.f32 %v442, %v442
    %v539 = vmul.f32 %v443, %v443
    %v540 = vmul.f32 %v444, %v444
    %v541 = vmul.f32 %v445, %v445
    %v542 = vmul.f32 %v446, %v446
    %v543 = vmul.f32 %v447, %v447
    %v544 = vmul.f32 %v448, %v448
    %v545 = vmul.f32 %v449, %v449
    %v546 = vmul.f32 %v450, %v450
    %v547 = vmul.f32 %v451, %v451
    %v548 = vmul.f32 %v452, %v452
    %v549 = vmul.f32 %v453, %v453
    %v550 = vmul.f32 %v454, %v454
    %v551 = vmul.f32 %v455, %v455
    %v552 = vmul.f32 %v456, %v456
    %v553 = vmul.f32 %v457, %v457
    %v554 = vmul.f32 %v458, %v458
    %v555 = vmul.f32 %v459, %v459
    %v556 = vmul.f32 %v460, %v460
    %v557 = vmul.f32 %v461, %v461
    %v558 = vmul.f32 %v462, %v462
    %v559 = vmul.f32 %v463, %v463
    %v560 = vmul.f32 %v464, %v464
    %v561 = vmul.f32 %v465, %v465
    %v562 = vmul.f32 %v466, %v466
    %v563 = vmul.f32 %v467, %v467
    %v564 = vadd.f32 %v468, %v469
    %v565 = vadd.f32 %v564, %v470
    %566 = vadd.xlane.f32.xlu0 %v565
    %v567 = vpop.xlane.xlu0 %566
    %v568 = vadd.f32 %v471, %v472
    %v569 = vadd.f32 %v568, %v473
    %570 = vadd.xlane.f32.xlu0 %v569
    %v571 = vpop.xlane.xlu0 %570
    %v572 = vadd.f32 %v474, %v475
    %v573 = vadd.f32 %v572, %v476
    %574 = vadd.xlane.f32.xlu0 %v573
    %v575 = vpop.xlane.xlu0 %574
    %v576 = vadd.f32 %v477, %v478
    %v577 = vadd.f32 %v576, %v479
    %578 = vadd.xlane.f32.xlu0 %v577
    %v579 = vpop.xlane.xlu0 %578
    %v580 = vadd.f32 %v480, %v481
    %v581 = vadd.f32 %v580, %v482
    %582 = vadd.xlane.f32.xlu0 %v581
    %v583 = vpop.xlane.xlu0 %582
    %v584 = vadd.f32 %v483, %v484
    %v585 = vadd.f32 %v584, %v485
    %586 = vadd.xlane.f32.xlu0 %v585
    %v587 = vpop.xlane.xlu0 %586
    %v588 = vadd.f32 %v486, %v487
    %v589 = vadd.f32 %v588, %v488
    %590 = vadd.xlane.f32.xlu0 %v589
    %v591 = vpop.xlane.xlu0 %590
    %v592 = vadd.f32 %v489, %v490
    %v593 = vadd.f32 %v592, %v491
    %594 = vadd.xlane.f32.xlu0 %v593
    %v595 = vpop.xlane.xlu0 %594
    %v596 = vadd.f32 %v492, %v493
    %v597 = vadd.f32 %v596, %v494
    %598 = vadd.xlane.f32.xlu0 %v597
    %v599 = vpop.xlane.xlu0 %598
    %v600 = vadd.f32 %v495, %v496
    %v601 = vadd.f32 %v600, %v497
    %602 = vadd.xlane.f32.xlu0 %v601
    %v603 = vpop.xlane.xlu0 %602
    %v604 = vadd.f32 %v498, %v499
    %v605 = vadd.f32 %v604, %v500
    %606 = vadd.xlane.f32.xlu0 %v605
    %v607 = vpop.xlane.xlu0 %606
    %v608 = vadd.f32 %v501, %v502
    %v609 = vadd.f32 %v608, %v503
    %610 = vadd.xlane.f32.xlu0 %v609
    %v611 = vpop.xlane.xlu0 %610
    %v612 = vadd.f32 %v504, %v505
    %v613 = vadd.f32 %v612, %v506
    %614 = vadd.xlane.f32.xlu0 %v613
    %v615 = vpop.xlane.xlu0 %614
    %v616 = vadd.f32 %v507, %v508
    %v617 = vadd.f32 %v616, %v509
    %618 = vadd.xlane.f32.xlu0 %v617
    %v619 = vpop.xlane.xlu0 %618
    %v620 = vadd.f32 %v510, %v511
    %v621 = vadd.f32 %v620, %v512
    %622 = vadd.xlane.f32.xlu0 %v621
    %v623 = vpop.xlane.xlu0 %622
    %v624 = vadd.f32 %v513, %v514
    %v625 = vadd.f32 %v624, %v515
    %626 = vadd.xlane.f32.xlu0 %v625
    %v627 = vpop.xlane.xlu0 %626
    %v628 = vadd.f32 %v516, %v517
    %v629 = vadd.f32 %v628, %v518
    %630 = vadd.xlane.f32.xlu0 %v629
    %v631 = vpop.xlane.xlu0 %630
    %v632 = vadd.f32 %v519, %v520
    %v633 = vadd.f32 %v632, %v521
    %634 = vadd.xlane.f32.xlu0 %v633
    %v635 = vpop.xlane.xlu0 %634
    %v636 = vadd.f32 %v522, %v523
    %v637 = vadd.f32 %v636, %v524
    %638 = vadd.xlane.f32.xlu0 %v637
    %v639 = vpop.xlane.xlu0 %638
    %v640 = vadd.f32 %v525, %v526
    %v641 = vadd.f32 %v640, %v527
    %642 = vadd.xlane.f32.xlu0 %v641
    %v643 = vpop.xlane.xlu0 %642
    %v644 = vadd.f32 %v528, %v529
    %v645 = vadd.f32 %v644, %v530
    %646 = vadd.xlane.f32.xlu0 %v645
    %v647 = vpop.xlane.xlu0 %646
    %v648 = vadd.f32 %v531, %v532
    %v649 = vadd.f32 %v648, %v533
    %650 = vadd.xlane.f32.xlu0 %v649
    %v651 = vpop.xlane.xlu0 %650
    %v652 = vadd.f32 %v534, %v535
    %v653 = vadd.f32 %v652, %v536
    %654 = vadd.xlane.f32.xlu0 %v653
    %v655 = vpop.xlane.xlu0 %654
    %v656 = vadd.f32 %v537, %v538
    %v657 = vadd.f32 %v656, %v539
    %658 = vadd.xlane.f32.xlu0 %v657
    %v659 = vpop.xlane.xlu0 %658
    %v660 = vadd.f32 %v540, %v541
    %v661 = vadd.f32 %v660, %v542
    %662 = vadd.xlane.f32.xlu0 %v661
    %v663 = vpop.xlane.xlu0 %662
    %v664 = vadd.f32 %v543, %v544
    %v665 = vadd.f32 %v664, %v545
    %666 = vadd.xlane.f32.xlu0 %v665
    %v667 = vpop.xlane.xlu0 %666
    %v668 = vadd.f32 %v546, %v547
    %v669 = vadd.f32 %v668, %v548
    %670 = vadd.xlane.f32.xlu0 %v669
    %v671 = vpop.xlane.xlu0 %670
    %v672 = vadd.f32 %v549, %v550
    %v673 = vadd.f32 %v672, %v551
    %674 = vadd.xlane.f32.xlu0 %v673
    %v675 = vpop.xlane.xlu0 %674
    %v676 = vadd.f32 %v552, %v553
    %v677 = vadd.f32 %v676, %v554
    %678 = vadd.xlane.f32.xlu0 %v677
    %v679 = vpop.xlane.xlu0 %678
    %v680 = vadd.f32 %v555, %v556
    %v681 = vadd.f32 %v680, %v557
    %682 = vadd.xlane.f32.xlu0 %v681
    %v683 = vpop.xlane.xlu0 %682
    %v684 = vadd.f32 %v558, %v559
    %v685 = vadd.f32 %v684, %v560
    %686 = vadd.xlane.f32.xlu0 %v685
    %v687 = vpop.xlane.xlu0 %686
    %v688 = vadd.f32 %v561, %v562
    %v689 = vadd.f32 %v688, %v563
    %690 = vadd.xlane.f32.xlu0 %v689
    %v691 = vpop.xlane.xlu0 %690
    %v692 = vmul.f32 %v567, %v339
    %v693 = vmul.f32 %v571, %v339
    %v694 = vmul.f32 %v575, %v339
    %v695 = vmul.f32 %v579, %v339
    %v696 = vmul.f32 %v583, %v339
    %v697 = vmul.f32 %v587, %v339
    %v698 = vmul.f32 %v591, %v339
    %v699 = vmul.f32 %v595, %v339
    %v700 = vmul.f32 %v599, %v339
    %v701 = vmul.f32 %v603, %v339
    %v702 = vmul.f32 %v607, %v339
    %v703 = vmul.f32 %v611, %v339
    %v704 = vmul.f32 %v615, %v339
    %v705 = vmul.f32 %v619, %v339
    %v706 = vmul.f32 %v623, %v339
    %v707 = vmul.f32 %v627, %v339
    %v708 = vmul.f32 %v631, %v339
    %v709 = vmul.f32 %v635, %v339
    %v710 = vmul.f32 %v639, %v339
    %v711 = vmul.f32 %v643, %v339
    %v712 = vmul.f32 %v647, %v339
    %v713 = vmul.f32 %v651, %v339
    %v714 = vmul.f32 %v655, %v339
    %v715 = vmul.f32 %v659, %v339
    %v716 = vmul.f32 %v663, %v339
    %v717 = vmul.f32 %v667, %v339
    %v718 = vmul.f32 %v671, %v339
    %v719 = vmul.f32 %v675, %v339
    %v720 = vmul.f32 %v679, %v339
    %v721 = vmul.f32 %v683, %v339
    %v722 = vmul.f32 %v687, %v339
    %v723 = vmul.f32 %v691, %v339
    %v724 = vadd.f32 %v692, 1e-06
    %v725 = vadd.f32 %v693, 1e-06
    %v726 = vadd.f32 %v694, 1e-06
    %v727 = vadd.f32 %v695, 1e-06
    %v728 = vadd.f32 %v696, 1e-06
    %v729 = vadd.f32 %v697, 1e-06
    %v730 = vadd.f32 %v698, 1e-06
    %v731 = vadd.f32 %v699, 1e-06
    %v732 = vadd.f32 %v700, 1e-06
    %v733 = vadd.f32 %v701, 1e-06
    %v734 = vadd.f32 %v702, 1e-06
    %v735 = vadd.f32 %v703, 1e-06
    %v736 = vadd.f32 %v704, 1e-06
    %v737 = vadd.f32 %v705, 1e-06
    %v738 = vadd.f32 %v706, 1e-06
    %v739 = vadd.f32 %v707, 1e-06
    %v740 = vadd.f32 %v708, 1e-06
    %v741 = vadd.f32 %v709, 1e-06
    %v742 = vadd.f32 %v710, 1e-06
    %v743 = vadd.f32 %v711, 1e-06
    %v744 = vadd.f32 %v712, 1e-06
    %v745 = vadd.f32 %v713, 1e-06
    %v746 = vadd.f32 %v714, 1e-06
    %v747 = vadd.f32 %v715, 1e-06
    %v748 = vadd.f32 %v716, 1e-06
    %v749 = vadd.f32 %v717, 1e-06
    %v750 = vadd.f32 %v718, 1e-06
    %v751 = vadd.f32 %v719, 1e-06
    %v752 = vadd.f32 %v720, 1e-06
    %v753 = vadd.f32 %v721, 1e-06
    %v754 = vadd.f32 %v722, 1e-06
    %v755 = vadd.f32 %v723, 1e-06
    %v756 = vrsqrt.pop %v724
    %v757 = vrsqrt.pop %v725
    %v758 = vrsqrt.pop %v726
    %v759 = vrsqrt.pop %v727
    %v760 = vrsqrt.pop %v728
    %v761 = vrsqrt.pop %v729
    %v762 = vrsqrt.pop %v730
    %v763 = vrsqrt.pop %v731
    %v764 = vrsqrt.pop %v732
    %v765 = vrsqrt.pop %v733
    %v766 = vrsqrt.pop %v734
    %v767 = vrsqrt.pop %v735
    %v768 = vrsqrt.pop %v736
    %v769 = vrsqrt.pop %v737
    %v770 = vrsqrt.pop %v738
    %v771 = vrsqrt.pop %v739
    %v772 = vrsqrt.pop %v740
    %v773 = vrsqrt.pop %v741
    %v774 = vrsqrt.pop %v742
    %v775 = vrsqrt.pop %v743
    %v776 = vrsqrt.pop %v744
    %v777 = vrsqrt.pop %v745
    %v778 = vrsqrt.pop %v746
    %v779 = vrsqrt.pop %v747
    %v780 = vrsqrt.pop %v748
    %v781 = vrsqrt.pop %v749
    %v782 = vrsqrt.pop %v750
    %v783 = vrsqrt.pop %v751
    %v784 = vrsqrt.pop %v752
    %v785 = vrsqrt.pop %v753
    %v786 = vrsqrt.pop %v754
    %v787 = vrsqrt.pop %v755
    %v788 = vmul.f32 %v372, %v756
    %v789 = vmul.f32 %v373, %v756
    %v790 = vmul.f32 %v374, %v756
    %v791 = vmul.f32 %v375, %v757
    %v792 = vmul.f32 %v376, %v757
    %v793 = vmul.f32 %v377, %v757
    %v794 = vmul.f32 %v378, %v758
    %v795 = vmul.f32 %v379, %v758
    %v796 = vmul.f32 %v380, %v758
    %v797 = vmul.f32 %v381, %v759
    %v798 = vmul.f32 %v382, %v759
    %v799 = vmul.f32 %v383, %v759
    %v800 = vmul.f32 %v384, %v760
    %v801 = vmul.f32 %v385, %v760
    %v802 = vmul.f32 %v386, %v760
    %v803 = vmul.f32 %v387, %v761
    %v804 = vmul.f32 %v388, %v761
    %v805 = vmul.f32 %v389, %v761
    %v806 = vmul.f32 %v390, %v762
    %v807 = vmul.f32 %v391, %v762
    %v808 = vmul.f32 %v392, %v762
    %v809 = vmul.f32 %v393, %v763
    %v810 = vmul.f32 %v394, %v763
    %v811 = vmul.f32 %v395, %v763
    %v812 = vmul.f32 %v396, %v764
    %v813 = vmul.f32 %v397, %v764
    %v814 = vmul.f32 %v398, %v764
    %v815 = vmul.f32 %v399, %v765
    %v816 = vmul.f32 %v400, %v765
    %v817 = vmul.f32 %v401, %v765
    %v818 = vmul.f32 %v402, %v766
    %v819 = vmul.f32 %v403, %v766
    %v820 = vmul.f32 %v404, %v766
    %v821 = vmul.f32 %v405, %v767
    %v822 = vmul.f32 %v406, %v767
    %v823 = vmul.f32 %v407, %v767
    %v824 = vmul.f32 %v408, %v768
    %v825 = vmul.f32 %v409, %v768
    %v826 = vmul.f32 %v410, %v768
    %v827 = vmul.f32 %v411, %v769
    %v828 = vmul.f32 %v412, %v769
    %v829 = vmul.f32 %v413, %v769
    %v830 = vmul.f32 %v414, %v770
    %v831 = vmul.f32 %v415, %v770
    %v832 = vmul.f32 %v416, %v770
    %v833 = vmul.f32 %v417, %v771
    %v834 = vmul.f32 %v418, %v771
    %v835 = vmul.f32 %v419, %v771
    %v836 = vmul.f32 %v420, %v772
    %v837 = vmul.f32 %v421, %v772
    %v838 = vmul.f32 %v422, %v772
    %v839 = vmul.f32 %v423, %v773
    %v840 = vmul.f32 %v424, %v773
    %v841 = vmul.f32 %v425, %v773
    %v842 = vmul.f32 %v426, %v774
    %v843 = vmul.f32 %v427, %v774
    %v844 = vmul.f32 %v428, %v774
    %v845 = vmul.f32 %v429, %v775
    %v846 = vmul.f32 %v430, %v775
    %v847 = vmul.f32 %v431, %v775
    %v848 = vmul.f32 %v432, %v776
    %v849 = vmul.f32 %v433, %v776
    %v850 = vmul.f32 %v434, %v776
    %v851 = vmul.f32 %v435, %v777
    %v852 = vmul.f32 %v436, %v777
    %v853 = vmul.f32 %v437, %v777
    %v854 = vmul.f32 %v438, %v778
    %v855 = vmul.f32 %v439, %v778
    %v856 = vmul.f32 %v440, %v778
    %v857 = vmul.f32 %v441, %v779
    %v858 = vmul.f32 %v442, %v779
    %v859 = vmul.f32 %v443, %v779
    %v860 = vmul.f32 %v444, %v780
    %v861 = vmul.f32 %v445, %v780
    %v862 = vmul.f32 %v446, %v780
    %v863 = vmul.f32 %v447, %v781
    %v864 = vmul.f32 %v448, %v781
    %v865 = vmul.f32 %v449, %v781
    %v866 = vmul.f32 %v450, %v782
    %v867 = vmul.f32 %v451, %v782
    %v868 = vmul.f32 %v452, %v782
    %v869 = vmul.f32 %v453, %v783
    %v870 = vmul.f32 %v454, %v783
    %v871 = vmul.f32 %v455, %v783
    %v872 = vmul.f32 %v456, %v784
    %v873 = vmul.f32 %v457, %v784
    %v874 = vmul.f32 %v458, %v784
    %v875 = vmul.f32 %v459, %v785
    %v876 = vmul.f32 %v460, %v785
    %v877 = vmul.f32 %v461, %v785
    %v878 = vmul.f32 %v462, %v786
    %v879 = vmul.f32 %v463, %v786
    %v880 = vmul.f32 %v464, %v786
    %v881 = vmul.f32 %v465, %v787
    %v882 = vmul.f32 %v466, %v787
    %v883 = vmul.f32 %v467, %v787
    %v884 = vld [vmem:[#allocation5] sm:$0x7]
    %v886 = vlaneseq
    %v887 = vshrl.u32 %v886, 7
    %v888 = vsub.s32 0, %v887
    %v889 = vrot.slane %v884, %v888
    %v890 = vlaneseq
    %v891 = vshrl.u32 %v890, 7
    %v892 = vsub.s32 1, %v891
    %v893 = vrot.slane %v884, %v892
    %v894 = vlaneseq
    %v895 = vshrl.u32 %v894, 7
    %v896 = vsub.s32 2, %v895
    %v897 = vrot.slane %v884, %v896
    %v901 = vmul.f32 %v788, %v889
    %v902 = vmul.f32 %v789, %v893
    %v903 = vmul.f32 %v790, %v897
    %v904 = vmul.f32 %v791, %v889
    %v905 = vmul.f32 %v792, %v893
    %v906 = vmul.f32 %v793, %v897
    %v907 = vmul.f32 %v794, %v889
    %v908 = vmul.f32 %v795, %v893
    %v909 = vmul.f32 %v796, %v897
    %v910 = vmul.f32 %v797, %v889
    %v911 = vmul.f32 %v798, %v893
    %v912 = vmul.f32 %v799, %v897
    %v913 = vmul.f32 %v800, %v889
    %v914 = vmul.f32 %v801, %v893
    %v915 = vmul.f32 %v802, %v897
    %v916 = vmul.f32 %v803, %v889
    %v917 = vmul.f32 %v804, %v893
    %v918 = vmul.f32 %v805, %v897
    %v919 = vmul.f32 %v806, %v889
    %v920 = vmul.f32 %v807, %v893
    %v921 = vmul.f32 %v808, %v897
    %v922 = vmul.f32 %v809, %v889
    %v923 = vmul.f32 %v810, %v893
    %v924 = vmul.f32 %v811, %v897
    %v925 = vmul.f32 %v812, %v889
    %v926 = vmul.f32 %v813, %v893
    %v927 = vmul.f32 %v814, %v897
    %v928 = vmul.f32 %v815, %v889
    %v929 = vmul.f32 %v816, %v893
    %v930 = vmul.f32 %v817, %v897
    %v931 = vmul.f32 %v818, %v889
    %v932 = vmul.f32 %v819, %v893
    %v933 = vmul.f32 %v820, %v897
    %v934 = vmul.f32 %v821, %v889
    %v935 = vmul.f32 %v822, %v893
    %v936 = vmul.f32 %v823, %v897
    %v937 = vmul.f32 %v824, %v889
    %v938 = vmul.f32 %v825, %v893
    %v939 = vmul.f32 %v826, %v897
    %v940 = vmul.f32 %v827, %v889
    %v941 = vmul.f32 %v828, %v893
    %v942 = vmul.f32 %v829, %v897
    %v943 = vmul.f32 %v830, %v889
    %v944 = vmul.f32 %v831, %v893
    %v945 = vmul.f32 %v832, %v897
    %v946 = vmul.f32 %v833, %v889
    %v947 = vmul.f32 %v834, %v893
    %v948 = vmul.f32 %v835, %v897
    %v949 = vmul.f32 %v836, %v889
    %v950 = vmul.f32 %v837, %v893
    %v951 = vmul.f32 %v838, %v897
    %v952 = vmul.f32 %v839, %v889
    %v953 = vmul.f32 %v840, %v893
    %v954 = vmul.f32 %v841, %v897
    %v955 = vmul.f32 %v842, %v889
    %v956 = vmul.f32 %v843, %v893
    %v957 = vmul.f32 %v844, %v897
    %v958 = vmul.f32 %v845, %v889
    %v959 = vmul.f32 %v846, %v893
    %v960 = vmul.f32 %v847, %v897
    %v961 = vmul.f32 %v848, %v889
    %v962 = vmul.f32 %v849, %v893
    %v963 = vmul.f32 %v850, %v897
    %v964 = vmul.f32 %v851, %v889
    %v965 = vmul.f32 %v852, %v893
    %v966 = vmul.f32 %v853, %v897
    %v967 = vmul.f32 %v854, %v889
    %v968 = vmul.f32 %v855, %v893
    %v969 = vmul.f32 %v856, %v897
    %v970 = vmul.f32 %v857, %v889
    %v971 = vmul.f32 %v858, %v893
    %v972 = vmul.f32 %v859, %v897
    %v973 = vmul.f32 %v860, %v889
    %v974 = vmul.f32 %v861, %v893
    %v975 = vmul.f32 %v862, %v897
    %v976 = vmul.f32 %v863, %v889
    %v977 = vmul.f32 %v864, %v893
    %v978 = vmul.f32 %v865, %v897
    %v979 = vmul.f32 %v866, %v889
    %v980 = vmul.f32 %v867, %v893
    %v981 = vmul.f32 %v868, %v897
    %v982 = vmul.f32 %v869, %v889
    %v983 = vmul.f32 %v870, %v893
    %v984 = vmul.f32 %v871, %v897
    %v985 = vmul.f32 %v872, %v889
    %v986 = vmul.f32 %v873, %v893
    %v987 = vmul.f32 %v874, %v897
    %v988 = vmul.f32 %v875, %v889
    %v989 = vmul.f32 %v876, %v893
    %v990 = vmul.f32 %v877, %v897
    %v991 = vmul.f32 %v878, %v889
    %v992 = vmul.f32 %v879, %v893
    %v993 = vmul.f32 %v880, %v897
    %v994 = vmul.f32 %v881, %v889
    %v995 = vmul.f32 %v882, %v893
    %v996 = vmul.f32 %v883, %v897
    %v997 = vld [vmem:[#allocation7] sm:$0x7]
    %v999 = vlaneseq
    %v1000 = vshrl.u32 %v999, 7
    %v1001 = vsub.s32 0, %v1000
    %v1002 = vrot.slane %v997, %v1001
    %v1003 = vlaneseq
    %v1004 = vshrl.u32 %v1003, 7
    %v1005 = vsub.s32 1, %v1004
    %v1006 = vrot.slane %v997, %v1005
    %v1007 = vlaneseq
    %v1008 = vshrl.u32 %v1007, 7
    %v1009 = vsub.s32 2, %v1008
    %v1010 = vrot.slane %v997, %v1009
    %v1014 = vadd.f32 %v901, %v1002
    %v1015 = vadd.f32 %v902, %v1006
    %v1016 = vadd.f32 %v903, %v1010
    %v1017 = vadd.f32 %v904, %v1002
    %v1018 = vadd.f32 %v905, %v1006
    %v1019 = vadd.f32 %v906, %v1010
    %v1020 = vadd.f32 %v907, %v1002
    %v1021 = vadd.f32 %v908, %v1006
    %v1022 = vadd.f32 %v909, %v1010
    %v1023 = vadd.f32 %v910, %v1002
    %v1024 = vadd.f32 %v911, %v1006
    %v1025 = vadd.f32 %v912, %v1010
    %v1026 = vadd.f32 %v913, %v1002
    %v1027 = vadd.f32 %v914, %v1006
    %v1028 = vadd.f32 %v915, %v1010
    %v1029 = vadd.f32 %v916, %v1002
    %v1030 = vadd.f32 %v917, %v1006
    %v1031 = vadd.f32 %v918, %v1010
    %v1032 = vadd.f32 %v919, %v1002
    %v1033 = vadd.f32 %v920, %v1006
    %v1034 = vadd.f32 %v921, %v1010
    %v1035 = vadd.f32 %v922, %v1002
    %v1036 = vadd.f32 %v923, %v1006
    %v1037 = vadd.f32 %v924, %v1010
    %v1038 = vadd.f32 %v925, %v1002
    %v1039 = vadd.f32 %v926, %v1006
    %v1040 = vadd.f32 %v927, %v1010
    %v1041 = vadd.f32 %v928, %v1002
    %v1042 = vadd.f32 %v929, %v1006
    %v1043 = vadd.f32 %v930, %v1010
    %v1044 = vadd.f32 %v931, %v1002
    %v1045 = vadd.f32 %v932, %v1006
    %v1046 = vadd.f32 %v933, %v1010
    %v1047 = vadd.f32 %v934, %v1002
    %v1048 = vadd.f32 %v935, %v1006
    %v1049 = vadd.f32 %v936, %v1010
    %v1050 = vadd.f32 %v937, %v1002
    %v1051 = vadd.f32 %v938, %v1006
    %v1052 = vadd.f32 %v939, %v1010
    %v1053 = vadd.f32 %v940, %v1002
    %v1054 = vadd.f32 %v941, %v1006
    %v1055 = vadd.f32 %v942, %v1010
    %v1056 = vadd.f32 %v943, %v1002
    %v1057 = vadd.f32 %v944, %v1006
    %v1058 = vadd.f32 %v945, %v1010
    %v1059 = vadd.f32 %v946, %v1002
    %v1060 = vadd.f32 %v947, %v1006
    %v1061 = vadd.f32 %v948, %v1010
    %v1062 = vadd.f32 %v949, %v1002
    %v1063 = vadd.f32 %v950, %v1006
    %v1064 = vadd.f32 %v951, %v1010
    %v1065 = vadd.f32 %v952, %v1002
    %v1066 = vadd.f32 %v953, %v1006
    %v1067 = vadd.f32 %v954, %v1010
    %v1068 = vadd.f32 %v955, %v1002
    %v1069 = vadd.f32 %v956, %v1006
    %v1070 = vadd.f32 %v957, %v1010
    %v1071 = vadd.f32 %v958, %v1002
    %v1072 = vadd.f32 %v959, %v1006
    %v1073 = vadd.f32 %v960, %v1010
    %v1074 = vadd.f32 %v961, %v1002
    %v1075 = vadd.f32 %v962, %v1006
    %v1076 = vadd.f32 %v963, %v1010
    %v1077 = vadd.f32 %v964, %v1002
    %v1078 = vadd.f32 %v965, %v1006
    %v1079 = vadd.f32 %v966, %v1010
    %v1080 = vadd.f32 %v967, %v1002
    %v1081 = vadd.f32 %v968, %v1006
    %v1082 = vadd.f32 %v969, %v1010
    %v1083 = vadd.f32 %v970, %v1002
    %v1084 = vadd.f32 %v971, %v1006
    %v1085 = vadd.f32 %v972, %v1010
    %v1086 = vadd.f32 %v973, %v1002
    %v1087 = vadd.f32 %v974, %v1006
    %v1088 = vadd.f32 %v975, %v1010
    %v1089 = vadd.f32 %v976, %v1002
    %v1090 = vadd.f32 %v977, %v1006
    %v1091 = vadd.f32 %v978, %v1010
    %v1092 = vadd.f32 %v979, %v1002
    %v1093 = vadd.f32 %v980, %v1006
    %v1094 = vadd.f32 %v981, %v1010
    %v1095 = vadd.f32 %v982, %v1002
    %v1096 = vadd.f32 %v983, %v1006
    %v1097 = vadd.f32 %v984, %v1010
    %v1098 = vadd.f32 %v985, %v1002
    %v1099 = vadd.f32 %v986, %v1006
    %v1100 = vadd.f32 %v987, %v1010
    %v1101 = vadd.f32 %v988, %v1002
    %v1102 = vadd.f32 %v989, %v1006
    %v1103 = vadd.f32 %v990, %v1010
    %v1104 = vadd.f32 %v991, %v1002
    %v1105 = vadd.f32 %v992, %v1006
    %v1106 = vadd.f32 %v993, %v1010
    %v1107 = vadd.f32 %v994, %v1002
    %v1108 = vadd.f32 %v995, %v1006
    %v1109 = vadd.f32 %v996, %v1010
    %v1110 = vpack.c.bf16 %v1017, %v1014
    %v1111 = vpack.c.bf16 %v1018, %v1015
    %v1112 = vpack.c.bf16 %v1019, %v1016
    %v1113 = vpack.c.bf16 %v1023, %v1020
    %v1114 = vpack.c.bf16 %v1024, %v1021
    %v1115 = vpack.c.bf16 %v1025, %v1022
    %v1116 = vpack.c.bf16 %v1029, %v1026
    %v1117 = vpack.c.bf16 %v1030, %v1027
    %v1118 = vpack.c.bf16 %v1031, %v1028
    %v1119 = vpack.c.bf16 %v1035, %v1032
    %v1120 = vpack.c.bf16 %v1036, %v1033
    %v1121 = vpack.c.bf16 %v1037, %v1034
    %v1122 = vpack.c.bf16 %v1041, %v1038
    %v1123 = vpack.c.bf16 %v1042, %v1039
    %v1124 = vpack.c.bf16 %v1043, %v1040
    %v1125 = vpack.c.bf16 %v1047, %v1044
    %v1126 = vpack.c.bf16 %v1048, %v1045
    %v1127 = vpack.c.bf16 %v1049, %v1046
    %v1128 = vpack.c.bf16 %v1053, %v1050
    %v1129 = vpack.c.bf16 %v1054, %v1051
    %v1130 = vpack.c.bf16 %v1055, %v1052
    %v1131 = vpack.c.bf16 %v1059, %v1056
    %v1132 = vpack.c.bf16 %v1060, %v1057
    %v1133 = vpack.c.bf16 %v1061, %v1058
    %v1134 = vpack.c.bf16 %v1065, %v1062
    %v1135 = vpack.c.bf16 %v1066, %v1063
    %v1136 = vpack.c.bf16 %v1067, %v1064
    %v1137 = vpack.c.bf16 %v1071, %v1068
    %v1138 = vpack.c.bf16 %v1072, %v1069
    %v1139 = vpack.c.bf16 %v1073, %v1070
    %v1140 = vpack.c.bf16 %v1077, %v1074
    %v1141 = vpack.c.bf16 %v1078, %v1075
    %v1142 = vpack.c.bf16 %v1079, %v1076
    %v1143 = vpack.c.bf16 %v1083, %v1080
    %v1144 = vpack.c.bf16 %v1084, %v1081
    %v1145 = vpack.c.bf16 %v1085, %v1082
    %v1146 = vpack.c.bf16 %v1089, %v1086
    %v1147 = vpack.c.bf16 %v1090, %v1087
    %v1148 = vpack.c.bf16 %v1091, %v1088
    %v1149 = vpack.c.bf16 %v1095, %v1092
    %v1150 = vpack.c.bf16 %v1096, %v1093
    %v1151 = vpack.c.bf16 %v1097, %v1094
    %v1152 = vpack.c.bf16 %v1101, %v1098
    %v1153 = vpack.c.bf16 %v1102, %v1099
    %v1154 = vpack.c.bf16 %v1103, %v1100
    %v1155 = vpack.c.bf16 %v1107, %v1104
    %v1156 = vpack.c.bf16 %v1108, %v1105
    %v1157 = vpack.c.bf16 %v1109, %v1106
    %v1158 = vld [vmem:[#allocation8] sm:$0xff]
    %v1159 = vld [vmem:[#allocation8 + $0x8] sm:$0xff]
    %v1160 = vld [vmem:[#allocation8 + $0x10] sm:$0xff]
    %v1161 = vld [vmem:[#allocation8 + $0x18] sm:$0xff]
    %v1162 = vld [vmem:[#allocation8 + $0x20] sm:$0xff]
    %v1163 = vld [vmem:[#allocation8 + $0x28] sm:$0xff]
    %v1164 = vld [vmem:[#allocation8 + $0x30] sm:$0xff]
    %v1165 = vld [vmem:[#allocation8 + $0x38] sm:$0xff]
    %v1166 = vld [vmem:[#allocation8 + $0x40] sm:$0xff]
    %v1167 = vld [vmem:[#allocation8 + $0x48] sm:$0xff]
    %v1168 = vld [vmem:[#allocation8 + $0x50] sm:$0xff]
    %v1169 = vld [vmem:[#allocation8 + $0x58] sm:$0xff]
    %v1170 = vld [vmem:[#allocation8 + $0x60] sm:$0xff]
    %v1171 = vld [vmem:[#allocation8 + $0x68] sm:$0xff]
    %v1172 = vld [vmem:[#allocation8 + $0x70] sm:$0xff]
    %v1173 = vld [vmem:[#allocation8 + $0x78] sm:$0xff]
    %v1174 = vld [vmem:[#allocation8 + $0x80] sm:$0xff]
    %v1175 = vld [vmem:[#allocation8 + $0x88] sm:$0xff]
    %v1176 = vld [vmem:[#allocation8 + $0x90] sm:$0xff]
    %v1177 = vld [vmem:[#allocation8 + $0x98] sm:$0xff]
    %v1178 = vld [vmem:[#allocation8 + $0xa0] sm:$0xff]
    %v1179 = vld [vmem:[#allocation8 + $0xa8] sm:$0xff]
    %v1180 = vld [vmem:[#allocation8 + $0xb0] sm:$0xff]
    %v1181 = vld [vmem:[#allocation8 + $0xb8] sm:$0xff]
    %v1182 = vld [vmem:[#allocation8 + $0xc0] sm:$0xff]
    %v1183 = vld [vmem:[#allocation8 + $0xc8] sm:$0xff]
    %v1184 = vld [vmem:[#allocation8 + $0xd0] sm:$0xff]
    %v1185 = vld [vmem:[#allocation8 + $0xd8] sm:$0xff]
    %v1186 = vld [vmem:[#allocation8 + $0xe0] sm:$0xff]
    %v1187 = vld [vmem:[#allocation8 + $0xe8] sm:$0xff]
    %v1188 = vld [vmem:[#allocation8 + $0xf0] sm:$0xff]
    %v1189 = vld [vmem:[#allocation8 + $0xf8] sm:$0xff]
    %v1190 = vld [vmem:[#allocation8 + $0x100] sm:$0xff]
    %v1191 = vld [vmem:[#allocation8 + $0x108] sm:$0xff]
    %v1192 = vld [vmem:[#allocation8 + $0x110] sm:$0xff]
    %v1193 = vld [vmem:[#allocation8 + $0x118] sm:$0xff]
    %v1194 = vld [vmem:[#allocation8 + $0x120] sm:$0xff]
    %v1195 = vld [vmem:[#allocation8 + $0x128] sm:$0xff]
    %v1196 = vld [vmem:[#allocation8 + $0x130] sm:$0xff]
    %v1197 = vld [vmem:[#allocation8 + $0x138] sm:$0xff]
    %v1198 = vld [vmem:[#allocation8 + $0x140] sm:$0xff]
    %v1199 = vld [vmem:[#allocation8 + $0x148] sm:$0xff]
    %v1200 = vld [vmem:[#allocation8 + $0x150] sm:$0xff]
    %v1201 = vld [vmem:[#allocation8 + $0x158] sm:$0xff]
    %v1202 = vld [vmem:[#allocation8 + $0x160] sm:$0xff]
    %v1203 = vld [vmem:[#allocation8 + $0x168] sm:$0xff]
    %v1204 = vld [vmem:[#allocation8 + $0x170] sm:$0xff]
    %v1205 = vld [vmem:[#allocation8 + $0x178] sm:$0xff]
    %v1206 = vld [vmem:[#allocation8 + $0x180] sm:$0xff]
    %v1207 = vld [vmem:[#allocation8 + $0x188] sm:$0xff]
    %v1208 = vld [vmem:[#allocation8 + $0x190] sm:$0xff]
    %v1209 = vld [vmem:[#allocation8 + $0x198] sm:$0xff]
    %v1210 = vld [vmem:[#allocation8 + $0x1a0] sm:$0xff]
    %v1211 = vld [vmem:[#allocation8 + $0x1a8] sm:$0xff]
    %v1212 = vld [vmem:[#allocation8 + $0x1b0] sm:$0xff]
    %v1213 = vld [vmem:[#allocation8 + $0x1b8] sm:$0xff]
    %v1214 = vld [vmem:[#allocation8 + $0x1c0] sm:$0xff]
    %v1215 = vld [vmem:[#allocation8 + $0x1c8] sm:$0xff]
    %v1216 = vld [vmem:[#allocation8 + $0x1d0] sm:$0xff]
    %v1217 = vld [vmem:[#allocation8 + $0x1d8] sm:$0xff]
    %v1218 = vld [vmem:[#allocation8 + $0x1e0] sm:$0xff]
    %v1219 = vld [vmem:[#allocation8 + $0x1e8] sm:$0xff]
    %v1220 = vld [vmem:[#allocation8 + $0x1f0] sm:$0xff]
    %v1221 = vld [vmem:[#allocation8 + $0x1f8] sm:$0xff]
    %v1222 = vld [vmem:[#allocation8 + $0x200] sm:$0xff]
    %v1223 = vld [vmem:[#allocation8 + $0x208] sm:$0xff]
    %v1224 = vld [vmem:[#allocation8 + $0x210] sm:$0xff]
    %v1225 = vld [vmem:[#allocation8 + $0x218] sm:$0xff]
    %v1226 = vld [vmem:[#allocation8 + $0x220] sm:$0xff]
    %v1227 = vld [vmem:[#allocation8 + $0x228] sm:$0xff]
    %v1228 = vld [vmem:[#allocation8 + $0x230] sm:$0xff]
    %v1229 = vld [vmem:[#allocation8 + $0x238] sm:$0xff]
    %v1230 = vld [vmem:[#allocation8 + $0x240] sm:$0xff]
    %v1231 = vld [vmem:[#allocation8 + $0x248] sm:$0xff]
    %v1232 = vld [vmem:[#allocation8 + $0x250] sm:$0xff]
    %v1233 = vld [vmem:[#allocation8 + $0x258] sm:$0xff]
    %v1234 = vld [vmem:[#allocation8 + $0x260] sm:$0xff]
    %v1235 = vld [vmem:[#allocation8 + $0x268] sm:$0xff]
    %v1236 = vld [vmem:[#allocation8 + $0x270] sm:$0xff]
    %v1237 = vld [vmem:[#allocation8 + $0x278] sm:$0xff]
    %v1238 = vld [vmem:[#allocation8 + $0x280] sm:$0xff]
    %v1239 = vld [vmem:[#allocation8 + $0x288] sm:$0xff]
    %v1240 = vld [vmem:[#allocation8 + $0x290] sm:$0xff]
    %v1241 = vld [vmem:[#allocation8 + $0x298] sm:$0xff]
    %v1242 = vld [vmem:[#allocation8 + $0x2a0] sm:$0xff]
    %v1243 = vld [vmem:[#allocation8 + $0x2a8] sm:$0xff]
    %v1244 = vld [vmem:[#allocation8 + $0x2b0] sm:$0xff]
    %v1245 = vld [vmem:[#allocation8 + $0x2b8] sm:$0xff]
    %v1246 = vld [vmem:[#allocation8 + $0x2c0] sm:$0xff]
    %v1247 = vld [vmem:[#allocation8 + $0x2c8] sm:$0xff]
    %v1248 = vld [vmem:[#allocation8 + $0x2d0] sm:$0xff]
    %v1249 = vld [vmem:[#allocation8 + $0x2d8] sm:$0xff]
    %v1250 = vld [vmem:[#allocation8 + $0x2e0] sm:$0xff]
    %v1251 = vld [vmem:[#allocation8 + $0x2e8] sm:$0xff]
    %v1252 = vld [vmem:[#allocation8 + $0x2f0] sm:$0xff]
    %v1253 = vld [vmem:[#allocation8 + $0x2f8] sm:$0xff]
    %v1254 = vld [vmem:[#allocation8 + $0x300] sm:$0xff]
    %v1255 = vld [vmem:[#allocation8 + $0x308] sm:$0xff]
    %v1256 = vld [vmem:[#allocation8 + $0x310] sm:$0xff]
    %v1257 = vld [vmem:[#allocation8 + $0x318] sm:$0xff]
    %v1258 = vld [vmem:[#allocation8 + $0x320] sm:$0xff]
    %v1259 = vld [vmem:[#allocation8 + $0x328] sm:$0xff]
    %v1260 = vld [vmem:[#allocation8 + $0x330] sm:$0xff]
    %v1261 = vld [vmem:[#allocation8 + $0x338] sm:$0xff]
    %v1262 = vld [vmem:[#allocation8 + $0x340] sm:$0xff]
    %v1263 = vld [vmem:[#allocation8 + $0x348] sm:$0xff]
    %v1264 = vld [vmem:[#allocation8 + $0x350] sm:$0xff]
    %v1265 = vld [vmem:[#allocation8 + $0x358] sm:$0xff]
    %v1266 = vld [vmem:[#allocation8 + $0x360] sm:$0xff]
    %v1267 = vld [vmem:[#allocation8 + $0x368] sm:$0xff]
    %v1268 = vld [vmem:[#allocation8 + $0x370] sm:$0xff]
    %v1269 = vld [vmem:[#allocation8 + $0x378] sm:$0xff]
    %v1270 = vld [vmem:[#allocation8 + $0x380] sm:$0xff]
    %v1271 = vld [vmem:[#allocation8 + $0x388] sm:$0xff]
    %v1272 = vld [vmem:[#allocation8 + $0x390] sm:$0xff]
    %v1273 = vld [vmem:[#allocation8 + $0x398] sm:$0xff]
    %v1274 = vld [vmem:[#allocation8 + $0x3a0] sm:$0xff]
    %v1275 = vld [vmem:[#allocation8 + $0x3a8] sm:$0xff]
    %v1276 = vld [vmem:[#allocation8 + $0x3b0] sm:$0xff]
    %v1277 = vld [vmem:[#allocation8 + $0x3b8] sm:$0xff]
    %v1278 = vld [vmem:[#allocation8 + $0x3c0] sm:$0xff]
    %v1279 = vld [vmem:[#allocation8 + $0x3c8] sm:$0xff]
    %v1280 = vld [vmem:[#allocation8 + $0x3d0] sm:$0xff]
    %v1281 = vld [vmem:[#allocation8 + $0x3d8] sm:$0xff]
    %v1282 = vld [vmem:[#allocation8 + $0x3e0] sm:$0xff]
    %v1283 = vld [vmem:[#allocation8 + $0x3e8] sm:$0xff]
    %v1284 = vld [vmem:[#allocation8 + $0x3f0] sm:$0xff]
    %v1285 = vld [vmem:[#allocation8 + $0x3f8] sm:$0xff]
    %v1286 = vld [vmem:[#allocation8 + $0x400] sm:$0xff]
    %v1287 = vld [vmem:[#allocation8 + $0x408] sm:$0xff]
    %v1288 = vld [vmem:[#allocation8 + $0x410] sm:$0xff]
    %v1289 = vld [vmem:[#allocation8 + $0x418] sm:$0xff]
    %v1290 = vld [vmem:[#allocation8 + $0x420] sm:$0xff]
    %v1291 = vld [vmem:[#allocation8 + $0x428] sm:$0xff]
    %v1292 = vld [vmem:[#allocation8 + $0x430] sm:$0xff]
    %v1293 = vld [vmem:[#allocation8 + $0x438] sm:$0xff]
    %v1294 = vld [vmem:[#allocation8 + $0x440] sm:$0xff]
    %v1295 = vld [vmem:[#allocation8 + $0x448] sm:$0xff]
    %v1296 = vld [vmem:[#allocation8 + $0x450] sm:$0xff]
    %v1297 = vld [vmem:[#allocation8 + $0x458] sm:$0xff]
    %v1298 = vld [vmem:[#allocation8 + $0x460] sm:$0xff]
    %v1299 = vld [vmem:[#allocation8 + $0x468] sm:$0xff]
    %v1300 = vld [vmem:[#allocation8 + $0x470] sm:$0xff]
    %v1301 = vld [vmem:[#allocation8 + $0x478] sm:$0xff]
    %v1302 = vld [vmem:[#allocation8 + $0x480] sm:$0xff]
    %v1303 = vld [vmem:[#allocation8 + $0x488] sm:$0xff]
    %v1304 = vld [vmem:[#allocation8 + $0x490] sm:$0xff]
    %v1305 = vld [vmem:[#allocation8 + $0x498] sm:$0xff]
    %v1306 = vld [vmem:[#allocation8 + $0x4a0] sm:$0xff]
    %v1307 = vld [vmem:[#allocation8 + $0x4a8] sm:$0xff]
    %v1308 = vld [vmem:[#allocation8 + $0x4b0] sm:$0xff]
    %v1309 = vld [vmem:[#allocation8 + $0x4b8] sm:$0xff]
    %v1310 = vld [vmem:[#allocation8 + $0x4c0] sm:$0xff]
    %v1311 = vld [vmem:[#allocation8 + $0x4c8] sm:$0xff]
    %v1312 = vld [vmem:[#allocation8 + $0x4d0] sm:$0xff]
    %v1313 = vld [vmem:[#allocation8 + $0x4d8] sm:$0xff]
    %v1314 = vld [vmem:[#allocation8 + $0x4e0] sm:$0xff]
    %v1315 = vld [vmem:[#allocation8 + $0x4e8] sm:$0xff]
    %v1316 = vld [vmem:[#allocation8 + $0x4f0] sm:$0xff]
    %v1317 = vld [vmem:[#allocation8 + $0x4f8] sm:$0xff]
    %v1318 = vld [vmem:[#allocation8 + $0x500] sm:$0xff]
    %v1319 = vld [vmem:[#allocation8 + $0x508] sm:$0xff]
    %v1320 = vld [vmem:[#allocation8 + $0x510] sm:$0xff]
    %v1321 = vld [vmem:[#allocation8 + $0x518] sm:$0xff]
    %v1322 = vld [vmem:[#allocation8 + $0x520] sm:$0xff]
    %v1323 = vld [vmem:[#allocation8 + $0x528] sm:$0xff]
    %v1324 = vld [vmem:[#allocation8 + $0x530] sm:$0xff]
    %v1325 = vld [vmem:[#allocation8 + $0x538] sm:$0xff]
    %v1326 = vld [vmem:[#allocation8 + $0x540] sm:$0xff]
    %v1327 = vld [vmem:[#allocation8 + $0x548] sm:$0xff]
    %v1328 = vld [vmem:[#allocation8 + $0x550] sm:$0xff]
    %v1329 = vld [vmem:[#allocation8 + $0x558] sm:$0xff]
    %v1330 = vld [vmem:[#allocation8 + $0x560] sm:$0xff]
    %v1331 = vld [vmem:[#allocation8 + $0x568] sm:$0xff]
    %v1332 = vld [vmem:[#allocation8 + $0x570] sm:$0xff]
    %v1333 = vld [vmem:[#allocation8 + $0x578] sm:$0xff]
    %v1334 = vld [vmem:[#allocation8 + $0x580] sm:$0xff]
    %v1335 = vld [vmem:[#allocation8 + $0x588] sm:$0xff]
    %v1336 = vld [vmem:[#allocation8 + $0x590] sm:$0xff]
    %v1337 = vld [vmem:[#allocation8 + $0x598] sm:$0xff]
    %v1338 = vld [vmem:[#allocation8 + $0x5a0] sm:$0xff]
    %v1339 = vld [vmem:[#allocation8 + $0x5a8] sm:$0xff]
    %v1340 = vld [vmem:[#allocation8 + $0x5b0] sm:$0xff]
    %v1341 = vld [vmem:[#allocation8 + $0x5b8] sm:$0xff]
    %v1342 = vld [vmem:[#allocation8 + $0x5c0] sm:$0xff]
    %v1343 = vld [vmem:[#allocation8 + $0x5c8] sm:$0xff]
    %v1344 = vld [vmem:[#allocation8 + $0x5d0] sm:$0xff]
    %v1345 = vld [vmem:[#allocation8 + $0x5d8] sm:$0xff]
    %v1346 = vld [vmem:[#allocation8 + $0x5e0] sm:$0xff]
    %v1347 = vld [vmem:[#allocation8 + $0x5e8] sm:$0xff]
    %v1348 = vld [vmem:[#allocation8 + $0x5f0] sm:$0xff]
    %v1349 = vld [vmem:[#allocation8 + $0x5f8] sm:$0xff]
    %v1350 = vld [vmem:[#allocation8 + $0x600] sm:$0xff]
    %v1351 = vld [vmem:[#allocation8 + $0x608] sm:$0xff]
    %v1352 = vld [vmem:[#allocation8 + $0x610] sm:$0xff]
    %v1353 = vld [vmem:[#allocation8 + $0x618] sm:$0xff]
    %v1354 = vld [vmem:[#allocation8 + $0x620] sm:$0xff]
    %v1355 = vld [vmem:[#allocation8 + $0x628] sm:$0xff]
    %v1356 = vld [vmem:[#allocation8 + $0x630] sm:$0xff]
    %v1357 = vld [vmem:[#allocation8 + $0x638] sm:$0xff]
    %v1358 = vld [vmem:[#allocation8 + $0x640] sm:$0xff]
    %v1359 = vld [vmem:[#allocation8 + $0x648] sm:$0xff]
    %v1360 = vld [vmem:[#allocation8 + $0x650] sm:$0xff]
    %v1361 = vld [vmem:[#allocation8 + $0x658] sm:$0xff]
    %v1362 = vld [vmem:[#allocation8 + $0x660] sm:$0xff]
    %v1363 = vld [vmem:[#allocation8 + $0x668] sm:$0xff]
    %v1364 = vld [vmem:[#allocation8 + $0x670] sm:$0xff]
    %v1365 = vld [vmem:[#allocation8 + $0x678] sm:$0xff]
    %v1366 = vld [vmem:[#allocation8 + $0x680] sm:$0xff]
    %v1367 = vld [vmem:[#allocation8 + $0x688] sm:$0xff]
    %v1368 = vld [vmem:[#allocation8 + $0x690] sm:$0xff]
    %v1369 = vld [vmem:[#allocation8 + $0x698] sm:$0xff]
    %v1370 = vld [vmem:[#allocation8 + $0x6a0] sm:$0xff]
    %v1371 = vld [vmem:[#allocation8 + $0x6a8] sm:$0xff]
    %v1372 = vld [vmem:[#allocation8 + $0x6b0] sm:$0xff]
    %v1373 = vld [vmem:[#allocation8 + $0x6b8] sm:$0xff]
    %v1374 = vld [vmem:[#allocation8 + $0x6c0] sm:$0xff]
    %v1375 = vld [vmem:[#allocation8 + $0x6c8] sm:$0xff]
    %v1376 = vld [vmem:[#allocation8 + $0x6d0] sm:$0xff]
    %v1377 = vld [vmem:[#allocation8 + $0x6d8] sm:$0xff]
    %v1378 = vld [vmem:[#allocation8 + $0x6e0] sm:$0xff]
    %v1379 = vld [vmem:[#allocation8 + $0x6e8] sm:$0xff]
    %v1380 = vld [vmem:[#allocation8 + $0x6f0] sm:$0xff]
    %v1381 = vld [vmem:[#allocation8 + $0x6f8] sm:$0xff]
    %v1382 = vld [vmem:[#allocation8 + $0x700] sm:$0xff]
    %v1383 = vld [vmem:[#allocation8 + $0x708] sm:$0xff]
    %v1384 = vld [vmem:[#allocation8 + $0x710] sm:$0xff]
    %v1385 = vld [vmem:[#allocation8 + $0x718] sm:$0xff]
    %v1386 = vld [vmem:[#allocation8 + $0x720] sm:$0xff]
    %v1387 = vld [vmem:[#allocation8 + $0x728] sm:$0xff]
    %v1388 = vld [vmem:[#allocation8 + $0x730] sm:$0xff]
    %v1389 = vld [vmem:[#allocation8 + $0x738] sm:$0xff]
    %v1390 = vld [vmem:[#allocation8 + $0x740] sm:$0xff]
    %v1391 = vld [vmem:[#allocation8 + $0x748] sm:$0xff]
    %v1392 = vld [vmem:[#allocation8 + $0x750] sm:$0xff]
    %v1393 = vld [vmem:[#allocation8 + $0x758] sm:$0xff]
    %v1394 = vld [vmem:[#allocation8 + $0x760] sm:$0xff]
    %v1395 = vld [vmem:[#allocation8 + $0x768] sm:$0xff]
    %v1396 = vld [vmem:[#allocation8 + $0x770] sm:$0xff]
    %v1397 = vld [vmem:[#allocation8 + $0x778] sm:$0xff]
    %v1398 = vld [vmem:[#allocation8 + $0x780] sm:$0xff]
    %v1399 = vld [vmem:[#allocation8 + $0x788] sm:$0xff]
    %v1400 = vld [vmem:[#allocation8 + $0x790] sm:$0xff]
    %v1401 = vld [vmem:[#allocation8 + $0x798] sm:$0xff]
    %v1402 = vld [vmem:[#allocation8 + $0x7a0] sm:$0xff]
    %v1403 = vld [vmem:[#allocation8 + $0x7a8] sm:$0xff]
    %v1404 = vld [vmem:[#allocation8 + $0x7b0] sm:$0xff]
    %v1405 = vld [vmem:[#allocation8 + $0x7b8] sm:$0xff]
    %v1406 = vld [vmem:[#allocation8 + $0x7c0] sm:$0xff]
    %v1407 = vld [vmem:[#allocation8 + $0x7c8] sm:$0xff]
    %v1408 = vld [vmem:[#allocation8 + $0x7d0] sm:$0xff]
    %v1409 = vld [vmem:[#allocation8 + $0x7d8] sm:$0xff]
    %v1410 = vld [vmem:[#allocation8 + $0x7e0] sm:$0xff]
    %v1411 = vld [vmem:[#allocation8 + $0x7e8] sm:$0xff]
    %v1412 = vld [vmem:[#allocation8 + $0x7f0] sm:$0xff]
    %v1413 = vld [vmem:[#allocation8 + $0x7f8] sm:$0xff]
    %v1414 = vld [vmem:[#allocation8 + $0x800] sm:$0xff]
    %v1415 = vld [vmem:[#allocation8 + $0x808] sm:$0xff]
    %v1416 = vld [vmem:[#allocation8 + $0x810] sm:$0xff]
    %v1417 = vld [vmem:[#allocation8 + $0x818] sm:$0xff]
    %v1418 = vld [vmem:[#allocation8 + $0x820] sm:$0xff]
    %v1419 = vld [vmem:[#allocation8 + $0x828] sm:$0xff]
    %v1420 = vld [vmem:[#allocation8 + $0x830] sm:$0xff]
    %v1421 = vld [vmem:[#allocation8 + $0x838] sm:$0xff]
    %v1422 = vld [vmem:[#allocation8 + $0x840] sm:$0xff]
    %v1423 = vld [vmem:[#allocation8 + $0x848] sm:$0xff]
    %v1424 = vld [vmem:[#allocation8 + $0x850] sm:$0xff]
    %v1425 = vld [vmem:[#allocation8 + $0x858] sm:$0xff]
    %v1426 = vld [vmem:[#allocation8 + $0x860] sm:$0xff]
    %v1427 = vld [vmem:[#allocation8 + $0x868] sm:$0xff]
    %v1428 = vld [vmem:[#allocation8 + $0x870] sm:$0xff]
    %v1429 = vld [vmem:[#allocation8 + $0x878] sm:$0xff]
    %v1430 = vld [vmem:[#allocation8 + $0x880] sm:$0xff]
    %v1431 = vld [vmem:[#allocation8 + $0x888] sm:$0xff]
    %v1432 = vld [vmem:[#allocation8 + $0x890] sm:$0xff]
    %v1433 = vld [vmem:[#allocation8 + $0x898] sm:$0xff]
    %v1434 = vld [vmem:[#allocation8 + $0x8a0] sm:$0xff]
    %v1435 = vld [vmem:[#allocation8 + $0x8a8] sm:$0xff]
    %v1436 = vld [vmem:[#allocation8 + $0x8b0] sm:$0xff]
    %v1437 = vld [vmem:[#allocation8 + $0x8b8] sm:$0xff]
    %v1438 = vld [vmem:[#allocation8 + $0x8c0] sm:$0xff]
    %v1439 = vld [vmem:[#allocation8 + $0x8c8] sm:$0xff]
    %v1440 = vld [vmem:[#allocation8 + $0x8d0] sm:$0xff]
    %v1441 = vld [vmem:[#allocation8 + $0x8d8] sm:$0xff]
    %v1442 = vld [vmem:[#allocation8 + $0x8e0] sm:$0xff]
    %v1443 = vld [vmem:[#allocation8 + $0x8e8] sm:$0xff]
    %v1444 = vld [vmem:[#allocation8 + $0x8f0] sm:$0xff]
    %v1445 = vld [vmem:[#allocation8 + $0x8f8] sm:$0xff]
    %v1446 = vld [vmem:[#allocation10] sm:$0xff]
    %v1447 = vld [vmem:[#allocation10 + $0x8] sm:$0xf]
    %v1450 = vlaneseq
    %v1451 = vshrl.u32 %v1450, 7
    %v1452 = vsub.s32 0, %v1451
    %v1453 = vrot.slane %v1446, %v1452
    %v1454 = vlaneseq
    %v1455 = vshrl.u32 %v1454, 7
    %v1456 = vsub.s32 1, %v1455
    %v1457 = vrot.slane %v1446, %v1456
    %v1458 = vlaneseq
    %v1459 = vshrl.u32 %v1458, 7
    %v1460 = vsub.s32 2, %v1459
    %v1461 = vrot.slane %v1446, %v1460
    %v1462 = vlaneseq
    %v1463 = vshrl.u32 %v1462, 7
    %v1464 = vsub.s32 3, %v1463
    %v1465 = vrot.slane %v1446, %v1464
    %v1466 = vlaneseq
    %v1467 = vshrl.u32 %v1466, 7
    %v1468 = vsub.s32 4, %v1467
    %v1469 = vrot.slane %v1446, %v1468
    %v1470 = vlaneseq
    %v1471 = vshrl.u32 %v1470, 7
    %v1472 = vsub.s32 5, %v1471
    %v1473 = vrot.slane %v1446, %v1472
    %v1474 = vlaneseq
    %v1475 = vshrl.u32 %v1474, 7
    %v1476 = vsub.s32 6, %v1475
    %v1477 = vrot.slane %v1446, %v1476
    %v1478 = vlaneseq
    %v1479 = vshrl.u32 %v1478, 7
    %v1480 = vsub.s32 7, %v1479
    %v1481 = vrot.slane %v1446, %v1480
    %v1482 = vlaneseq
    %v1483 = vshrl.u32 %v1482, 7
    %v1484 = vsub.s32 0, %v1483
    %v1485 = vrot.slane %v1447, %v1484
    %v1486 = vlaneseq
    %v1487 = vshrl.u32 %v1486, 7
    %v1488 = vsub.s32 1, %v1487
    %v1489 = vrot.slane %v1447, %v1488
    %v1490 = vlaneseq
    %v1491 = vshrl.u32 %v1490, 7
    %v1492 = vsub.s32 2, %v1491
    %v1493 = vrot.slane %v1447, %v1492
    %v1494 = vlaneseq
    %v1495 = vshrl.u32 %v1494, 7
    %v1496 = vsub.s32 3, %v1495
    %v1497 = vrot.slane %v1447, %v1496
    %v1798 = vunpack.c.l.b16 %v1158
    %v1799 = vunpack.c.h.b16 %v1158
    %v1800 = vunpack.c.l.b16 %v1159
    %v1801 = vunpack.c.h.b16 %v1159
    %v1802 = vunpack.c.l.b16 %v1160
    %v1803 = vunpack.c.h.b16 %v1160
    %v1804 = vunpack.c.l.b16 %v1161
    %v1805 = vunpack.c.h.b16 %v1161
    %v1806 = vunpack.c.l.b16 %v1162
    %v1807 = vunpack.c.h.b16 %v1162
    %v1808 = vunpack.c.l.b16 %v1163
    %v1809 = vunpack.c.h.b16 %v1163
    %v1810 = vunpack.c.l.b16 %v1164
    %v1811 = vunpack.c.h.b16 %v1164
    %v1812 = vunpack.c.l.b16 %v1165
    %v1813 = vunpack.c.h.b16 %v1165
    %v1814 = vunpack.c.l.b16 %v1166
    %v1815 = vunpack.c.h.b16 %v1166
    %v1816 = vunpack.c.l.b16 %v1167
    %v1817 = vunpack.c.h.b16 %v1167
    %v1818 = vunpack.c.l.b16 %v1168
    %v1819 = vunpack.c.h.b16 %v1168
    %v1820 = vunpack.c.l.b16 %v1169
    %v1821 = vunpack.c.h.b16 %v1169
    %v1822 = vunpack.c.l.b16 %v1170
    %v1823 = vunpack.c.h.b16 %v1170
    %v1824 = vunpack.c.l.b16 %v1171
    %v1825 = vunpack.c.h.b16 %v1171
    %v1826 = vunpack.c.l.b16 %v1172
    %v1827 = vunpack.c.h.b16 %v1172
    %v1828 = vunpack.c.l.b16 %v1173
    %v1829 = vunpack.c.h.b16 %v1173
    %v1830 = vunpack.c.l.b16 %v1174
    %v1831 = vunpack.c.h.b16 %v1174
    %v1832 = vunpack.c.l.b16 %v1175
    %v1833 = vunpack.c.h.b16 %v1175
    %v1834 = vunpack.c.l.b16 %v1176
    %v1835 = vunpack.c.h.b16 %v1176
    %v1836 = vunpack.c.l.b16 %v1177
    %v1837 = vunpack.c.h.b16 %v1177
    %v1838 = vunpack.c.l.b16 %v1178
    %v1839 = vunpack.c.h.b16 %v1178
    %v1840 = vunpack.c.l.b16 %v1179
    %v1841 = vunpack.c.h.b16 %v1179
    %v1842 = vunpack.c.l.b16 %v1180
    %v1843 = vunpack.c.h.b16 %v1180
    %v1844 = vunpack.c.l.b16 %v1181
    %v1845 = vunpack.c.h.b16 %v1181
    %v1846 = vunpack.c.l.b16 %v1182
    %v1847 = vunpack.c.h.b16 %v1182
    %v1848 = vunpack.c.l.b16 %v1183
    %v1849 = vunpack.c.h.b16 %v1183
    %v1850 = vunpack.c.l.b16 %v1184
    %v1851 = vunpack.c.h.b16 %v1184
    %v1852 = vunpack.c.l.b16 %v1185
    %v1853 = vunpack.c.h.b16 %v1185
    %v1854 = vunpack.c.l.b16 %v1186
    %v1855 = vunpack.c.h.b16 %v1186
    %v1856 = vunpack.c.l.b16 %v1187
    %v1857 = vunpack.c.h.b16 %v1187
    %v1858 = vunpack.c.l.b16 %v1188
    %v1859 = vunpack.c.h.b16 %v1188
    %v1860 = vunpack.c.l.b16 %v1189
    %v1861 = vunpack.c.h.b16 %v1189
    %v1862 = vunpack.c.l.b16 %v1190
    %v1863 = vunpack.c.h.b16 %v1190
    %v1864 = vunpack.c.l.b16 %v1191
    %v1865 = vunpack.c.h.b16 %v1191
    %v1866 = vunpack.c.l.b16 %v1192
    %v1867 = vunpack.c.h.b16 %v1192
    %v1868 = vunpack.c.l.b16 %v1193
    %v1869 = vunpack.c.h.b16 %v1193
    %v1870 = vunpack.c.l.b16 %v1194
    %v1871 = vunpack.c.h.b16 %v1194
    %v1872 = vunpack.c.l.b16 %v1195
    %v1873 = vunpack.c.h.b16 %v1195
    %v1874 = vunpack.c.l.b16 %v1196
    %v1875 = vunpack.c.h.b16 %v1196
    %v1876 = vunpack.c.l.b16 %v1197
    %v1877 = vunpack.c.h.b16 %v1197
    %v1878 = vunpack.c.l.b16 %v1198
    %v1879 = vunpack.c.h.b16 %v1198
    %v1880 = vunpack.c.l.b16 %v1199
    %v1881 = vunpack.c.h.b16 %v1199
    %v1882 = vunpack.c.l.b16 %v1200
    %v1883 = vunpack.c.h.b16 %v1200
    %v1884 = vunpack.c.l.b16 %v1201
    %v1885 = vunpack.c.h.b16 %v1201
    %v1886 = vunpack.c.l.b16 %v1202
    %v1887 = vunpack.c.h.b16 %v1202
    %v1888 = vunpack.c.l.b16 %v1203
    %v1889 = vunpack.c.h.b16 %v1203
    %v1890 = vunpack.c.l.b16 %v1204
    %v1891 = vunpack.c.h.b16 %v1204
    %v1892 = vunpack.c.l.b16 %v1205
    %v1893 = vunpack.c.h.b16 %v1205
    %v1894 = vunpack.c.l.b16 %v1206
    %v1895 = vunpack.c.h.b16 %v1206
    %v1896 = vunpack.c.l.b16 %v1207
    %v1897 = vunpack.c.h.b16 %v1207
    %v1898 = vunpack.c.l.b16 %v1208
    %v1899 = vunpack.c.h.b16 %v1208
    %v1900 = vunpack.c.l.b16 %v1209
    %v1901 = vunpack.c.h.b16 %v1209
    %v1902 = vunpack.c.l.b16 %v1210
    %v1903 = vunpack.c.h.b16 %v1210
    %v1904 = vunpack.c.l.b16 %v1211
    %v1905 = vunpack.c.h.b16 %v1211
    %v1906 = vunpack.c.l.b16 %v1212
    %v1907 = vunpack.c.h.b16 %v1212
    %v1908 = vunpack.c.l.b16 %v1213
    %v1909 = vunpack.c.h.b16 %v1213
    %v1910 = vunpack.c.l.b16 %v1214
    %v1911 = vunpack.c.h.b16 %v1214
    %v1912 = vunpack.c.l.b16 %v1215
    %v1913 = vunpack.c.h.b16 %v1215
    %v1914 = vunpack.c.l.b16 %v1216
    %v1915 = vunpack.c.h.b16 %v1216
    %v1916 = vunpack.c.l.b16 %v1217
    %v1917 = vunpack.c.h.b16 %v1217
    %v1918 = vunpack.c.l.b16 %v1218
    %v1919 = vunpack.c.h.b16 %v1218
    %v1920 = vunpack.c.l.b16 %v1219
    %v1921 = vunpack.c.h.b16 %v1219
    %v1922 = vunpack.c.l.b16 %v1220
    %v1923 = vunpack.c.h.b16 %v1220
    %v1924 = vunpack.c.l.b16 %v1221
    %v1925 = vunpack.c.h.b16 %v1221
    %v1926 = vunpack.c.l.b16 %v1222
    %v1927 = vunpack.c.h.b16 %v1222
    %v1928 = vunpack.c.l.b16 %v1223
    %v1929 = vunpack.c.h.b16 %v1223
    %v1930 = vunpack.c.l.b16 %v1224
    %v1931 = vunpack.c.h.b16 %v1224
    %v1932 = vunpack.c.l.b16 %v1225
    %v1933 = vunpack.c.h.b16 %v1225
    %v1934 = vunpack.c.l.b16 %v1226
    %v1935 = vunpack.c.h.b16 %v1226
    %v1936 = vunpack.c.l.b16 %v1227
    %v1937 = vunpack.c.h.b16 %v1227
    %v1938 = vunpack.c.l.b16 %v1228
    %v1939 = vunpack.c.h.b16 %v1228
    %v1940 = vunpack.c.l.b16 %v1229
    %v1941 = vunpack.c.h.b16 %v1229
    %v1942 = vunpack.c.l.b16 %v1230
    %v1943 = vunpack.c.h.b16 %v1230
    %v1944 = vunpack.c.l.b16 %v1231
    %v1945 = vunpack.c.h.b16 %v1231
    %v1946 = vunpack.c.l.b16 %v1232
    %v1947 = vunpack.c.h.b16 %v1232
    %v1948 = vunpack.c.l.b16 %v1233
    %v1949 = vunpack.c.h.b16 %v1233
    %v1950 = vunpack.c.l.b16 %v1234
    %v1951 = vunpack.c.h.b16 %v1234
    %v1952 = vunpack.c.l.b16 %v1235
    %v1953 = vunpack.c.h.b16 %v1235
    %v1954 = vunpack.c.l.b16 %v1236
    %v1955 = vunpack.c.h.b16 %v1236
    %v1956 = vunpack.c.l.b16 %v1237
    %v1957 = vunpack.c.h.b16 %v1237
    %v1958 = vunpack.c.l.b16 %v1238
    %v1959 = vunpack.c.h.b16 %v1238
    %v1960 = vunpack.c.l.b16 %v1239
    %v1961 = vunpack.c.h.b16 %v1239
    %v1962 = vunpack.c.l.b16 %v1240
    %v1963 = vunpack.c.h.b16 %v1240
    %v1964 = vunpack.c.l.b16 %v1241
    %v1965 = vunpack.c.h.b16 %v1241
    %v1966 = vunpack.c.l.b16 %v1242
    %v1967 = vunpack.c.h.b16 %v1242
    %v1968 = vunpack.c.l.b16 %v1243
    %v1969 = vunpack.c.h.b16 %v1243
    %v1970 = vunpack.c.l.b16 %v1244
    %v1971 = vunpack.c.h.b16 %v1244
    %v1972 = vunpack.c.l.b16 %v1245
    %v1973 = vunpack.c.h.b16 %v1245
    %v1974 = vunpack.c.l.b16 %v1246
    %v1975 = vunpack.c.h.b16 %v1246
    %v1976 = vunpack.c.l.b16 %v1247
    %v1977 = vunpack.c.h.b16 %v1247
    %v1978 = vunpack.c.l.b16 %v1248
    %v1979 = vunpack.c.h.b16 %v1248
    %v1980 = vunpack.c.l.b16 %v1249
    %v1981 = vunpack.c.h.b16 %v1249
    %v1982 = vunpack.c.l.b16 %v1250
    %v1983 = vunpack.c.h.b16 %v1250
    %v1984 = vunpack.c.l.b16 %v1251
    %v1985 = vunpack.c.h.b16 %v1251
    %v1986 = vunpack.c.l.b16 %v1252
    %v1987 = vunpack.c.h.b16 %v1252
    %v1988 = vunpack.c.l.b16 %v1253
    %v1989 = vunpack.c.h.b16 %v1253
    %v1990 = vunpack.c.l.b16 %v1254
    %v1991 = vunpack.c.h.b16 %v1254
    %v1992 = vunpack.c.l.b16 %v1255
    %v1993 = vunpack.c.h.b16 %v1255
    %v1994 = vunpack.c.l.b16 %v1256
    %v1995 = vunpack.c.h.b16 %v1256
    %v1996 = vunpack.c.l.b16 %v1257
    %v1997 = vunpack.c.h.b16 %v1257
    %v1998 = vunpack.c.l.b16 %v1258
    %v1999 = vunpack.c.h.b16 %v1258
    %v2000 = vunpack.c.l.b16 %v1259
    %v2001 = vunpack.c.h.b16 %v1259
    %v2002 = vunpack.c.l.b16 %v1260
    %v2003 = vunpack.c.h.b16 %v1260
    %v2004 = vunpack.c.l.b16 %v1261
    %v2005 = vunpack.c.h.b16 %v1261
    %v2006 = vunpack.c.l.b16 %v1262
    %v2007 = vunpack.c.h.b16 %v1262
    %v2008 = vunpack.c.l.b16 %v1263
    %v2009 = vunpack.c.h.b16 %v1263
    %v2010 = vunpack.c.l.b16 %v1264
    %v2011 = vunpack.c.h.b16 %v1264
    %v2012 = vunpack.c.l.b16 %v1265
    %v2013 = vunpack.c.h.b16 %v1265
    %v2014 = vunpack.c.l.b16 %v1266
    %v2015 = vunpack.c.h.b16 %v1266
    %v2016 = vunpack.c.l.b16 %v1267
    %v2017 = vunpack.c.h.b16 %v1267
    %v2018 = vunpack.c.l.b16 %v1268
    %v2019 = vunpack.c.h.b16 %v1268
    %v2020 = vunpack.c.l.b16 %v1269
    %v2021 = vunpack.c.h.b16 %v1269
    %v2022 = vunpack.c.l.b16 %v1270
    %v2023 = vunpack.c.h.b16 %v1270
    %v2024 = vunpack.c.l.b16 %v1271
    %v2025 = vunpack.c.h.b16 %v1271
    %v2026 = vunpack.c.l.b16 %v1272
    %v2027 = vunpack.c.h.b16 %v1272
    %v2028 = vunpack.c.l.b16 %v1273
    %v2029 = vunpack.c.h.b16 %v1273
    %v2030 = vunpack.c.l.b16 %v1274
    %v2031 = vunpack.c.h.b16 %v1274
    %v2032 = vunpack.c.l.b16 %v1275
    %v2033 = vunpack.c.h.b16 %v1275
    %v2034 = vunpack.c.l.b16 %v1276
    %v2035 = vunpack.c.h.b16 %v1276
    %v2036 = vunpack.c.l.b16 %v1277
    %v2037 = vunpack.c.h.b16 %v1277
    %v2038 = vunpack.c.l.b16 %v1278
    %v2039 = vunpack.c.h.b16 %v1278
    %v2040 = vunpack.c.l.b16 %v1279
    %v2041 = vunpack.c.h.b16 %v1279
    %v2042 = vunpack.c.l.b16 %v1280
    %v2043 = vunpack.c.h.b16 %v1280
    %v2044 = vunpack.c.l.b16 %v1281
    %v2045 = vunpack.c.h.b16 %v1281
    %v2046 = vunpack.c.l.b16 %v1282
    %v2047 = vunpack.c.h.b16 %v1282
    %v2048 = vunpack.c.l.b16 %v1283
    %v2049 = vunpack.c.h.b16 %v1283
    %v2050 = vunpack.c.l.b16 %v1284
    %v2051 = vunpack.c.h.b16 %v1284
    %v2052 = vunpack.c.l.b16 %v1285
    %v2053 = vunpack.c.h.b16 %v1285
    %v2054 = vunpack.c.l.b16 %v1286
    %v2055 = vunpack.c.h.b16 %v1286
    %v2056 = vunpack.c.l.b16 %v1287
    %v2057 = vunpack.c.h.b16 %v1287
    %v2058 = vunpack.c.l.b16 %v1288
    %v2059 = vunpack.c.h.b16 %v1288
    %v2060 = vunpack.c.l.b16 %v1289
    %v2061 = vunpack.c.h.b16 %v1289
    %v2062 = vunpack.c.l.b16 %v1290
    %v2063 = vunpack.c.h.b16 %v1290
    %v2064 = vunpack.c.l.b16 %v1291
    %v2065 = vunpack.c.h.b16 %v1291
    %v2066 = vunpack.c.l.b16 %v1292
    %v2067 = vunpack.c.h.b16 %v1292
    %v2068 = vunpack.c.l.b16 %v1293
    %v2069 = vunpack.c.h.b16 %v1293
    %v2070 = vunpack.c.l.b16 %v1294
    %v2071 = vunpack.c.h.b16 %v1294
    %v2072 = vunpack.c.l.b16 %v1295
    %v2073 = vunpack.c.h.b16 %v1295
    %v2074 = vunpack.c.l.b16 %v1296
    %v2075 = vunpack.c.h.b16 %v1296
    %v2076 = vunpack.c.l.b16 %v1297
    %v2077 = vunpack.c.h.b16 %v1297
    %v2078 = vunpack.c.l.b16 %v1298
    %v2079 = vunpack.c.h.b16 %v1298
    %v2080 = vunpack.c.l.b16 %v1299
    %v2081 = vunpack.c.h.b16 %v1299
    %v2082 = vunpack.c.l.b16 %v1300
    %v2083 = vunpack.c.h.b16 %v1300
    %v2084 = vunpack.c.l.b16 %v1301
    %v2085 = vunpack.c.h.b16 %v1301
    %v2086 = vunpack.c.l.b16 %v1302
    %v2087 = vunpack.c.h.b16 %v1302
    %v2088 = vunpack.c.l.b16 %v1303
    %v2089 = vunpack.c.h.b16 %v1303
    %v2090 = vunpack.c.l.b16 %v1304
    %v2091 = vunpack.c.h.b16 %v1304
    %v2092 = vunpack.c.l.b16 %v1305
    %v2093 = vunpack.c.h.b16 %v1305
    %v2094 = vunpack.c.l.b16 %v1306
    %v2095 = vunpack.c.h.b16 %v1306
    %v2096 = vunpack.c.l.b16 %v1307
    %v2097 = vunpack.c.h.b16 %v1307
    %v2098 = vunpack.c.l.b16 %v1308
    %v2099 = vunpack.c.h.b16 %v1308
    %v2100 = vunpack.c.l.b16 %v1309
    %v2101 = vunpack.c.h.b16 %v1309
    %v2102 = vunpack.c.l.b16 %v1310
    %v2103 = vunpack.c.h.b16 %v1310
    %v2104 = vunpack.c.l.b16 %v1311
    %v2105 = vunpack.c.h.b16 %v1311
    %v2106 = vunpack.c.l.b16 %v1312
    %v2107 = vunpack.c.h.b16 %v1312
    %v2108 = vunpack.c.l.b16 %v1313
    %v2109 = vunpack.c.h.b16 %v1313
    %v2110 = vunpack.c.l.b16 %v1314
    %v2111 = vunpack.c.h.b16 %v1314
    %v2112 = vunpack.c.l.b16 %v1315
    %v2113 = vunpack.c.h.b16 %v1315
    %v2114 = vunpack.c.l.b16 %v1316
    %v2115 = vunpack.c.h.b16 %v1316
    %v2116 = vunpack.c.l.b16 %v1317
    %v2117 = vunpack.c.h.b16 %v1317
    %v2118 = vunpack.c.l.b16 %v1318
    %v2119 = vunpack.c.h.b16 %v1318
    %v2120 = vunpack.c.l.b16 %v1319
    %v2121 = vunpack.c.h.b16 %v1319
    %v2122 = vunpack.c.l.b16 %v1320
    %v2123 = vunpack.c.h.b16 %v1320
    %v2124 = vunpack.c.l.b16 %v1321
    %v2125 = vunpack.c.h.b16 %v1321
    %v2126 = vunpack.c.l.b16 %v1322
    %v2127 = vunpack.c.h.b16 %v1322
    %v2128 = vunpack.c.l.b16 %v1323
    %v2129 = vunpack.c.h.b16 %v1323
    %v2130 = vunpack.c.l.b16 %v1324
    %v2131 = vunpack.c.h.b16 %v1324
    %v2132 = vunpack.c.l.b16 %v1325
    %v2133 = vunpack.c.h.b16 %v1325
    %v2134 = vunpack.c.l.b16 %v1326
    %v2135 = vunpack.c.h.b16 %v1326
    %v2136 = vunpack.c.l.b16 %v1327
    %v2137 = vunpack.c.h.b16 %v1327
    %v2138 = vunpack.c.l.b16 %v1328
    %v2139 = vunpack.c.h.b16 %v1328
    %v2140 = vunpack.c.l.b16 %v1329
    %v2141 = vunpack.c.h.b16 %v1329
    %v2142 = vunpack.c.l.b16 %v1330
    %v2143 = vunpack.c.h.b16 %v1330
    %v2144 = vunpack.c.l.b16 %v1331
    %v2145 = vunpack.c.h.b16 %v1331
    %v2146 = vunpack.c.l.b16 %v1332
    %v2147 = vunpack.c.h.b16 %v1332
    %v2148 = vunpack.c.l.b16 %v1333
    %v2149 = vunpack.c.h.b16 %v1333
    %v2150 = vunpack.c.l.b16 %v1334
    %v2151 = vunpack.c.h.b16 %v1334
    %v2152 = vunpack.c.l.b16 %v1335
    %v2153 = vunpack.c.h.b16 %v1335
    %v2154 = vunpack.c.l.b16 %v1336
    %v2155 = vunpack.c.h.b16 %v1336
    %v2156 = vunpack.c.l.b16 %v1337
    %v2157 = vunpack.c.h.b16 %v1337
    %v2158 = vunpack.c.l.b16 %v1338
    %v2159 = vunpack.c.h.b16 %v1338
    %v2160 = vunpack.c.l.b16 %v1339
    %v2161 = vunpack.c.h.b16 %v1339
    %v2162 = vunpack.c.l.b16 %v1340
    %v2163 = vunpack.c.h.b16 %v1340
    %v2164 = vunpack.c.l.b16 %v1341
    %v2165 = vunpack.c.h.b16 %v1341
    %v2166 = vunpack.c.l.b16 %v1342
    %v2167 = vunpack.c.h.b16 %v1342
    %v2168 = vunpack.c.l.b16 %v1343
    %v2169 = vunpack.c.h.b16 %v1343
    %v2170 = vunpack.c.l.b16 %v1344
    %v2171 = vunpack.c.h.b16 %v1344
    %v2172 = vunpack.c.l.b16 %v1345
    %v2173 = vunpack.c.h.b16 %v1345
    %v2174 = vunpack.c.l.b16 %v1346
    %v2175 = vunpack.c.h.b16 %v1346
    %v2176 = vunpack.c.l.b16 %v1347
    %v2177 = vunpack.c.h.b16 %v1347
    %v2178 = vunpack.c.l.b16 %v1348
    %v2179 = vunpack.c.h.b16 %v1348
    %v2180 = vunpack.c.l.b16 %v1349
    %v2181 = vunpack.c.h.b16 %v1349
    %v2182 = vunpack.c.l.b16 %v1350
    %v2183 = vunpack.c.h.b16 %v1350
    %v2184 = vunpack.c.l.b16 %v1351
    %v2185 = vunpack.c.h.b16 %v1351
    %v2186 = vunpack.c.l.b16 %v1352
    %v2187 = vunpack.c.h.b16 %v1352
    %v2188 = vunpack.c.l.b16 %v1353
    %v2189 = vunpack.c.h.b16 %v1353
    %v2190 = vunpack.c.l.b16 %v1354
    %v2191 = vunpack.c.h.b16 %v1354
    %v2192 = vunpack.c.l.b16 %v1355
    %v2193 = vunpack.c.h.b16 %v1355
    %v2194 = vunpack.c.l.b16 %v1356
    %v2195 = vunpack.c.h.b16 %v1356
    %v2196 = vunpack.c.l.b16 %v1357
    %v2197 = vunpack.c.h.b16 %v1357
    %v2198 = vunpack.c.l.b16 %v1358
    %v2199 = vunpack.c.h.b16 %v1358
    %v2200 = vunpack.c.l.b16 %v1359
    %v2201 = vunpack.c.h.b16 %v1359
    %v2202 = vunpack.c.l.b16 %v1360
    %v2203 = vunpack.c.h.b16 %v1360
    %v2204 = vunpack.c.l.b16 %v1361
    %v2205 = vunpack.c.h.b16 %v1361
    %v2206 = vunpack.c.l.b16 %v1362
    %v2207 = vunpack.c.h.b16 %v1362
    %v2208 = vunpack.c.l.b16 %v1363
    %v2209 = vunpack.c.h.b16 %v1363
    %v2210 = vunpack.c.l.b16 %v1364
    %v2211 = vunpack.c.h.b16 %v1364
    %v2212 = vunpack.c.l.b16 %v1365
    %v2213 = vunpack.c.h.b16 %v1365
    %v2214 = vunpack.c.l.b16 %v1366
    %v2215 = vunpack.c.h.b16 %v1366
    %v2216 = vunpack.c.l.b16 %v1367
    %v2217 = vunpack.c.h.b16 %v1367
    %v2218 = vunpack.c.l.b16 %v1368
    %v2219 = vunpack.c.h.b16 %v1368
    %v2220 = vunpack.c.l.b16 %v1369
    %v2221 = vunpack.c.h.b16 %v1369
    %v2222 = vunpack.c.l.b16 %v1370
    %v2223 = vunpack.c.h.b16 %v1370
    %v2224 = vunpack.c.l.b16 %v1371
    %v2225 = vunpack.c.h.b16 %v1371
    %v2226 = vunpack.c.l.b16 %v1372
    %v2227 = vunpack.c.h.b16 %v1372
    %v2228 = vunpack.c.l.b16 %v1373
    %v2229 = vunpack.c.h.b16 %v1373
    %v2230 = vunpack.c.l.b16 %v1374
    %v2231 = vunpack.c.h.b16 %v1374
    %v2232 = vunpack.c.l.b16 %v1375
    %v2233 = vunpack.c.h.b16 %v1375
    %v2234 = vunpack.c.l.b16 %v1376
    %v2235 = vunpack.c.h.b16 %v1376
    %v2236 = vunpack.c.l.b16 %v1377
    %v2237 = vunpack.c.h.b16 %v1377
    %v2238 = vunpack.c.l.b16 %v1378
    %v2239 = vunpack.c.h.b16 %v1378
    %v2240 = vunpack.c.l.b16 %v1379
    %v2241 = vunpack.c.h.b16 %v1379
    %v2242 = vunpack.c.l.b16 %v1380
    %v2243 = vunpack.c.h.b16 %v1380
    %v2244 = vunpack.c.l.b16 %v1381
    %v2245 = vunpack.c.h.b16 %v1381
    %v2246 = vunpack.c.l.b16 %v1382
    %v2247 = vunpack.c.h.b16 %v1382
    %v2248 = vunpack.c.l.b16 %v1383
    %v2249 = vunpack.c.h.b16 %v1383
    %v2250 = vunpack.c.l.b16 %v1384
    %v2251 = vunpack.c.h.b16 %v1384
    %v2252 = vunpack.c.l.b16 %v1385
    %v2253 = vunpack.c.h.b16 %v1385
    %v2254 = vunpack.c.l.b16 %v1386
    %v2255 = vunpack.c.h.b16 %v1386
    %v2256 = vunpack.c.l.b16 %v1387
    %v2257 = vunpack.c.h.b16 %v1387
    %v2258 = vunpack.c.l.b16 %v1388
    %v2259 = vunpack.c.h.b16 %v1388
    %v2260 = vunpack.c.l.b16 %v1389
    %v2261 = vunpack.c.h.b16 %v1389
    %v2262 = vunpack.c.l.b16 %v1390
    %v2263 = vunpack.c.h.b16 %v1390
    %v2264 = vunpack.c.l.b16 %v1391
    %v2265 = vunpack.c.h.b16 %v1391
    %v2266 = vunpack.c.l.b16 %v1392
    %v2267 = vunpack.c.h.b16 %v1392
    %v2268 = vunpack.c.l.b16 %v1393
    %v2269 = vunpack.c.h.b16 %v1393
    %v2270 = vunpack.c.l.b16 %v1394
    %v2271 = vunpack.c.h.b16 %v1394
    %v2272 = vunpack.c.l.b16 %v1395
    %v2273 = vunpack.c.h.b16 %v1395
    %v2274 = vunpack.c.l.b16 %v1396
    %v2275 = vunpack.c.h.b16 %v1396
    %v2276 = vunpack.c.l.b16 %v1397
    %v2277 = vunpack.c.h.b16 %v1397
    %v2278 = vunpack.c.l.b16 %v1398
    %v2279 = vunpack.c.h.b16 %v1398
    %v2280 = vunpack.c.l.b16 %v1399
    %v2281 = vunpack.c.h.b16 %v1399
    %v2282 = vunpack.c.l.b16 %v1400
    %v2283 = vunpack.c.h.b16 %v1400
    %v2284 = vunpack.c.l.b16 %v1401
    %v2285 = vunpack.c.h.b16 %v1401
    %v2286 = vunpack.c.l.b16 %v1402
    %v2287 = vunpack.c.h.b16 %v1402
    %v2288 = vunpack.c.l.b16 %v1403
    %v2289 = vunpack.c.h.b16 %v1403
    %v2290 = vunpack.c.l.b16 %v1404
    %v2291 = vunpack.c.h.b16 %v1404
    %v2292 = vunpack.c.l.b16 %v1405
    %v2293 = vunpack.c.h.b16 %v1405
    %v2294 = vunpack.c.l.b16 %v1406
    %v2295 = vunpack.c.h.b16 %v1406
    %v2296 = vunpack.c.l.b16 %v1407
    %v2297 = vunpack.c.h.b16 %v1407
    %v2298 = vunpack.c.l.b16 %v1408
    %v2299 = vunpack.c.h.b16 %v1408
    %v2300 = vunpack.c.l.b16 %v1409
    %v2301 = vunpack.c.h.b16 %v1409
    %v2302 = vunpack.c.l.b16 %v1410
    %v2303 = vunpack.c.h.b16 %v1410
    %v2304 = vunpack.c.l.b16 %v1411
    %v2305 = vunpack.c.h.b16 %v1411
    %v2306 = vunpack.c.l.b16 %v1412
    %v2307 = vunpack.c.h.b16 %v1412
    %v2308 = vunpack.c.l.b16 %v1413
    %v2309 = vunpack.c.h.b16 %v1413
    %v2310 = vunpack.c.l.b16 %v1414
    %v2311 = vunpack.c.h.b16 %v1414
    %v2312 = vunpack.c.l.b16 %v1415
    %v2313 = vunpack.c.h.b16 %v1415
    %v2314 = vunpack.c.l.b16 %v1416
    %v2315 = vunpack.c.h.b16 %v1416
    %v2316 = vunpack.c.l.b16 %v1417
    %v2317 = vunpack.c.h.b16 %v1417
    %v2318 = vunpack.c.l.b16 %v1418
    %v2319 = vunpack.c.h.b16 %v1418
    %v2320 = vunpack.c.l.b16 %v1419
    %v2321 = vunpack.c.h.b16 %v1419
    %v2322 = vunpack.c.l.b16 %v1420
    %v2323 = vunpack.c.h.b16 %v1420
    %v2324 = vunpack.c.l.b16 %v1421
    %v2325 = vunpack.c.h.b16 %v1421
    %v2326 = vunpack.c.l.b16 %v1422
    %v2327 = vunpack.c.h.b16 %v1422
    %v2328 = vunpack.c.l.b16 %v1423
    %v2329 = vunpack.c.h.b16 %v1423
    %v2330 = vunpack.c.l.b16 %v1424
    %v2331 = vunpack.c.h.b16 %v1424
    %v2332 = vunpack.c.l.b16 %v1425
    %v2333 = vunpack.c.h.b16 %v1425
    %v2334 = vunpack.c.l.b16 %v1426
    %v2335 = vunpack.c.h.b16 %v1426
    %v2336 = vunpack.c.l.b16 %v1427
    %v2337 = vunpack.c.h.b16 %v1427
    %v2338 = vunpack.c.l.b16 %v1428
    %v2339 = vunpack.c.h.b16 %v1428
    %v2340 = vunpack.c.l.b16 %v1429
    %v2341 = vunpack.c.h.b16 %v1429
    %v2342 = vunpack.c.l.b16 %v1430
    %v2343 = vunpack.c.h.b16 %v1430
    %v2344 = vunpack.c.l.b16 %v1431
    %v2345 = vunpack.c.h.b16 %v1431
    %v2346 = vunpack.c.l.b16 %v1432
    %v2347 = vunpack.c.h.b16 %v1432
    %v2348 = vunpack.c.l.b16 %v1433
    %v2349 = vunpack.c.h.b16 %v1433
    %v2350 = vunpack.c.l.b16 %v1434
    %v2351 = vunpack.c.h.b16 %v1434
    %v2352 = vunpack.c.l.b16 %v1435
    %v2353 = vunpack.c.h.b16 %v1435
    %v2354 = vunpack.c.l.b16 %v1436
    %v2355 = vunpack.c.h.b16 %v1436
    %v2356 = vunpack.c.l.b16 %v1437
    %v2357 = vunpack.c.h.b16 %v1437
    %v2358 = vunpack.c.l.b16 %v1438
    %v2359 = vunpack.c.h.b16 %v1438
    %v2360 = vunpack.c.l.b16 %v1439
    %v2361 = vunpack.c.h.b16 %v1439
    %v2362 = vunpack.c.l.b16 %v1440
    %v2363 = vunpack.c.h.b16 %v1440
    %v2364 = vunpack.c.l.b16 %v1441
    %v2365 = vunpack.c.h.b16 %v1441
    %v2366 = vunpack.c.l.b16 %v1442
    %v2367 = vunpack.c.h.b16 %v1442
    %v2368 = vunpack.c.l.b16 %v1443
    %v2369 = vunpack.c.h.b16 %v1443
    %v2370 = vunpack.c.l.b16 %v1444
    %v2371 = vunpack.c.h.b16 %v1444
    %v2372 = vunpack.c.l.b16 %v1445
    %v2373 = vunpack.c.h.b16 %v1445
    %v2374 = vpack.c.b16 %v1810, %v1798
    %v2375 = vpack.c.b16 %v1811, %v1799
    %v2376 = vpack.c.b16 %v1812, %v1800
    %v2377 = vpack.c.b16 %v1813, %v1801
    %v2378 = vpack.c.b16 %v1814, %v1802
    %v2379 = vpack.c.b16 %v1815, %v1803
    %v2380 = vpack.c.b16 %v1816, %v1804
    %v2381 = vpack.c.b16 %v1817, %v1805
    %v2382 = vpack.c.b16 %v1818, %v1806
    %v2383 = vpack.c.b16 %v1819, %v1807
    %v2384 = vpack.c.b16 %v1820, %v1808
    %v2385 = vpack.c.b16 %v1821, %v1809
    %v2386 = vpack.c.b16 %v1834, %v1822
    %v2387 = vpack.c.b16 %v1835, %v1823
    %v2388 = vpack.c.b16 %v1836, %v1824
    %v2389 = vpack.c.b16 %v1837, %v1825
    %v2390 = vpack.c.b16 %v1838, %v1826
    %v2391 = vpack.c.b16 %v1839, %v1827
    %v2392 = vpack.c.b16 %v1840, %v1828
    %v2393 = vpack.c.b16 %v1841, %v1829
    %v2394 = vpack.c.b16 %v1842, %v1830
    %v2395 = vpack.c.b16 %v1843, %v1831
    %v2396 = vpack.c.b16 %v1844, %v1832
    %v2397 = vpack.c.b16 %v1845, %v1833
    %v2398 = vpack.c.b16 %v1858, %v1846
    %v2399 = vpack.c.b16 %v1859, %v1847
    %v2400 = vpack.c.b16 %v1860, %v1848
    %v2401 = vpack.c.b16 %v1861, %v1849
    %v2402 = vpack.c.b16 %v1862, %v1850
    %v2403 = vpack.c.b16 %v1863, %v1851
    %v2404 = vpack.c.b16 %v1864, %v1852
    %v2405 = vpack.c.b16 %v1865, %v1853
    %v2406 = vpack.c.b16 %v1866, %v1854
    %v2407 = vpack.c.b16 %v1867, %v1855
    %v2408 = vpack.c.b16 %v1868, %v1856
    %v2409 = vpack.c.b16 %v1869, %v1857
    %v2410 = vpack.c.b16 %v1882, %v1870
    %v2411 = vpack.c.b16 %v1883, %v1871
    %v2412 = vpack.c.b16 %v1884, %v1872
    %v2413 = vpack.c.b16 %v1885, %v1873
    %v2414 = vpack.c.b16 %v1886, %v1874
    %v2415 = vpack.c.b16 %v1887, %v1875
    %v2416 = vpack.c.b16 %v1888, %v1876
    %v2417 = vpack.c.b16 %v1889, %v1877
    %v2418 = vpack.c.b16 %v1890, %v1878
    %v2419 = vpack.c.b16 %v1891, %v1879
    %v2420 = vpack.c.b16 %v1892, %v1880
    %v2421 = vpack.c.b16 %v1893, %v1881
    %v2422 = vpack.c.b16 %v1906, %v1894
    %v2423 = vpack.c.b16 %v1907, %v1895
    %v2424 = vpack.c.b16 %v1908, %v1896
    %v2425 = vpack.c.b16 %v1909, %v1897
    %v2426 = vpack.c.b16 %v1910, %v1898
    %v2427 = vpack.c.b16 %v1911, %v1899
    %v2428 = vpack.c.b16 %v1912, %v1900
    %v2429 = vpack.c.b16 %v1913, %v1901
    %v2430 = vpack.c.b16 %v1914, %v1902
    %v2431 = vpack.c.b16 %v1915, %v1903
    %v2432 = vpack.c.b16 %v1916, %v1904
    %v2433 = vpack.c.b16 %v1917, %v1905
    %v2434 = vpack.c.b16 %v1930, %v1918
    %v2435 = vpack.c.b16 %v1931, %v1919
    %v2436 = vpack.c.b16 %v1932, %v1920
    %v2437 = vpack.c.b16 %v1933, %v1921
    %v2438 = vpack.c.b16 %v1934, %v1922
    %v2439 = vpack.c.b16 %v1935, %v1923
    %v2440 = vpack.c.b16 %v1936, %v1924
    %v2441 = vpack.c.b16 %v1937, %v1925
    %v2442 = vpack.c.b16 %v1938, %v1926
    %v2443 = vpack.c.b16 %v1939, %v1927
    %v2444 = vpack.c.b16 %v1940, %v1928
    %v2445 = vpack.c.b16 %v1941, %v1929
    %v2446 = vpack.c.b16 %v1954, %v1942
    %v2447 = vpack.c.b16 %v1955, %v1943
    %v2448 = vpack.c.b16 %v1956, %v1944
    %v2449 = vpack.c.b16 %v1957, %v1945
    %v2450 = vpack.c.b16 %v1958, %v1946
    %v2451 = vpack.c.b16 %v1959, %v1947
    %v2452 = vpack.c.b16 %v1960, %v1948
    %v2453 = vpack.c.b16 %v1961, %v1949
    %v2454 = vpack.c.b16 %v1962, %v1950
    %v2455 = vpack.c.b16 %v1963, %v1951
    %v2456 = vpack.c.b16 %v1964, %v1952
    %v2457 = vpack.c.b16 %v1965, %v1953
    %v2458 = vpack.c.b16 %v1978, %v1966
    %v2459 = vpack.c.b16 %v1979, %v1967
    %v2460 = vpack.c.b16 %v1980, %v1968
    %v2461 = vpack.c.b16 %v1981, %v1969
    %v2462 = vpack.c.b16 %v1982, %v1970
    %v2463 = vpack.c.b16 %v1983, %v1971
    %v2464 = vpack.c.b16 %v1984, %v1972
    %v2465 = vpack.c.b16 %v1985, %v1973
    %v2466 = vpack.c.b16 %v1986, %v1974
    %v2467 = vpack.c.b16 %v1987, %v1975
    %v2468 = vpack.c.b16 %v1988, %v1976
    %v2469 = vpack.c.b16 %v1989, %v1977
    %v2470 = vpack.c.b16 %v2002, %v1990
    %v2471 = vpack.c.b16 %v2003, %v1991
    %v2472 = vpack.c.b16 %v2004, %v1992
    %v2473 = vpack.c.b16 %v2005, %v1993
    %v2474 = vpack.c.b16 %v2006, %v1994
    %v2475 = vpack.c.b16 %v2007, %v1995
    %v2476 = vpack.c.b16 %v2008, %v1996
    %v2477 = vpack.c.b16 %v2009, %v1997
    %v2478 = vpack.c.b16 %v2010, %v1998
    %v2479 = vpack.c.b16 %v2011, %v1999
    %v2480 = vpack.c.b16 %v2012, %v2000
    %v2481 = vpack.c.b16 %v2013, %v2001
    %v2482 = vpack.c.b16 %v2026, %v2014
    %v2483 = vpack.c.b16 %v2027, %v2015
    %v2484 = vpack.c.b16 %v2028, %v2016
    %v2485 = vpack.c.b16 %v2029, %v2017
    %v2486 = vpack.c.b16 %v2030, %v2018
    %v2487 = vpack.c.b16 %v2031, %v2019
    %v2488 = vpack.c.b16 %v2032, %v2020
    %v2489 = vpack.c.b16 %v2033, %v2021
    %v2490 = vpack.c.b16 %v2034, %v2022
    %v2491 = vpack.c.b16 %v2035, %v2023
    %v2492 = vpack.c.b16 %v2036, %v2024
    %v2493 = vpack.c.b16 %v2037, %v2025
    %v2494 = vpack.c.b16 %v2050, %v2038
    %v2495 = vpack.c.b16 %v2051, %v2039
    %v2496 = vpack.c.b16 %v2052, %v2040
    %v2497 = vpack.c.b16 %v2053, %v2041
    %v2498 = vpack.c.b16 %v2054, %v2042
    %v2499 = vpack.c.b16 %v2055, %v2043
    %v2500 = vpack.c.b16 %v2056, %v2044
    %v2501 = vpack.c.b16 %v2057, %v2045
    %v2502 = vpack.c.b16 %v2058, %v2046
    %v2503 = vpack.c.b16 %v2059, %v2047
    %v2504 = vpack.c.b16 %v2060, %v2048
    %v2505 = vpack.c.b16 %v2061, %v2049
    %v2506 = vpack.c.b16 %v2074, %v2062
    %v2507 = vpack.c.b16 %v2075, %v2063
    %v2508 = vpack.c.b16 %v2076, %v2064
    %v2509 = vpack.c.b16 %v2077, %v2065
    %v2510 = vpack.c.b16 %v2078, %v2066
    %v2511 = vpack.c.b16 %v2079, %v2067
    %v2512 = vpack.c.b16 %v2080, %v2068
    %v2513 = vpack.c.b16 %v2081, %v2069
    %v2514 = vpack.c.b16 %v2082, %v2070
    %v2515 = vpack.c.b16 %v2083, %v2071
    %v2516 = vpack.c.b16 %v2084, %v2072
    %v2517 = vpack.c.b16 %v2085, %v2073
    %v2518 = vpack.c.b16 %v2098, %v2086
    %v2519 = vpack.c.b16 %v2099, %v2087
    %v2520 = vpack.c.b16 %v2100, %v2088
    %v2521 = vpack.c.b16 %v2101, %v2089
    %v2522 = vpack.c.b16 %v2102, %v2090
    %v2523 = vpack.c.b16 %v2103, %v2091
    %v2524 = vpack.c.b16 %v2104, %v2092
    %v2525 = vpack.c.b16 %v2105, %v2093
    %v2526 = vpack.c.b16 %v2106, %v2094
    %v2527 = vpack.c.b16 %v2107, %v2095
    %v2528 = vpack.c.b16 %v2108, %v2096
    %v2529 = vpack.c.b16 %v2109, %v2097
    %v2530 = vpack.c.b16 %v2122, %v2110
    %v2531 = vpack.c.b16 %v2123, %v2111
    %v2532 = vpack.c.b16 %v2124, %v2112
    %v2533 = vpack.c.b16 %v2125, %v2113
    %v2534 = vpack.c.b16 %v2126, %v2114
    %v2535 = vpack.c.b16 %v2127, %v2115
    %v2536 = vpack.c.b16 %v2128, %v2116
    %v2537 = vpack.c.b16 %v2129, %v2117
    %v2538 = vpack.c.b16 %v2130, %v2118
    %v2539 = vpack.c.b16 %v2131, %v2119
    %v2540 = vpack.c.b16 %v2132, %v2120
    %v2541 = vpack.c.b16 %v2133, %v2121
    %v2542 = vpack.c.b16 %v2146, %v2134
    %v2543 = vpack.c.b16 %v2147, %v2135
    %v2544 = vpack.c.b16 %v2148, %v2136
    %v2545 = vpack.c.b16 %v2149, %v2137
    %v2546 = vpack.c.b16 %v2150, %v2138
    %v2547 = vpack.c.b16 %v2151, %v2139
    %v2548 = vpack.c.b16 %v2152, %v2140
    %v2549 = vpack.c.b16 %v2153, %v2141
    %v2550 = vpack.c.b16 %v2154, %v2142
    %v2551 = vpack.c.b16 %v2155, %v2143
    %v2552 = vpack.c.b16 %v2156, %v2144
    %v2553 = vpack.c.b16 %v2157, %v2145
    %v2554 = vpack.c.b16 %v2170, %v2158
    %v2555 = vpack.c.b16 %v2171, %v2159
    %v2556 = vpack.c.b16 %v2172, %v2160
    %v2557 = vpack.c.b16 %v2173, %v2161
    %v2558 = vpack.c.b16 %v2174, %v2162
    %v2559 = vpack.c.b16 %v2175, %v2163
    %v2560 = vpack.c.b16 %v2176, %v2164
    %v2561 = vpack.c.b16 %v2177, %v2165
    %v2562 = vpack.c.b16 %v2178, %v2166
    %v2563 = vpack.c.b16 %v2179, %v2167
    %v2564 = vpack.c.b16 %v2180, %v2168
    %v2565 = vpack.c.b16 %v2181, %v2169
    %v2566 = vpack.c.b16 %v2194, %v2182
    %v2567 = vpack.c.b16 %v2195, %v2183
    %v2568 = vpack.c.b16 %v2196, %v2184
    %v2569 = vpack.c.b16 %v2197, %v2185
    %v2570 = vpack.c.b16 %v2198, %v2186
    %v2571 = vpack.c.b16 %v2199, %v2187
    %v2572 = vpack.c.b16 %v2200, %v2188
    %v2573 = vpack.c.b16 %v2201, %v2189
    %v2574 = vpack.c.b16 %v2202, %v2190
    %v2575 = vpack.c.b16 %v2203, %v2191
    %v2576 = vpack.c.b16 %v2204, %v2192
    %v2577 = vpack.c.b16 %v2205, %v2193
    %v2578 = vpack.c.b16 %v2218, %v2206
    %v2579 = vpack.c.b16 %v2219, %v2207
    %v2580 = vpack.c.b16 %v2220, %v2208
    %v2581 = vpack.c.b16 %v2221, %v2209
    %v2582 = vpack.c.b16 %v2222, %v2210
    %v2583 = vpack.c.b16 %v2223, %v2211
    %v2584 = vpack.c.b16 %v2224, %v2212
    %v2585 = vpack.c.b16 %v2225, %v2213
    %v2586 = vpack.c.b16 %v2226, %v2214
    %v2587 = vpack.c.b16 %v2227, %v2215
    %v2588 = vpack.c.b16 %v2228, %v2216
    %v2589 = vpack.c.b16 %v2229, %v2217
    %v2590 = vpack.c.b16 %v2242, %v2230
    %v2591 = vpack.c.b16 %v2243, %v2231
    %v2592 = vpack.c.b16 %v2244, %v2232
    %v2593 = vpack.c.b16 %v2245, %v2233
    %v2594 = vpack.c.b16 %v2246, %v2234
    %v2595 = vpack.c.b16 %v2247, %v2235
    %v2596 = vpack.c.b16 %v2248, %v2236
    %v2597 = vpack.c.b16 %v2249, %v2237
    %v2598 = vpack.c.b16 %v2250, %v2238
    %v2599 = vpack.c.b16 %v2251, %v2239
    %v2600 = vpack.c.b16 %v2252, %v2240
    %v2601 = vpack.c.b16 %v2253, %v2241
    %v2602 = vpack.c.b16 %v2266, %v2254
    %v2603 = vpack.c.b16 %v2267, %v2255
    %v2604 = vpack.c.b16 %v2268, %v2256
    %v2605 = vpack.c.b16 %v2269, %v2257
    %v2606 = vpack.c.b16 %v2270, %v2258
    %v2607 = vpack.c.b16 %v2271, %v2259
    %v2608 = vpack.c.b16 %v2272, %v2260
    %v2609 = vpack.c.b16 %v2273, %v2261
    %v2610 = vpack.c.b16 %v2274, %v2262
    %v2611 = vpack.c.b16 %v2275, %v2263
    %v2612 = vpack.c.b16 %v2276, %v2264
    %v2613 = vpack.c.b16 %v2277, %v2265
    %v2614 = vpack.c.b16 %v2290, %v2278
    %v2615 = vpack.c.b16 %v2291, %v2279
    %v2616 = vpack.c.b16 %v2292, %v2280
    %v2617 = vpack.c.b16 %v2293, %v2281
    %v2618 = vpack.c.b16 %v2294, %v2282
    %v2619 = vpack.c.b16 %v2295, %v2283
    %v2620 = vpack.c.b16 %v2296, %v2284
    %v2621 = vpack.c.b16 %v2297, %v2285
    %v2622 = vpack.c.b16 %v2298, %v2286
    %v2623 = vpack.c.b16 %v2299, %v2287
    %v2624 = vpack.c.b16 %v2300, %v2288
    %v2625 = vpack.c.b16 %v2301, %v2289
    %v2626 = vpack.c.b16 %v2314, %v2302
    %v2627 = vpack.c.b16 %v2315, %v2303
    %v2628 = vpack.c.b16 %v2316, %v2304
    %v2629 = vpack.c.b16 %v2317, %v2305
    %v2630 = vpack.c.b16 %v2318, %v2306
    %v2631 = vpack.c.b16 %v2319, %v2307
    %v2632 = vpack.c.b16 %v2320, %v2308
    %v2633 = vpack.c.b16 %v2321, %v2309
    %v2634 = vpack.c.b16 %v2322, %v2310
    %v2635 = vpack.c.b16 %v2323, %v2311
    %v2636 = vpack.c.b16 %v2324, %v2312
    %v2637 = vpack.c.b16 %v2325, %v2313
    %v2638 = vpack.c.b16 %v2338, %v2326
    %v2639 = vpack.c.b16 %v2339, %v2327
    %v2640 = vpack.c.b16 %v2340, %v2328
    %v2641 = vpack.c.b16 %v2341, %v2329
    %v2642 = vpack.c.b16 %v2342, %v2330
    %v2643 = vpack.c.b16 %v2343, %v2331
    %v2644 = vpack.c.b16 %v2344, %v2332
    %v2645 = vpack.c.b16 %v2345, %v2333
    %v2646 = vpack.c.b16 %v2346, %v2334
    %v2647 = vpack.c.b16 %v2347, %v2335
    %v2648 = vpack.c.b16 %v2348, %v2336
    %v2649 = vpack.c.b16 %v2349, %v2337
    %v2650 = vpack.c.b16 %v2362, %v2350
    %v2651 = vpack.c.b16 %v2363, %v2351
    %v2652 = vpack.c.b16 %v2364, %v2352
    %v2653 = vpack.c.b16 %v2365, %v2353
    %v2654 = vpack.c.b16 %v2366, %v2354
    %v2655 = vpack.c.b16 %v2367, %v2355
    %v2656 = vpack.c.b16 %v2368, %v2356
    %v2657 = vpack.c.b16 %v2369, %v2357
    %v2658 = vpack.c.b16 %v2370, %v2358
    %v2659 = vpack.c.b16 %v2371, %v2359
    %v2660 = vpack.c.b16 %v2372, %v2360
    %v2661 = vpack.c.b16 %v2373, %v2361
    %2950 = vmatprep.subr.bf16.mxu0 %v2375
    %2951 = vmatpush1.bf16.msra.mxu0 %v2374
    %2952 = vmatprep.subr.bf16.mxu0 %v2387
    %2953 = vmatpush1.bf16.msra.mxu0 %v2386
    %2954 = vmatprep.subr.bf16.mxu0 %v2399
    %2955 = vmatpush1.bf16.msra.mxu0 %v2398
    %2956 = vmatprep.subr.bf16.mxu0 %v2411
    %2957 = vmatpush1.bf16.msra.mxu0 %v2410
    %2958 = vmatprep.subr.bf16.mxu0 %v2423
    %2959 = vmatpush1.bf16.msra.mxu0 %v2422
    %2960 = vmatprep.subr.bf16.mxu0 %v2435
    %2961 = vmatpush1.bf16.msra.mxu0 %v2434
    %2962 = vmatprep.subr.bf16.mxu0 %v2447
    %2963 = vmatpush1.bf16.msra.mxu0 %v2446
    %2964 = vmatprep.subr.bf16.mxu0 %v2459
    %2965 = vmatpush1.bf16.msra.mxu0 %v2458
    %2966 = vmatprep.subr.bf16.mxu0 %v2471
    %2967 = vmatpush1.bf16.msra.mxu0 %v2470
    %2968 = vmatprep.subr.bf16.mxu0 %v2483
    %2969 = vmatpush1.bf16.msra.mxu0 %v2482
    %2970 = vmatprep.subr.bf16.mxu0 %v2495
    %2971 = vmatpush1.bf16.msra.mxu0 %v2494
    %2972 = vmatprep.subr.bf16.mxu0 %v2507
    %2973 = vmatpush1.bf16.msra.mxu0 %v2506
    %2974 = vmatprep.subr.bf16.mxu0 %v2519
    %2975 = vmatpush1.bf16.msra.mxu0 %v2518
    %2976 = vmatprep.subr.bf16.mxu0 %v2531
    %2977 = vmatpush1.bf16.msra.mxu0 %v2530
    %2978 = vmatprep.subr.bf16.mxu0 %v2543
    %2979 = vmatpush1.bf16.msra.mxu0 %v2542
    %2980 = vmatprep.subr.bf16.mxu0 %v2555
    %2981 = vmatpush1.bf16.msra.mxu0 %v2554
    %2982 = vmatprep.mubr.bf16.mxu0 %v1111
    %2983 = vmatmul.mubr.bf16.gmra.mrb[0].mxu0 %v1110
    %v2984 = vpop.f32.mrb[0].mxu0
    %v2985 = vadd.f32 %v1453, %v2984
    %v2986 = vpop.f32.mrb[0].mxu0
    %v2987 = vadd.f32 %v1457, %v2986
    %v2988 = vpop.f32.mrb[0].mxu0
    %v2989 = vadd.f32 %v1453, %v2988
    %v2990 = vpop.f32.mrb[0].mxu0
    %v2991 = vadd.f32 %v1457, %v2990
    %2992 = vmatprep.mubr.bf16.mxu0 %v1114
    %2993 = vmatmul.mubr.bf16.gmra.mrb[0].mxu0 %v1113
    %v2994 = vpop.f32.mrb[0].mxu0
    %v2995 = vadd.f32 %v1453, %v2994
    %v2996 = vpop.f32.mrb[0].mxu0
    %v2997 = vadd.f32 %v1457, %v2996
    %v2998 = vpop.f32.mrb[0].mxu0
    %v2999 = vadd.f32 %v1453, %v2998
    %v3000 = vpop.f32.mrb[0].mxu0
    %v3001 = vadd.f32 %v1457, %v3000
    %3002 = vmatprep.mubr.bf16.mxu0 %v1117
    %3003 = vmatmul.mubr.bf16.gmra.mrb[0].mxu0 %v1116
    %v3004 = vpop.f32.mrb[0].mxu0
    %v3005 = vadd.f32 %v1453, %v3004
    %v3006 = vpop.f32.mrb[0].mxu0
    %v3007 = vadd.f32 %v1457, %v3006
    %v3008 = vpop.f32.mrb[0].mxu0
    %v3009 = vadd.f32 %v1453, %v3008
    %v3010 = vpop.f32.mrb[0].mxu0
    %v3011 = vadd.f32 %v1457, %v3010
    %3012 = vmatprep.mubr.bf16.mxu0 %v1120
    %3013 = vmatmul.mubr.bf16.gmra.mrb[0].mxu0 %v1119
    %v3014 = vpop.f32.mrb[0].mxu0
    %v3015 = vadd.f32 %v1453, %v3014
    %v3016 = vpop.f32.mrb[0].mxu0
    %v3017 = vadd.f32 %v1457, %v3016
    %v3018 = vpop.f32.mrb[0].mxu0
    %v3019 = vadd.f32 %v1453, %v3018
    %v3020 = vpop.f32.mrb[0].mxu0
    %v3021 = vadd.f32 %v1457, %v3020
    %3022 = vmatprep.mubr.bf16.mxu0 %v1123
    %3023 = vmatmul.mubr.bf16.gmra.mrb[0].mxu0 %v1122
    %v3024 = vpop.f32.mrb[0].mxu0
    %v3025 = vadd.f32 %v1453, %v3024
    %v3026 = vpop.f32.mrb[0].mxu0
    %v3027 = vadd.f32 %v1457, %v3026
    %v3028 = vpop.f32.mrb[0].mxu0
    %v3029 = vadd.f32 %v1453, %v3028
    %v3030 = vpop.f32.mrb[0].mxu0
    %v3031 = vadd.f32 %v1457, %v3030
    %3032 = vmatprep.mubr.bf16.mxu0 %v1126
    %3033 = vmatmul.mubr.bf16.gmra.mrb[0].mxu0 %v1125
    %v3034 = vpop.f32.mrb[0].mxu0
    %v3035 = vadd.f32 %v1453, %v3034
    %v3036 = vpop.f32.mrb[0].mxu0
    %v3037 = vadd.f32 %v1457, %v3036
    %v3038 = vpop.f32.mrb[0].mxu0
    %v3039 = vadd.f32 %v1453, %v3038
    %v3040 = vpop.f32.mrb[0].mxu0
    %v3041 = vadd.f32 %v1457, %v3040
    %3042 = vmatprep.mubr.bf16.mxu0 %v1129
    %3043 = vmatmul.mubr.bf16.gmra.mrb[0].mxu0 %v1128
    %v3044 = vpop.f32.mrb[0].mxu0
    %v3045 = vadd.f32 %v1453, %v3044
    %v3046 = vpop.f32.mrb[0].mxu0
    %v3047 = vadd.f32 %v1457, %v3046
    %v3048 = vpop.f32.mrb[0].mxu0
    %v3049 = vadd.f32 %v1453, %v3048
    %v3050 = vpop.f32.mrb[0].mxu0
    %v3051 = vadd.f32 %v1457, %v3050
    %3052 = vmatprep.mubr.bf16.mxu0 %v1132
    %3053 = vmatmul.mubr.bf16.gmra.mrb[0].mxu0 %v1131
    %v3054 = vpop.f32.mrb[0].mxu0
    %v3055 = vadd.f32 %v1453, %v3054
    %v3056 = vpop.f32.mrb[0].mxu0
    %v3057 = vadd.f32 %v1457, %v3056
    %v3058 = vpop.f32.mrb[0].mxu0
    %v3059 = vadd.f32 %v1453, %v3058
    %v3060 = vpop.f32.mrb[0].mxu0
    %v3061 = vadd.f32 %v1457, %v3060
    %3062 = vmatprep.mubr.bf16.mxu0 %v1135
    %3063 = vmatmul.mubr.bf16.gmra.mrb[0].mxu0 %v1134
    %v3064 = vpop.f32.mrb[0].mxu0
    %v3065 = vadd.f32 %v1453, %v3064
    %v3066 = vpop.f32.mrb[0].mxu0
    %v3067 = vadd.f32 %v1457, %v3066
    %v3068 = vpop.f32.mrb[0].mxu0
    %v3069 = vadd.f32 %v1453, %v3068
    %v3070 = vpop.f32.mrb[0].mxu0
    %v3071 = vadd.f32 %v1457, %v3070
    %3072 = vmatprep.mubr.bf16.mxu0 %v1138
    %3073 = vmatmul.mubr.bf16.gmra.mrb[0].mxu0 %v1137
    %v3074 = vpop.f32.mrb[0].mxu0
    %v3075 = vadd.f32 %v1453, %v3074
    %v3076 = vpop.f32.mrb[0].mxu0
    %v3077 = vadd.f32 %v1457, %v3076
    %v3078 = vpop.f32.mrb[0].mxu0
    %v3079 = vadd.f32 %v1453, %v3078
    %v3080 = vpop.f32.mrb[0].mxu0
    %v3081 = vadd.f32 %v1457, %v3080
    %3082 = vmatprep.mubr.bf16.mxu0 %v1141
    %3083 = vmatmul.mubr.bf16.gmra.mrb[0].mxu0 %v1140
    %v3084 = vpop.f32.mrb[0].mxu0
    %v3085 = vadd.f32 %v1453, %v3084
    %v3086 = vpop.f32.mrb[0].mxu0
    %v3087 = vadd.f32 %v1457, %v3086
    %v3088 = vpop.f32.mrb[0].mxu0
    %v3089 = vadd.f32 %v1453, %v3088
    %v3090 = vpop.f32.mrb[0].mxu0
    %v3091 = vadd.f32 %v1457, %v3090
    %3092 = vmatprep.mubr.bf16.mxu0 %v1144
    %3093 = vmatmul.mubr.bf16.gmra.mrb[0].mxu0 %v1143
    %v3094 = vpop.f32.mrb[0].mxu0
    %v3095 = vadd.f32 %v1453, %v3094
    %v3096 = vpop.f32.mrb[0].mxu0
    %v3097 = vadd.f32 %v1457, %v3096
    %v3098 = vpop.f32.mrb[0].mxu0
    %v3099 = vadd.f32 %v1453, %v3098
    %v3100 = vpop.f32.mrb[0].mxu0
    %v3101 = vadd.f32 %v1457, %v3100
    %3102 = vmatprep.mubr.bf16.mxu0 %v1147
    %3103 = vmatmul.mubr.bf16.gmra.mrb[0].mxu0 %v1146
    %v3104 = vpop.f32.mrb[0].mxu0
    %v3105 = vadd.f32 %v1453, %v3104
    %v3106 = vpop.f32.mrb[0].mxu0
    %v3107 = vadd.f32 %v1457, %v3106
    %v3108 = vpop.f32.mrb[0].mxu0
    %v3109 = vadd.f32 %v1453, %v3108
    %v3110 = vpop.f32.mrb[0].mxu0
    %v3111 = vadd.f32 %v1457, %v3110
    %3112 = vmatprep.mubr.bf16.mxu0 %v1150
    %3113 = vmatmul.mubr.bf16.gmra.mrb[0].mxu0 %v1149
    %v3114 = vpop.f32.mrb[0].mxu0
    %v3115 = vadd.f32 %v1453, %v3114
    %v3116 = vpop.f32.mrb[0].mxu0
    %v3117 = vadd.f32 %v1457, %v3116
    %v3118 = vpop.f32.mrb[0].mxu0
    %v3119 = vadd.f32 %v1453, %v3118
    %v3120 = vpop.f32.mrb[0].mxu0
    %v3121 = vadd.f32 %v1457, %v3120
    %3122 = vmatprep.mubr.bf16.mxu0 %v1153
    %3123 = vmatmul.mubr.bf16.gmra.mrb[0].mxu0 %v1152
    %v3124 = vpop.f32.mrb[0].mxu0
    %v3125 = vadd.f32 %v1453, %v3124
    %v3126 = vpop.f32.mrb[0].mxu0
    %v3127 = vadd.f32 %v1457, %v3126
    %v3128 = vpop.f32.mrb[0].mxu0
    %v3129 = vadd.f32 %v1453, %v3128
    %v3130 = vpop.f32.mrb[0].mxu0
    %v3131 = vadd.f32 %v1457, %v3130
    %3132 = vmatprep.mubr.bf16.mxu0 %v1156
    %3133 = vmatmul.mubr.bf16.gmra.mrb[0].mxu0 %v1155
    %v3134 = vpop.f32.mrb[0].mxu0
    %v3135 = vadd.f32 %v1453, %v3134
    %v3136 = vpop.f32.mrb[0].mxu0
    %v3137 = vadd.f32 %v1457, %v3136
    %v3138 = vpop.f32.mrb[0].mxu0
    %v3139 = vadd.f32 %v1453, %v3138
    %v3140 = vpop.f32.mrb[0].mxu0
    %v3141 = vadd.f32 %v1457, %v3140
    %3142 = vdwg.mxu0
    %3143 = vmatprep.subr.bf16.mxu0 %v2567
    %3144 = vmatpush1.bf16.msra.mxu0 %v2566
    %3145 = vmatprep.subr.bf16.mxu0 %v2579
    %3146 = vmatpush1.bf16.msra.mxu0 %v2578
    %3147 = vmatprep.subr.bf16.mxu0 %v2591
    %3148 = vmatpush1.bf16.msra.mxu0 %v2590
    %3149 = vmatprep.subr.bf16.mxu0 %v2603
    %3150 = vmatpush1.bf16.msra.mxu0 %v2602
    %3151 = vmatprep.subr.bf16.mxu0 %v2615
    %3152 = vmatpush1.bf16.msra.mxu0 %v2614
    %3153 = vmatprep.subr.bf16.mxu0 %v2627
    %3154 = vmatpush1.bf16.msra.mxu0 %v2626
    %3155 = vmatprep.subr.bf16.mxu0 %v2639
    %3156 = vmatpush1.bf16.msra.mxu0 %v2638
    %3157 = vmatprep.subr.bf16.mxu0 %v2651
    %3158 = vmatpush1.bf16.msra.mxu0 %v2650
    %3159 = vmatprep.subr.bf16.mxu0 0
    %3160 = vmatpush1.bf16.msra.mxu0 0
    %3161 = vmatprep.subr.bf16.mxu0 0
    %3162 = vmatpush1.bf16.msra.mxu0 0
    %3163 = vmatprep.subr.bf16.mxu0 0
    %3164 = vmatpush1.bf16.msra.mxu0 0
    %3165 = vmatprep.subr.bf16.mxu0 0
    %3166 = vmatpush1.bf16.msra.mxu0 0
    %3167 = vmatprep.subr.bf16.mxu0 0
    %3168 = vmatpush1.bf16.msra.mxu0 0
    %3169 = vmatprep.subr.bf16.mxu0 0
    %3170 = vmatpush1.bf16.msra.mxu0 0
    %3171 = vmatprep.subr.bf16.mxu0 0
    %3172 = vmatpush1.bf16.msra.mxu0 0
    %3173 = vmatprep.subr.bf16.mxu0 0
    %3174 = vmatpush1.bf16.msra.mxu0 0
    %3175 = vmatprep.mubr.bf16.mxu0 0
    %3176 = vmatmul.mubr.bf16.gmra.mrb[0].mxu0 %v1112
    %v3177 = vpop.f32.mrb[0].mxu0
    %v3178 = vadd.f32 %v2985, %v3177
    %v3179 = vpop.f32.mrb[0].mxu0
    %v3180 = vadd.f32 %v2987, %v3179
    %v3181 = vpop.f32.mrb[0].mxu0
    %v3182 = vadd.f32 %v2989, %v3181
    %v3183 = vpop.f32.mrb[0].mxu0
    %v3184 = vadd.f32 %v2991, %v3183
    %3185 = vmatprep.mubr.bf16.mxu0 0
    %3186 = vmatmul.mubr.bf16.gmra.mrb[0].mxu0 %v1115
    %v3187 = vpop.f32.mrb[0].mxu0
    %v3188 = vadd.f32 %v2995, %v3187
    %v3189 = vpop.f32.mrb[0].mxu0
    %v3190 = vadd.f32 %v2997, %v3189
    %v3191 = vpop.f32.mrb[0].mxu0
    %v3192 = vadd.f32 %v2999, %v3191
    %v3193 = vpop.f32.mrb[0].mxu0
    %v3194 = vadd.f32 %v3001, %v3193
    %3195 = vmatprep.mubr.bf16.mxu0 0
    %3196 = vmatmul.mubr.bf16.gmra.mrb[0].mxu0 %v1118
    %v3197 = vpop.f32.mrb[0].mxu0
    %v3198 = vadd.f32 %v3005, %v3197
    %v3199 = vpop.f32.mrb[0].mxu0
    %v3200 = vadd.f32 %v3007, %v3199
    %v3201 = vpop.f32.mrb[0].mxu0
    %v3202 = vadd.f32 %v3009, %v3201
    %v3203 = vpop.f32.mrb[0].mxu0
    %v3204 = vadd.f32 %v3011, %v3203
    %3205 = vmatprep.mubr.bf16.mxu0 0
    %3206 = vmatmul.mubr.bf16.gmra.mrb[0].mxu0 %v1121
    %v3207 = vpop.f32.mrb[0].mxu0
    %v3208 = vadd.f32 %v3015, %v3207
    %v3209 = vpop.f32.mrb[0].mxu0
    %v3210 = vadd.f32 %v3017, %v3209
    %v3211 = vpop.f32.mrb[0].mxu0
    %v3212 = vadd.f32 %v3019, %v3211
    %v3213 = vpop.f32.mrb[0].mxu0
    %v3214 = vadd.f32 %v3021, %v3213
    %3215 = vmatprep.mubr.bf16.mxu0 0
    %3216 = vmatmul.mubr.bf16.gmra.mrb[0].mxu0 %v1124
    %v3217 = vpop.f32.mrb[0].mxu0
    %v3218 = vadd.f32 %v3025, %v3217
    %v3219 = vpop.f32.mrb[0].mxu0
    %v3220 = vadd.f32 %v3027, %v3219
    %v3221 = vpop.f32.mrb[0].mxu0
    %v3222 = vadd.f32 %v3029, %v3221
    %v3223 = vpop.f32.mrb[0].mxu0
    %v3224 = vadd.f32 %v3031, %v3223
    %3225 = vmatprep.mubr.bf16.mxu0 0
    %3226 = vmatmul.mubr.bf16.gmra.mrb[0].mxu0 %v1127
    %v3227 = vpop.f32.mrb[0].mxu0
    %v3228 = vadd.f32 %v3035, %v3227
    %v3229 = vpop.f32.mrb[0].mxu0
    %v3230 = vadd.f32 %v3037, %v3229
    %v3231 = vpop.f32.mrb[0].mxu0
    %v3232 = vadd.f32 %v3039, %v3231
    %v3233 = vpop.f32.mrb[0].mxu0
    %v3234 = vadd.f32 %v3041, %v3233
    %3235 = vmatprep.mubr.bf16.mxu0 0
    %3236 = vmatmul.mubr.bf16.gmra.mrb[0].mxu0 %v1130
    %v3237 = vpop.f32.mrb[0].mxu0
    %v3238 = vadd.f32 %v3045, %v3237
    %v3239 = vpop.f32.mrb[0].mxu0
    %v3240 = vadd.f32 %v3047, %v3239
    %v3241 = vpop.f32.mrb[0].mxu0
    %v3242 = vadd.f32 %v3049, %v3241
    %v3243 = vpop.f32.mrb[0].mxu0
    %v3244 = vadd.f32 %v3051, %v3243
    %3245 = vmatprep.mubr.bf16.mxu0 0
    %3246 = vmatmul.mubr.bf16.gmra.mrb[0].mxu0 %v1133
    %v3247 = vpop.f32.mrb[0].mxu0
    %v3248 = vadd.f32 %v3055, %v3247
    %v3249 = vpop.f32.mrb[0].mxu0
    %v3250 = vadd.f32 %v3057, %v3249
    %v3251 = vpop.f32.mrb[0].mxu0
    %v3252 = vadd.f32 %v3059, %v3251
    %v3253 = vpop.f32.mrb[0].mxu0
    %v3254 = vadd.f32 %v3061, %v3253
    %3255 = vmatprep.mubr.bf16.mxu0 0
    %3256 = vmatmul.mubr.bf16.gmra.mrb[0].mxu0 %v1136
    %v3257 = vpop.f32.mrb[0].mxu0
    %v3258 = vadd.f32 %v3065, %v3257
    %v3259 = vpop.f32.mrb[0].mxu0
    %v3260 = vadd.f32 %v3067, %v3259
    %v3261 = vpop.f32.mrb[0].mxu0
    %v3262 = vadd.f32 %v3069, %v3261
    %v3263 = vpop.f32.mrb[0].mxu0
    %v3264 = vadd.f32 %v3071, %v3263
    %3265 = vmatprep.mubr.bf16.mxu0 0
    %3266 = vmatmul.mubr.bf16.gmra.mrb[0].mxu0 %v1139
    %v3267 = vpop.f32.mrb[0].mxu0
    %v3268 = vadd.f32 %v3075, %v3267
    %v3269 = vpop.f32.mrb[0].mxu0
    %v3270 = vadd.f32 %v3077, %v3269
    %v3271 = vpop.f32.mrb[0].mxu0
    %v3272 = vadd.f32 %v3079, %v3271
    %v3273 = vpop.f32.mrb[0].mxu0
    %v3274 = vadd.f32 %v3081, %v3273
    %3275 = vmatprep.mubr.bf16.mxu0 0
    %3276 = vmatmul.mubr.bf16.gmra.mrb[0].mxu0 %v1142
    %v3277 = vpop.f32.mrb[0].mxu0
    %v3278 = vadd.f32 %v3085, %v3277
    %v3279 = vpop.f32.mrb[0].mxu0
    %v3280 = vadd.f32 %v3087, %v3279
    %v3281 = vpop.f32.mrb[0].mxu0
    %v3282 = vadd.f32 %v3089, %v3281
    %v3283 = vpop.f32.mrb[0].mxu0
    %v3284 = vadd.f32 %v3091, %v3283
    %3285 = vmatprep.mubr.bf16.mxu0 0
    %3286 = vmatmul.mubr.bf16.gmra.mrb[0].mxu0 %v1145
    %v3287 = vpop.f32.mrb[0].mxu0
    %v3288 = vadd.f32 %v3095, %v3287
    %v3289 = vpop.f32.mrb[0].mxu0
    %v3290 = vadd.f32 %v3097, %v3289
    %v3291 = vpop.f32.mrb[0].mxu0
    %v3292 = vadd.f32 %v3099, %v3291
    %v3293 = vpop.f32.mrb[0].mxu0
    %v3294 = vadd.f32 %v3101, %v3293
    %3295 = vmatprep.mubr.bf16.mxu0 0
    %3296 = vmatmul.mubr.bf16.gmra.mrb[0].mxu0 %v1148
    %v3297 = vpop.f32.mrb[0].mxu0
    %v3298 = vadd.f32 %v3105, %v3297
    %v3299 = vpop.f32.mrb[0].mxu0
    %v3300 = vadd.f32 %v3107, %v3299
    %v3301 = vpop.f32.mrb[0].mxu0
    %v3302 = vadd.f32 %v3109, %v3301
    %v3303 = vpop.f32.mrb[0].mxu0
    %v3304 = vadd.f32 %v3111, %v3303
    %3305 = vmatprep.mubr.bf16.mxu0 0
    %3306 = vmatmul.mubr.bf16.gmra.mrb[0].mxu0 %v1151
    %v3307 = vpop.f32.mrb[0].mxu0
    %v3308 = vadd.f32 %v3115, %v3307
    %v3309 = vpop.f32.mrb[0].mxu0
    %v3310 = vadd.f32 %v3117, %v3309
    %v3311 = vpop.f32.mrb[0].mxu0
    %v3312 = vadd.f32 %v3119, %v3311
    %v3313 = vpop.f32.mrb[0].mxu0
    %v3314 = vadd.f32 %v3121, %v3313
    %3315 = vmatprep.mubr.bf16.mxu0 0
    %3316 = vmatmul.mubr.bf16.gmra.mrb[0].mxu0 %v1154
    %v3317 = vpop.f32.mrb[0].mxu0
    %v3318 = vadd.f32 %v3125, %v3317
    %v3319 = vpop.f32.mrb[0].mxu0
    %v3320 = vadd.f32 %v3127, %v3319
    %v3321 = vpop.f32.mrb[0].mxu0
    %v3322 = vadd.f32 %v3129, %v3321
    %v3323 = vpop.f32.mrb[0].mxu0
    %v3324 = vadd.f32 %v3131, %v3323
    %3325 = vmatprep.mubr.bf16.mxu0 0
    %3326 = vmatmul.mubr.bf16.gmra.mrb[0].mxu0 %v1157
    %v3327 = vpop.f32.mrb[0].mxu0
    %v3328 = vadd.f32 %v3135, %v3327
    %v3329 = vpop.f32.mrb[0].mxu0
    %v3330 = vadd.f32 %v3137, %v3329
    %v3331 = vpop.f32.mrb[0].mxu0
    %v3332 = vadd.f32 %v3139, %v3331
    %v3333 = vpop.f32.mrb[0].mxu0
    %v3334 = vadd.f32 %v3141, %v3333
    %3335 = vdwg.mxu0
    %3336 = vmatprep.subr.bf16.mxu0 %v2377
    %3337 = vmatpush1.bf16.msra.mxu0 %v2376
    %3338 = vmatprep.subr.bf16.mxu0 %v2389
    %3339 = vmatpush1.bf16.msra.mxu0 %v2388
    %3340 = vmatprep.subr.bf16.mxu0 %v2401
    %3341 = vmatpush1.bf16.msra.mxu0 %v2400
    %3342 = vmatprep.subr.bf16.mxu0 %v2413
    %3343 = vmatpush1.bf16.msra.mxu0 %v2412
    %3344 = vmatprep.subr.bf16.mxu0 %v2425
    %3345 = vmatpush1.bf16.msra.mxu0 %v2424
    %3346 = vmatprep.subr.bf16.mxu0 %v2437
    %3347 = vmatpush1.bf16.msra.mxu0 %v2436
    %3348 = vmatprep.subr.bf16.mxu0 %v2449
    %3349 = vmatpush1.bf16.msra.mxu0 %v2448
    %3350 = vmatprep.subr.bf16.mxu0 %v2461
    %3351 = vmatpush1.bf16.msra.mxu0 %v2460
    %3352 = vmatprep.subr.bf16.mxu0 %v2473
    %3353 = vmatpush1.bf16.msra.mxu0 %v2472
    %3354 = vmatprep.subr.bf16.mxu0 %v2485
    %3355 = vmatpush1.bf16.msra.mxu0 %v2484
    %3356 = vmatprep.subr.bf16.mxu0 %v2497
    %3357 = vmatpush1.bf16.msra.mxu0 %v2496
    %3358 = vmatprep.subr.bf16.mxu0 %v2509
    %3359 = vmatpush1.bf16.msra.mxu0 %v2508
    %3360 = vmatprep.subr.bf16.mxu0 %v2521
    %3361 = vmatpush1.bf16.msra.mxu0 %v2520
    %3362 = vmatprep.subr.bf16.mxu0 %v2533
    %3363 = vmatpush1.bf16.msra.mxu0 %v2532
    %3364 = vmatprep.subr.bf16.mxu0 %v2545
    %3365 = vmatpush1.bf16.msra.mxu0 %v2544
    %3366 = vmatprep.subr.bf16.mxu0 %v2557
    %3367 = vmatpush1.bf16.msra.mxu0 %v2556
    %3368 = vmatprep.mubr.bf16.mxu0 %v1111
    %3369 = vmatmul.mubr.bf16.gmra.mrb[0].mxu0 %v1110
    %v3370 = vpop.f32.mrb[0].mxu0
    %v3371 = vadd.f32 %v1461, %v3370
    %v3372 = vpop.f32.mrb[0].mxu0
    %v3373 = vadd.f32 %v1465, %v3372
    %v3374 = vpop.f32.mrb[0].mxu0
    %v3375 = vadd.f32 %v1461, %v3374
    %v3376 = vpop.f32.mrb[0].mxu0
    %v3377 = vadd.f32 %v1465, %v3376
    %3378 = vmatprep.mubr.bf16.mxu0 %v1114
    %3379 = vmatmul.mubr.bf16.gmra.mrb[0].mxu0 %v1113
    %v3380 = vpop.f32.mrb[0].mxu0
    %v3381 = vadd.f32 %v1461, %v3380
    %v3382 = vpop.f32.mrb[0].mxu0
    %v3383 = vadd.f32 %v1465, %v3382
    %v3384 = vpop.f32.mrb[0].mxu0
    %v3385 = vadd.f32 %v1461, %v3384
    %v3386 = vpop.f32.mrb[0].mxu0
    %v3387 = vadd.f32 %v1465, %v3386
    %3388 = vmatprep.mubr.bf16.mxu0 %v1117
    %3389 = vmatmul.mubr.bf16.gmra.mrb[0].mxu0 %v1116
    %v3390 = vpop.f32.mrb[0].mxu0
    %v3391 = vadd.f32 %v1461, %v3390
    %v3392 = vpop.f32.mrb[0].mxu0
    %v3393 = vadd.f32 %v1465, %v3392
    %v3394 = vpop.f32.mrb[0].mxu0
    %v3395 = vadd.f32 %v1461, %v3394
    %v3396 = vpop.f32.mrb[0].mxu0
    %v3397 = vadd.f32 %v1465, %v3396
    %3398 = vmatprep.mubr.bf16.mxu0 %v1120
    %3399 = vmatmul.mubr.bf16.gmra.mrb[0].mxu0 %v1119
    %v3400 = vpop.f32.mrb[0].mxu0
    %v3401 = vadd.f32 %v1461, %v3400
    %v3402 = vpop.f32.mrb[0].mxu0
    %v3403 = vadd.f32 %v1465, %v3402
    %v3404 = vpop.f32.mrb[0].mxu0
    %v3405 = vadd.f32 %v1461, %v3404
    %v3406 = vpop.f32.mrb[0].mxu0
    %v3407 = vadd.f32 %v1465, %v3406
    %3408 = vmatprep.mubr.bf16.mxu0 %v1123
    %3409 = vmatmul.mubr.bf16.gmra.mrb[0].mxu0 %v1122
    %v3410 = vpop.f32.mrb[0].mxu0
    %v3411 = vadd.f32 %v1461, %v3410
    %v3412 = vpop.f32.mrb[0].mxu0
    %v3413 = vadd.f32 %v1465, %v3412
    %v3414 = vpop.f32.mrb[0].mxu0
    %v3415 = vadd.f32 %v1461, %v3414
    %v3416 = vpop.f32.mrb[0].mxu0
    %v3417 = vadd.f32 %v1465, %v3416
    %3418 = vmatprep.mubr.bf16.mxu0 %v1126
    %3419 = vmatmul.mubr.bf16.gmra.mrb[0].mxu0 %v1125
    %v3420 = vpop.f32.mrb[0].mxu0
    %v3421 = vadd.f32 %v1461, %v3420
    %v3422 = vpop.f32.mrb[0].mxu0
    %v3423 = vadd.f32 %v1465, %v3422
    %v3424 = vpop.f32.mrb[0].mxu0
    %v3425 = vadd.f32 %v1461, %v3424
    %v3426 = vpop.f32.mrb[0].mxu0
    %v3427 = vadd.f32 %v1465, %v3426
    %3428 = vmatprep.mubr.bf16.mxu0 %v1129
    %3429 = vmatmul.mubr.bf16.gmra.mrb[0].mxu0 %v1128
    %v3430 = vpop.f32.mrb[0].mxu0
    %v3431 = vadd.f32 %v1461, %v3430
    %v3432 = vpop.f32.mrb[0].mxu0
    %v3433 = vadd.f32 %v1465, %v3432
    %v3434 = vpop.f32.mrb[0].mxu0
    %v3435 = vadd.f32 %v1461, %v3434
    %v3436 = vpop.f32.mrb[0].mxu0
    %v3437 = vadd.f32 %v1465, %v3436
    %3438 = vmatprep.mubr.bf16.mxu0 %v1132
    %3439 = vmatmul.mubr.bf16.gmra.mrb[0].mxu0 %v1131
    %v3440 = vpop.f32.mrb[0].mxu0
    %v3441 = vadd.f32 %v1461, %v3440
    %v3442 = vpop.f32.mrb[0].mxu0
    %v3443 = vadd.f32 %v1465, %v3442
    %v3444 = vpop.f32.mrb[0].mxu0
    %v3445 = vadd.f32 %v1461, %v3444
    %v3446 = vpop.f32.mrb[0].mxu0
    %v3447 = vadd.f32 %v1465, %v3446
    %3448 = vmatprep.mubr.bf16.mxu0 %v1135
    %3449 = vmatmul.mubr.bf16.gmra.mrb[0].mxu0 %v1134
    %v3450 = vpop.f32.mrb[0].mxu0
    %v3451 = vadd.f32 %v1461, %v3450
    %v3452 = vpop.f32.mrb[0].mxu0
    %v3453 = vadd.f32 %v1465, %v3452
    %v3454 = vpop.f32.mrb[0].mxu0
    %v3455 = vadd.f32 %v1461, %v3454
    %v3456 = vpop.f32.mrb[0].mxu0
    %v3457 = vadd.f32 %v1465, %v3456
    %3458 = vmatprep.mubr.bf16.mxu0 %v1138
    %3459 = vmatmul.mubr.bf16.gmra.mrb[0].mxu0 %v1137
    %v3460 = vpop.f32.mrb[0].mxu0
    %v3461 = vadd.f32 %v1461, %v3460
    %v3462 = vpop.f32.mrb[0].mxu0
    %v3463 = vadd.f32 %v1465, %v3462
    %v3464 = vpop.f32.mrb[0].mxu0
    %v3465 = vadd.f32 %v1461, %v3464
    %v3466 = vpop.f32.mrb[0].mxu0
    %v3467 = vadd.f32 %v1465, %v3466
    %3468 = vmatprep.mubr.bf16.mxu0 %v1141
    %3469 = vmatmul.mubr.bf16.gmra.mrb[0].mxu0 %v1140
    %v3470 = vpop.f32.mrb[0].mxu0
    %v3471 = vadd.f32 %v1461, %v3470
    %v3472 = vpop.f32.mrb[0].mxu0
    %v3473 = vadd.f32 %v1465, %v3472
    %v3474 = vpop.f32.mrb[0].mxu0
    %v3475 = vadd.f32 %v1461, %v3474
    %v3476 = vpop.f32.mrb[0].mxu0
    %v3477 = vadd.f32 %v1465, %v3476
    %3478 = vmatprep.mubr.bf16.mxu0 %v1144
    %3479 = vmatmul.mubr.bf16.gmra.mrb[0].mxu0 %v1143
    %v3480 = vpop.f32.mrb[0].mxu0
    %v3481 = vadd.f32 %v1461, %v3480
    %v3482 = vpop.f32.mrb[0].mxu0
    %v3483 = vadd.f32 %v1465, %v3482
    %v3484 = vpop.f32.mrb[0].mxu0
    %v3485 = vadd.f32 %v1461, %v3484
    %v3486 = vpop.f32.mrb[0].mxu0
    %v3487 = vadd.f32 %v1465, %v3486
    %3488 = vmatprep.mubr.bf16.mxu0 %v1147
    %3489 = vmatmul.mubr.bf16.gmra.mrb[0].mxu0 %v1146
    %v3490 = vpop.f32.mrb[0].mxu0
    %v3491 = vadd.f32 %v1461, %v3490
    %v3492 = vpop.f32.mrb[0].mxu0
    %v3493 = vadd.f32 %v1465, %v3492
    %v3494 = vpop.f32.mrb[0].mxu0
    %v3495 = vadd.f32 %v1461, %v3494
    %v3496 = vpop.f32.mrb[0].mxu0
    %v3497 = vadd.f32 %v1465, %v3496
    %3498 = vmatprep.mubr.bf16.mxu0 %v1150
    %3499 = vmatmul.mubr.bf16.gmra.mrb[0].mxu0 %v1149
    %v3500 = vpop.f32.mrb[0].mxu0
    %v3501 = vadd.f32 %v1461, %v3500
    %v3502 = vpop.f32.mrb[0].mxu0
    %v3503 = vadd.f32 %v1465, %v3502
    %v3504 = vpop.f32.mrb[0].mxu0
    %v3505 = vadd.f32 %v1461, %v3504
    %v3506 = vpop.f32.mrb[0].mxu0
    %v3507 = vadd.f32 %v1465, %v3506
    %3508 = vmatprep.mubr.bf16.mxu0 %v1153
    %3509 = vmatmul.mubr.bf16.gmra.mrb[0].mxu0 %v1152
    %v3510 = vpop.f32.mrb[0].mxu0
    %v3511 = vadd.f32 %v1461, %v3510
    %v3512 = vpop.f32.mrb[0].mxu0
    %v3513 = vadd.f32 %v1465, %v3512
    %v3514 = vpop.f32.mrb[0].mxu0
    %v3515 = vadd.f32 %v1461, %v3514
    %v3516 = vpop.f32.mrb[0].mxu0
    %v3517 = vadd.f32 %v1465, %v3516
    %3518 = vmatprep.mubr.bf16.mxu0 %v1156
    %3519 = vmatmul.mubr.bf16.gmra.mrb[0].mxu0 %v1155
    %v3520 = vpop.f32.mrb[0].mxu0
    %v3521 = vadd.f32 %v1461, %v3520
    %v3522 = vpop.f32.mrb[0].mxu0
    %v3523 = vadd.f32 %v1465, %v3522
    %v3524 = vpop.f32.mrb[0].mxu0
    %v3525 = vadd.f32 %v1461, %v3524
    %v3526 = vpop.f32.mrb[0].mxu0
    %v3527 = vadd.f32 %v1465, %v3526
    %3528 = vdwg.mxu0
    %3529 = vmatprep.subr.bf16.mxu0 %v2569
    %3530 = vmatpush1.bf16.msra.mxu0 %v2568
    %3531 = vmatprep.subr.bf16.mxu0 %v2581
    %3532 = vmatpush1.bf16.msra.mxu0 %v2580
    %3533 = vmatprep.subr.bf16.mxu0 %v2593
    %3534 = vmatpush1.bf16.msra.mxu0 %v2592
    %3535 = vmatprep.subr.bf16.mxu0 %v2605
    %3536 = vmatpush1.bf16.msra.mxu0 %v2604
    %3537 = vmatprep.subr.bf16.mxu0 %v2617
    %3538 = vmatpush1.bf16.msra.mxu0 %v2616
    %3539 = vmatprep.subr.bf16.mxu0 %v2629
    %3540 = vmatpush1.bf16.msra.mxu0 %v2628
    %3541 = vmatprep.subr.bf16.mxu0 %v2641
    %3542 = vmatpush1.bf16.msra.mxu0 %v2640
    %3543 = vmatprep.subr.bf16.mxu0 %v2653
    %3544 = vmatpush1.bf16.msra.mxu0 %v2652
    %3545 = vmatprep.subr.bf16.mxu0 0
    %3546 = vmatpush1.bf16.msra.mxu0 0
    %3547 = vmatprep.subr.bf16.mxu0 0
    %3548 = vmatpush1.bf16.msra.mxu0 0
    %3549 = vmatprep.subr.bf16.mxu0 0
    %3550 = vmatpush1.bf16.msra.mxu0 0
    %3551 = vmatprep.subr.bf16.mxu0 0
    %3552 = vmatpush1.bf16.msra.mxu0 0
    %3553 = vmatprep.subr.bf16.mxu0 0
    %3554 = vmatpush1.bf16.msra.mxu0 0
    %3555 = vmatprep.subr.bf16.mxu0 0
    %3556 = vmatpush1.bf16.msra.mxu0 0
    %3557 = vmatprep.subr.bf16.mxu0 0
    %3558 = vmatpush1.bf16.msra.mxu0 0
    %3559 = vmatprep.subr.bf16.mxu0 0
    %3560 = vmatpush1.bf16.msra.mxu0 0
    %3561 = vmatprep.mubr.bf16.mxu0 0
    %3562 = vmatmul.mubr.bf16.gmra.mrb[0].mxu0 %v1112
    %v3563 = vpop.f32.mrb[0].mxu0
    %v3564 = vadd.f32 %v3371, %v3563
    %v3565 = vpop.f32.mrb[0].mxu0
    %v3566 = vadd.f32 %v3373, %v3565
    %v3567 = vpop.f32.mrb[0].mxu0
    %v3568 = vadd.f32 %v3375, %v3567
    %v3569 = vpop.f32.mrb[0].mxu0
    %v3570 = vadd.f32 %v3377, %v3569
    %3571 = vmatprep.mubr.bf16.mxu0 0
    %3572 = vmatmul.mubr.bf16.gmra.mrb[0].mxu0 %v1115
    %v3573 = vpop.f32.mrb[0].mxu0
    %v3574 = vadd.f32 %v3381, %v3573
    %v3575 = vpop.f32.mrb[0].mxu0
    %v3576 = vadd.f32 %v3383, %v3575
    %v3577 = vpop.f32.mrb[0].mxu0
    %v3578 = vadd.f32 %v3385, %v3577
    %v3579 = vpop.f32.mrb[0].mxu0
    %v3580 = vadd.f32 %v3387, %v3579
    %3581 = vmatprep.mubr.bf16.mxu0 0
    %3582 = vmatmul.mubr.bf16.gmra.mrb[0].mxu0 %v1118
    %v3583 = vpop.f32.mrb[0].mxu0
    %v3584 = vadd.f32 %v3391, %v3583
    %v3585 = vpop.f32.mrb[0].mxu0
    %v3586 = vadd.f32 %v3393, %v3585
    %v3587 = vpop.f32.mrb[0].mxu0
    %v3588 = vadd.f32 %v3395, %v3587
    %v3589 = vpop.f32.mrb[0].mxu0
    %v3590 = vadd.f32 %v3397, %v3589
    %3591 = vmatprep.mubr.bf16.mxu0 0
    %3592 = vmatmul.mubr.bf16.gmra.mrb[0].mxu0 %v1121
    %v3593 = vpop.f32.mrb[0].mxu0
    %v3594 = vadd.f32 %v3401, %v3593
    %v3595 = vpop.f32.mrb[0].mxu0
    %v3596 = vadd.f32 %v3403, %v3595
    %v3597 = vpop.f32.mrb[0].mxu0
    %v3598 = vadd.f32 %v3405, %v3597
    %v3599 = vpop.f32.mrb[0].mxu0
    %v3600 = vadd.f32 %v3407, %v3599
    %3601 = vmatprep.mubr.bf16.mxu0 0
    %3602 = vmatmul.mubr.bf16.gmra.mrb[0].mxu0 %v1124
    %v3603 = vpop.f32.mrb[0].mxu0
    %v3604 = vadd.f32 %v3411, %v3603
    %v3605 = vpop.f32.mrb[0].mxu0
    %v3606 = vadd.f32 %v3413, %v3605
    %v3607 = vpop.f32.mrb[0].mxu0
    %v3608 = vadd.f32 %v3415, %v3607
    %v3609 = vpop.f32.mrb[0].mxu0
    %v3610 = vadd.f32 %v3417, %v3609
    %3611 = vmatprep.mubr.bf16.mxu0 0
    %3612 = vmatmul.mubr.bf16.gmra.mrb[0].mxu0 %v1127
    %v3613 = vpop.f32.mrb[0].mxu0
    %v3614 = vadd.f32 %v3421, %v3613
    %v3615 = vpop.f32.mrb[0].mxu0
    %v3616 = vadd.f32 %v3423, %v3615
    %v3617 = vpop.f32.mrb[0].mxu0
    %v3618 = vadd.f32 %v3425, %v3617
    %v3619 = vpop.f32.mrb[0].mxu0
    %v3620 = vadd.f32 %v3427, %v3619
    %3621 = vmatprep.mubr.bf16.mxu0 0
    %3622 = vmatmul.mubr.bf16.gmra.mrb[0].mxu0 %v1130
    %v3623 = vpop.f32.mrb[0].mxu0
    %v3624 = vadd.f32 %v3431, %v3623
    %v3625 = vpop.f32.mrb[0].mxu0
    %v3626 = vadd.f32 %v3433, %v3625
    %v3627 = vpop.f32.mrb[0].mxu0
    %v3628 = vadd.f32 %v3435, %v3627
    %v3629 = vpop.f32.mrb[0].mxu0
    %v3630 = vadd.f32 %v3437, %v3629
    %3631 = vmatprep.mubr.bf16.mxu0 0
    %3632 = vmatmul.mubr.bf16.gmra.mrb[0].mxu0 %v1133
    %v3633 = vpop.f32.mrb[0].mxu0
    %v3634 = vadd.f32 %v3441, %v3633
    %v3635 = vpop.f32.mrb[0].mxu0
    %v3636 = vadd.f32 %v3443, %v3635
    %v3637 = vpop.f32.mrb[0].mxu0
    %v3638 = vadd.f32 %v3445, %v3637
    %v3639 = vpop.f32.mrb[0].mxu0
    %v3640 = vadd.f32 %v3447, %v3639
    %3641 = vmatprep.mubr.bf16.mxu0 0
    %3642 = vmatmul.mubr.bf16.gmra.mrb[0].mxu0 %v1136
    %v3643 = vpop.f32.mrb[0].mxu0
    %v3644 = vadd.f32 %v3451, %v3643
    %v3645 = vpop.f32.mrb[0].mxu0
    %v3646 = vadd.f32 %v3453, %v3645
    %v3647 = vpop.f32.mrb[0].mxu0
    %v3648 = vadd.f32 %v3455, %v3647
    %v3649 = vpop.f32.mrb[0].mxu0
    %v3650 = vadd.f32 %v3457, %v3649
    %3651 = vmatprep.mubr.bf16.mxu0 0
    %3652 = vmatmul.mubr.bf16.gmra.mrb[0].mxu0 %v1139
    %v3653 = vpop.f32.mrb[0].mxu0
    %v3654 = vadd.f32 %v3461, %v3653
    %v3655 = vpop.f32.mrb[0].mxu0
    %v3656 = vadd.f32 %v3463, %v3655
    %v3657 = vpop.f32.mrb[0].mxu0
    %v3658 = vadd.f32 %v3465, %v3657
    %v3659 = vpop.f32.mrb[0].mxu0
    %v3660 = vadd.f32 %v3467, %v3659
    %3661 = vmatprep.mubr.bf16.mxu0 0
    %3662 = vmatmul.mubr.bf16.gmra.mrb[0].mxu0 %v1142
    %v3663 = vpop.f32.mrb[0].mxu0
    %v3664 = vadd.f32 %v3471, %v3663
    %v3665 = vpop.f32.mrb[0].mxu0
    %v3666 = vadd.f32 %v3473, %v3665
    %v3667 = vpop.f32.mrb[0].mxu0
    %v3668 = vadd.f32 %v3475, %v3667
    %v3669 = vpop.f32.mrb[0].mxu0
    %v3670 = vadd.f32 %v3477, %v3669
    %3671 = vmatprep.mubr.bf16.mxu0 0
    %3672 = vmatmul.mubr.bf16.gmra.mrb[0].mxu0 %v1145
    %v3673 = vpop.f32.mrb[0].mxu0
    %v3674 = vadd.f32 %v3481, %v3673
    %v3675 = vpop.f32.mrb[0].mxu0
    %v3676 = vadd.f32 %v3483, %v3675
    %v3677 = vpop.f32.mrb[0].mxu0
    %v3678 = vadd.f32 %v3485, %v3677
    %v3679 = vpop.f32.mrb[0].mxu0
    %v3680 = vadd.f32 %v3487, %v3679
    %3681 = vmatprep.mubr.bf16.mxu0 0
    %3682 = vmatmul.mubr.bf16.gmra.mrb[0].mxu0 %v1148
    %v3683 = vpop.f32.mrb[0].mxu0
    %v3684 = vadd.f32 %v3491, %v3683
    %v3685 = vpop.f32.mrb[0].mxu0
    %v3686 = vadd.f32 %v3493, %v3685
    %v3687 = vpop.f32.mrb[0].mxu0
    %v3688 = vadd.f32 %v3495, %v3687
    %v3689 = vpop.f32.mrb[0].mxu0
    %v3690 = vadd.f32 %v3497, %v3689
    %3691 = vmatprep.mubr.bf16.mxu0 0
    %3692 = vmatmul.mubr.bf16.gmra.mrb[0].mxu0 %v1151
    %v3693 = vpop.f32.mrb[0].mxu0
    %v3694 = vadd.f32 %v3501, %v3693
    %v3695 = vpop.f32.mrb[0].mxu0
    %v3696 = vadd.f32 %v3503, %v3695
    %v3697 = vpop.f32.mrb[0].mxu0
    %v3698 = vadd.f32 %v3505, %v3697
    %v3699 = vpop.f32.mrb[0].mxu0
    %v3700 = vadd.f32 %v3507, %v3699
    %3701 = vmatprep.mubr.bf16.mxu0 0
    %3702 = vmatmul.mubr.bf16.gmra.mrb[0].mxu0 %v1154
    %v3703 = vpop.f32.mrb[0].mxu0
    %v3704 = vadd.f32 %v3511, %v3703
    %v3705 = vpop.f32.mrb[0].mxu0
    %v3706 = vadd.f32 %v3513, %v3705
    %v3707 = vpop.f32.mrb[0].mxu0
    %v3708 = vadd.f32 %v3515, %v3707
    %v3709 = vpop.f32.mrb[0].mxu0
    %v3710 = vadd.f32 %v3517, %v3709
    %3711 = vmatprep.mubr.bf16.mxu0 0
    %3712 = vmatmul.mubr.bf16.gmra.mrb[0].mxu0 %v1157
    %v3713 = vpop.f32.mrb[0].mxu0
    %v3714 = vadd.f32 %v3521, %v3713
    %v3715 = vpop.f32.mrb[0].mxu0
    %v3716 = vadd.f32 %v3523, %v3715
    %v3717 = vpop.f32.mrb[0].mxu0
    %v3718 = vadd.f32 %v3525, %v3717
    %v3719 = vpop.f32.mrb[0].mxu0
    %v3720 = vadd.f32 %v3527, %v3719
    %3721 = vdwg.mxu0
    %3722 = vmatprep.subr.bf16.mxu0 %v2379
    %3723 = vmatpush1.bf16.msra.mxu0 %v2378
    %3724 = vmatprep.subr.bf16.mxu0 %v2391
    %3725 = vmatpush1.bf16.msra.mxu0 %v2390
    %3726 = vmatprep.subr.bf16.mxu0 %v2403
    %3727 = vmatpush1.bf16.msra.mxu0 %v2402
    %3728 = vmatprep.subr.bf16.mxu0 %v2415
    %3729 = vmatpush1.bf16.msra.mxu0 %v2414
    %3730 = vmatprep.subr.bf16.mxu0 %v2427
    %3731 = vmatpush1.bf16.msra.mxu0 %v2426
    %3732 = vmatprep.subr.bf16.mxu0 %v2439
    %3733 = vmatpush1.bf16.msra.mxu0 %v2438
    %3734 = vmatprep.subr.bf16.mxu0 %v2451
    %3735 = vmatpush1.bf16.msra.mxu0 %v2450
    %3736 = vmatprep.subr.bf16.mxu0 %v2463
    %3737 = vmatpush1.bf16.msra.mxu0 %v2462
    %3738 = vmatprep.subr.bf16.mxu0 %v2475
    %3739 = vmatpush1.bf16.msra.mxu0 %v2474
    %3740 = vmatprep.subr.bf16.mxu0 %v2487
    %3741 = vmatpush1.bf16.msra.mxu0 %v2486
    %3742 = vmatprep.subr.bf16.mxu0 %v2499
    %3743 = vmatpush1.bf16.msra.mxu0 %v2498
    %3744 = vmatprep.subr.bf16.mxu0 %v2511
    %3745 = vmatpush1.bf16.msra.mxu0 %v2510
    %3746 = vmatprep.subr.bf16.mxu0 %v2523
    %3747 = vmatpush1.bf16.msra.mxu0 %v2522
    %3748 = vmatprep.subr.bf16.mxu0 %v2535
    %3749 = vmatpush1.bf16.msra.mxu0 %v2534
    %3750 = vmatprep.subr.bf16.mxu0 %v2547
    %3751 = vmatpush1.bf16.msra.mxu0 %v2546
    %3752 = vmatprep.subr.bf16.mxu0 %v2559
    %3753 = vmatpush1.bf16.msra.mxu0 %v2558
    %3754 = vmatprep.mubr.bf16.mxu0 %v1111
    %3755 = vmatmul.mubr.bf16.gmra.mrb[0].mxu0 %v1110
    %v3756 = vpop.f32.mrb[0].mxu0
    %v3757 = vadd.f32 %v1469, %v3756
    %v3758 = vpop.f32.mrb[0].mxu0
    %v3759 = vadd.f32 %v1473, %v3758
    %v3760 = vpop.f32.mrb[0].mxu0
    %v3761 = vadd.f32 %v1469, %v3760
    %v3762 = vpop.f32.mrb[0].mxu0
    %v3763 = vadd.f32 %v1473, %v3762
    %3764 = vmatprep.mubr.bf16.mxu0 %v1114
    %3765 = vmatmul.mubr.bf16.gmra.mrb[0].mxu0 %v1113
    %v3766 = vpop.f32.mrb[0].mxu0
    %v3767 = vadd.f32 %v1469, %v3766
    %v3768 = vpop.f32.mrb[0].mxu0
    %v3769 = vadd.f32 %v1473, %v3768
    %v3770 = vpop.f32.mrb[0].mxu0
    %v3771 = vadd.f32 %v1469, %v3770
    %v3772 = vpop.f32.mrb[0].mxu0
    %v3773 = vadd.f32 %v1473, %v3772
    %3774 = vmatprep.mubr.bf16.mxu0 %v1117
    %3775 = vmatmul.mubr.bf16.gmra.mrb[0].mxu0 %v1116
    %v3776 = vpop.f32.mrb[0].mxu0
    %v3777 = vadd.f32 %v1469, %v3776
    %v3778 = vpop.f32.mrb[0].mxu0
    %v3779 = vadd.f32 %v1473, %v3778
    %v3780 = vpop.f32.mrb[0].mxu0
    %v3781 = vadd.f32 %v1469, %v3780
    %v3782 = vpop.f32.mrb[0].mxu0
    %v3783 = vadd.f32 %v1473, %v3782
    %3784 = vmatprep.mubr.bf16.mxu0 %v1120
    %3785 = vmatmul.mubr.bf16.gmra.mrb[0].mxu0 %v1119
    %v3786 = vpop.f32.mrb[0].mxu0
    %v3787 = vadd.f32 %v1469, %v3786
    %v3788 = vpop.f32.mrb[0].mxu0
    %v3789 = vadd.f32 %v1473, %v3788
    %v3790 = vpop.f32.mrb[0].mxu0
    %v3791 = vadd.f32 %v1469, %v3790
    %v3792 = vpop.f32.mrb[0].mxu0
    %v3793 = vadd.f32 %v1473, %v3792
    %3794 = vmatprep.mubr.bf16.mxu0 %v1123
    %3795 = vmatmul.mubr.bf16.gmra.mrb[0].mxu0 %v1122
    %v3796 = vpop.f32.mrb[0].mxu0
    %v3797 = vadd.f32 %v1469, %v3796
    %v3798 = vpop.f32.mrb[0].mxu0
    %v3799 = vadd.f32 %v1473, %v3798
    %v3800 = vpop.f32.mrb[0].mxu0
    %v3801 = vadd.f32 %v1469, %v3800
    %v3802 = vpop.f32.mrb[0].mxu0
    %v3803 = vadd.f32 %v1473, %v3802
    %3804 = vmatprep.mubr.bf16.mxu0 %v1126
    %3805 = vmatmul.mubr.bf16.gmra.mrb[0].mxu0 %v1125
    %v3806 = vpop.f32.mrb[0].mxu0
    %v3807 = vadd.f32 %v1469, %v3806
    %v3808 = vpop.f32.mrb[0].mxu0
    %v3809 = vadd.f32 %v1473, %v3808
    %v3810 = vpop.f32.mrb[0].mxu0
    %v3811 = vadd.f32 %v1469, %v3810
    %v3812 = vpop.f32.mrb[0].mxu0
    %v3813 = vadd.f32 %v1473, %v3812
    %3814 = vmatprep.mubr.bf16.mxu0 %v1129
    %3815 = vmatmul.mubr.bf16.gmra.mrb[0].mxu0 %v1128
    %v3816 = vpop.f32.mrb[0].mxu0
    %v3817 = vadd.f32 %v1469, %v3816
    %v3818 = vpop.f32.mrb[0].mxu0
    %v3819 = vadd.f32 %v1473, %v3818
    %v3820 = vpop.f32.mrb[0].mxu0
    %v3821 = vadd.f32 %v1469, %v3820
    %v3822 = vpop.f32.mrb[0].mxu0
    %v3823 = vadd.f32 %v1473, %v3822
    %3824 = vmatprep.mubr.bf16.mxu0 %v1132
    %3825 = vmatmul.mubr.bf16.gmra.mrb[0].mxu0 %v1131
    %v3826 = vpop.f32.mrb[0].mxu0
    %v3827 = vadd.f32 %v1469, %v3826
    %v3828 = vpop.f32.mrb[0].mxu0
    %v3829 = vadd.f32 %v1473, %v3828
    %v3830 = vpop.f32.mrb[0].mxu0
    %v3831 = vadd.f32 %v1469, %v3830
    %v3832 = vpop.f32.mrb[0].mxu0
    %v3833 = vadd.f32 %v1473, %v3832
    %3834 = vmatprep.mubr.bf16.mxu0 %v1135
    %3835 = vmatmul.mubr.bf16.gmra.mrb[0].mxu0 %v1134
    %v3836 = vpop.f32.mrb[0].mxu0
    %v3837 = vadd.f32 %v1469, %v3836
    %v3838 = vpop.f32.mrb[0].mxu0
    %v3839 = vadd.f32 %v1473, %v3838
    %v3840 = vpop.f32.mrb[0].mxu0
    %v3841 = vadd.f32 %v1469, %v3840
    %v3842 = vpop.f32.mrb[0].mxu0
    %v3843 = vadd.f32 %v1473, %v3842
    %3844 = vmatprep.mubr.bf16.mxu0 %v1138
    %3845 = vmatmul.mubr.bf16.gmra.mrb[0].mxu0 %v1137
    %v3846 = vpop.f32.mrb[0].mxu0
    %v3847 = vadd.f32 %v1469, %v3846
    %v3848 = vpop.f32.mrb[0].mxu0
    %v3849 = vadd.f32 %v1473, %v3848
    %v3850 = vpop.f32.mrb[0].mxu0
    %v3851 = vadd.f32 %v1469, %v3850
    %v3852 = vpop.f32.mrb[0].mxu0
    %v3853 = vadd.f32 %v1473, %v3852
    %3854 = vmatprep.mubr.bf16.mxu0 %v1141
    %3855 = vmatmul.mubr.bf16.gmra.mrb[0].mxu0 %v1140
    %v3856 = vpop.f32.mrb[0].mxu0
    %v3857 = vadd.f32 %v1469, %v3856
    %v3858 = vpop.f32.mrb[0].mxu0
    %v3859 = vadd.f32 %v1473, %v3858
    %v3860 = vpop.f32.mrb[0].mxu0
    %v3861 = vadd.f32 %v1469, %v3860
    %v3862 = vpop.f32.mrb[0].mxu0
    %v3863 = vadd.f32 %v1473, %v3862
    %3864 = vmatprep.mubr.bf16.mxu0 %v1144
    %3865 = vmatmul.mubr.bf16.gmra.mrb[0].mxu0 %v1143
    %v3866 = vpop.f32.mrb[0].mxu0
    %v3867 = vadd.f32 %v1469, %v3866
    %v3868 = vpop.f32.mrb[0].mxu0
    %v3869 = vadd.f32 %v1473, %v3868
    %v3870 = vpop.f32.mrb[0].mxu0
    %v3871 = vadd.f32 %v1469, %v3870
    %v3872 = vpop.f32.mrb[0].mxu0
    %v3873 = vadd.f32 %v1473, %v3872
    %3874 = vmatprep.mubr.bf16.mxu0 %v1147
    %3875 = vmatmul.mubr.bf16.gmra.mrb[0].mxu0 %v1146
    %v3876 = vpop.f32.mrb[0].mxu0
    %v3877 = vadd.f32 %v1469, %v3876
    %v3878 = vpop.f32.mrb[0].mxu0
    %v3879 = vadd.f32 %v1473, %v3878
    %v3880 = vpop.f32.mrb[0].mxu0
    %v3881 = vadd.f32 %v1469, %v3880
    %v3882 = vpop.f32.mrb[0].mxu0
    %v3883 = vadd.f32 %v1473, %v3882
    %3884 = vmatprep.mubr.bf16.mxu0 %v1150
    %3885 = vmatmul.mubr.bf16.gmra.mrb[0].mxu0 %v1149
    %v3886 = vpop.f32.mrb[0].mxu0
    %v3887 = vadd.f32 %v1469, %v3886
    %v3888 = vpop.f32.mrb[0].mxu0
    %v3889 = vadd.f32 %v1473, %v3888
    %v3890 = vpop.f32.mrb[0].mxu0
    %v3891 = vadd.f32 %v1469, %v3890
    %v3892 = vpop.f32.mrb[0].mxu0
    %v3893 = vadd.f32 %v1473, %v3892
    %3894 = vmatprep.mubr.bf16.mxu0 %v1153
    %3895 = vmatmul.mubr.bf16.gmra.mrb[0].mxu0 %v1152
    %v3896 = vpop.f32.mrb[0].mxu0
    %v3897 = vadd.f32 %v1469, %v3896
    %v3898 = vpop.f32.mrb[0].mxu0
    %v3899 = vadd.f32 %v1473, %v3898
    %v3900 = vpop.f32.mrb[0].mxu0
    %v3901 = vadd.f32 %v1469, %v3900
    %v3902 = vpop.f32.mrb[0].mxu0
    %v3903 = vadd.f32 %v1473, %v3902
    %3904 = vmatprep.mubr.bf16.mxu0 %v1156
    %3905 = vmatmul.mubr.bf16.gmra.mrb[0].mxu0 %v1155
    %v3906 = vpop.f32.mrb[0].mxu0
    %v3907 = vadd.f32 %v1469, %v3906
    %v3908 = vpop.f32.mrb[0].mxu0
    %v3909 = vadd.f32 %v1473, %v3908
    %v3910 = vpop.f32.mrb[0].mxu0
    %v3911 = vadd.f32 %v1469, %v3910
    %v3912 = vpop.f32.mrb[0].mxu0
    %v3913 = vadd.f32 %v1473, %v3912
    %3914 = vdwg.mxu0
    %3915 = vmatprep.subr.bf16.mxu0 %v2571
    %3916 = vmatpush1.bf16.msra.mxu0 %v2570
    %3917 = vmatprep.subr.bf16.mxu0 %v2583
    %3918 = vmatpush1.bf16.msra.mxu0 %v2582
    %3919 = vmatprep.subr.bf16.mxu0 %v2595
    %3920 = vmatpush1.bf16.msra.mxu0 %v2594
    %3921 = vmatprep.subr.bf16.mxu0 %v2607
    %3922 = vmatpush1.bf16.msra.mxu0 %v2606
    %3923 = vmatprep.subr.bf16.mxu0 %v2619
    %3924 = vmatpush1.bf16.msra.mxu0 %v2618
    %3925 = vmatprep.subr.bf16.mxu0 %v2631
    %3926 = vmatpush1.bf16.msra.mxu0 %v2630
    %3927 = vmatprep.subr.bf16.mxu0 %v2643
    %3928 = vmatpush1.bf16.msra.mxu0 %v2642
    %3929 = vmatprep.subr.bf16.mxu0 %v2655
    %3930 = vmatpush1.bf16.msra.mxu0 %v2654
    %3931 = vmatprep.subr.bf16.mxu0 0
    %3932 = vmatpush1.bf16.msra.mxu0 0
    %3933 = vmatprep.subr.bf16.mxu0 0
    %3934 = vmatpush1.bf16.msra.mxu0 0
    %3935 = vmatprep.subr.bf16.mxu0 0
    %3936 = vmatpush1.bf16.msra.mxu0 0
    %3937 = vmatprep.subr.bf16.mxu0 0
    %3938 = vmatpush1.bf16.msra.mxu0 0
    %3939 = vmatprep.subr.bf16.mxu0 0
    %3940 = vmatpush1.bf16.msra.mxu0 0
    %3941 = vmatprep.subr.bf16.mxu0 0
    %3942 = vmatpush1.bf16.msra.mxu0 0
    %3943 = vmatprep.subr.bf16.mxu0 0
    %3944 = vmatpush1.bf16.msra.mxu0 0
    %3945 = vmatprep.subr.bf16.mxu0 0
    %3946 = vmatpush1.bf16.msra.mxu0 0
    %3947 = vmatprep.mubr.bf16.mxu0 0
    %3948 = vmatmul.mubr.bf16.gmra.mrb[0].mxu0 %v1112
    %v3949 = vpop.f32.mrb[0].mxu0
    %v3950 = vadd.f32 %v3757, %v3949
    %v3951 = vpop.f32.mrb[0].mxu0
    %v3952 = vadd.f32 %v3759, %v3951
    %v3953 = vpop.f32.mrb[0].mxu0
    %v3954 = vadd.f32 %v3761, %v3953
    %v3955 = vpop.f32.mrb[0].mxu0
    %v3956 = vadd.f32 %v3763, %v3955
    %3957 = vmatprep.mubr.bf16.mxu0 0
    %3958 = vmatmul.mubr.bf16.gmra.mrb[0].mxu0 %v1115
    %v3959 = vpop.f32.mrb[0].mxu0
    %v3960 = vadd.f32 %v3767, %v3959
    %v3961 = vpop.f32.mrb[0].mxu0
    %v3962 = vadd.f32 %v3769, %v3961
    %v3963 = vpop.f32.mrb[0].mxu0
    %v3964 = vadd.f32 %v3771, %v3963
    %v3965 = vpop.f32.mrb[0].mxu0
    %v3966 = vadd.f32 %v3773, %v3965
    %3967 = vmatprep.mubr.bf16.mxu0 0
    %3968 = vmatmul.mubr.bf16.gmra.mrb[0].mxu0 %v1118
    %v3969 = vpop.f32.mrb[0].mxu0
    %v3970 = vadd.f32 %v3777, %v3969
    %v3971 = vpop.f32.mrb[0].mxu0
    %v3972 = vadd.f32 %v3779, %v3971
    %v3973 = vpop.f32.mrb[0].mxu0
    %v3974 = vadd.f32 %v3781, %v3973
    %v3975 = vpop.f32.mrb[0].mxu0
    %v3976 = vadd.f32 %v3783, %v3975
    %3977 = vmatprep.mubr.bf16.mxu0 0
    %3978 = vmatmul.mubr.bf16.gmra.mrb[0].mxu0 %v1121
    %v3979 = vpop.f32.mrb[0].mxu0
    %v3980 = vadd.f32 %v3787, %v3979
    %v3981 = vpop.f32.mrb[0].mxu0
    %v3982 = vadd.f32 %v3789, %v3981
    %v3983 = vpop.f32.mrb[0].mxu0
    %v3984 = vadd.f32 %v3791, %v3983
    %v3985 = vpop.f32.mrb[0].mxu0
    %v3986 = vadd.f32 %v3793, %v3985
    %3987 = vmatprep.mubr.bf16.mxu0 0
    %3988 = vmatmul.mubr.bf16.gmra.mrb[0].mxu0 %v1124
    %v3989 = vpop.f32.mrb[0].mxu0
    %v3990 = vadd.f32 %v3797, %v3989
    %v3991 = vpop.f32.mrb[0].mxu0
    %v3992 = vadd.f32 %v3799, %v3991
    %v3993 = vpop.f32.mrb[0].mxu0
    %v3994 = vadd.f32 %v3801, %v3993
    %v3995 = vpop.f32.mrb[0].mxu0
    %v3996 = vadd.f32 %v3803, %v3995
    %3997 = vmatprep.mubr.bf16.mxu0 0
    %3998 = vmatmul.mubr.bf16.gmra.mrb[0].mxu0 %v1127
    %v3999 = vpop.f32.mrb[0].mxu0
    %v4000 = vadd.f32 %v3807, %v3999
    %v4001 = vpop.f32.mrb[0].mxu0
    %v4002 = vadd.f32 %v3809, %v4001
    %v4003 = vpop.f32.mrb[0].mxu0
    %v4004 = vadd.f32 %v3811, %v4003
    %v4005 = vpop.f32.mrb[0].mxu0
    %v4006 = vadd.f32 %v3813, %v4005
    %4007 = vmatprep.mubr.bf16.mxu0 0
    %4008 = vmatmul.mubr.bf16.gmra.mrb[0].mxu0 %v1130
    %v4009 = vpop.f32.mrb[0].mxu0
    %v4010 = vadd.f32 %v3817, %v4009
    %v4011 = vpop.f32.mrb[0].mxu0
    %v4012 = vadd.f32 %v3819, %v4011
    %v4013 = vpop.f32.mrb[0].mxu0
    %v4014 = vadd.f32 %v3821, %v4013
    %v4015 = vpop.f32.mrb[0].mxu0
    %v4016 = vadd.f32 %v3823, %v4015
    %4017 = vmatprep.mubr.bf16.mxu0 0
    %4018 = vmatmul.mubr.bf16.gmra.mrb[0].mxu0 %v1133
    %v4019 = vpop.f32.mrb[0].mxu0
    %v4020 = vadd.f32 %v3827, %v4019
    %v4021 = vpop.f32.mrb[0].mxu0
    %v4022 = vadd.f32 %v3829, %v4021
    %v4023 = vpop.f32.mrb[0].mxu0
    %v4024 = vadd.f32 %v3831, %v4023
    %v4025 = vpop.f32.mrb[0].mxu0
    %v4026 = vadd.f32 %v3833, %v4025
    %4027 = vmatprep.mubr.bf16.mxu0 0
    %4028 = vmatmul.mubr.bf16.gmra.mrb[0].mxu0 %v1136
    %v4029 = vpop.f32.mrb[0].mxu0
    %v4030 = vadd.f32 %v3837, %v4029
    %v4031 = vpop.f32.mrb[0].mxu0
    %v4032 = vadd.f32 %v3839, %v4031
    %v4033 = vpop.f32.mrb[0].mxu0
    %v4034 = vadd.f32 %v3841, %v4033
    %v4035 = vpop.f32.mrb[0].mxu0
    %v4036 = vadd.f32 %v3843, %v4035
    %4037 = vmatprep.mubr.bf16.mxu0 0
    %4038 = vmatmul.mubr.bf16.gmra.mrb[0].mxu0 %v1139
    %v4039 = vpop.f32.mrb[0].mxu0
    %v4040 = vadd.f32 %v3847, %v4039
    %v4041 = vpop.f32.mrb[0].mxu0
    %v4042 = vadd.f32 %v3849, %v4041
    %v4043 = vpop.f32.mrb[0].mxu0
    %v4044 = vadd.f32 %v3851, %v4043
    %v4045 = vpop.f32.mrb[0].mxu0
    %v4046 = vadd.f32 %v3853, %v4045
    %4047 = vmatprep.mubr.bf16.mxu0 0
    %4048 = vmatmul.mubr.bf16.gmra.mrb[0].mxu0 %v1142
    %v4049 = vpop.f32.mrb[0].mxu0
    %v4050 = vadd.f32 %v3857, %v4049
    %v4051 = vpop.f32.mrb[0].mxu0
    %v4052 = vadd.f32 %v3859, %v4051
    %v4053 = vpop.f32.mrb[0].mxu0
    %v4054 = vadd.f32 %v3861, %v4053
    %v4055 = vpop.f32.mrb[0].mxu0
    %v4056 = vadd.f32 %v3863, %v4055
    %4057 = vmatprep.mubr.bf16.mxu0 0
    %4058 = vmatmul.mubr.bf16.gmra.mrb[0].mxu0 %v1145
    %v4059 = vpop.f32.mrb[0].mxu0
    %v4060 = vadd.f32 %v3867, %v4059
    %v4061 = vpop.f32.mrb[0].mxu0
    %v4062 = vadd.f32 %v3869, %v4061
    %v4063 = vpop.f32.mrb[0].mxu0
    %v4064 = vadd.f32 %v3871, %v4063
    %v4065 = vpop.f32.mrb[0].mxu0
    %v4066 = vadd.f32 %v3873, %v4065
    %4067 = vmatprep.mubr.bf16.mxu0 0
    %4068 = vmatmul.mubr.bf16.gmra.mrb[0].mxu0 %v1148
    %v4069 = vpop.f32.mrb[0].mxu0
    %v4070 = vadd.f32 %v3877, %v4069
    %v4071 = vpop.f32.mrb[0].mxu0
    %v4072 = vadd.f32 %v3879, %v4071
    %v4073 = vpop.f32.mrb[0].mxu0
    %v4074 = vadd.f32 %v3881, %v4073
    %v4075 = vpop.f32.mrb[0].mxu0
    %v4076 = vadd.f32 %v3883, %v4075
    %4077 = vmatprep.mubr.bf16.mxu0 0
    %4078 = vmatmul.mubr.bf16.gmra.mrb[0].mxu0 %v1151
    %v4079 = vpop.f32.mrb[0].mxu0
    %v4080 = vadd.f32 %v3887, %v4079
    %v4081 = vpop.f32.mrb[0].mxu0
    %v4082 = vadd.f32 %v3889, %v4081
    %v4083 = vpop.f32.mrb[0].mxu0
    %v4084 = vadd.f32 %v3891, %v4083
    %v4085 = vpop.f32.mrb[0].mxu0
    %v4086 = vadd.f32 %v3893, %v4085
    %4087 = vmatprep.mubr.bf16.mxu0 0
    %4088 = vmatmul.mubr.bf16.gmra.mrb[0].mxu0 %v1154
    %v4089 = vpop.f32.mrb[0].mxu0
    %v4090 = vadd.f32 %v3897, %v4089
    %v4091 = vpop.f32.mrb[0].mxu0
    %v4092 = vadd.f32 %v3899, %v4091
    %v4093 = vpop.f32.mrb[0].mxu0
    %v4094 = vadd.f32 %v3901, %v4093
    %v4095 = vpop.f32.mrb[0].mxu0
    %v4096 = vadd.f32 %v3903, %v4095
    %4097 = vmatprep.mubr.bf16.mxu0 0
    %4098 = vmatmul.mubr.bf16.gmra.mrb[0].mxu0 %v1157
    %v4099 = vpop.f32.mrb[0].mxu0
    %v4100 = vadd.f32 %v3907, %v4099
    %v4101 = vpop.f32.mrb[0].mxu0
    %v4102 = vadd.f32 %v3909, %v4101
    %v4103 = vpop.f32.mrb[0].mxu0
    %v4104 = vadd.f32 %v3911, %v4103
    %v4105 = vpop.f32.mrb[0].mxu0
    %v4106 = vadd.f32 %v3913, %v4105
    %4107 = vdwg.mxu0
    %4108 = vmatprep.subr.bf16.mxu0 %v2381
    %4109 = vmatpush1.bf16.msra.mxu0 %v2380
    %4110 = vmatprep.subr.bf16.mxu0 %v2393
    %4111 = vmatpush1.bf16.msra.mxu0 %v2392
    %4112 = vmatprep.subr.bf16.mxu0 %v2405
    %4113 = vmatpush1.bf16.msra.mxu0 %v2404
    %4114 = vmatprep.subr.bf16.mxu0 %v2417
    %4115 = vmatpush1.bf16.msra.mxu0 %v2416
    %4116 = vmatprep.subr.bf16.mxu0 %v2429
    %4117 = vmatpush1.bf16.msra.mxu0 %v2428
    %4118 = vmatprep.subr.bf16.mxu0 %v2441
    %4119 = vmatpush1.bf16.msra.mxu0 %v2440
    %4120 = vmatprep.subr.bf16.mxu0 %v2453
    %4121 = vmatpush1.bf16.msra.mxu0 %v2452
    %4122 = vmatprep.subr.bf16.mxu0 %v2465
    %4123 = vmatpush1.bf16.msra.mxu0 %v2464
    %4124 = vmatprep.subr.bf16.mxu0 %v2477
    %4125 = vmatpush1.bf16.msra.mxu0 %v2476
    %4126 = vmatprep.subr.bf16.mxu0 %v2489
    %4127 = vmatpush1.bf16.msra.mxu0 %v2488
    %4128 = vmatprep.subr.bf16.mxu0 %v2501
    %4129 = vmatpush1.bf16.msra.mxu0 %v2500
    %4130 = vmatprep.subr.bf16.mxu0 %v2513
    %4131 = vmatpush1.bf16.msra.mxu0 %v2512
    %4132 = vmatprep.subr.bf16.mxu0 %v2525
    %4133 = vmatpush1.bf16.msra.mxu0 %v2524
    %4134 = vmatprep.subr.bf16.mxu0 %v2537
    %4135 = vmatpush1.bf16.msra.mxu0 %v2536
    %4136 = vmatprep.subr.bf16.mxu0 %v2549
    %4137 = vmatpush1.bf16.msra.mxu0 %v2548
    %4138 = vmatprep.subr.bf16.mxu0 %v2561
    %4139 = vmatpush1.bf16.msra.mxu0 %v2560
    %4140 = vmatprep.mubr.bf16.mxu0 %v1111
    %4141 = vmatmul.mubr.bf16.gmra.mrb[0].mxu0 %v1110
    %v4142 = vpop.f32.mrb[0].mxu0
    %v4143 = vadd.f32 %v1477, %v4142
    %v4144 = vpop.f32.mrb[0].mxu0
    %v4145 = vadd.f32 %v1481, %v4144
    %v4146 = vpop.f32.mrb[0].mxu0
    %v4147 = vadd.f32 %v1477, %v4146
    %v4148 = vpop.f32.mrb[0].mxu0
    %v4149 = vadd.f32 %v1481, %v4148
    %4150 = vmatprep.mubr.bf16.mxu0 %v1114
    %4151 = vmatmul.mubr.bf16.gmra.mrb[0].mxu0 %v1113
    %v4152 = vpop.f32.mrb[0].mxu0
    %v4153 = vadd.f32 %v1477, %v4152
    %v4154 = vpop.f32.mrb[0].mxu0
    %v4155 = vadd.f32 %v1481, %v4154
    %v4156 = vpop.f32.mrb[0].mxu0
    %v4157 = vadd.f32 %v1477, %v4156
    %v4158 = vpop.f32.mrb[0].mxu0
    %v4159 = vadd.f32 %v1481, %v4158
    %4160 = vmatprep.mubr.bf16.mxu0 %v1117
    %4161 = vmatmul.mubr.bf16.gmra.mrb[0].mxu0 %v1116
    %v4162 = vpop.f32.mrb[0].mxu0
    %v4163 = vadd.f32 %v1477, %v4162
    %v4164 = vpop.f32.mrb[0].mxu0
    %v4165 = vadd.f32 %v1481, %v4164
    %v4166 = vpop.f32.mrb[0].mxu0
    %v4167 = vadd.f32 %v1477, %v4166
    %v4168 = vpop.f32.mrb[0].mxu0
    %v4169 = vadd.f32 %v1481, %v4168
    %4170 = vmatprep.mubr.bf16.mxu0 %v1120
    %4171 = vmatmul.mubr.bf16.gmra.mrb[0].mxu0 %v1119
    %v4172 = vpop.f32.mrb[0].mxu0
    %v4173 = vadd.f32 %v1477, %v4172
    %v4174 = vpop.f32.mrb[0].mxu0
    %v4175 = vadd.f32 %v1481, %v4174
    %v4176 = vpop.f32.mrb[0].mxu0
    %v4177 = vadd.f32 %v1477, %v4176
    %v4178 = vpop.f32.mrb[0].mxu0
    %v4179 = vadd.f32 %v1481, %v4178
    %4180 = vmatprep.mubr.bf16.mxu0 %v1123
    %4181 = vmatmul.mubr.bf16.gmra.mrb[0].mxu0 %v1122
    %v4182 = vpop.f32.mrb[0].mxu0
    %v4183 = vadd.f32 %v1477, %v4182
    %v4184 = vpop.f32.mrb[0].mxu0
    %v4185 = vadd.f32 %v1481, %v4184
    %v4186 = vpop.f32.mrb[0].mxu0
    %v4187 = vadd.f32 %v1477, %v4186
    %v4188 = vpop.f32.mrb[0].mxu0
    %v4189 = vadd.f32 %v1481, %v4188
    %4190 = vmatprep.mubr.bf16.mxu0 %v1126
    %4191 = vmatmul.mubr.bf16.gmra.mrb[0].mxu0 %v1125
    %v4192 = vpop.f32.mrb[0].mxu0
    %v4193 = vadd.f32 %v1477, %v4192
    %v4194 = vpop.f32.mrb[0].mxu0
    %v4195 = vadd.f32 %v1481, %v4194
    %v4196 = vpop.f32.mrb[0].mxu0
    %v4197 = vadd.f32 %v1477, %v4196
    %v4198 = vpop.f32.mrb[0].mxu0
    %v4199 = vadd.f32 %v1481, %v4198
    %4200 = vmatprep.mubr.bf16.mxu0 %v1129
    %4201 = vmatmul.mubr.bf16.gmra.mrb[0].mxu0 %v1128
    %v4202 = vpop.f32.mrb[0].mxu0
    %v4203 = vadd.f32 %v1477, %v4202
    %v4204 = vpop.f32.mrb[0].mxu0
    %v4205 = vadd.f32 %v1481, %v4204
    %v4206 = vpop.f32.mrb[0].mxu0
    %v4207 = vadd.f32 %v1477, %v4206
    %v4208 = vpop.f32.mrb[0].mxu0
    %v4209 = vadd.f32 %v1481, %v4208
    %4210 = vmatprep.mubr.bf16.mxu0 %v1132
    %4211 = vmatmul.mubr.bf16.gmra.mrb[0].mxu0 %v1131
    %v4212 = vpop.f32.mrb[0].mxu0
    %v4213 = vadd.f32 %v1477, %v4212
    %v4214 = vpop.f32.mrb[0].mxu0
    %v4215 = vadd.f32 %v1481, %v4214
    %v4216 = vpop.f32.mrb[0].mxu0
    %v4217 = vadd.f32 %v1477, %v4216
    %v4218 = vpop.f32.mrb[0].mxu0
    %v4219 = vadd.f32 %v1481, %v4218
    %4220 = vmatprep.mubr.bf16.mxu0 %v1135
    %4221 = vmatmul.mubr.bf16.gmra.mrb[0].mxu0 %v1134
    %v4222 = vpop.f32.mrb[0].mxu0
    %v4223 = vadd.f32 %v1477, %v4222
    %v4224 = vpop.f32.mrb[0].mxu0
    %v4225 = vadd.f32 %v1481, %v4224
    %v4226 = vpop.f32.mrb[0].mxu0
    %v4227 = vadd.f32 %v1477, %v4226
    %v4228 = vpop.f32.mrb[0].mxu0
    %v4229 = vadd.f32 %v1481, %v4228
    %4230 = vmatprep.mubr.bf16.mxu0 %v1138
    %4231 = vmatmul.mubr.bf16.gmra.mrb[0].mxu0 %v1137
    %v4232 = vpop.f32.mrb[0].mxu0
    %v4233 = vadd.f32 %v1477, %v4232
    %v4234 = vpop.f32.mrb[0].mxu0
    %v4235 = vadd.f32 %v1481, %v4234
    %v4236 = vpop.f32.mrb[0].mxu0
    %v4237 = vadd.f32 %v1477, %v4236
    %v4238 = vpop.f32.mrb[0].mxu0
    %v4239 = vadd.f32 %v1481, %v4238
    %4240 = vmatprep.mubr.bf16.mxu0 %v1141
    %4241 = vmatmul.mubr.bf16.gmra.mrb[0].mxu0 %v1140
    %v4242 = vpop.f32.mrb[0].mxu0
    %v4243 = vadd.f32 %v1477, %v4242
    %v4244 = vpop.f32.mrb[0].mxu0
    %v4245 = vadd.f32 %v1481, %v4244
    %v4246 = vpop.f32.mrb[0].mxu0
    %v4247 = vadd.f32 %v1477, %v4246
    %v4248 = vpop.f32.mrb[0].mxu0
    %v4249 = vadd.f32 %v1481, %v4248
    %4250 = vmatprep.mubr.bf16.mxu0 %v1144
    %4251 = vmatmul.mubr.bf16.gmra.mrb[0].mxu0 %v1143
    %v4252 = vpop.f32.mrb[0].mxu0
    %v4253 = vadd.f32 %v1477, %v4252
    %v4254 = vpop.f32.mrb[0].mxu0
    %v4255 = vadd.f32 %v1481, %v4254
    %v4256 = vpop.f32.mrb[0].mxu0
    %v4257 = vadd.f32 %v1477, %v4256
    %v4258 = vpop.f32.mrb[0].mxu0
    %v4259 = vadd.f32 %v1481, %v4258
    %4260 = vmatprep.mubr.bf16.mxu0 %v1147
    %4261 = vmatmul.mubr.bf16.gmra.mrb[0].mxu0 %v1146
    %v4262 = vpop.f32.mrb[0].mxu0
    %v4263 = vadd.f32 %v1477, %v4262
    %v4264 = vpop.f32.mrb[0].mxu0
    %v4265 = vadd.f32 %v1481, %v4264
    %v4266 = vpop.f32.mrb[0].mxu0
    %v4267 = vadd.f32 %v1477, %v4266
    %v4268 = vpop.f32.mrb[0].mxu0
    %v4269 = vadd.f32 %v1481, %v4268
    %4270 = vmatprep.mubr.bf16.mxu0 %v1150
    %4271 = vmatmul.mubr.bf16.gmra.mrb[0].mxu0 %v1149
    %v4272 = vpop.f32.mrb[0].mxu0
    %v4273 = vadd.f32 %v1477, %v4272
    %v4274 = vpop.f32.mrb[0].mxu0
    %v4275 = vadd.f32 %v1481, %v4274
    %v4276 = vpop.f32.mrb[0].mxu0
    %v4277 = vadd.f32 %v1477, %v4276
    %v4278 = vpop.f32.mrb[0].mxu0
    %v4279 = vadd.f32 %v1481, %v4278
    %4280 = vmatprep.mubr.bf16.mxu0 %v1153
    %4281 = vmatmul.mubr.bf16.gmra.mrb[0].mxu0 %v1152
    %v4282 = vpop.f32.mrb[0].mxu0
    %v4283 = vadd.f32 %v1477, %v4282
    %v4284 = vpop.f32.mrb[0].mxu0
    %v4285 = vadd.f32 %v1481, %v4284
    %v4286 = vpop.f32.mrb[0].mxu0
    %v4287 = vadd.f32 %v1477, %v4286
    %v4288 = vpop.f32.mrb[0].mxu0
    %v4289 = vadd.f32 %v1481, %v4288
    %4290 = vmatprep.mubr.bf16.mxu0 %v1156
    %4291 = vmatmul.mubr.bf16.gmra.mrb[0].mxu0 %v1155
    %v4292 = vpop.f32.mrb[0].mxu0
    %v4293 = vadd.f32 %v1477, %v4292
    %v4294 = vpop.f32.mrb[0].mxu0
    %v4295 = vadd.f32 %v1481, %v4294
    %v4296 = vpop.f32.mrb[0].mxu0
    %v4297 = vadd.f32 %v1477, %v4296
    %v4298 = vpop.f32.mrb[0].mxu0
    %v4299 = vadd.f32 %v1481, %v4298
    %4300 = vdwg.mxu0
    %4301 = vmatprep.subr.bf16.mxu0 %v2573
    %4302 = vmatpush1.bf16.msra.mxu0 %v2572
    %4303 = vmatprep.subr.bf16.mxu0 %v2585
    %4304 = vmatpush1.bf16.msra.mxu0 %v2584
    %4305 = vmatprep.subr.bf16.mxu0 %v2597
    %4306 = vmatpush1.bf16.msra.mxu0 %v2596
    %4307 = vmatprep.subr.bf16.mxu0 %v2609
    %4308 = vmatpush1.bf16.msra.mxu0 %v2608
    %4309 = vmatprep.subr.bf16.mxu0 %v2621
    %4310 = vmatpush1.bf16.msra.mxu0 %v2620
    %4311 = vmatprep.subr.bf16.mxu0 %v2633
    %4312 = vmatpush1.bf16.msra.mxu0 %v2632
    %4313 = vmatprep.subr.bf16.mxu0 %v2645
    %4314 = vmatpush1.bf16.msra.mxu0 %v2644
    %4315 = vmatprep.subr.bf16.mxu0 %v2657
    %4316 = vmatpush1.bf16.msra.mxu0 %v2656
    %4317 = vmatprep.subr.bf16.mxu0 0
    %4318 = vmatpush1.bf16.msra.mxu0 0
    %4319 = vmatprep.subr.bf16.mxu0 0
    %4320 = vmatpush1.bf16.msra.mxu0 0
    %4321 = vmatprep.subr.bf16.mxu0 0
    %4322 = vmatpush1.bf16.msra.mxu0 0
    %4323 = vmatprep.subr.bf16.mxu0 0
    %4324 = vmatpush1.bf16.msra.mxu0 0
    %4325 = vmatprep.subr.bf16.mxu0 0
    %4326 = vmatpush1.bf16.msra.mxu0 0
    %4327 = vmatprep.subr.bf16.mxu0 0
    %4328 = vmatpush1.bf16.msra.mxu0 0
    %4329 = vmatprep.subr.bf16.mxu0 0
    %4330 = vmatpush1.bf16.msra.mxu0 0
    %4331 = vmatprep.subr.bf16.mxu0 0
    %4332 = vmatpush1.bf16.msra.mxu0 0
    %4333 = vmatprep.mubr.bf16.mxu0 0
    %4334 = vmatmul.mubr.bf16.gmra.mrb[0].mxu0 %v1112
    %v4335 = vpop.f32.mrb[0].mxu0
    %v4336 = vadd.f32 %v4143, %v4335
    %v4337 = vpop.f32.mrb[0].mxu0
    %v4338 = vadd.f32 %v4145, %v4337
    %v4339 = vpop.f32.mrb[0].mxu0
    %v4340 = vadd.f32 %v4147, %v4339
    %v4341 = vpop.f32.mrb[0].mxu0
    %v4342 = vadd.f32 %v4149, %v4341
    %4343 = vmatprep.mubr.bf16.mxu0 0
    %4344 = vmatmul.mubr.bf16.gmra.mrb[0].mxu0 %v1115
    %v4345 = vpop.f32.mrb[0].mxu0
    %v4346 = vadd.f32 %v4153, %v4345
    %v4347 = vpop.f32.mrb[0].mxu0
    %v4348 = vadd.f32 %v4155, %v4347
    %v4349 = vpop.f32.mrb[0].mxu0
    %v4350 = vadd.f32 %v4157, %v4349
    %v4351 = vpop.f32.mrb[0].mxu0
    %v4352 = vadd.f32 %v4159, %v4351
    %4353 = vmatprep.mubr.bf16.mxu0 0
    %4354 = vmatmul.mubr.bf16.gmra.mrb[0].mxu0 %v1118
    %v4355 = vpop.f32.mrb[0].mxu0
    %v4356 = vadd.f32 %v4163, %v4355
    %v4357 = vpop.f32.mrb[0].mxu0
    %v4358 = vadd.f32 %v4165, %v4357
    %v4359 = vpop.f32.mrb[0].mxu0
    %v4360 = vadd.f32 %v4167, %v4359
    %v4361 = vpop.f32.mrb[0].mxu0
    %v4362 = vadd.f32 %v4169, %v4361
    %4363 = vmatprep.mubr.bf16.mxu0 0
    %4364 = vmatmul.mubr.bf16.gmra.mrb[0].mxu0 %v1121
    %v4365 = vpop.f32.mrb[0].mxu0
    %v4366 = vadd.f32 %v4173, %v4365
    %v4367 = vpop.f32.mrb[0].mxu0
    %v4368 = vadd.f32 %v4175, %v4367
    %v4369 = vpop.f32.mrb[0].mxu0
    %v4370 = vadd.f32 %v4177, %v4369
    %v4371 = vpop.f32.mrb[0].mxu0
    %v4372 = vadd.f32 %v4179, %v4371
    %4373 = vmatprep.mubr.bf16.mxu0 0
    %4374 = vmatmul.mubr.bf16.gmra.mrb[0].mxu0 %v1124
    %v4375 = vpop.f32.mrb[0].mxu0
    %v4376 = vadd.f32 %v4183, %v4375
    %v4377 = vpop.f32.mrb[0].mxu0
    %v4378 = vadd.f32 %v4185, %v4377
    %v4379 = vpop.f32.mrb[0].mxu0
    %v4380 = vadd.f32 %v4187, %v4379
    %v4381 = vpop.f32.mrb[0].mxu0
    %v4382 = vadd.f32 %v4189, %v4381
    %4383 = vmatprep.mubr.bf16.mxu0 0
    %4384 = vmatmul.mubr.bf16.gmra.mrb[0].mxu0 %v1127
    %v4385 = vpop.f32.mrb[0].mxu0
    %v4386 = vadd.f32 %v4193, %v4385
    %v4387 = vpop.f32.mrb[0].mxu0
    %v4388 = vadd.f32 %v4195, %v4387
    %v4389 = vpop.f32.mrb[0].mxu0
    %v4390 = vadd.f32 %v4197, %v4389
    %v4391 = vpop.f32.mrb[0].mxu0
    %v4392 = vadd.f32 %v4199, %v4391
    %4393 = vmatprep.mubr.bf16.mxu0 0
    %4394 = vmatmul.mubr.bf16.gmra.mrb[0].mxu0 %v1130
    %v4395 = vpop.f32.mrb[0].mxu0
    %v4396 = vadd.f32 %v4203, %v4395
    %v4397 = vpop.f32.mrb[0].mxu0
    %v4398 = vadd.f32 %v4205, %v4397
    %v4399 = vpop.f32.mrb[0].mxu0
    %v4400 = vadd.f32 %v4207, %v4399
    %v4401 = vpop.f32.mrb[0].mxu0
    %v4402 = vadd.f32 %v4209, %v4401
    %4403 = vmatprep.mubr.bf16.mxu0 0
    %4404 = vmatmul.mubr.bf16.gmra.mrb[0].mxu0 %v1133
    %v4405 = vpop.f32.mrb[0].mxu0
    %v4406 = vadd.f32 %v4213, %v4405
    %v4407 = vpop.f32.mrb[0].mxu0
    %v4408 = vadd.f32 %v4215, %v4407
    %v4409 = vpop.f32.mrb[0].mxu0
    %v4410 = vadd.f32 %v4217, %v4409
    %v4411 = vpop.f32.mrb[0].mxu0
    %v4412 = vadd.f32 %v4219, %v4411
    %4413 = vmatprep.mubr.bf16.mxu0 0
    %4414 = vmatmul.mubr.bf16.gmra.mrb[0].mxu0 %v1136
    %v4415 = vpop.f32.mrb[0].mxu0
    %v4416 = vadd.f32 %v4223, %v4415
    %v4417 = vpop.f32.mrb[0].mxu0
    %v4418 = vadd.f32 %v4225, %v4417
    %v4419 = vpop.f32.mrb[0].mxu0
    %v4420 = vadd.f32 %v4227, %v4419
    %v4421 = vpop.f32.mrb[0].mxu0
    %v4422 = vadd.f32 %v4229, %v4421
    %4423 = vmatprep.mubr.bf16.mxu0 0
    %4424 = vmatmul.mubr.bf16.gmra.mrb[0].mxu0 %v1139
    %v4425 = vpop.f32.mrb[0].mxu0
    %v4426 = vadd.f32 %v4233, %v4425
    %v4427 = vpop.f32.mrb[0].mxu0
    %v4428 = vadd.f32 %v4235, %v4427
    %v4429 = vpop.f32.mrb[0].mxu0
    %v4430 = vadd.f32 %v4237, %v4429
    %v4431 = vpop.f32.mrb[0].mxu0
    %v4432 = vadd.f32 %v4239, %v4431
    %4433 = vmatprep.mubr.bf16.mxu0 0
    %4434 = vmatmul.mubr.bf16.gmra.mrb[0].mxu0 %v1142
    %v4435 = vpop.f32.mrb[0].mxu0
    %v4436 = vadd.f32 %v4243, %v4435
    %v4437 = vpop.f32.mrb[0].mxu0
    %v4438 = vadd.f32 %v4245, %v4437
    %v4439 = vpop.f32.mrb[0].mxu0
    %v4440 = vadd.f32 %v4247, %v4439
    %v4441 = vpop.f32.mrb[0].mxu0
    %v4442 = vadd.f32 %v4249, %v4441
    %4443 = vmatprep.mubr.bf16.mxu0 0
    %4444 = vmatmul.mubr.bf16.gmra.mrb[0].mxu0 %v1145
    %v4445 = vpop.f32.mrb[0].mxu0
    %v4446 = vadd.f32 %v4253, %v4445
    %v4447 = vpop.f32.mrb[0].mxu0
    %v4448 = vadd.f32 %v4255, %v4447
    %v4449 = vpop.f32.mrb[0].mxu0
    %v4450 = vadd.f32 %v4257, %v4449
    %v4451 = vpop.f32.mrb[0].mxu0
    %v4452 = vadd.f32 %v4259, %v4451
    %4453 = vmatprep.mubr.bf16.mxu0 0
    %4454 = vmatmul.mubr.bf16.gmra.mrb[0].mxu0 %v1148
    %v4455 = vpop.f32.mrb[0].mxu0
    %v4456 = vadd.f32 %v4263, %v4455
    %v4457 = vpop.f32.mrb[0].mxu0
    %v4458 = vadd.f32 %v4265, %v4457
    %v4459 = vpop.f32.mrb[0].mxu0
    %v4460 = vadd.f32 %v4267, %v4459
    %v4461 = vpop.f32.mrb[0].mxu0
    %v4462 = vadd.f32 %v4269, %v4461
    %4463 = vmatprep.mubr.bf16.mxu0 0
    %4464 = vmatmul.mubr.bf16.gmra.mrb[0].mxu0 %v1151
    %v4465 = vpop.f32.mrb[0].mxu0
    %v4466 = vadd.f32 %v4273, %v4465
    %v4467 = vpop.f32.mrb[0].mxu0
    %v4468 = vadd.f32 %v4275, %v4467
    %v4469 = vpop.f32.mrb[0].mxu0
    %v4470 = vadd.f32 %v4277, %v4469
    %v4471 = vpop.f32.mrb[0].mxu0
    %v4472 = vadd.f32 %v4279, %v4471
    %4473 = vmatprep.mubr.bf16.mxu0 0
    %4474 = vmatmul.mubr.bf16.gmra.mrb[0].mxu0 %v1154
    %v4475 = vpop.f32.mrb[0].mxu0
    %v4476 = vadd.f32 %v4283, %v4475
    %v4477 = vpop.f32.mrb[0].mxu0
    %v4478 = vadd.f32 %v4285, %v4477
    %v4479 = vpop.f32.mrb[0].mxu0
    %v4480 = vadd.f32 %v4287, %v4479
    %v4481 = vpop.f32.mrb[0].mxu0
    %v4482 = vadd.f32 %v4289, %v4481
    %4483 = vmatprep.mubr.bf16.mxu0 0
    %4484 = vmatmul.mubr.bf16.gmra.mrb[0].mxu0 %v1157
    %v4485 = vpop.f32.mrb[0].mxu0
    %v4486 = vadd.f32 %v4293, %v4485
    %v4487 = vpop.f32.mrb[0].mxu0
    %v4488 = vadd.f32 %v4295, %v4487
    %v4489 = vpop.f32.mrb[0].mxu0
    %v4490 = vadd.f32 %v4297, %v4489
    %v4491 = vpop.f32.mrb[0].mxu0
    %v4492 = vadd.f32 %v4299, %v4491
    %4493 = vdwg.mxu0
    %4494 = vmatprep.subr.bf16.mxu0 %v2383
    %4495 = vmatpush1.bf16.msra.mxu0 %v2382
    %4496 = vmatprep.subr.bf16.mxu0 %v2395
    %4497 = vmatpush1.bf16.msra.mxu0 %v2394
    %4498 = vmatprep.subr.bf16.mxu0 %v2407
    %4499 = vmatpush1.bf16.msra.mxu0 %v2406
    %4500 = vmatprep.subr.bf16.mxu0 %v2419
    %4501 = vmatpush1.bf16.msra.mxu0 %v2418
    %4502 = vmatprep.subr.bf16.mxu0 %v2431
    %4503 = vmatpush1.bf16.msra.mxu0 %v2430
    %4504 = vmatprep.subr.bf16.mxu0 %v2443
    %4505 = vmatpush1.bf16.msra.mxu0 %v2442
    %4506 = vmatprep.subr.bf16.mxu0 %v2455
    %4507 = vmatpush1.bf16.msra.mxu0 %v2454
    %4508 = vmatprep.subr.bf16.mxu0 %v2467
    %4509 = vmatpush1.bf16.msra.mxu0 %v2466
    %4510 = vmatprep.subr.bf16.mxu0 %v2479
    %4511 = vmatpush1.bf16.msra.mxu0 %v2478
    %4512 = vmatprep.subr.bf16.mxu0 %v2491
    %4513 = vmatpush1.bf16.msra.mxu0 %v2490
    %4514 = vmatprep.subr.bf16.mxu0 %v2503
    %4515 = vmatpush1.bf16.msra.mxu0 %v2502
    %4516 = vmatprep.subr.bf16.mxu0 %v2515
    %4517 = vmatpush1.bf16.msra.mxu0 %v2514
    %4518 = vmatprep.subr.bf16.mxu0 %v2527
    %4519 = vmatpush1.bf16.msra.mxu0 %v2526
    %4520 = vmatprep.subr.bf16.mxu0 %v2539
    %4521 = vmatpush1.bf16.msra.mxu0 %v2538
    %4522 = vmatprep.subr.bf16.mxu0 %v2551
    %4523 = vmatpush1.bf16.msra.mxu0 %v2550
    %4524 = vmatprep.subr.bf16.mxu0 %v2563
    %4525 = vmatpush1.bf16.msra.mxu0 %v2562
    %4526 = vmatprep.mubr.bf16.mxu0 %v1111
    %4527 = vmatmul.mubr.bf16.gmra.mrb[0].mxu0 %v1110
    %v4528 = vpop.f32.mrb[0].mxu0
    %v4529 = vadd.f32 %v1485, %v4528
    %v4530 = vpop.f32.mrb[0].mxu0
    %v4531 = vadd.f32 %v1489, %v4530
    %v4532 = vpop.f32.mrb[0].mxu0
    %v4533 = vadd.f32 %v1485, %v4532
    %v4534 = vpop.f32.mrb[0].mxu0
    %v4535 = vadd.f32 %v1489, %v4534
    %4536 = vmatprep.mubr.bf16.mxu0 %v1114
    %4537 = vmatmul.mubr.bf16.gmra.mrb[0].mxu0 %v1113
    %v4538 = vpop.f32.mrb[0].mxu0
    %v4539 = vadd.f32 %v1485, %v4538
    %v4540 = vpop.f32.mrb[0].mxu0
    %v4541 = vadd.f32 %v1489, %v4540
    %v4542 = vpop.f32.mrb[0].mxu0
    %v4543 = vadd.f32 %v1485, %v4542
    %v4544 = vpop.f32.mrb[0].mxu0
    %v4545 = vadd.f32 %v1489, %v4544
    %4546 = vmatprep.mubr.bf16.mxu0 %v1117
    %4547 = vmatmul.mubr.bf16.gmra.mrb[0].mxu0 %v1116
    %v4548 = vpop.f32.mrb[0].mxu0
    %v4549 = vadd.f32 %v1485, %v4548
    %v4550 = vpop.f32.mrb[0].mxu0
    %v4551 = vadd.f32 %v1489, %v4550
    %v4552 = vpop.f32.mrb[0].mxu0
    %v4553 = vadd.f32 %v1485, %v4552
    %v4554 = vpop.f32.mrb[0].mxu0
    %v4555 = vadd.f32 %v1489, %v4554
    %4556 = vmatprep.mubr.bf16.mxu0 %v1120
    %4557 = vmatmul.mubr.bf16.gmra.mrb[0].mxu0 %v1119
    %v4558 = vpop.f32.mrb[0].mxu0
    %v4559 = vadd.f32 %v1485, %v4558
    %v4560 = vpop.f32.mrb[0].mxu0
    %v4561 = vadd.f32 %v1489, %v4560
    %v4562 = vpop.f32.mrb[0].mxu0
    %v4563 = vadd.f32 %v1485, %v4562
    %v4564 = vpop.f32.mrb[0].mxu0
    %v4565 = vadd.f32 %v1489, %v4564
    %4566 = vmatprep.mubr.bf16.mxu0 %v1123
    %4567 = vmatmul.mubr.bf16.gmra.mrb[0].mxu0 %v1122
    %v4568 = vpop.f32.mrb[0].mxu0
    %v4569 = vadd.f32 %v1485, %v4568
    %v4570 = vpop.f32.mrb[0].mxu0
    %v4571 = vadd.f32 %v1489, %v4570
    %v4572 = vpop.f32.mrb[0].mxu0
    %v4573 = vadd.f32 %v1485, %v4572
    %v4574 = vpop.f32.mrb[0].mxu0
    %v4575 = vadd.f32 %v1489, %v4574
    %4576 = vmatprep.mubr.bf16.mxu0 %v1126
    %4577 = vmatmul.mubr.bf16.gmra.mrb[0].mxu0 %v1125
    %v4578 = vpop.f32.mrb[0].mxu0
    %v4579 = vadd.f32 %v1485, %v4578
    %v4580 = vpop.f32.mrb[0].mxu0
    %v4581 = vadd.f32 %v1489, %v4580
    %v4582 = vpop.f32.mrb[0].mxu0
    %v4583 = vadd.f32 %v1485, %v4582
    %v4584 = vpop.f32.mrb[0].mxu0
    %v4585 = vadd.f32 %v1489, %v4584
    %4586 = vmatprep.mubr.bf16.mxu0 %v1129
    %4587 = vmatmul.mubr.bf16.gmra.mrb[0].mxu0 %v1128
    %v4588 = vpop.f32.mrb[0].mxu0
    %v4589 = vadd.f32 %v1485, %v4588
    %v4590 = vpop.f32.mrb[0].mxu0
    %v4591 = vadd.f32 %v1489, %v4590
    %v4592 = vpop.f32.mrb[0].mxu0
    %v4593 = vadd.f32 %v1485, %v4592
    %v4594 = vpop.f32.mrb[0].mxu0
    %v4595 = vadd.f32 %v1489, %v4594
    %4596 = vmatprep.mubr.bf16.mxu0 %v1132
    %4597 = vmatmul.mubr.bf16.gmra.mrb[0].mxu0 %v1131
    %v4598 = vpop.f32.mrb[0].mxu0
    %v4599 = vadd.f32 %v1485, %v4598
    %v4600 = vpop.f32.mrb[0].mxu0
    %v4601 = vadd.f32 %v1489, %v4600
    %v4602 = vpop.f32.mrb[0].mxu0
    %v4603 = vadd.f32 %v1485, %v4602
    %v4604 = vpop.f32.mrb[0].mxu0
    %v4605 = vadd.f32 %v1489, %v4604
    %4606 = vmatprep.mubr.bf16.mxu0 %v1135
    %4607 = vmatmul.mubr.bf16.gmra.mrb[0].mxu0 %v1134
    %v4608 = vpop.f32.mrb[0].mxu0
    %v4609 = vadd.f32 %v1485, %v4608
    %v4610 = vpop.f32.mrb[0].mxu0
    %v4611 = vadd.f32 %v1489, %v4610
    %v4612 = vpop.f32.mrb[0].mxu0
    %v4613 = vadd.f32 %v1485, %v4612
    %v4614 = vpop.f32.mrb[0].mxu0
    %v4615 = vadd.f32 %v1489, %v4614
    %4616 = vmatprep.mubr.bf16.mxu0 %v1138
    %4617 = vmatmul.mubr.bf16.gmra.mrb[0].mxu0 %v1137
    %v4618 = vpop.f32.mrb[0].mxu0
    %v4619 = vadd.f32 %v1485, %v4618
    %v4620 = vpop.f32.mrb[0].mxu0
    %v4621 = vadd.f32 %v1489, %v4620
    %v4622 = vpop.f32.mrb[0].mxu0
    %v4623 = vadd.f32 %v1485, %v4622
    %v4624 = vpop.f32.mrb[0].mxu0
    %v4625 = vadd.f32 %v1489, %v4624
    %4626 = vmatprep.mubr.bf16.mxu0 %v1141
    %4627 = vmatmul.mubr.bf16.gmra.mrb[0].mxu0 %v1140
    %v4628 = vpop.f32.mrb[0].mxu0
    %v4629 = vadd.f32 %v1485, %v4628
    %v4630 = vpop.f32.mrb[0].mxu0
    %v4631 = vadd.f32 %v1489, %v4630
    %v4632 = vpop.f32.mrb[0].mxu0
    %v4633 = vadd.f32 %v1485, %v4632
    %v4634 = vpop.f32.mrb[0].mxu0
    %v4635 = vadd.f32 %v1489, %v4634
    %4636 = vmatprep.mubr.bf16.mxu0 %v1144
    %4637 = vmatmul.mubr.bf16.gmra.mrb[0].mxu0 %v1143
    %v4638 = vpop.f32.mrb[0].mxu0
    %v4639 = vadd.f32 %v1485, %v4638
    %v4640 = vpop.f32.mrb[0].mxu0
    %v4641 = vadd.f32 %v1489, %v4640
    %v4642 = vpop.f32.mrb[0].mxu0
    %v4643 = vadd.f32 %v1485, %v4642
    %v4644 = vpop.f32.mrb[0].mxu0
    %v4645 = vadd.f32 %v1489, %v4644
    %4646 = vmatprep.mubr.bf16.mxu0 %v1147
    %4647 = vmatmul.mubr.bf16.gmra.mrb[0].mxu0 %v1146
    %v4648 = vpop.f32.mrb[0].mxu0
    %v4649 = vadd.f32 %v1485, %v4648
    %v4650 = vpop.f32.mrb[0].mxu0
    %v4651 = vadd.f32 %v1489, %v4650
    %v4652 = vpop.f32.mrb[0].mxu0
    %v4653 = vadd.f32 %v1485, %v4652
    %v4654 = vpop.f32.mrb[0].mxu0
    %v4655 = vadd.f32 %v1489, %v4654
    %4656 = vmatprep.mubr.bf16.mxu0 %v1150
    %4657 = vmatmul.mubr.bf16.gmra.mrb[0].mxu0 %v1149
    %v4658 = vpop.f32.mrb[0].mxu0
    %v4659 = vadd.f32 %v1485, %v4658
    %v4660 = vpop.f32.mrb[0].mxu0
    %v4661 = vadd.f32 %v1489, %v4660
    %v4662 = vpop.f32.mrb[0].mxu0
    %v4663 = vadd.f32 %v1485, %v4662
    %v4664 = vpop.f32.mrb[0].mxu0
    %v4665 = vadd.f32 %v1489, %v4664
    %4666 = vmatprep.mubr.bf16.mxu0 %v1153
    %4667 = vmatmul.mubr.bf16.gmra.mrb[0].mxu0 %v1152
    %v4668 = vpop.f32.mrb[0].mxu0
    %v4669 = vadd.f32 %v1485, %v4668
    %v4670 = vpop.f32.mrb[0].mxu0
    %v4671 = vadd.f32 %v1489, %v4670
    %v4672 = vpop.f32.mrb[0].mxu0
    %v4673 = vadd.f32 %v1485, %v4672
    %v4674 = vpop.f32.mrb[0].mxu0
    %v4675 = vadd.f32 %v1489, %v4674
    %4676 = vmatprep.mubr.bf16.mxu0 %v1156
    %4677 = vmatmul.mubr.bf16.gmra.mrb[0].mxu0 %v1155
    %v4678 = vpop.f32.mrb[0].mxu0
    %v4679 = vadd.f32 %v1485, %v4678
    %v4680 = vpop.f32.mrb[0].mxu0
    %v4681 = vadd.f32 %v1489, %v4680
    %v4682 = vpop.f32.mrb[0].mxu0
    %v4683 = vadd.f32 %v1485, %v4682
    %v4684 = vpop.f32.mrb[0].mxu0
    %v4685 = vadd.f32 %v1489, %v4684
    %4686 = vdwg.mxu0
    %4687 = vmatprep.subr.bf16.mxu0 %v2575
    %4688 = vmatpush1.bf16.msra.mxu0 %v2574
    %4689 = vmatprep.subr.bf16.mxu0 %v2587
    %4690 = vmatpush1.bf16.msra.mxu0 %v2586
    %4691 = vmatprep.subr.bf16.mxu0 %v2599
    %4692 = vmatpush1.bf16.msra.mxu0 %v2598
    %4693 = vmatprep.subr.bf16.mxu0 %v2611
    %4694 = vmatpush1.bf16.msra.mxu0 %v2610
    %4695 = vmatprep.subr.bf16.mxu0 %v2623
    %4696 = vmatpush1.bf16.msra.mxu0 %v2622
    %4697 = vmatprep.subr.bf16.mxu0 %v2635
    %4698 = vmatpush1.bf16.msra.mxu0 %v2634
    %4699 = vmatprep.subr.bf16.mxu0 %v2647
    %4700 = vmatpush1.bf16.msra.mxu0 %v2646
    %4701 = vmatprep.subr.bf16.mxu0 %v2659
    %4702 = vmatpush1.bf16.msra.mxu0 %v2658
    %4703 = vmatprep.subr.bf16.mxu0 0
    %4704 = vmatpush1.bf16.msra.mxu0 0
    %4705 = vmatprep.subr.bf16.mxu0 0
    %4706 = vmatpush1.bf16.msra.mxu0 0
    %4707 = vmatprep.subr.bf16.mxu0 0
    %4708 = vmatpush1.bf16.msra.mxu0 0
    %4709 = vmatprep.subr.bf16.mxu0 0
    %4710 = vmatpush1.bf16.msra.mxu0 0
    %4711 = vmatprep.subr.bf16.mxu0 0
    %4712 = vmatpush1.bf16.msra.mxu0 0
    %4713 = vmatprep.subr.bf16.mxu0 0
    %4714 = vmatpush1.bf16.msra.mxu0 0
    %4715 = vmatprep.subr.bf16.mxu0 0
    %4716 = vmatpush1.bf16.msra.mxu0 0
    %4717 = vmatprep.subr.bf16.mxu0 0
    %4718 = vmatpush1.bf16.msra.mxu0 0
    %4719 = vmatprep.mubr.bf16.mxu0 0
    %4720 = vmatmul.mubr.bf16.gmra.mrb[0].mxu0 %v1112
    %v4721 = vpop.f32.mrb[0].mxu0
    %v4722 = vadd.f32 %v4529, %v4721
    %v4723 = vpop.f32.mrb[0].mxu0
    %v4724 = vadd.f32 %v4531, %v4723
    %v4725 = vpop.f32.mrb[0].mxu0
    %v4726 = vadd.f32 %v4533, %v4725
    %v4727 = vpop.f32.mrb[0].mxu0
    %v4728 = vadd.f32 %v4535, %v4727
    %4729 = vmatprep.mubr.bf16.mxu0 0
    %4730 = vmatmul.mubr.bf16.gmra.mrb[0].mxu0 %v1115
    %v4731 = vpop.f32.mrb[0].mxu0
    %v4732 = vadd.f32 %v4539, %v4731
    %v4733 = vpop.f32.mrb[0].mxu0
    %v4734 = vadd.f32 %v4541, %v4733
    %v4735 = vpop.f32.mrb[0].mxu0
    %v4736 = vadd.f32 %v4543, %v4735
    %v4737 = vpop.f32.mrb[0].mxu0
    %v4738 = vadd.f32 %v4545, %v4737
    %4739 = vmatprep.mubr.bf16.mxu0 0
    %4740 = vmatmul.mubr.bf16.gmra.mrb[0].mxu0 %v1118
    %v4741 = vpop.f32.mrb[0].mxu0
    %v4742 = vadd.f32 %v4549, %v4741
    %v4743 = vpop.f32.mrb[0].mxu0
    %v4744 = vadd.f32 %v4551, %v4743
    %v4745 = vpop.f32.mrb[0].mxu0
    %v4746 = vadd.f32 %v4553, %v4745
    %v4747 = vpop.f32.mrb[0].mxu0
    %v4748 = vadd.f32 %v4555, %v4747
    %4749 = vmatprep.mubr.bf16.mxu0 0
    %4750 = vmatmul.mubr.bf16.gmra.mrb[0].mxu0 %v1121
    %v4751 = vpop.f32.mrb[0].mxu0
    %v4752 = vadd.f32 %v4559, %v4751
    %v4753 = vpop.f32.mrb[0].mxu0
    %v4754 = vadd.f32 %v4561, %v4753
    %v4755 = vpop.f32.mrb[0].mxu0
    %v4756 = vadd.f32 %v4563, %v4755
    %v4757 = vpop.f32.mrb[0].mxu0
    %v4758 = vadd.f32 %v4565, %v4757
    %4759 = vmatprep.mubr.bf16.mxu0 0
    %4760 = vmatmul.mubr.bf16.gmra.mrb[0].mxu0 %v1124
    %v4761 = vpop.f32.mrb[0].mxu0
    %v4762 = vadd.f32 %v4569, %v4761
    %v4763 = vpop.f32.mrb[0].mxu0
    %v4764 = vadd.f32 %v4571, %v4763
    %v4765 = vpop.f32.mrb[0].mxu0
    %v4766 = vadd.f32 %v4573, %v4765
    %v4767 = vpop.f32.mrb[0].mxu0
    %v4768 = vadd.f32 %v4575, %v4767
    %4769 = vmatprep.mubr.bf16.mxu0 0
    %4770 = vmatmul.mubr.bf16.gmra.mrb[0].mxu0 %v1127
    %v4771 = vpop.f32.mrb[0].mxu0
    %v4772 = vadd.f32 %v4579, %v4771
    %v4773 = vpop.f32.mrb[0].mxu0
    %v4774 = vadd.f32 %v4581, %v4773
    %v4775 = vpop.f32.mrb[0].mxu0
    %v4776 = vadd.f32 %v4583, %v4775
    %v4777 = vpop.f32.mrb[0].mxu0
    %v4778 = vadd.f32 %v4585, %v4777
    %4779 = vmatprep.mubr.bf16.mxu0 0
    %4780 = vmatmul.mubr.bf16.gmra.mrb[0].mxu0 %v1130
    %v4781 = vpop.f32.mrb[0].mxu0
    %v4782 = vadd.f32 %v4589, %v4781
    %v4783 = vpop.f32.mrb[0].mxu0
    %v4784 = vadd.f32 %v4591, %v4783
    %v4785 = vpop.f32.mrb[0].mxu0
    %v4786 = vadd.f32 %v4593, %v4785
    %v4787 = vpop.f32.mrb[0].mxu0
    %v4788 = vadd.f32 %v4595, %v4787
    %4789 = vmatprep.mubr.bf16.mxu0 0
    %4790 = vmatmul.mubr.bf16.gmra.mrb[0].mxu0 %v1133
    %v4791 = vpop.f32.mrb[0].mxu0
    %v4792 = vadd.f32 %v4599, %v4791
    %v4793 = vpop.f32.mrb[0].mxu0
    %v4794 = vadd.f32 %v4601, %v4793
    %v4795 = vpop.f32.mrb[0].mxu0
    %v4796 = vadd.f32 %v4603, %v4795
    %v4797 = vpop.f32.mrb[0].mxu0
    %v4798 = vadd.f32 %v4605, %v4797
    %4799 = vmatprep.mubr.bf16.mxu0 0
    %4800 = vmatmul.mubr.bf16.gmra.mrb[0].mxu0 %v1136
    %v4801 = vpop.f32.mrb[0].mxu0
    %v4802 = vadd.f32 %v4609, %v4801
    %v4803 = vpop.f32.mrb[0].mxu0
    %v4804 = vadd.f32 %v4611, %v4803
    %v4805 = vpop.f32.mrb[0].mxu0
    %v4806 = vadd.f32 %v4613, %v4805
    %v4807 = vpop.f32.mrb[0].mxu0
    %v4808 = vadd.f32 %v4615, %v4807
    %4809 = vmatprep.mubr.bf16.mxu0 0
    %4810 = vmatmul.mubr.bf16.gmra.mrb[0].mxu0 %v1139
    %v4811 = vpop.f32.mrb[0].mxu0
    %v4812 = vadd.f32 %v4619, %v4811
    %v4813 = vpop.f32.mrb[0].mxu0
    %v4814 = vadd.f32 %v4621, %v4813
    %v4815 = vpop.f32.mrb[0].mxu0
    %v4816 = vadd.f32 %v4623, %v4815
    %v4817 = vpop.f32.mrb[0].mxu0
    %v4818 = vadd.f32 %v4625, %v4817
    %4819 = vmatprep.mubr.bf16.mxu0 0
    %4820 = vmatmul.mubr.bf16.gmra.mrb[0].mxu0 %v1142
    %v4821 = vpop.f32.mrb[0].mxu0
    %v4822 = vadd.f32 %v4629, %v4821
    %v4823 = vpop.f32.mrb[0].mxu0
    %v4824 = vadd.f32 %v4631, %v4823
    %v4825 = vpop.f32.mrb[0].mxu0
    %v4826 = vadd.f32 %v4633, %v4825
    %v4827 = vpop.f32.mrb[0].mxu0
    %v4828 = vadd.f32 %v4635, %v4827
    %4829 = vmatprep.mubr.bf16.mxu0 0
    %4830 = vmatmul.mubr.bf16.gmra.mrb[0].mxu0 %v1145
    %v4831 = vpop.f32.mrb[0].mxu0
    %v4832 = vadd.f32 %v4639, %v4831
    %v4833 = vpop.f32.mrb[0].mxu0
    %v4834 = vadd.f32 %v4641, %v4833
    %v4835 = vpop.f32.mrb[0].mxu0
    %v4836 = vadd.f32 %v4643, %v4835
    %v4837 = vpop.f32.mrb[0].mxu0
    %v4838 = vadd.f32 %v4645, %v4837
    %4839 = vmatprep.mubr.bf16.mxu0 0
    %4840 = vmatmul.mubr.bf16.gmra.mrb[0].mxu0 %v1148
    %v4841 = vpop.f32.mrb[0].mxu0
    %v4842 = vadd.f32 %v4649, %v4841
    %v4843 = vpop.f32.mrb[0].mxu0
    %v4844 = vadd.f32 %v4651, %v4843
    %v4845 = vpop.f32.mrb[0].mxu0
    %v4846 = vadd.f32 %v4653, %v4845
    %v4847 = vpop.f32.mrb[0].mxu0
    %v4848 = vadd.f32 %v4655, %v4847
    %4849 = vmatprep.mubr.bf16.mxu0 0
    %4850 = vmatmul.mubr.bf16.gmra.mrb[0].mxu0 %v1151
    %v4851 = vpop.f32.mrb[0].mxu0
    %v4852 = vadd.f32 %v4659, %v4851
    %v4853 = vpop.f32.mrb[0].mxu0
    %v4854 = vadd.f32 %v4661, %v4853
    %v4855 = vpop.f32.mrb[0].mxu0
    %v4856 = vadd.f32 %v4663, %v4855
    %v4857 = vpop.f32.mrb[0].mxu0
    %v4858 = vadd.f32 %v4665, %v4857
    %4859 = vmatprep.mubr.bf16.mxu0 0
    %4860 = vmatmul.mubr.bf16.gmra.mrb[0].mxu0 %v1154
    %v4861 = vpop.f32.mrb[0].mxu0
    %v4862 = vadd.f32 %v4669, %v4861
    %v4863 = vpop.f32.mrb[0].mxu0
    %v4864 = vadd.f32 %v4671, %v4863
    %v4865 = vpop.f32.mrb[0].mxu0
    %v4866 = vadd.f32 %v4673, %v4865
    %v4867 = vpop.f32.mrb[0].mxu0
    %v4868 = vadd.f32 %v4675, %v4867
    %4869 = vmatprep.mubr.bf16.mxu0 0
    %4870 = vmatmul.mubr.bf16.gmra.mrb[0].mxu0 %v1157
    %v4871 = vpop.f32.mrb[0].mxu0
    %v4872 = vadd.f32 %v4679, %v4871
    %v4873 = vpop.f32.mrb[0].mxu0
    %v4874 = vadd.f32 %v4681, %v4873
    %v4875 = vpop.f32.mrb[0].mxu0
    %v4876 = vadd.f32 %v4683, %v4875
    %v4877 = vpop.f32.mrb[0].mxu0
    %v4878 = vadd.f32 %v4685, %v4877
    %4879 = vdwg.mxu0
    %4880 = vmatprep.subr.bf16.mxu0 %v2385
    %4881 = vmatpush1.bf16.msra.mxu0 %v2384
    %4882 = vmatprep.subr.bf16.mxu0 %v2397
    %4883 = vmatpush1.bf16.msra.mxu0 %v2396
    %4884 = vmatprep.subr.bf16.mxu0 %v2409
    %4885 = vmatpush1.bf16.msra.mxu0 %v2408
    %4886 = vmatprep.subr.bf16.mxu0 %v2421
    %4887 = vmatpush1.bf16.msra.mxu0 %v2420
    %4888 = vmatprep.subr.bf16.mxu0 %v2433
    %4889 = vmatpush1.bf16.msra.mxu0 %v2432
    %4890 = vmatprep.subr.bf16.mxu0 %v2445
    %4891 = vmatpush1.bf16.msra.mxu0 %v2444
    %4892 = vmatprep.subr.bf16.mxu0 %v2457
    %4893 = vmatpush1.bf16.msra.mxu0 %v2456
    %4894 = vmatprep.subr.bf16.mxu0 %v2469
    %4895 = vmatpush1.bf16.msra.mxu0 %v2468
    %4896 = vmatprep.subr.bf16.mxu0 %v2481
    %4897 = vmatpush1.bf16.msra.mxu0 %v2480
    %4898 = vmatprep.subr.bf16.mxu0 %v2493
    %4899 = vmatpush1.bf16.msra.mxu0 %v2492
    %4900 = vmatprep.subr.bf16.mxu0 %v2505
    %4901 = vmatpush1.bf16.msra.mxu0 %v2504
    %4902 = vmatprep.subr.bf16.mxu0 %v2517
    %4903 = vmatpush1.bf16.msra.mxu0 %v2516
    %4904 = vmatprep.subr.bf16.mxu0 %v2529
    %4905 = vmatpush1.bf16.msra.mxu0 %v2528
    %4906 = vmatprep.subr.bf16.mxu0 %v2541
    %4907 = vmatpush1.bf16.msra.mxu0 %v2540
    %4908 = vmatprep.subr.bf16.mxu0 %v2553
    %4909 = vmatpush1.bf16.msra.mxu0 %v2552
    %4910 = vmatprep.subr.bf16.mxu0 %v2565
    %4911 = vmatpush1.bf16.msra.mxu0 %v2564
    %4912 = vmatprep.mubr.bf16.mxu0 %v1111
    %4913 = vmatmul.mubr.bf16.gmra.mrb[0].mxu0 %v1110
    %v4914 = vpop.f32.mrb[0].mxu0
    %v4915 = vadd.f32 %v1493, %v4914
    %v4916 = vpop.f32.mrb[0].mxu0
    %v4917 = vadd.f32 %v1497, %v4916
    %v4918 = vpop.f32.mrb[0].mxu0
    %v4919 = vadd.f32 %v1493, %v4918
    %v4920 = vpop.f32.mrb[0].mxu0
    %v4921 = vadd.f32 %v1497, %v4920
    %4922 = vmatprep.mubr.bf16.mxu0 %v1114
    %4923 = vmatmul.mubr.bf16.gmra.mrb[0].mxu0 %v1113
    %v4924 = vpop.f32.mrb[0].mxu0
    %v4925 = vadd.f32 %v1493, %v4924
    %v4926 = vpop.f32.mrb[0].mxu0
    %v4927 = vadd.f32 %v1497, %v4926
    %v4928 = vpop.f32.mrb[0].mxu0
    %v4929 = vadd.f32 %v1493, %v4928
    %v4930 = vpop.f32.mrb[0].mxu0
    %v4931 = vadd.f32 %v1497, %v4930
    %4932 = vmatprep.mubr.bf16.mxu0 %v1117
    %4933 = vmatmul.mubr.bf16.gmra.mrb[0].mxu0 %v1116
    %v4934 = vpop.f32.mrb[0].mxu0
    %v4935 = vadd.f32 %v1493, %v4934
    %v4936 = vpop.f32.mrb[0].mxu0
    %v4937 = vadd.f32 %v1497, %v4936
    %v4938 = vpop.f32.mrb[0].mxu0
    %v4939 = vadd.f32 %v1493, %v4938
    %v4940 = vpop.f32.mrb[0].mxu0
    %v4941 = vadd.f32 %v1497, %v4940
    %4942 = vmatprep.mubr.bf16.mxu0 %v1120
    %4943 = vmatmul.mubr.bf16.gmra.mrb[0].mxu0 %v1119
    %v4944 = vpop.f32.mrb[0].mxu0
    %v4945 = vadd.f32 %v1493, %v4944
    %v4946 = vpop.f32.mrb[0].mxu0
    %v4947 = vadd.f32 %v1497, %v4946
    %v4948 = vpop.f32.mrb[0].mxu0
    %v4949 = vadd.f32 %v1493, %v4948
    %v4950 = vpop.f32.mrb[0].mxu0
    %v4951 = vadd.f32 %v1497, %v4950
    %4952 = vmatprep.mubr.bf16.mxu0 %v1123
    %4953 = vmatmul.mubr.bf16.gmra.mrb[0].mxu0 %v1122
    %v4954 = vpop.f32.mrb[0].mxu0
    %v4955 = vadd.f32 %v1493, %v4954
    %v4956 = vpop.f32.mrb[0].mxu0
    %v4957 = vadd.f32 %v1497, %v4956
    %v4958 = vpop.f32.mrb[0].mxu0
    %v4959 = vadd.f32 %v1493, %v4958
    %v4960 = vpop.f32.mrb[0].mxu0
    %v4961 = vadd.f32 %v1497, %v4960
    %4962 = vmatprep.mubr.bf16.mxu0 %v1126
    %4963 = vmatmul.mubr.bf16.gmra.mrb[0].mxu0 %v1125
    %v4964 = vpop.f32.mrb[0].mxu0
    %v4965 = vadd.f32 %v1493, %v4964
    %v4966 = vpop.f32.mrb[0].mxu0
    %v4967 = vadd.f32 %v1497, %v4966
    %v4968 = vpop.f32.mrb[0].mxu0
    %v4969 = vadd.f32 %v1493, %v4968
    %v4970 = vpop.f32.mrb[0].mxu0
    %v4971 = vadd.f32 %v1497, %v4970
    %4972 = vmatprep.mubr.bf16.mxu0 %v1129
    %4973 = vmatmul.mubr.bf16.gmra.mrb[0].mxu0 %v1128
    %v4974 = vpop.f32.mrb[0].mxu0
    %v4975 = vadd.f32 %v1493, %v4974
    %v4976 = vpop.f32.mrb[0].mxu0
    %v4977 = vadd.f32 %v1497, %v4976
    %v4978 = vpop.f32.mrb[0].mxu0
    %v4979 = vadd.f32 %v1493, %v4978
    %v4980 = vpop.f32.mrb[0].mxu0
    %v4981 = vadd.f32 %v1497, %v4980
    %4982 = vmatprep.mubr.bf16.mxu0 %v1132
    %4983 = vmatmul.mubr.bf16.gmra.mrb[0].mxu0 %v1131
    %v4984 = vpop.f32.mrb[0].mxu0
    %v4985 = vadd.f32 %v1493, %v4984
    %v4986 = vpop.f32.mrb[0].mxu0
    %v4987 = vadd.f32 %v1497, %v4986
    %v4988 = vpop.f32.mrb[0].mxu0
    %v4989 = vadd.f32 %v1493, %v4988
    %v4990 = vpop.f32.mrb[0].mxu0
    %v4991 = vadd.f32 %v1497, %v4990
    %4992 = vmatprep.mubr.bf16.mxu0 %v1135
    %4993 = vmatmul.mubr.bf16.gmra.mrb[0].mxu0 %v1134
    %v4994 = vpop.f32.mrb[0].mxu0
    %v4995 = vadd.f32 %v1493, %v4994
    %v4996 = vpop.f32.mrb[0].mxu0
    %v4997 = vadd.f32 %v1497, %v4996
    %v4998 = vpop.f32.mrb[0].mxu0
    %v4999 = vadd.f32 %v1493, %v4998
    %v5000 = vpop.f32.mrb[0].mxu0
    %v5001 = vadd.f32 %v1497, %v5000
    %5002 = vmatprep.mubr.bf16.mxu0 %v1138
    %5003 = vmatmul.mubr.bf16.gmra.mrb[0].mxu0 %v1137
    %v5004 = vpop.f32.mrb[0].mxu0
    %v5005 = vadd.f32 %v1493, %v5004
    %v5006 = vpop.f32.mrb[0].mxu0
    %v5007 = vadd.f32 %v1497, %v5006
    %v5008 = vpop.f32.mrb[0].mxu0
    %v5009 = vadd.f32 %v1493, %v5008
    %v5010 = vpop.f32.mrb[0].mxu0
    %v5011 = vadd.f32 %v1497, %v5010
    %5012 = vmatprep.mubr.bf16.mxu0 %v1141
    %5013 = vmatmul.mubr.bf16.gmra.mrb[0].mxu0 %v1140
    %v5014 = vpop.f32.mrb[0].mxu0
    %v5015 = vadd.f32 %v1493, %v5014
    %v5016 = vpop.f32.mrb[0].mxu0
    %v5017 = vadd.f32 %v1497, %v5016
    %v5018 = vpop.f32.mrb[0].mxu0
    %v5019 = vadd.f32 %v1493, %v5018
    %v5020 = vpop.f32.mrb[0].mxu0
    %v5021 = vadd.f32 %v1497, %v5020
    %5022 = vmatprep.mubr.bf16.mxu0 %v1144
    %5023 = vmatmul.mubr.bf16.gmra.mrb[0].mxu0 %v1143
    %v5024 = vpop.f32.mrb[0].mxu0
    %v5025 = vadd.f32 %v1493, %v5024
    %v5026 = vpop.f32.mrb[0].mxu0
    %v5027 = vadd.f32 %v1497, %v5026
    %v5028 = vpop.f32.mrb[0].mxu0
    %v5029 = vadd.f32 %v1493, %v5028
    %v5030 = vpop.f32.mrb[0].mxu0
    %v5031 = vadd.f32 %v1497, %v5030
    %5032 = vmatprep.mubr.bf16.mxu0 %v1147
    %5033 = vmatmul.mubr.bf16.gmra.mrb[0].mxu0 %v1146
    %v5034 = vpop.f32.mrb[0].mxu0
    %v5035 = vadd.f32 %v1493, %v5034
    %v5036 = vpop.f32.mrb[0].mxu0
    %v5037 = vadd.f32 %v1497, %v5036
    %v5038 = vpop.f32.mrb[0].mxu0
    %v5039 = vadd.f32 %v1493, %v5038
    %v5040 = vpop.f32.mrb[0].mxu0
    %v5041 = vadd.f32 %v1497, %v5040
    %5042 = vmatprep.mubr.bf16.mxu0 %v1150
    %5043 = vmatmul.mubr.bf16.gmra.mrb[0].mxu0 %v1149
    %v5044 = vpop.f32.mrb[0].mxu0
    %v5045 = vadd.f32 %v1493, %v5044
    %v5046 = vpop.f32.mrb[0].mxu0
    %v5047 = vadd.f32 %v1497, %v5046
    %v5048 = vpop.f32.mrb[0].mxu0
    %v5049 = vadd.f32 %v1493, %v5048
    %v5050 = vpop.f32.mrb[0].mxu0
    %v5051 = vadd.f32 %v1497, %v5050
    %5052 = vmatprep.mubr.bf16.mxu0 %v1153
    %5053 = vmatmul.mubr.bf16.gmra.mrb[0].mxu0 %v1152
    %v5054 = vpop.f32.mrb[0].mxu0
    %v5055 = vadd.f32 %v1493, %v5054
    %v5056 = vpop.f32.mrb[0].mxu0
    %v5057 = vadd.f32 %v1497, %v5056
    %v5058 = vpop.f32.mrb[0].mxu0
    %v5059 = vadd.f32 %v1493, %v5058
    %v5060 = vpop.f32.mrb[0].mxu0
    %v5061 = vadd.f32 %v1497, %v5060
    %5062 = vmatprep.mubr.bf16.mxu0 %v1156
    %5063 = vmatmul.mubr.bf16.gmra.mrb[0].mxu0 %v1155
    %v5064 = vpop.f32.mrb[0].mxu0
    %v5065 = vadd.f32 %v1493, %v5064
    %v5066 = vpop.f32.mrb[0].mxu0
    %v5067 = vadd.f32 %v1497, %v5066
    %v5068 = vpop.f32.mrb[0].mxu0
    %v5069 = vadd.f32 %v1493, %v5068
    %v5070 = vpop.f32.mrb[0].mxu0
    %v5071 = vadd.f32 %v1497, %v5070
    %5072 = vdwg.mxu0
    %5073 = vmatprep.subr.bf16.mxu0 %v2577
    %5074 = vmatpush1.bf16.msra.mxu0 %v2576
    %5075 = vmatprep.subr.bf16.mxu0 %v2589
    %5076 = vmatpush1.bf16.msra.mxu0 %v2588
    %5077 = vmatprep.subr.bf16.mxu0 %v2601
    %5078 = vmatpush1.bf16.msra.mxu0 %v2600
    %5079 = vmatprep.subr.bf16.mxu0 %v2613
    %5080 = vmatpush1.bf16.msra.mxu0 %v2612
    %5081 = vmatprep.subr.bf16.mxu0 %v2625
    %5082 = vmatpush1.bf16.msra.mxu0 %v2624
    %5083 = vmatprep.subr.bf16.mxu0 %v2637
    %5084 = vmatpush1.bf16.msra.mxu0 %v2636
    %5085 = vmatprep.subr.bf16.mxu0 %v2649
    %5086 = vmatpush1.bf16.msra.mxu0 %v2648
    %5087 = vmatprep.subr.bf16.mxu0 %v2661
    %5088 = vmatpush1.bf16.msra.mxu0 %v2660
    %5089 = vmatprep.subr.bf16.mxu0 0
    %5090 = vmatpush1.bf16.msra.mxu0 0
    %5091 = vmatprep.subr.bf16.mxu0 0
    %5092 = vmatpush1.bf16.msra.mxu0 0
    %5093 = vmatprep.subr.bf16.mxu0 0
    %5094 = vmatpush1.bf16.msra.mxu0 0
    %5095 = vmatprep.subr.bf16.mxu0 0
    %5096 = vmatpush1.bf16.msra.mxu0 0
    %5097 = vmatprep.subr.bf16.mxu0 0
    %5098 = vmatpush1.bf16.msra.mxu0 0
    %5099 = vmatprep.subr.bf16.mxu0 0
    %5100 = vmatpush1.bf16.msra.mxu0 0
    %5101 = vmatprep.subr.bf16.mxu0 0
    %5102 = vmatpush1.bf16.msra.mxu0 0
    %5103 = vmatprep.subr.bf16.mxu0 0
    %5104 = vmatpush1.bf16.msra.mxu0 0
    %5105 = vmatprep.mubr.bf16.mxu0 0
    %5106 = vmatmul.mubr.bf16.gmra.mrb[0].mxu0 %v1112
    %v5107 = vpop.f32.mrb[0].mxu0
    %v5108 = vadd.f32 %v4915, %v5107
    %v5109 = vpop.f32.mrb[0].mxu0
    %v5110 = vadd.f32 %v4917, %v5109
    %v5111 = vpop.f32.mrb[0].mxu0
    %v5112 = vadd.f32 %v4919, %v5111
    %v5113 = vpop.f32.mrb[0].mxu0
    %v5114 = vadd.f32 %v4921, %v5113
    %5115 = vmatprep.mubr.bf16.mxu0 0
    %5116 = vmatmul.mubr.bf16.gmra.mrb[0].mxu0 %v1115
    %v5117 = vpop.f32.mrb[0].mxu0
    %v5118 = vadd.f32 %v4925, %v5117
    %v5119 = vpop.f32.mrb[0].mxu0
    %v5120 = vadd.f32 %v4927, %v5119
    %v5121 = vpop.f32.mrb[0].mxu0
    %v5122 = vadd.f32 %v4929, %v5121
    %v5123 = vpop.f32.mrb[0].mxu0
    %v5124 = vadd.f32 %v4931, %v5123
    %5125 = vmatprep.mubr.bf16.mxu0 0
    %5126 = vmatmul.mubr.bf16.gmra.mrb[0].mxu0 %v1118
    %v5127 = vpop.f32.mrb[0].mxu0
    %v5128 = vadd.f32 %v4935, %v5127
    %v5129 = vpop.f32.mrb[0].mxu0
    %v5130 = vadd.f32 %v4937, %v5129
    %v5131 = vpop.f32.mrb[0].mxu0
    %v5132 = vadd.f32 %v4939, %v5131
    %v5133 = vpop.f32.mrb[0].mxu0
    %v5134 = vadd.f32 %v4941, %v5133
    %5135 = vmatprep.mubr.bf16.mxu0 0
    %5136 = vmatmul.mubr.bf16.gmra.mrb[0].mxu0 %v1121
    %v5137 = vpop.f32.mrb[0].mxu0
    %v5138 = vadd.f32 %v4945, %v5137
    %v5139 = vpop.f32.mrb[0].mxu0
    %v5140 = vadd.f32 %v4947, %v5139
    %v5141 = vpop.f32.mrb[0].mxu0
    %v5142 = vadd.f32 %v4949, %v5141
    %v5143 = vpop.f32.mrb[0].mxu0
    %v5144 = vadd.f32 %v4951, %v5143
    %5145 = vmatprep.mubr.bf16.mxu0 0
    %5146 = vmatmul.mubr.bf16.gmra.mrb[0].mxu0 %v1124
    %v5147 = vpop.f32.mrb[0].mxu0
    %v5148 = vadd.f32 %v4955, %v5147
    %v5149 = vpop.f32.mrb[0].mxu0
    %v5150 = vadd.f32 %v4957, %v5149
    %v5151 = vpop.f32.mrb[0].mxu0
    %v5152 = vadd.f32 %v4959, %v5151
    %v5153 = vpop.f32.mrb[0].mxu0
    %v5154 = vadd.f32 %v4961, %v5153
    %5155 = vmatprep.mubr.bf16.mxu0 0
    %5156 = vmatmul.mubr.bf16.gmra.mrb[0].mxu0 %v1127
    %v5157 = vpop.f32.mrb[0].mxu0
    %v5158 = vadd.f32 %v4965, %v5157
    %v5159 = vpop.f32.mrb[0].mxu0
    %v5160 = vadd.f32 %v4967, %v5159
    %v5161 = vpop.f32.mrb[0].mxu0
    %v5162 = vadd.f32 %v4969, %v5161
    %v5163 = vpop.f32.mrb[0].mxu0
    %v5164 = vadd.f32 %v4971, %v5163
    %5165 = vmatprep.mubr.bf16.mxu0 0
    %5166 = vmatmul.mubr.bf16.gmra.mrb[0].mxu0 %v1130
    %v5167 = vpop.f32.mrb[0].mxu0
    %v5168 = vadd.f32 %v4975, %v5167
    %v5169 = vpop.f32.mrb[0].mxu0
    %v5170 = vadd.f32 %v4977, %v5169
    %v5171 = vpop.f32.mrb[0].mxu0
    %v5172 = vadd.f32 %v4979, %v5171
    %v5173 = vpop.f32.mrb[0].mxu0
    %v5174 = vadd.f32 %v4981, %v5173
    %5175 = vmatprep.mubr.bf16.mxu0 0
    %5176 = vmatmul.mubr.bf16.gmra.mrb[0].mxu0 %v1133
    %v5177 = vpop.f32.mrb[0].mxu0
    %v5178 = vadd.f32 %v4985, %v5177
    %v5179 = vpop.f32.mrb[0].mxu0
    %v5180 = vadd.f32 %v4987, %v5179
    %v5181 = vpop.f32.mrb[0].mxu0
    %v5182 = vadd.f32 %v4989, %v5181
    %v5183 = vpop.f32.mrb[0].mxu0
    %v5184 = vadd.f32 %v4991, %v5183
    %5185 = vmatprep.mubr.bf16.mxu0 0
    %5186 = vmatmul.mubr.bf16.gmra.mrb[0].mxu0 %v1136
    %v5187 = vpop.f32.mrb[0].mxu0
    %v5188 = vadd.f32 %v4995, %v5187
    %v5189 = vpop.f32.mrb[0].mxu0
    %v5190 = vadd.f32 %v4997, %v5189
    %v5191 = vpop.f32.mrb[0].mxu0
    %v5192 = vadd.f32 %v4999, %v5191
    %v5193 = vpop.f32.mrb[0].mxu0
    %v5194 = vadd.f32 %v5001, %v5193
    %5195 = vmatprep.mubr.bf16.mxu0 0
    %5196 = vmatmul.mubr.bf16.gmra.mrb[0].mxu0 %v1139
    %v5197 = vpop.f32.mrb[0].mxu0
    %v5198 = vadd.f32 %v5005, %v5197
    %v5199 = vpop.f32.mrb[0].mxu0
    %v5200 = vadd.f32 %v5007, %v5199
    %v5201 = vpop.f32.mrb[0].mxu0
    %v5202 = vadd.f32 %v5009, %v5201
    %v5203 = vpop.f32.mrb[0].mxu0
    %v5204 = vadd.f32 %v5011, %v5203
    %5205 = vmatprep.mubr.bf16.mxu0 0
    %5206 = vmatmul.mubr.bf16.gmra.mrb[0].mxu0 %v1142
    %v5207 = vpop.f32.mrb[0].mxu0
    %v5208 = vadd.f32 %v5015, %v5207
    %v5209 = vpop.f32.mrb[0].mxu0
    %v5210 = vadd.f32 %v5017, %v5209
    %v5211 = vpop.f32.mrb[0].mxu0
    %v5212 = vadd.f32 %v5019, %v5211
    %v5213 = vpop.f32.mrb[0].mxu0
    %v5214 = vadd.f32 %v5021, %v5213
    %5215 = vmatprep.mubr.bf16.mxu0 0
    %5216 = vmatmul.mubr.bf16.gmra.mrb[0].mxu0 %v1145
    %v5217 = vpop.f32.mrb[0].mxu0
    %v5218 = vadd.f32 %v5025, %v5217
    %v5219 = vpop.f32.mrb[0].mxu0
    %v5220 = vadd.f32 %v5027, %v5219
    %v5221 = vpop.f32.mrb[0].mxu0
    %v5222 = vadd.f32 %v5029, %v5221
    %v5223 = vpop.f32.mrb[0].mxu0
    %v5224 = vadd.f32 %v5031, %v5223
    %5225 = vmatprep.mubr.bf16.mxu0 0
    %5226 = vmatmul.mubr.bf16.gmra.mrb[0].mxu0 %v1148
    %v5227 = vpop.f32.mrb[0].mxu0
    %v5228 = vadd.f32 %v5035, %v5227
    %v5229 = vpop.f32.mrb[0].mxu0
    %v5230 = vadd.f32 %v5037, %v5229
    %v5231 = vpop.f32.mrb[0].mxu0
    %v5232 = vadd.f32 %v5039, %v5231
    %v5233 = vpop.f32.mrb[0].mxu0
    %v5234 = vadd.f32 %v5041, %v5233
    %5235 = vmatprep.mubr.bf16.mxu0 0
    %5236 = vmatmul.mubr.bf16.gmra.mrb[0].mxu0 %v1151
    %v5237 = vpop.f32.mrb[0].mxu0
    %v5238 = vadd.f32 %v5045, %v5237
    %v5239 = vpop.f32.mrb[0].mxu0
    %v5240 = vadd.f32 %v5047, %v5239
    %v5241 = vpop.f32.mrb[0].mxu0
    %v5242 = vadd.f32 %v5049, %v5241
    %v5243 = vpop.f32.mrb[0].mxu0
    %v5244 = vadd.f32 %v5051, %v5243
    %5245 = vmatprep.mubr.bf16.mxu0 0
    %5246 = vmatmul.mubr.bf16.gmra.mrb[0].mxu0 %v1154
    %v5247 = vpop.f32.mrb[0].mxu0
    %v5248 = vadd.f32 %v5055, %v5247
    %v5249 = vpop.f32.mrb[0].mxu0
    %v5250 = vadd.f32 %v5057, %v5249
    %v5251 = vpop.f32.mrb[0].mxu0
    %v5252 = vadd.f32 %v5059, %v5251
    %v5253 = vpop.f32.mrb[0].mxu0
    %v5254 = vadd.f32 %v5061, %v5253
    %5255 = vmatprep.mubr.bf16.mxu0 0
    %5256 = vmatmul.mubr.bf16.gmra.mrb[0].mxu0 %v1157
    %v5257 = vpop.f32.mrb[0].mxu0
    %v5258 = vadd.f32 %v5065, %v5257
    %v5259 = vpop.f32.mrb[0].mxu0
    %v5260 = vadd.f32 %v5067, %v5259
    %v5261 = vpop.f32.mrb[0].mxu0
    %v5262 = vadd.f32 %v5069, %v5261
    %v5263 = vpop.f32.mrb[0].mxu0
    %v5264 = vadd.f32 %v5071, %v5263
    %5265 = vdwg.mxu0
    %v5266 = vmul.f32 %v3178, 0.5
    %v5267 = vmul.f32 %v3180, 0.5
    %v5268 = vmul.f32 %v3564, 0.5
    %v5269 = vmul.f32 %v3566, 0.5
    %v5270 = vmul.f32 %v3950, 0.5
    %v5271 = vmul.f32 %v3952, 0.5
    %v5272 = vmul.f32 %v4336, 0.5
    %v5273 = vmul.f32 %v4338, 0.5
    %v5274 = vmul.f32 %v4722, 0.5
    %v5275 = vmul.f32 %v4724, 0.5
    %v5276 = vmul.f32 %v5108, 0.5
    %v5277 = vmul.f32 %v5110, 0.5
    %v5278 = vmul.f32 %v3182, 0.5
    %v5279 = vmul.f32 %v3184, 0.5
    %v5280 = vmul.f32 %v3568, 0.5
    %v5281 = vmul.f32 %v3570, 0.5
    %v5282 = vmul.f32 %v3954, 0.5
    %v5283 = vmul.f32 %v3956, 0.5
    %v5284 = vmul.f32 %v4340, 0.5
    %v5285 = vmul.f32 %v4342, 0.5
    %v5286 = vmul.f32 %v4726, 0.5
    %v5287 = vmul.f32 %v4728, 0.5
    %v5288 = vmul.f32 %v5112, 0.5
    %v5289 = vmul.f32 %v5114, 0.5
    %v5290 = vmul.f32 %v3188, 0.5
    %v5291 = vmul.f32 %v3190, 0.5
    %v5292 = vmul.f32 %v3574, 0.5
    %v5293 = vmul.f32 %v3576, 0.5
    %v5294 = vmul.f32 %v3960, 0.5
    %v5295 = vmul.f32 %v3962, 0.5
    %v5296 = vmul.f32 %v4346, 0.5
    %v5297 = vmul.f32 %v4348, 0.5
    %v5298 = vmul.f32 %v4732, 0.5
    %v5299 = vmul.f32 %v4734, 0.5
    %v5300 = vmul.f32 %v5118, 0.5
    %v5301 = vmul.f32 %v5120, 0.5
    %v5302 = vmul.f32 %v3192, 0.5
    %v5303 = vmul.f32 %v3194, 0.5
    %v5304 = vmul.f32 %v3578, 0.5
    %v5305 = vmul.f32 %v3580, 0.5
    %v5306 = vmul.f32 %v3964, 0.5
    %v5307 = vmul.f32 %v3966, 0.5
    %v5308 = vmul.f32 %v4350, 0.5
    %v5309 = vmul.f32 %v4352, 0.5
    %v5310 = vmul.f32 %v4736, 0.5
    %v5311 = vmul.f32 %v4738, 0.5
    %v5312 = vmul.f32 %v5122, 0.5
    %v5313 = vmul.f32 %v5124, 0.5
    %v5314 = vmul.f32 %v3198, 0.5
    %v5315 = vmul.f32 %v3200, 0.5
    %v5316 = vmul.f32 %v3584, 0.5
    %v5317 = vmul.f32 %v3586, 0.5
    %v5318 = vmul.f32 %v3970, 0.5
    %v5319 = vmul.f32 %v3972, 0.5
    %v5320 = vmul.f32 %v4356, 0.5
    %v5321 = vmul.f32 %v4358, 0.5
    %v5322 = vmul.f32 %v4742, 0.5
    %v5323 = vmul.f32 %v4744, 0.5
    %v5324 = vmul.f32 %v5128, 0.5
    %v5325 = vmul.f32 %v5130, 0.5
    %v5326 = vmul.f32 %v3202, 0.5
    %v5327 = vmul.f32 %v3204, 0.5
    %v5328 = vmul.f32 %v3588, 0.5
    %v5329 = vmul.f32 %v3590, 0.5
    %v5330 = vmul.f32 %v3974, 0.5
    %v5331 = vmul.f32 %v3976, 0.5
    %v5332 = vmul.f32 %v4360, 0.5
    %v5333 = vmul.f32 %v4362, 0.5
    %v5334 = vmul.f32 %v4746, 0.5
    %v5335 = vmul.f32 %v4748, 0.5
    %v5336 = vmul.f32 %v5132, 0.5
    %v5337 = vmul.f32 %v5134, 0.5
    %v5338 = vmul.f32 %v3208, 0.5
    %v5339 = vmul.f32 %v3210, 0.5
    %v5340 = vmul.f32 %v3594, 0.5
    %v5341 = vmul.f32 %v3596, 0.5
    %v5342 = vmul.f32 %v3980, 0.5
    %v5343 = vmul.f32 %v3982, 0.5
    %v5344 = vmul.f32 %v4366, 0.5
    %v5345 = vmul.f32 %v4368, 0.5
    %v5346 = vmul.f32 %v4752, 0.5
    %v5347 = vmul.f32 %v4754, 0.5
    %v5348 = vmul.f32 %v5138, 0.5
    %v5349 = vmul.f32 %v5140, 0.5
    %v5350 = vmul.f32 %v3212, 0.5
    %v5351 = vmul.f32 %v3214, 0.5
    %v5352 = vmul.f32 %v3598, 0.5
    %v5353 = vmul.f32 %v3600, 0.5
    %v5354 = vmul.f32 %v3984, 0.5
    %v5355 = vmul.f32 %v3986, 0.5
    %v5356 = vmul.f32 %v4370, 0.5
    %v5357 = vmul.f32 %v4372, 0.5
    %v5358 = vmul.f32 %v4756, 0.5
    %v5359 = vmul.f32 %v4758, 0.5
    %v5360 = vmul.f32 %v5142, 0.5
    %v5361 = vmul.f32 %v5144, 0.5
    %v5362 = vmul.f32 %v3218, 0.5
    %v5363 = vmul.f32 %v3220, 0.5
    %v5364 = vmul.f32 %v3604, 0.5
    %v5365 = vmul.f32 %v3606, 0.5
    %v5366 = vmul.f32 %v3990, 0.5
    %v5367 = vmul.f32 %v3992, 0.5
    %v5368 = vmul.f32 %v4376, 0.5
    %v5369 = vmul.f32 %v4378, 0.5
    %v5370 = vmul.f32 %v4762, 0.5
    %v5371 = vmul.f32 %v4764, 0.5
    %v5372 = vmul.f32 %v5148, 0.5
    %v5373 = vmul.f32 %v5150, 0.5
    %v5374 = vmul.f32 %v3222, 0.5
    %v5375 = vmul.f32 %v3224, 0.5
    %v5376 = vmul.f32 %v3608, 0.5
    %v5377 = vmul.f32 %v3610, 0.5
    %v5378 = vmul.f32 %v3994, 0.5
    %v5379 = vmul.f32 %v3996, 0.5
    %v5380 = vmul.f32 %v4380, 0.5
    %v5381 = vmul.f32 %v4382, 0.5
    %v5382 = vmul.f32 %v4766, 0.5
    %v5383 = vmul.f32 %v4768, 0.5
    %v5384 = vmul.f32 %v5152, 0.5
    %v5385 = vmul.f32 %v5154, 0.5
    %v5386 = vmul.f32 %v3228, 0.5
    %v5387 = vmul.f32 %v3230, 0.5
    %v5388 = vmul.f32 %v3614, 0.5
    %v5389 = vmul.f32 %v3616, 0.5
    %v5390 = vmul.f32 %v4000, 0.5
    %v5391 = vmul.f32 %v4002, 0.5
    %v5392 = vmul.f32 %v4386, 0.5
    %v5393 = vmul.f32 %v4388, 0.5
    %v5394 = vmul.f32 %v4772, 0.5
    %v5395 = vmul.f32 %v4774, 0.5
    %v5396 = vmul.f32 %v5158, 0.5
    %v5397 = vmul.f32 %v5160, 0.5
    %v5398 = vmul.f32 %v3232, 0.5
    %v5399 = vmul.f32 %v3234, 0.5
    %v5400 = vmul.f32 %v3618, 0.5
    %v5401 = vmul.f32 %v3620, 0.5
    %v5402 = vmul.f32 %v4004, 0.5
    %v5403 = vmul.f32 %v4006, 0.5
    %v5404 = vmul.f32 %v4390, 0.5
    %v5405 = vmul.f32 %v4392, 0.5
    %v5406 = vmul.f32 %v4776, 0.5
    %v5407 = vmul.f32 %v4778, 0.5
    %v5408 = vmul.f32 %v5162, 0.5
    %v5409 = vmul.f32 %v5164, 0.5
    %v5410 = vmul.f32 %v3238, 0.5
    %v5411 = vmul.f32 %v3240, 0.5
    %v5412 = vmul.f32 %v3624, 0.5
    %v5413 = vmul.f32 %v3626, 0.5
    %v5414 = vmul.f32 %v4010, 0.5
    %v5415 = vmul.f32 %v4012, 0.5
    %v5416 = vmul.f32 %v4396, 0.5
    %v5417 = vmul.f32 %v4398, 0.5
    %v5418 = vmul.f32 %v4782, 0.5
    %v5419 = vmul.f32 %v4784, 0.5
    %v5420 = vmul.f32 %v5168, 0.5
    %v5421 = vmul.f32 %v5170, 0.5
    %v5422 = vmul.f32 %v3242, 0.5
    %v5423 = vmul.f32 %v3244, 0.5
    %v5424 = vmul.f32 %v3628, 0.5
    %v5425 = vmul.f32 %v3630, 0.5
    %v5426 = vmul.f32 %v4014, 0.5
    %v5427 = vmul.f32 %v4016, 0.5
    %v5428 = vmul.f32 %v4400, 0.5
    %v5429 = vmul.f32 %v4402, 0.5
    %v5430 = vmul.f32 %v4786, 0.5
    %v5431 = vmul.f32 %v4788, 0.5
    %v5432 = vmul.f32 %v5172, 0.5
    %v5433 = vmul.f32 %v5174, 0.5
    %v5434 = vmul.f32 %v3248, 0.5
    %v5435 = vmul.f32 %v3250, 0.5
    %v5436 = vmul.f32 %v3634, 0.5
    %v5437 = vmul.f32 %v3636, 0.5
    %v5438 = vmul.f32 %v4020, 0.5
    %v5439 = vmul.f32 %v4022, 0.5
    %v5440 = vmul.f32 %v4406, 0.5
    %v5441 = vmul.f32 %v4408, 0.5
    %v5442 = vmul.f32 %v4792, 0.5
    %v5443 = vmul.f32 %v4794, 0.5
    %v5444 = vmul.f32 %v5178, 0.5
    %v5445 = vmul.f32 %v5180, 0.5
    %v5446 = vmul.f32 %v3252, 0.5
    %v5447 = vmul.f32 %v3254, 0.5
    %v5448 = vmul.f32 %v3638, 0.5
    %v5449 = vmul.f32 %v3640, 0.5
    %v5450 = vmul.f32 %v4024, 0.5
    %v5451 = vmul.f32 %v4026, 0.5
    %v5452 = vmul.f32 %v4410, 0.5
    %v5453 = vmul.f32 %v4412, 0.5
    %v5454 = vmul.f32 %v4796, 0.5
    %v5455 = vmul.f32 %v4798, 0.5
    %v5456 = vmul.f32 %v5182, 0.5
    %v5457 = vmul.f32 %v5184, 0.5
    %v5458 = vmul.f32 %v3258, 0.5
    %v5459 = vmul.f32 %v3260, 0.5
    %v5460 = vmul.f32 %v3644, 0.5
    %v5461 = vmul.f32 %v3646, 0.5
    %v5462 = vmul.f32 %v4030, 0.5
    %v5463 = vmul.f32 %v4032, 0.5
    %v5464 = vmul.f32 %v4416, 0.5
    %v5465 = vmul.f32 %v4418, 0.5
    %v5466 = vmul.f32 %v4802, 0.5
    %v5467 = vmul.f32 %v4804, 0.5
    %v5468 = vmul.f32 %v5188, 0.5
    %v5469 = vmul.f32 %v5190, 0.5
    %v5470 = vmul.f32 %v3262, 0.5
    %v5471 = vmul.f32 %v3264, 0.5
    %v5472 = vmul.f32 %v3648, 0.5
    %v5473 = vmul.f32 %v3650, 0.5
    %v5474 = vmul.f32 %v4034, 0.5
    %v5475 = vmul.f32 %v4036, 0.5
    %v5476 = vmul.f32 %v4420, 0.5
    %v5477 = vmul.f32 %v4422, 0.5
    %v5478 = vmul.f32 %v4806, 0.5
    %v5479 = vmul.f32 %v4808, 0.5
    %v5480 = vmul.f32 %v5192, 0.5
    %v5481 = vmul.f32 %v5194, 0.5
    %v5482 = vmul.f32 %v3268, 0.5
    %v5483 = vmul.f32 %v3270, 0.5
    %v5484 = vmul.f32 %v3654, 0.5
    %v5485 = vmul.f32 %v3656, 0.5
    %v5486 = vmul.f32 %v4040, 0.5
    %v5487 = vmul.f32 %v4042, 0.5
    %v5488 = vmul.f32 %v4426, 0.5
    %v5489 = vmul.f32 %v4428, 0.5
    %v5490 = vmul.f32 %v4812, 0.5
    %v5491 = vmul.f32 %v4814, 0.5
    %v5492 = vmul.f32 %v5198, 0.5
    %v5493 = vmul.f32 %v5200, 0.5
    %v5494 = vmul.f32 %v3272, 0.5
    %v5495 = vmul.f32 %v3274, 0.5
    %v5496 = vmul.f32 %v3658, 0.5
    %v5497 = vmul.f32 %v3660, 0.5
    %v5498 = vmul.f32 %v4044, 0.5
    %v5499 = vmul.f32 %v4046, 0.5
    %v5500 = vmul.f32 %v4430, 0.5
    %v5501 = vmul.f32 %v4432, 0.5
    %v5502 = vmul.f32 %v4816, 0.5
    %v5503 = vmul.f32 %v4818, 0.5
    %v5504 = vmul.f32 %v5202, 0.5
    %v5505 = vmul.f32 %v5204, 0.5
    %v5506 = vmul.f32 %v3278, 0.5
    %v5507 = vmul.f32 %v3280, 0.5
    %v5508 = vmul.f32 %v3664, 0.5
    %v5509 = vmul.f32 %v3666, 0.5
    %v5510 = vmul.f32 %v4050, 0.5
    %v5511 = vmul.f32 %v4052, 0.5
    %v5512 = vmul.f32 %v4436, 0.5
    %v5513 = vmul.f32 %v4438, 0.5
    %v5514 = vmul.f32 %v4822, 0.5
    %v5515 = vmul.f32 %v4824, 0.5
    %v5516 = vmul.f32 %v5208, 0.5
    %v5517 = vmul.f32 %v5210, 0.5
    %v5518 = vmul.f32 %v3282, 0.5
    %v5519 = vmul.f32 %v3284, 0.5
    %v5520 = vmul.f32 %v3668, 0.5
    %v5521 = vmul.f32 %v3670, 0.5
    %v5522 = vmul.f32 %v4054, 0.5
    %v5523 = vmul.f32 %v4056, 0.5
    %v5524 = vmul.f32 %v4440, 0.5
    %v5525 = vmul.f32 %v4442, 0.5
    %v5526 = vmul.f32 %v4826, 0.5
    %v5527 = vmul.f32 %v4828, 0.5
    %v5528 = vmul.f32 %v5212, 0.5
    %v5529 = vmul.f32 %v5214, 0.5
    %v5530 = vmul.f32 %v3288, 0.5
    %v5531 = vmul.f32 %v3290, 0.5
    %v5532 = vmul.f32 %v3674, 0.5
    %v5533 = vmul.f32 %v3676, 0.5
    %v5534 = vmul.f32 %v4060, 0.5
    %v5535 = vmul.f32 %v4062, 0.5
    %v5536 = vmul.f32 %v4446, 0.5
    %v5537 = vmul.f32 %v4448, 0.5
    %v5538 = vmul.f32 %v4832, 0.5
    %v5539 = vmul.f32 %v4834, 0.5
    %v5540 = vmul.f32 %v5218, 0.5
    %v5541 = vmul.f32 %v5220, 0.5
    %v5542 = vmul.f32 %v3292, 0.5
    %v5543 = vmul.f32 %v3294, 0.5
    %v5544 = vmul.f32 %v3678, 0.5
    %v5545 = vmul.f32 %v3680, 0.5
    %v5546 = vmul.f32 %v4064, 0.5
    %v5547 = vmul.f32 %v4066, 0.5
    %v5548 = vmul.f32 %v4450, 0.5
    %v5549 = vmul.f32 %v4452, 0.5
    %v5550 = vmul.f32 %v4836, 0.5
    %v5551 = vmul.f32 %v4838, 0.5
    %v5552 = vmul.f32 %v5222, 0.5
    %v5553 = vmul.f32 %v5224, 0.5
    %v5554 = vmul.f32 %v3298, 0.5
    %v5555 = vmul.f32 %v3300, 0.5
    %v5556 = vmul.f32 %v3684, 0.5
    %v5557 = vmul.f32 %v3686, 0.5
    %v5558 = vmul.f32 %v4070, 0.5
    %v5559 = vmul.f32 %v4072, 0.5
    %v5560 = vmul.f32 %v4456, 0.5
    %v5561 = vmul.f32 %v4458, 0.5
    %v5562 = vmul.f32 %v4842, 0.5
    %v5563 = vmul.f32 %v4844, 0.5
    %v5564 = vmul.f32 %v5228, 0.5
    %v5565 = vmul.f32 %v5230, 0.5
    %v5566 = vmul.f32 %v3302, 0.5
    %v5567 = vmul.f32 %v3304, 0.5
    %v5568 = vmul.f32 %v3688, 0.5
    %v5569 = vmul.f32 %v3690, 0.5
    %v5570 = vmul.f32 %v4074, 0.5
    %v5571 = vmul.f32 %v4076, 0.5
    %v5572 = vmul.f32 %v4460, 0.5
    %v5573 = vmul.f32 %v4462, 0.5
    %v5574 = vmul.f32 %v4846, 0.5
    %v5575 = vmul.f32 %v4848, 0.5
    %v5576 = vmul.f32 %v5232, 0.5
    %v5577 = vmul.f32 %v5234, 0.5
    %v5578 = vmul.f32 %v3308, 0.5
    %v5579 = vmul.f32 %v3310, 0.5
    %v5580 = vmul.f32 %v3694, 0.5
    %v5581 = vmul.f32 %v3696, 0.5
    %v5582 = vmul.f32 %v4080, 0.5
    %v5583 = vmul.f32 %v4082, 0.5
    %v5584 = vmul.f32 %v4466, 0.5
    %v5585 = vmul.f32 %v4468, 0.5
    %v5586 = vmul.f32 %v4852, 0.5
    %v5587 = vmul.f32 %v4854, 0.5
    %v5588 = vmul.f32 %v5238, 0.5
    %v5589 = vmul.f32 %v5240, 0.5
    %v5590 = vmul.f32 %v3312, 0.5
    %v5591 = vmul.f32 %v3314, 0.5
    %v5592 = vmul.f32 %v3698, 0.5
    %v5593 = vmul.f32 %v3700, 0.5
    %v5594 = vmul.f32 %v4084, 0.5
    %v5595 = vmul.f32 %v4086, 0.5
    %v5596 = vmul.f32 %v4470, 0.5
    %v5597 = vmul.f32 %v4472, 0.5
    %v5598 = vmul.f32 %v4856, 0.5
    %v5599 = vmul.f32 %v4858, 0.5
    %v5600 = vmul.f32 %v5242, 0.5
    %v5601 = vmul.f32 %v5244, 0.5
    %v5602 = vmul.f32 %v3318, 0.5
    %v5603 = vmul.f32 %v3320, 0.5
    %v5604 = vmul.f32 %v3704, 0.5
    %v5605 = vmul.f32 %v3706, 0.5
    %v5606 = vmul.f32 %v4090, 0.5
    %v5607 = vmul.f32 %v4092, 0.5
    %v5608 = vmul.f32 %v4476, 0.5
    %v5609 = vmul.f32 %v4478, 0.5
    %v5610 = vmul.f32 %v4862, 0.5
    %v5611 = vmul.f32 %v4864, 0.5
    %v5612 = vmul.f32 %v5248, 0.5
    %v5613 = vmul.f32 %v5250, 0.5
    %v5614 = vmul.f32 %v3322, 0.5
    %v5615 = vmul.f32 %v3324, 0.5
    %v5616 = vmul.f32 %v3708, 0.5
    %v5617 = vmul.f32 %v3710, 0.5
    %v5618 = vmul.f32 %v4094, 0.5
    %v5619 = vmul.f32 %v4096, 0.5
    %v5620 = vmul.f32 %v4480, 0.5
    %v5621 = vmul.f32 %v4482, 0.5
    %v5622 = vmul.f32 %v4866, 0.5
    %v5623 = vmul.f32 %v4868, 0.5
    %v5624 = vmul.f32 %v5252, 0.5
    %v5625 = vmul.f32 %v5254, 0.5
    %v5626 = vmul.f32 %v3328, 0.5
    %v5627 = vmul.f32 %v3330, 0.5
    %v5628 = vmul.f32 %v3714, 0.5
    %v5629 = vmul.f32 %v3716, 0.5
    %v5630 = vmul.f32 %v4100, 0.5
    %v5631 = vmul.f32 %v4102, 0.5
    %v5632 = vmul.f32 %v4486, 0.5
    %v5633 = vmul.f32 %v4488, 0.5
    %v5634 = vmul.f32 %v4872, 0.5
    %v5635 = vmul.f32 %v4874, 0.5
    %v5636 = vmul.f32 %v5258, 0.5
    %v5637 = vmul.f32 %v5260, 0.5
    %v5638 = vmul.f32 %v3332, 0.5
    %v5639 = vmul.f32 %v3334, 0.5
    %v5640 = vmul.f32 %v3718, 0.5
    %v5641 = vmul.f32 %v3720, 0.5
    %v5642 = vmul.f32 %v4104, 0.5
    %v5643 = vmul.f32 %v4106, 0.5
    %v5644 = vmul.f32 %v4490, 0.5
    %v5645 = vmul.f32 %v4492, 0.5
    %v5646 = vmul.f32 %v4876, 0.5
    %v5647 = vmul.f32 %v4878, 0.5
    %v5648 = vmul.f32 %v5262, 0.5
    %v5649 = vmul.f32 %v5264, 0.5
    %v5650 = vmul.f32 %v3178, 0.70710677
    %v5651 = vmul.f32 %v3180, 0.70710677
    %v5652 = vmul.f32 %v3564, 0.70710677
    %v5653 = vmul.f32 %v3566, 0.70710677
    %v5654 = vmul.f32 %v3950, 0.70710677
    %v5655 = vmul.f32 %v3952, 0.70710677
    %v5656 = vmul.f32 %v4336, 0.70710677
    %v5657 = vmul.f32 %v4338, 0.70710677
    %v5658 = vmul.f32 %v4722, 0.70710677
    %v5659 = vmul.f32 %v4724, 0.70710677
    %v5660 = vmul.f32 %v5108, 0.70710677
    %v5661 = vmul.f32 %v5110, 0.70710677
    %v5662 = vmul.f32 %v3182, 0.70710677
    %v5663 = vmul.f32 %v3184, 0.70710677
    %v5664 = vmul.f32 %v3568, 0.70710677
    %v5665 = vmul.f32 %v3570, 0.70710677
    %v5666 = vmul.f32 %v3954, 0.70710677
    %v5667 = vmul.f32 %v3956, 0.70710677
    %v5668 = vmul.f32 %v4340, 0.70710677
    %v5669 = vmul.f32 %v4342, 0.70710677
    %v5670 = vmul.f32 %v4726, 0.70710677
    %v5671 = vmul.f32 %v4728, 0.70710677
    %v5672 = vmul.f32 %v5112, 0.70710677
    %v5673 = vmul.f32 %v5114, 0.70710677
    %v5674 = vmul.f32 %v3188, 0.70710677
    %v5675 = vmul.f32 %v3190, 0.70710677
    %v5676 = vmul.f32 %v3574, 0.70710677
    %v5677 = vmul.f32 %v3576, 0.70710677
    %v5678 = vmul.f32 %v3960, 0.70710677
    %v5679 = vmul.f32 %v3962, 0.70710677
    %v5680 = vmul.f32 %v4346, 0.70710677
    %v5681 = vmul.f32 %v4348, 0.70710677
    %v5682 = vmul.f32 %v4732, 0.70710677
    %v5683 = vmul.f32 %v4734, 0.70710677
    %v5684 = vmul.f32 %v5118, 0.70710677
    %v5685 = vmul.f32 %v5120, 0.70710677
    %v5686 = vmul.f32 %v3192, 0.70710677
    %v5687 = vmul.f32 %v3194, 0.70710677
    %v5688 = vmul.f32 %v3578, 0.70710677
    %v5689 = vmul.f32 %v3580, 0.70710677
    %v5690 = vmul.f32 %v3964, 0.70710677
    %v5691 = vmul.f32 %v3966, 0.70710677
    %v5692 = vmul.f32 %v4350, 0.70710677
    %v5693 = vmul.f32 %v4352, 0.70710677
    %v5694 = vmul.f32 %v4736, 0.70710677
    %v5695 = vmul.f32 %v4738, 0.70710677
    %v5696 = vmul.f32 %v5122, 0.70710677
    %v5697 = vmul.f32 %v5124, 0.70710677
    %v5698 = vmul.f32 %v3198, 0.70710677
    %v5699 = vmul.f32 %v3200, 0.70710677
    %v5700 = vmul.f32 %v3584, 0.70710677
    %v5701 = vmul.f32 %v3586, 0.70710677
    %v5702 = vmul.f32 %v3970, 0.70710677
    %v5703 = vmul.f32 %v3972, 0.70710677
    %v5704 = vmul.f32 %v4356, 0.70710677
    %v5705 = vmul.f32 %v4358, 0.70710677
    %v5706 = vmul.f32 %v4742, 0.70710677
    %v5707 = vmul.f32 %v4744, 0.70710677
    %v5708 = vmul.f32 %v5128, 0.70710677
    %v5709 = vmul.f32 %v5130, 0.70710677
    %v5710 = vmul.f32 %v3202, 0.70710677
    %v5711 = vmul.f32 %v3204, 0.70710677
    %v5712 = vmul.f32 %v3588, 0.70710677
    %v5713 = vmul.f32 %v3590, 0.70710677
    %v5714 = vmul.f32 %v3974, 0.70710677
    %v5715 = vmul.f32 %v3976, 0.70710677
    %v5716 = vmul.f32 %v4360, 0.70710677
    %v5717 = vmul.f32 %v4362, 0.70710677
    %v5718 = vmul.f32 %v4746, 0.70710677
    %v5719 = vmul.f32 %v4748, 0.70710677
    %v5720 = vmul.f32 %v5132, 0.70710677
    %v5721 = vmul.f32 %v5134, 0.70710677
    %v5722 = vmul.f32 %v3208, 0.70710677
    %v5723 = vmul.f32 %v3210, 0.70710677
    %v5724 = vmul.f32 %v3594, 0.70710677
    %v5725 = vmul.f32 %v3596, 0.70710677
    %v5726 = vmul.f32 %v3980, 0.70710677
    %v5727 = vmul.f32 %v3982, 0.70710677
    %v5728 = vmul.f32 %v4366, 0.70710677
    %v5729 = vmul.f32 %v4368, 0.70710677
    %v5730 = vmul.f32 %v4752, 0.70710677
    %v5731 = vmul.f32 %v4754, 0.70710677
    %v5732 = vmul.f32 %v5138, 0.70710677
    %v5733 = vmul.f32 %v5140, 0.70710677
    %v5734 = vmul.f32 %v3212, 0.70710677
    %v5735 = vmul.f32 %v3214, 0.70710677
    %v5736 = vmul.f32 %v3598, 0.70710677
    %v5737 = vmul.f32 %v3600, 0.70710677
    %v5738 = vmul.f32 %v3984, 0.70710677
    %v5739 = vmul.f32 %v3986, 0.70710677
    %v5740 = vmul.f32 %v4370, 0.70710677
    %v5741 = vmul.f32 %v4372, 0.70710677
    %v5742 = vmul.f32 %v4756, 0.70710677
    %v5743 = vmul.f32 %v4758, 0.70710677
    %v5744 = vmul.f32 %v5142, 0.70710677
    %v5745 = vmul.f32 %v5144, 0.70710677
    %v5746 = vmul.f32 %v3218, 0.70710677
    %v5747 = vmul.f32 %v3220, 0.70710677
    %v5748 = vmul.f32 %v3604, 0.70710677
    %v5749 = vmul.f32 %v3606, 0.70710677
    %v5750 = vmul.f32 %v3990, 0.70710677
    %v5751 = vmul.f32 %v3992, 0.70710677
    %v5752 = vmul.f32 %v4376, 0.70710677
    %v5753 = vmul.f32 %v4378, 0.70710677
    %v5754 = vmul.f32 %v4762, 0.70710677
    %v5755 = vmul.f32 %v4764, 0.70710677
    %v5756 = vmul.f32 %v5148, 0.70710677
    %v5757 = vmul.f32 %v5150, 0.70710677
    %v5758 = vmul.f32 %v3222, 0.70710677
    %v5759 = vmul.f32 %v3224, 0.70710677
    %v5760 = vmul.f32 %v3608, 0.70710677
    %v5761 = vmul.f32 %v3610, 0.70710677
    %v5762 = vmul.f32 %v3994, 0.70710677
    %v5763 = vmul.f32 %v3996, 0.70710677
    %v5764 = vmul.f32 %v4380, 0.70710677
    %v5765 = vmul.f32 %v4382, 0.70710677
    %v5766 = vmul.f32 %v4766, 0.70710677
    %v5767 = vmul.f32 %v4768, 0.70710677
    %v5768 = vmul.f32 %v5152, 0.70710677
    %v5769 = vmul.f32 %v5154, 0.70710677
    %v5770 = vmul.f32 %v3228, 0.70710677
    %v5771 = vmul.f32 %v3230, 0.70710677
    %v5772 = vmul.f32 %v3614, 0.70710677
    %v5773 = vmul.f32 %v3616, 0.70710677
    %v5774 = vmul.f32 %v4000, 0.70710677
    %v5775 = vmul.f32 %v4002, 0.70710677
    %v5776 = vmul.f32 %v4386, 0.70710677
    %v5777 = vmul.f32 %v4388, 0.70710677
    %v5778 = vmul.f32 %v4772, 0.70710677
    %v5779 = vmul.f32 %v4774, 0.70710677
    %v5780 = vmul.f32 %v5158, 0.70710677
    %v5781 = vmul.f32 %v5160, 0.70710677
    %v5782 = vmul.f32 %v3232, 0.70710677
    %v5783 = vmul.f32 %v3234, 0.70710677
    %v5784 = vmul.f32 %v3618, 0.70710677
    %v5785 = vmul.f32 %v3620, 0.70710677
    %v5786 = vmul.f32 %v4004, 0.70710677
    %v5787 = vmul.f32 %v4006, 0.70710677
    %v5788 = vmul.f32 %v4390, 0.70710677
    %v5789 = vmul.f32 %v4392, 0.70710677
    %v5790 = vmul.f32 %v4776, 0.70710677
    %v5791 = vmul.f32 %v4778, 0.70710677
    %v5792 = vmul.f32 %v5162, 0.70710677
    %v5793 = vmul.f32 %v5164, 0.70710677
    %v5794 = vmul.f32 %v3238, 0.70710677
    %v5795 = vmul.f32 %v3240, 0.70710677
    %v5796 = vmul.f32 %v3624, 0.70710677
    %v5797 = vmul.f32 %v3626, 0.70710677
    %v5798 = vmul.f32 %v4010, 0.70710677
    %v5799 = vmul.f32 %v4012, 0.70710677
    %v5800 = vmul.f32 %v4396, 0.70710677
    %v5801 = vmul.f32 %v4398, 0.70710677
    %v5802 = vmul.f32 %v4782, 0.70710677
    %v5803 = vmul.f32 %v4784, 0.70710677
    %v5804 = vmul.f32 %v5168, 0.70710677
    %v5805 = vmul.f32 %v5170, 0.70710677
    %v5806 = vmul.f32 %v3242, 0.70710677
    %v5807 = vmul.f32 %v3244, 0.70710677
    %v5808 = vmul.f32 %v3628, 0.70710677
    %v5809 = vmul.f32 %v3630, 0.70710677
    %v5810 = vmul.f32 %v4014, 0.70710677
    %v5811 = vmul.f32 %v4016, 0.70710677
    %v5812 = vmul.f32 %v4400, 0.70710677
    %v5813 = vmul.f32 %v4402, 0.70710677
    %v5814 = vmul.f32 %v4786, 0.70710677
    %v5815 = vmul.f32 %v4788, 0.70710677
    %v5816 = vmul.f32 %v5172, 0.70710677
    %v5817 = vmul.f32 %v5174, 0.70710677
    %v5818 = vmul.f32 %v3248, 0.70710677
    %v5819 = vmul.f32 %v3250, 0.70710677
    %v5820 = vmul.f32 %v3634, 0.70710677
    %v5821 = vmul.f32 %v3636, 0.70710677
    %v5822 = vmul.f32 %v4020, 0.70710677
    %v5823 = vmul.f32 %v4022, 0.70710677
    %v5824 = vmul.f32 %v4406, 0.70710677
    %v5825 = vmul.f32 %v4408, 0.70710677
    %v5826 = vmul.f32 %v4792, 0.70710677
    %v5827 = vmul.f32 %v4794, 0.70710677
    %v5828 = vmul.f32 %v5178, 0.70710677
    %v5829 = vmul.f32 %v5180, 0.70710677
    %v5830 = vmul.f32 %v3252, 0.70710677
    %v5831 = vmul.f32 %v3254, 0.70710677
    %v5832 = vmul.f32 %v3638, 0.70710677
    %v5833 = vmul.f32 %v3640, 0.70710677
    %v5834 = vmul.f32 %v4024, 0.70710677
    %v5835 = vmul.f32 %v4026, 0.70710677
    %v5836 = vmul.f32 %v4410, 0.70710677
    %v5837 = vmul.f32 %v4412, 0.70710677
    %v5838 = vmul.f32 %v4796, 0.70710677
    %v5839 = vmul.f32 %v4798, 0.70710677
    %v5840 = vmul.f32 %v5182, 0.70710677
    %v5841 = vmul.f32 %v5184, 0.70710677
    %v5842 = vmul.f32 %v3258, 0.70710677
    %v5843 = vmul.f32 %v3260, 0.70710677
    %v5844 = vmul.f32 %v3644, 0.70710677
    %v5845 = vmul.f32 %v3646, 0.70710677
    %v5846 = vmul.f32 %v4030, 0.70710677
    %v5847 = vmul.f32 %v4032, 0.70710677
    %v5848 = vmul.f32 %v4416, 0.70710677
    %v5849 = vmul.f32 %v4418, 0.70710677
    %v5850 = vmul.f32 %v4802, 0.70710677
    %v5851 = vmul.f32 %v4804, 0.70710677
    %v5852 = vmul.f32 %v5188, 0.70710677
    %v5853 = vmul.f32 %v5190, 0.70710677
    %v5854 = vmul.f32 %v3262, 0.70710677
    %v5855 = vmul.f32 %v3264, 0.70710677
    %v5856 = vmul.f32 %v3648, 0.70710677
    %v5857 = vmul.f32 %v3650, 0.70710677
    %v5858 = vmul.f32 %v4034, 0.70710677
    %v5859 = vmul.f32 %v4036, 0.70710677
    %v5860 = vmul.f32 %v4420, 0.70710677
    %v5861 = vmul.f32 %v4422, 0.70710677
    %v5862 = vmul.f32 %v4806, 0.70710677
    %v5863 = vmul.f32 %v4808, 0.70710677
    %v5864 = vmul.f32 %v5192, 0.70710677
    %v5865 = vmul.f32 %v5194, 0.70710677
    %v5866 = vmul.f32 %v3268, 0.70710677
    %v5867 = vmul.f32 %v3270, 0.70710677
    %v5868 = vmul.f32 %v3654, 0.70710677
    %v5869 = vmul.f32 %v3656, 0.70710677
    %v5870 = vmul.f32 %v4040, 0.70710677
    %v5871 = vmul.f32 %v4042, 0.70710677
    %v5872 = vmul.f32 %v4426, 0.70710677
    %v5873 = vmul.f32 %v4428, 0.70710677
    %v5874 = vmul.f32 %v4812, 0.70710677
    %v5875 = vmul.f32 %v4814, 0.70710677
    %v5876 = vmul.f32 %v5198, 0.70710677
    %v5877 = vmul.f32 %v5200, 0.70710677
    %v5878 = vmul.f32 %v3272, 0.70710677
    %v5879 = vmul.f32 %v3274, 0.70710677
    %v5880 = vmul.f32 %v3658, 0.70710677
    %v5881 = vmul.f32 %v3660, 0.70710677
    %v5882 = vmul.f32 %v4044, 0.70710677
    %v5883 = vmul.f32 %v4046, 0.70710677
    %v5884 = vmul.f32 %v4430, 0.70710677
    %v5885 = vmul.f32 %v4432, 0.70710677
    %v5886 = vmul.f32 %v4816, 0.70710677
    %v5887 = vmul.f32 %v4818, 0.70710677
    %v5888 = vmul.f32 %v5202, 0.70710677
    %v5889 = vmul.f32 %v5204, 0.70710677
    %v5890 = vmul.f32 %v3278, 0.70710677
    %v5891 = vmul.f32 %v3280, 0.70710677
    %v5892 = vmul.f32 %v3664, 0.70710677
    %v5893 = vmul.f32 %v3666, 0.70710677
    %v5894 = vmul.f32 %v4050, 0.70710677
    %v5895 = vmul.f32 %v4052, 0.70710677
    %v5896 = vmul.f32 %v4436, 0.70710677
    %v5897 = vmul.f32 %v4438, 0.70710677
    %v5898 = vmul.f32 %v4822, 0.70710677
    %v5899 = vmul.f32 %v4824, 0.70710677
    %v5900 = vmul.f32 %v5208, 0.70710677
    %v5901 = vmul.f32 %v5210, 0.70710677
    %v5902 = vmul.f32 %v3282, 0.70710677
    %v5903 = vmul.f32 %v3284, 0.70710677
    %v5904 = vmul.f32 %v3668, 0.70710677
    %v5905 = vmul.f32 %v3670, 0.70710677
    %v5906 = vmul.f32 %v4054, 0.70710677
    %v5907 = vmul.f32 %v4056, 0.70710677
    %v5908 = vmul.f32 %v4440, 0.70710677
    %v5909 = vmul.f32 %v4442, 0.70710677
    %v5910 = vmul.f32 %v4826, 0.70710677
    %v5911 = vmul.f32 %v4828, 0.70710677
    %v5912 = vmul.f32 %v5212, 0.70710677
    %v5913 = vmul.f32 %v5214, 0.70710677
    %v5914 = vmul.f32 %v3288, 0.70710677
    %v5915 = vmul.f32 %v3290, 0.70710677
    %v5916 = vmul.f32 %v3674, 0.70710677
    %v5917 = vmul.f32 %v3676, 0.70710677
    %v5918 = vmul.f32 %v4060, 0.70710677
    %v5919 = vmul.f32 %v4062, 0.70710677
    %v5920 = vmul.f32 %v4446, 0.70710677
    %v5921 = vmul.f32 %v4448, 0.70710677
    %v5922 = vmul.f32 %v4832, 0.70710677
    %v5923 = vmul.f32 %v4834, 0.70710677
    %v5924 = vmul.f32 %v5218, 0.70710677
    %v5925 = vmul.f32 %v5220, 0.70710677
    %v5926 = vmul.f32 %v3292, 0.70710677
    %v5927 = vmul.f32 %v3294, 0.70710677
    %v5928 = vmul.f32 %v3678, 0.70710677
    %v5929 = vmul.f32 %v3680, 0.70710677
    %v5930 = vmul.f32 %v4064, 0.70710677
    %v5931 = vmul.f32 %v4066, 0.70710677
    %v5932 = vmul.f32 %v4450, 0.70710677
    %v5933 = vmul.f32 %v4452, 0.70710677
    %v5934 = vmul.f32 %v4836, 0.70710677
    %v5935 = vmul.f32 %v4838, 0.70710677
    %v5936 = vmul.f32 %v5222, 0.70710677
    %v5937 = vmul.f32 %v5224, 0.70710677
    %v5938 = vmul.f32 %v3298, 0.70710677
    %v5939 = vmul.f32 %v3300, 0.70710677
    %v5940 = vmul.f32 %v3684, 0.70710677
    %v5941 = vmul.f32 %v3686, 0.70710677
    %v5942 = vmul.f32 %v4070, 0.70710677
    %v5943 = vmul.f32 %v4072, 0.70710677
    %v5944 = vmul.f32 %v4456, 0.70710677
    %v5945 = vmul.f32 %v4458, 0.70710677
    %v5946 = vmul.f32 %v4842, 0.70710677
    %v5947 = vmul.f32 %v4844, 0.70710677
    %v5948 = vmul.f32 %v5228, 0.70710677
    %v5949 = vmul.f32 %v5230, 0.70710677
    %v5950 = vmul.f32 %v3302, 0.70710677
    %v5951 = vmul.f32 %v3304, 0.70710677
    %v5952 = vmul.f32 %v3688, 0.70710677
    %v5953 = vmul.f32 %v3690, 0.70710677
    %v5954 = vmul.f32 %v4074, 0.70710677
    %v5955 = vmul.f32 %v4076, 0.70710677
    %v5956 = vmul.f32 %v4460, 0.70710677
    %v5957 = vmul.f32 %v4462, 0.70710677
    %v5958 = vmul.f32 %v4846, 0.70710677
    %v5959 = vmul.f32 %v4848, 0.70710677
    %v5960 = vmul.f32 %v5232, 0.70710677
    %v5961 = vmul.f32 %v5234, 0.70710677
    %v5962 = vmul.f32 %v3308, 0.70710677
    %v5963 = vmul.f32 %v3310, 0.70710677
    %v5964 = vmul.f32 %v3694, 0.70710677
    %v5965 = vmul.f32 %v3696, 0.70710677
    %v5966 = vmul.f32 %v4080, 0.70710677
    %v5967 = vmul.f32 %v4082, 0.70710677
    %v5968 = vmul.f32 %v4466, 0.70710677
    %v5969 = vmul.f32 %v4468, 0.70710677
    %v5970 = vmul.f32 %v4852, 0.70710677
    %v5971 = vmul.f32 %v4854, 0.70710677
    %v5972 = vmul.f32 %v5238, 0.70710677
    %v5973 = vmul.f32 %v5240, 0.70710677
    %v5974 = vmul.f32 %v3312, 0.70710677
    %v5975 = vmul.f32 %v3314, 0.70710677
    %v5976 = vmul.f32 %v3698, 0.70710677
    %v5977 = vmul.f32 %v3700, 0.70710677
    %v5978 = vmul.f32 %v4084, 0.70710677
    %v5979 = vmul.f32 %v4086, 0.70710677
    %v5980 = vmul.f32 %v4470, 0.70710677
    %v5981 = vmul.f32 %v4472, 0.70710677
    %v5982 = vmul.f32 %v4856, 0.70710677
    %v5983 = vmul.f32 %v4858, 0.70710677
    %v5984 = vmul.f32 %v5242, 0.70710677
    %v5985 = vmul.f32 %v5244, 0.70710677
    %v5986 = vmul.f32 %v3318, 0.70710677
    %v5987 = vmul.f32 %v3320, 0.70710677
    %v5988 = vmul.f32 %v3704, 0.70710677
    %v5989 = vmul.f32 %v3706, 0.70710677
    %v5990 = vmul.f32 %v4090, 0.70710677
    %v5991 = vmul.f32 %v4092, 0.70710677
    %v5992 = vmul.f32 %v4476, 0.70710677
    %v5993 = vmul.f32 %v4478, 0.70710677
    %v5994 = vmul.f32 %v4862, 0.70710677
    %v5995 = vmul.f32 %v4864, 0.70710677
    %v5996 = vmul.f32 %v5248, 0.70710677
    %v5997 = vmul.f32 %v5250, 0.70710677
    %v5998 = vmul.f32 %v3322, 0.70710677
    %v5999 = vmul.f32 %v3324, 0.70710677
    %v6000 = vmul.f32 %v3708, 0.70710677
    %v6001 = vmul.f32 %v3710, 0.70710677
    %v6002 = vmul.f32 %v4094, 0.70710677
    %v6003 = vmul.f32 %v4096, 0.70710677
    %v6004 = vmul.f32 %v4480, 0.70710677
    %v6005 = vmul.f32 %v4482, 0.70710677
    %v6006 = vmul.f32 %v4866, 0.70710677
    %v6007 = vmul.f32 %v4868, 0.70710677
    %v6008 = vmul.f32 %v5252, 0.70710677
    %v6009 = vmul.f32 %v5254, 0.70710677
    %v6010 = vmul.f32 %v3328, 0.70710677
    %v6011 = vmul.f32 %v3330, 0.70710677
    %v6012 = vmul.f32 %v3714, 0.70710677
    %v6013 = vmul.f32 %v3716, 0.70710677
    %v6014 = vmul.f32 %v4100, 0.70710677
    %v6015 = vmul.f32 %v4102, 0.70710677
    %v6016 = vmul.f32 %v4486, 0.70710677
    %v6017 = vmul.f32 %v4488, 0.70710677
    %v6018 = vmul.f32 %v4872, 0.70710677
    %v6019 = vmul.f32 %v4874, 0.70710677
    %v6020 = vmul.f32 %v5258, 0.70710677
    %v6021 = vmul.f32 %v5260, 0.70710677
    %v6022 = vmul.f32 %v3332, 0.70710677
    %v6023 = vmul.f32 %v3334, 0.70710677
    %v6024 = vmul.f32 %v3718, 0.70710677
    %v6025 = vmul.f32 %v3720, 0.70710677
    %v6026 = vmul.f32 %v4104, 0.70710677
    %v6027 = vmul.f32 %v4106, 0.70710677
    %v6028 = vmul.f32 %v4490, 0.70710677
    %v6029 = vmul.f32 %v4492, 0.70710677
    %v6030 = vmul.f32 %v4876, 0.70710677
    %v6031 = vmul.f32 %v4878, 0.70710677
    %v6032 = vmul.f32 %v5262, 0.70710677
    %v6033 = vmul.f32 %v5264, 0.70710677
    %v6034 = verf.f32.pop %v5650
    %v6035 = verf.f32.pop %v5651
    %v6036 = verf.f32.pop %v5652
    %v6037 = verf.f32.pop %v5653
    %v6038 = verf.f32.pop %v5654
    %v6039 = verf.f32.pop %v5655
    %v6040 = verf.f32.pop %v5656
    %v6041 = verf.f32.pop %v5657
    %v6042 = verf.f32.pop %v5658
    %v6043 = verf.f32.pop %v5659
    %v6044 = verf.f32.pop %v5660
    %v6045 = verf.f32.pop %v5661
    %v6046 = verf.f32.pop %v5662
    %v6047 = verf.f32.pop %v5663
    %v6048 = verf.f32.pop %v5664
    %v6049 = verf.f32.pop %v5665
    %v6050 = verf.f32.pop %v5666
    %v6051 = verf.f32.pop %v5667
    %v6052 = verf.f32.pop %v5668
    %v6053 = verf.f32.pop %v5669
    %v6054 = verf.f32.pop %v5670
    %v6055 = verf.f32.pop %v5671
    %v6056 = verf.f32.pop %v5672
    %v6057 = verf.f32.pop %v5673
    %v6058 = verf.f32.pop %v5674
    %v6059 = verf.f32.pop %v5675
    %v6060 = verf.f32.pop %v5676
    %v6061 = verf.f32.pop %v5677
    %v6062 = verf.f32.pop %v5678
    %v6063 = verf.f32.pop %v5679
    %v6064 = verf.f32.pop %v5680
    %v6065 = verf.f32.pop %v5681
    %v6066 = verf.f32.pop %v5682
    %v6067 = verf.f32.pop %v5683
    %v6068 = verf.f32.pop %v5684
    %v6069 = verf.f32.pop %v5685
    %v6070 = verf.f32.pop %v5686
    %v6071 = verf.f32.pop %v5687
    %v6072 = verf.f32.pop %v5688
    %v6073 = verf.f32.pop %v5689
    %v6074 = verf.f32.pop %v5690
    %v6075 = verf.f32.pop %v5691
    %v6076 = verf.f32.pop %v5692
    %v6077 = verf.f32.pop %v5693
    %v6078 = verf.f32.pop %v5694
    %v6079 = verf.f32.pop %v5695
    %v6080 = verf.f32.pop %v5696
    %v6081 = verf.f32.pop %v5697
    %v6082 = verf.f32.pop %v5698
    %v6083 = verf.f32.pop %v5699
    %v6084 = verf.f32.pop %v5700
    %v6085 = verf.f32.pop %v5701
    %v6086 = verf.f32.pop %v5702
    %v6087 = verf.f32.pop %v5703
    %v6088 = verf.f32.pop %v5704
    %v6089 = verf.f32.pop %v5705
    %v6090 = verf.f32.pop %v5706
    %v6091 = verf.f32.pop %v5707
    %v6092 = verf.f32.pop %v5708
    %v6093 = verf.f32.pop %v5709
    %v6094 = verf.f32.pop %v5710
    %v6095 = verf.f32.pop %v5711
    %v6096 = verf.f32.pop %v5712
    %v6097 = verf.f32.pop %v5713
    %v6098 = verf.f32.pop %v5714
    %v6099 = verf.f32.pop %v5715
    %v6100 = verf.f32.pop %v5716
    %v6101 = verf.f32.pop %v5717
    %v6102 = verf.f32.pop %v5718
    %v6103 = verf.f32.pop %v5719
    %v6104 = verf.f32.pop %v5720
    %v6105 = verf.f32.pop %v5721
    %v6106 = verf.f32.pop %v5722
    %v6107 = verf.f32.pop %v5723
    %v6108 = verf.f32.pop %v5724
    %v6109 = verf.f32.pop %v5725
    %v6110 = verf.f32.pop %v5726
    %v6111 = verf.f32.pop %v5727
    %v6112 = verf.f32.pop %v5728
    %v6113 = verf.f32.pop %v5729
    %v6114 = verf.f32.pop %v5730
    %v6115 = verf.f32.pop %v5731
    %v6116 = verf.f32.pop %v5732
    %v6117 = verf.f32.pop %v5733
    %v6118 = verf.f32.pop %v5734
    %v6119 = verf.f32.pop %v5735
    %v6120 = verf.f32.pop %v5736
    %v6121 = verf.f32.pop %v5737
    %v6122 = verf.f32.pop %v5738
    %v6123 = verf.f32.pop %v5739
    %v6124 = verf.f32.pop %v5740
    %v6125 = verf.f32.pop %v5741
    %v6126 = verf.f32.pop %v5742
    %v6127 = verf.f32.pop %v5743
    %v6128 = verf.f32.pop %v5744
    %v6129 = verf.f32.pop %v5745
    %v6130 = verf.f32.pop %v5746
    %v6131 = verf.f32.pop %v5747
    %v6132 = verf.f32.pop %v5748
    %v6133 = verf.f32.pop %v5749
    %v6134 = verf.f32.pop %v5750
    %v6135 = verf.f32.pop %v5751
    %v6136 = verf.f32.pop %v5752
    %v6137 = verf.f32.pop %v5753
    %v6138 = verf.f32.pop %v5754
    %v6139 = verf.f32.pop %v5755
    %v6140 = verf.f32.pop %v5756
    %v6141 = verf.f32.pop %v5757
    %v6142 = verf.f32.pop %v5758
    %v6143 = verf.f32.pop %v5759
    %v6144 = verf.f32.pop %v5760
    %v6145 = verf.f32.pop %v5761
    %v6146 = verf.f32.pop %v5762
    %v6147 = verf.f32.pop %v5763
    %v6148 = verf.f32.pop %v5764
    %v6149 = verf.f32.pop %v5765
    %v6150 = verf.f32.pop %v5766
    %v6151 = verf.f32.pop %v5767
    %v6152 = verf.f32.pop %v5768
    %v6153 = verf.f32.pop %v5769
    %v6154 = verf.f32.pop %v5770
    %v6155 = verf.f32.pop %v5771
    %v6156 = verf.f32.pop %v5772
    %v6157 = verf.f32.pop %v5773
    %v6158 = verf.f32.pop %v5774
    %v6159 = verf.f32.pop %v5775
    %v6160 = verf.f32.pop %v5776
    %v6161 = verf.f32.pop %v5777
    %v6162 = verf.f32.pop %v5778
    %v6163 = verf.f32.pop %v5779
    %v6164 = verf.f32.pop %v5780
    %v6165 = verf.f32.pop %v5781
    %v6166 = verf.f32.pop %v5782
    %v6167 = verf.f32.pop %v5783
    %v6168 = verf.f32.pop %v5784
    %v6169 = verf.f32.pop %v5785
    %v6170 = verf.f32.pop %v5786
    %v6171 = verf.f32.pop %v5787
    %v6172 = verf.f32.pop %v5788
    %v6173 = verf.f32.pop %v5789
    %v6174 = verf.f32.pop %v5790
    %v6175 = verf.f32.pop %v5791
    %v6176 = verf.f32.pop %v5792
    %v6177 = verf.f32.pop %v5793
    %v6178 = verf.f32.pop %v5794
    %v6179 = verf.f32.pop %v5795
    %v6180 = verf.f32.pop %v5796
    %v6181 = verf.f32.pop %v5797
    %v6182 = verf.f32.pop %v5798
    %v6183 = verf.f32.pop %v5799
    %v6184 = verf.f32.pop %v5800
    %v6185 = verf.f32.pop %v5801
    %v6186 = verf.f32.pop %v5802
    %v6187 = verf.f32.pop %v5803
    %v6188 = verf.f32.pop %v5804
    %v6189 = verf.f32.pop %v5805
    %v6190 = verf.f32.pop %v5806
    %v6191 = verf.f32.pop %v5807
    %v6192 = verf.f32.pop %v5808
    %v6193 = verf.f32.pop %v5809
    %v6194 = verf.f32.pop %v5810
    %v6195 = verf.f32.pop %v5811
    %v6196 = verf.f32.pop %v5812
    %v6197 = verf.f32.pop %v5813
    %v6198 = verf.f32.pop %v5814
    %v6199 = verf.f32.pop %v5815
    %v6200 = verf.f32.pop %v5816
    %v6201 = verf.f32.pop %v5817
    %v6202 = verf.f32.pop %v5818
    %v6203 = verf.f32.pop %v5819
    %v6204 = verf.f32.pop %v5820
    %v6205 = verf.f32.pop %v5821
    %v6206 = verf.f32.pop %v5822
    %v6207 = verf.f32.pop %v5823
    %v6208 = verf.f32.pop %v5824
    %v6209 = verf.f32.pop %v5825
    %v6210 = verf.f32.pop %v5826
    %v6211 = verf.f32.pop %v5827
    %v6212 = verf.f32.pop %v5828
    %v6213 = verf.f32.pop %v5829
    %v6214 = verf.f32.pop %v5830
    %v6215 = verf.f32.pop %v5831
    %v6216 = verf.f32.pop %v5832
    %v6217 = verf.f32.pop %v5833
    %v6218 = verf.f32.pop %v5834
    %v6219 = verf.f32.pop %v5835
    %v6220 = verf.f32.pop %v5836
    %v6221 = verf.f32.pop %v5837
    %v6222 = verf.f32.pop %v5838
    %v6223 = verf.f32.pop %v5839
    %v6224 = verf.f32.pop %v5840
    %v6225 = verf.f32.pop %v5841
    %v6226 = verf.f32.pop %v5842
    %v6227 = verf.f32.pop %v5843
    %v6228 = verf.f32.pop %v5844
    %v6229 = verf.f32.pop %v5845
    %v6230 = verf.f32.pop %v5846
    %v6231 = verf.f32.pop %v5847
    %v6232 = verf.f32.pop %v5848
    %v6233 = verf.f32.pop %v5849
    %v6234 = verf.f32.pop %v5850
    %v6235 = verf.f32.pop %v5851
    %v6236 = verf.f32.pop %v5852
    %v6237 = verf.f32.pop %v5853
    %v6238 = verf.f32.pop %v5854
    %v6239 = verf.f32.pop %v5855
    %v6240 = verf.f32.pop %v5856
    %v6241 = verf.f32.pop %v5857
    %v6242 = verf.f32.pop %v5858
    %v6243 = verf.f32.pop %v5859
    %v6244 = verf.f32.pop %v5860
    %v6245 = verf.f32.pop %v5861
    %v6246 = verf.f32.pop %v5862
    %v6247 = verf.f32.pop %v5863
    %v6248 = verf.f32.pop %v5864
    %v6249 = verf.f32.pop %v5865
    %v6250 = verf.f32.pop %v5866
    %v6251 = verf.f32.pop %v5867
    %v6252 = verf.f32.pop %v5868
    %v6253 = verf.f32.pop %v5869
    %v6254 = verf.f32.pop %v5870
    %v6255 = verf.f32.pop %v5871
    %v6256 = verf.f32.pop %v5872
    %v6257 = verf.f32.pop %v5873
    %v6258 = verf.f32.pop %v5874
    %v6259 = verf.f32.pop %v5875
    %v6260 = verf.f32.pop %v5876
    %v6261 = verf.f32.pop %v5877
    %v6262 = verf.f32.pop %v5878
    %v6263 = verf.f32.pop %v5879
    %v6264 = verf.f32.pop %v5880
    %v6265 = verf.f32.pop %v5881
    %v6266 = verf.f32.pop %v5882
    %v6267 = verf.f32.pop %v5883
    %v6268 = verf.f32.pop %v5884
    %v6269 = verf.f32.pop %v5885
    %v6270 = verf.f32.pop %v5886
    %v6271 = verf.f32.pop %v5887
    %v6272 = verf.f32.pop %v5888
    %v6273 = verf.f32.pop %v5889
    %v6274 = verf.f32.pop %v5890
    %v6275 = verf.f32.pop %v5891
    %v6276 = verf.f32.pop %v5892
    %v6277 = verf.f32.pop %v5893
    %v6278 = verf.f32.pop %v5894
    %v6279 = verf.f32.pop %v5895
    %v6280 = verf.f32.pop %v5896
    %v6281 = verf.f32.pop %v5897
    %v6282 = verf.f32.pop %v5898
    %v6283 = verf.f32.pop %v5899
    %v6284 = verf.f32.pop %v5900
    %v6285 = verf.f32.pop %v5901
    %v6286 = verf.f32.pop %v5902
    %v6287 = verf.f32.pop %v5903
    %v6288 = verf.f32.pop %v5904
    %v6289 = verf.f32.pop %v5905
    %v6290 = verf.f32.pop %v5906
    %v6291 = verf.f32.pop %v5907
    %v6292 = verf.f32.pop %v5908
    %v6293 = verf.f32.pop %v5909
    %v6294 = verf.f32.pop %v5910
    %v6295 = verf.f32.pop %v5911
    %v6296 = verf.f32.pop %v5912
    %v6297 = verf.f32.pop %v5913
    %v6298 = verf.f32.pop %v5914
    %v6299 = verf.f32.pop %v5915
    %v6300 = verf.f32.pop %v5916
    %v6301 = verf.f32.pop %v5917
    %v6302 = verf.f32.pop %v5918
    %v6303 = verf.f32.pop %v5919
    %v6304 = verf.f32.pop %v5920
    %v6305 = verf.f32.pop %v5921
    %v6306 = verf.f32.pop %v5922
    %v6307 = verf.f32.pop %v5923
    %v6308 = verf.f32.pop %v5924
    %v6309 = verf.f32.pop %v5925
    %v6310 = verf.f32.pop %v5926
    %v6311 = verf.f32.pop %v5927
    %v6312 = verf.f32.pop %v5928
    %v6313 = verf.f32.pop %v5929
    %v6314 = verf.f32.pop %v5930
    %v6315 = verf.f32.pop %v5931
    %v6316 = verf.f32.pop %v5932
    %v6317 = verf.f32.pop %v5933
    %v6318 = verf.f32.pop %v5934
    %v6319 = verf.f32.pop %v5935
    %v6320 = verf.f32.pop %v5936
    %v6321 = verf.f32.pop %v5937
    %v6322 = verf.f32.pop %v5938
    %v6323 = verf.f32.pop %v5939
    %v6324 = verf.f32.pop %v5940
    %v6325 = verf.f32.pop %v5941
    %v6326 = verf.f32.pop %v5942
    %v6327 = verf.f32.pop %v5943
    %v6328 = verf.f32.pop %v5944
    %v6329 = verf.f32.pop %v5945
    %v6330 = verf.f32.pop %v5946
    %v6331 = verf.f32.pop %v5947
    %v6332 = verf.f32.pop %v5948
    %v6333 = verf.f32.pop %v5949
    %v6334 = verf.f32.pop %v5950
    %v6335 = verf.f32.pop %v5951
    %v6336 = verf.f32.pop %v5952
    %v6337 = verf.f32.pop %v5953
    %v6338 = verf.f32.pop %v5954
    %v6339 = verf.f32.pop %v5955
    %v6340 = verf.f32.pop %v5956
    %v6341 = verf.f32.pop %v5957
    %v6342 = verf.f32.pop %v5958
    %v6343 = verf.f32.pop %v5959
    %v6344 = verf.f32.pop %v5960
    %v6345 = verf.f32.pop %v5961
    %v6346 = verf.f32.pop %v5962
    %v6347 = verf.f32.pop %v5963
    %v6348 = verf.f32.pop %v5964
    %v6349 = verf.f32.pop %v5965
    %v6350 = verf.f32.pop %v5966
    %v6351 = verf.f32.pop %v5967
    %v6352 = verf.f32.pop %v5968
    %v6353 = verf.f32.pop %v5969
    %v6354 = verf.f32.pop %v5970
    %v6355 = verf.f32.pop %v5971
    %v6356 = verf.f32.pop %v5972
    %v6357 = verf.f32.pop %v5973
    %v6358 = verf.f32.pop %v5974
    %v6359 = verf.f32.pop %v5975
    %v6360 = verf.f32.pop %v5976
    %v6361 = verf.f32.pop %v5977
    %v6362 = verf.f32.pop %v5978
    %v6363 = verf.f32.pop %v5979
    %v6364 = verf.f32.pop %v5980
    %v6365 = verf.f32.pop %v5981
    %v6366 = verf.f32.pop %v5982
    %v6367 = verf.f32.pop %v5983
    %v6368 = verf.f32.pop %v5984
    %v6369 = verf.f32.pop %v5985
    %v6370 = verf.f32.pop %v5986
    %v6371 = verf.f32.pop %v5987
    %v6372 = verf.f32.pop %v5988
    %v6373 = verf.f32.pop %v5989
    %v6374 = verf.f32.pop %v5990
    %v6375 = verf.f32.pop %v5991
    %v6376 = verf.f32.pop %v5992
    %v6377 = verf.f32.pop %v5993
    %v6378 = verf.f32.pop %v5994
    %v6379 = verf.f32.pop %v5995
    %v6380 = verf.f32.pop %v5996
    %v6381 = verf.f32.pop %v5997
    %v6382 = verf.f32.pop %v5998
    %v6383 = verf.f32.pop %v5999
    %v6384 = verf.f32.pop %v6000
    %v6385 = verf.f32.pop %v6001
    %v6386 = verf.f32.pop %v6002
    %v6387 = verf.f32.pop %v6003
    %v6388 = verf.f32.pop %v6004
    %v6389 = verf.f32.pop %v6005
    %v6390 = verf.f32.pop %v6006
    %v6391 = verf.f32.pop %v6007
    %v6392 = verf.f32.pop %v6008
    %v6393 = verf.f32.pop %v6009
    %v6394 = verf.f32.pop %v6010
    %v6395 = verf.f32.pop %v6011
    %v6396 = verf.f32.pop %v6012
    %v6397 = verf.f32.pop %v6013
    %v6398 = verf.f32.pop %v6014
    %v6399 = verf.f32.pop %v6015
    %v6400 = verf.f32.pop %v6016
    %v6401 = verf.f32.pop %v6017
    %v6402 = verf.f32.pop %v6018
    %v6403 = verf.f32.pop %v6019
    %v6404 = verf.f32.pop %v6020
    %v6405 = verf.f32.pop %v6021
    %v6406 = verf.f32.pop %v6022
    %v6407 = verf.f32.pop %v6023
    %v6408 = verf.f32.pop %v6024
    %v6409 = verf.f32.pop %v6025
    %v6410 = verf.f32.pop %v6026
    %v6411 = verf.f32.pop %v6027
    %v6412 = verf.f32.pop %v6028
    %v6413 = verf.f32.pop %v6029
    %v6414 = verf.f32.pop %v6030
    %v6415 = verf.f32.pop %v6031
    %v6416 = verf.f32.pop %v6032
    %v6417 = verf.f32.pop %v6033
    %v6418 = vadd.f32 %v6034, 1.0
    %v6419 = vadd.f32 %v6035, 1.0
    %v6420 = vadd.f32 %v6036, 1.0
    %v6421 = vadd.f32 %v6037, 1.0
    %v6422 = vadd.f32 %v6038, 1.0
    %v6423 = vadd.f32 %v6039, 1.0
    %v6424 = vadd.f32 %v6040, 1.0
    %v6425 = vadd.f32 %v6041, 1.0
    %v6426 = vadd.f32 %v6042, 1.0
    %v6427 = vadd.f32 %v6043, 1.0
    %v6428 = vadd.f32 %v6044, 1.0
    %v6429 = vadd.f32 %v6045, 1.0
    %v6430 = vadd.f32 %v6046, 1.0
    %v6431 = vadd.f32 %v6047, 1.0
    %v6432 = vadd.f32 %v6048, 1.0
    %v6433 = vadd.f32 %v6049, 1.0
    %v6434 = vadd.f32 %v6050, 1.0
    %v6435 = vadd.f32 %v6051, 1.0
    %v6436 = vadd.f32 %v6052, 1.0
    %v6437 = vadd.f32 %v6053, 1.0
    %v6438 = vadd.f32 %v6054, 1.0
    %v6439 = vadd.f32 %v6055, 1.0
    %v6440 = vadd.f32 %v6056, 1.0
    %v6441 = vadd.f32 %v6057, 1.0
    %v6442 = vadd.f32 %v6058, 1.0
    %v6443 = vadd.f32 %v6059, 1.0
    %v6444 = vadd.f32 %v6060, 1.0
    %v6445 = vadd.f32 %v6061, 1.0
    %v6446 = vadd.f32 %v6062, 1.0
    %v6447 = vadd.f32 %v6063, 1.0
    %v6448 = vadd.f32 %v6064, 1.0
    %v6449 = vadd.f32 %v6065, 1.0
    %v6450 = vadd.f32 %v6066, 1.0
    %v6451 = vadd.f32 %v6067, 1.0
    %v6452 = vadd.f32 %v6068, 1.0
    %v6453 = vadd.f32 %v6069, 1.0
    %v6454 = vadd.f32 %v6070, 1.0
    %v6455 = vadd.f32 %v6071, 1.0
    %v6456 = vadd.f32 %v6072, 1.0
    %v6457 = vadd.f32 %v6073, 1.0
    %v6458 = vadd.f32 %v6074, 1.0
    %v6459 = vadd.f32 %v6075, 1.0
    %v6460 = vadd.f32 %v6076, 1.0
    %v6461 = vadd.f32 %v6077, 1.0
    %v6462 = vadd.f32 %v6078, 1.0
    %v6463 = vadd.f32 %v6079, 1.0
    %v6464 = vadd.f32 %v6080, 1.0
    %v6465 = vadd.f32 %v6081, 1.0
    %v6466 = vadd.f32 %v6082, 1.0
    %v6467 = vadd.f32 %v6083, 1.0
    %v6468 = vadd.f32 %v6084, 1.0
    %v6469 = vadd.f32 %v6085, 1.0
    %v6470 = vadd.f32 %v6086, 1.0
    %v6471 = vadd.f32 %v6087, 1.0
    %v6472 = vadd.f32 %v6088, 1.0
    %v6473 = vadd.f32 %v6089, 1.0
    %v6474 = vadd.f32 %v6090, 1.0
    %v6475 = vadd.f32 %v6091, 1.0
    %v6476 = vadd.f32 %v6092, 1.0
    %v6477 = vadd.f32 %v6093, 1.0
    %v6478 = vadd.f32 %v6094, 1.0
    %v6479 = vadd.f32 %v6095, 1.0
    %v6480 = vadd.f32 %v6096, 1.0
    %v6481 = vadd.f32 %v6097, 1.0
    %v6482 = vadd.f32 %v6098, 1.0
    %v6483 = vadd.f32 %v6099, 1.0
    %v6484 = vadd.f32 %v6100, 1.0
    %v6485 = vadd.f32 %v6101, 1.0
    %v6486 = vadd.f32 %v6102, 1.0
    %v6487 = vadd.f32 %v6103, 1.0
    %v6488 = vadd.f32 %v6104, 1.0
    %v6489 = vadd.f32 %v6105, 1.0
    %v6490 = vadd.f32 %v6106, 1.0
    %v6491 = vadd.f32 %v6107, 1.0
    %v6492 = vadd.f32 %v6108, 1.0
    %v6493 = vadd.f32 %v6109, 1.0
    %v6494 = vadd.f32 %v6110, 1.0
    %v6495 = vadd.f32 %v6111, 1.0
    %v6496 = vadd.f32 %v6112, 1.0
    %v6497 = vadd.f32 %v6113, 1.0
    %v6498 = vadd.f32 %v6114, 1.0
    %v6499 = vadd.f32 %v6115, 1.0
    %v6500 = vadd.f32 %v6116, 1.0
    %v6501 = vadd.f32 %v6117, 1.0
    %v6502 = vadd.f32 %v6118, 1.0
    %v6503 = vadd.f32 %v6119, 1.0
    %v6504 = vadd.f32 %v6120, 1.0
    %v6505 = vadd.f32 %v6121, 1.0
    %v6506 = vadd.f32 %v6122, 1.0
    %v6507 = vadd.f32 %v6123, 1.0
    %v6508 = vadd.f32 %v6124, 1.0
    %v6509 = vadd.f32 %v6125, 1.0
    %v6510 = vadd.f32 %v6126, 1.0
    %v6511 = vadd.f32 %v6127, 1.0
    %v6512 = vadd.f32 %v6128, 1.0
    %v6513 = vadd.f32 %v6129, 1.0
    %v6514 = vadd.f32 %v6130, 1.0
    %v6515 = vadd.f32 %v6131, 1.0
    %v6516 = vadd.f32 %v6132, 1.0
    %v6517 = vadd.f32 %v6133, 1.0
    %v6518 = vadd.f32 %v6134, 1.0
    %v6519 = vadd.f32 %v6135, 1.0
    %v6520 = vadd.f32 %v6136, 1.0
    %v6521 = vadd.f32 %v6137, 1.0
    %v6522 = vadd.f32 %v6138, 1.0
    %v6523 = vadd.f32 %v6139, 1.0
    %v6524 = vadd.f32 %v6140, 1.0
    %v6525 = vadd.f32 %v6141, 1.0
    %v6526 = vadd.f32 %v6142, 1.0
    %v6527 = vadd.f32 %v6143, 1.0
    %v6528 = vadd.f32 %v6144, 1.0
    %v6529 = vadd.f32 %v6145, 1.0
    %v6530 = vadd.f32 %v6146, 1.0
    %v6531 = vadd.f32 %v6147, 1.0
    %v6532 = vadd.f32 %v6148, 1.0
    %v6533 = vadd.f32 %v6149, 1.0
    %v6534 = vadd.f32 %v6150, 1.0
    %v6535 = vadd.f32 %v6151, 1.0
    %v6536 = vadd.f32 %v6152, 1.0
    %v6537 = vadd.f32 %v6153, 1.0
    %v6538 = vadd.f32 %v6154, 1.0
    %v6539 = vadd.f32 %v6155, 1.0
    %v6540 = vadd.f32 %v6156, 1.0
    %v6541 = vadd.f32 %v6157, 1.0
    %v6542 = vadd.f32 %v6158, 1.0
    %v6543 = vadd.f32 %v6159, 1.0
    %v6544 = vadd.f32 %v6160, 1.0
    %v6545 = vadd.f32 %v6161, 1.0
    %v6546 = vadd.f32 %v6162, 1.0
    %v6547 = vadd.f32 %v6163, 1.0
    %v6548 = vadd.f32 %v6164, 1.0
    %v6549 = vadd.f32 %v6165, 1.0
    %v6550 = vadd.f32 %v6166, 1.0
    %v6551 = vadd.f32 %v6167, 1.0
    %v6552 = vadd.f32 %v6168, 1.0
    %v6553 = vadd.f32 %v6169, 1.0
    %v6554 = vadd.f32 %v6170, 1.0
    %v6555 = vadd.f32 %v6171, 1.0
    %v6556 = vadd.f32 %v6172, 1.0
    %v6557 = vadd.f32 %v6173, 1.0
    %v6558 = vadd.f32 %v6174, 1.0
    %v6559 = vadd.f32 %v6175, 1.0
    %v6560 = vadd.f32 %v6176, 1.0
    %v6561 = vadd.f32 %v6177, 1.0
    %v6562 = vadd.f32 %v6178, 1.0
    %v6563 = vadd.f32 %v6179, 1.0
    %v6564 = vadd.f32 %v6180, 1.0
    %v6565 = vadd.f32 %v6181, 1.0
    %v6566 = vadd.f32 %v6182, 1.0
    %v6567 = vadd.f32 %v6183, 1.0
    %v6568 = vadd.f32 %v6184, 1.0
    %v6569 = vadd.f32 %v6185, 1.0
    %v6570 = vadd.f32 %v6186, 1.0
    %v6571 = vadd.f32 %v6187, 1.0
    %v6572 = vadd.f32 %v6188, 1.0
    %v6573 = vadd.f32 %v6189, 1.0
    %v6574 = vadd.f32 %v6190, 1.0
    %v6575 = vadd.f32 %v6191, 1.0
    %v6576 = vadd.f32 %v6192, 1.0
    %v6577 = vadd.f32 %v6193, 1.0
    %v6578 = vadd.f32 %v6194, 1.0
    %v6579 = vadd.f32 %v6195, 1.0
    %v6580 = vadd.f32 %v6196, 1.0
    %v6581 = vadd.f32 %v6197, 1.0
    %v6582 = vadd.f32 %v6198, 1.0
    %v6583 = vadd.f32 %v6199, 1.0
    %v6584 = vadd.f32 %v6200, 1.0
    %v6585 = vadd.f32 %v6201, 1.0
    %v6586 = vadd.f32 %v6202, 1.0
    %v6587 = vadd.f32 %v6203, 1.0
    %v6588 = vadd.f32 %v6204, 1.0
    %v6589 = vadd.f32 %v6205, 1.0
    %v6590 = vadd.f32 %v6206, 1.0
    %v6591 = vadd.f32 %v6207, 1.0
    %v6592 = vadd.f32 %v6208, 1.0
    %v6593 = vadd.f32 %v6209, 1.0
    %v6594 = vadd.f32 %v6210, 1.0
    %v6595 = vadd.f32 %v6211, 1.0
    %v6596 = vadd.f32 %v6212, 1.0
    %v6597 = vadd.f32 %v6213, 1.0
    %v6598 = vadd.f32 %v6214, 1.0
    %v6599 = vadd.f32 %v6215, 1.0
    %v6600 = vadd.f32 %v6216, 1.0
    %v6601 = vadd.f32 %v6217, 1.0
    %v6602 = vadd.f32 %v6218, 1.0
    %v6603 = vadd.f32 %v6219, 1.0
    %v6604 = vadd.f32 %v6220, 1.0
    %v6605 = vadd.f32 %v6221, 1.0
    %v6606 = vadd.f32 %v6222, 1.0
    %v6607 = vadd.f32 %v6223, 1.0
    %v6608 = vadd.f32 %v6224, 1.0
    %v6609 = vadd.f32 %v6225, 1.0
    %v6610 = vadd.f32 %v6226, 1.0
    %v6611 = vadd.f32 %v6227, 1.0
    %v6612 = vadd.f32 %v6228, 1.0
    %v6613 = vadd.f32 %v6229, 1.0
    %v6614 = vadd.f32 %v6230, 1.0
    %v6615 = vadd.f32 %v6231, 1.0
    %v6616 = vadd.f32 %v6232, 1.0
    %v6617 = vadd.f32 %v6233, 1.0
    %v6618 = vadd.f32 %v6234, 1.0
    %v6619 = vadd.f32 %v6235, 1.0
    %v6620 = vadd.f32 %v6236, 1.0
    %v6621 = vadd.f32 %v6237, 1.0
    %v6622 = vadd.f32 %v6238, 1.0
    %v6623 = vadd.f32 %v6239, 1.0
    %v6624 = vadd.f32 %v6240, 1.0
    %v6625 = vadd.f32 %v6241, 1.0
    %v6626 = vadd.f32 %v6242, 1.0
    %v6627 = vadd.f32 %v6243, 1.0
    %v6628 = vadd.f32 %v6244, 1.0
    %v6629 = vadd.f32 %v6245, 1.0
    %v6630 = vadd.f32 %v6246, 1.0
    %v6631 = vadd.f32 %v6247, 1.0
    %v6632 = vadd.f32 %v6248, 1.0
    %v6633 = vadd.f32 %v6249, 1.0
    %v6634 = vadd.f32 %v6250, 1.0
    %v6635 = vadd.f32 %v6251, 1.0
    %v6636 = vadd.f32 %v6252, 1.0
    %v6637 = vadd.f32 %v6253, 1.0
    %v6638 = vadd.f32 %v6254, 1.0
    %v6639 = vadd.f32 %v6255, 1.0
    %v6640 = vadd.f32 %v6256, 1.0
    %v6641 = vadd.f32 %v6257, 1.0
    %v6642 = vadd.f32 %v6258, 1.0
    %v6643 = vadd.f32 %v6259, 1.0
    %v6644 = vadd.f32 %v6260, 1.0
    %v6645 = vadd.f32 %v6261, 1.0
    %v6646 = vadd.f32 %v6262, 1.0
    %v6647 = vadd.f32 %v6263, 1.0
    %v6648 = vadd.f32 %v6264, 1.0
    %v6649 = vadd.f32 %v6265, 1.0
    %v6650 = vadd.f32 %v6266, 1.0
    %v6651 = vadd.f32 %v6267, 1.0
    %v6652 = vadd.f32 %v6268, 1.0
    %v6653 = vadd.f32 %v6269, 1.0
    %v6654 = vadd.f32 %v6270, 1.0
    %v6655 = vadd.f32 %v6271, 1.0
    %v6656 = vadd.f32 %v6272, 1.0
    %v6657 = vadd.f32 %v6273, 1.0
    %v6658 = vadd.f32 %v6274, 1.0
    %v6659 = vadd.f32 %v6275, 1.0
    %v6660 = vadd.f32 %v6276, 1.0
    %v6661 = vadd.f32 %v6277, 1.0
    %v6662 = vadd.f32 %v6278, 1.0
    %v6663 = vadd.f32 %v6279, 1.0
    %v6664 = vadd.f32 %v6280, 1.0
    %v6665 = vadd.f32 %v6281, 1.0
    %v6666 = vadd.f32 %v6282, 1.0
    %v6667 = vadd.f32 %v6283, 1.0
    %v6668 = vadd.f32 %v6284, 1.0
    %v6669 = vadd.f32 %v6285, 1.0
    %v6670 = vadd.f32 %v6286, 1.0
    %v6671 = vadd.f32 %v6287, 1.0
    %v6672 = vadd.f32 %v6288, 1.0
    %v6673 = vadd.f32 %v6289, 1.0
    %v6674 = vadd.f32 %v6290, 1.0
    %v6675 = vadd.f32 %v6291, 1.0
    %v6676 = vadd.f32 %v6292, 1.0
    %v6677 = vadd.f32 %v6293, 1.0
    %v6678 = vadd.f32 %v6294, 1.0
    %v6679 = vadd.f32 %v6295, 1.0
    %v6680 = vadd.f32 %v6296, 1.0
    %v6681 = vadd.f32 %v6297, 1.0
    %v6682 = vadd.f32 %v6298, 1.0
    %v6683 = vadd.f32 %v6299, 1.0
    %v6684 = vadd.f32 %v6300, 1.0
    %v6685 = vadd.f32 %v6301, 1.0
    %v6686 = vadd.f32 %v6302, 1.0
    %v6687 = vadd.f32 %v6303, 1.0
    %v6688 = vadd.f32 %v6304, 1.0
    %v6689 = vadd.f32 %v6305, 1.0
    %v6690 = vadd.f32 %v6306, 1.0
    %v6691 = vadd.f32 %v6307, 1.0
    %v6692 = vadd.f32 %v6308, 1.0
    %v6693 = vadd.f32 %v6309, 1.0
    %v6694 = vadd.f32 %v6310, 1.0
    %v6695 = vadd.f32 %v6311, 1.0
    %v6696 = vadd.f32 %v6312, 1.0
    %v6697 = vadd.f32 %v6313, 1.0
    %v6698 = vadd.f32 %v6314, 1.0
    %v6699 = vadd.f32 %v6315, 1.0
    %v6700 = vadd.f32 %v6316, 1.0
    %v6701 = vadd.f32 %v6317, 1.0
    %v6702 = vadd.f32 %v6318, 1.0
    %v6703 = vadd.f32 %v6319, 1.0
    %v6704 = vadd.f32 %v6320, 1.0
    %v6705 = vadd.f32 %v6321, 1.0
    %v6706 = vadd.f32 %v6322, 1.0
    %v6707 = vadd.f32 %v6323, 1.0
    %v6708 = vadd.f32 %v6324, 1.0
    %v6709 = vadd.f32 %v6325, 1.0
    %v6710 = vadd.f32 %v6326, 1.0
    %v6711 = vadd.f32 %v6327, 1.0
    %v6712 = vadd.f32 %v6328, 1.0
    %v6713 = vadd.f32 %v6329, 1.0
    %v6714 = vadd.f32 %v6330, 1.0
    %v6715 = vadd.f32 %v6331, 1.0
    %v6716 = vadd.f32 %v6332, 1.0
    %v6717 = vadd.f32 %v6333, 1.0
    %v6718 = vadd.f32 %v6334, 1.0
    %v6719 = vadd.f32 %v6335, 1.0
    %v6720 = vadd.f32 %v6336, 1.0
    %v6721 = vadd.f32 %v6337, 1.0
    %v6722 = vadd.f32 %v6338, 1.0
    %v6723 = vadd.f32 %v6339, 1.0
    %v6724 = vadd.f32 %v6340, 1.0
    %v6725 = vadd.f32 %v6341, 1.0
    %v6726 = vadd.f32 %v6342, 1.0
    %v6727 = vadd.f32 %v6343, 1.0
    %v6728 = vadd.f32 %v6344, 1.0
    %v6729 = vadd.f32 %v6345, 1.0
    %v6730 = vadd.f32 %v6346, 1.0
    %v6731 = vadd.f32 %v6347, 1.0
    %v6732 = vadd.f32 %v6348, 1.0
    %v6733 = vadd.f32 %v6349, 1.0
    %v6734 = vadd.f32 %v6350, 1.0
    %v6735 = vadd.f32 %v6351, 1.0
    %v6736 = vadd.f32 %v6352, 1.0
    %v6737 = vadd.f32 %v6353, 1.0
    %v6738 = vadd.f32 %v6354, 1.0
    %v6739 = vadd.f32 %v6355, 1.0
    %v6740 = vadd.f32 %v6356, 1.0
    %v6741 = vadd.f32 %v6357, 1.0
    %v6742 = vadd.f32 %v6358, 1.0
    %v6743 = vadd.f32 %v6359, 1.0
    %v6744 = vadd.f32 %v6360, 1.0
    %v6745 = vadd.f32 %v6361, 1.0
    %v6746 = vadd.f32 %v6362, 1.0
    %v6747 = vadd.f32 %v6363, 1.0
    %v6748 = vadd.f32 %v6364, 1.0
    %v6749 = vadd.f32 %v6365, 1.0
    %v6750 = vadd.f32 %v6366, 1.0
    %v6751 = vadd.f32 %v6367, 1.0
    %v6752 = vadd.f32 %v6368, 1.0
    %v6753 = vadd.f32 %v6369, 1.0
    %v6754 = vadd.f32 %v6370, 1.0
    %v6755 = vadd.f32 %v6371, 1.0
    %v6756 = vadd.f32 %v6372, 1.0
    %v6757 = vadd.f32 %v6373, 1.0
    %v6758 = vadd.f32 %v6374, 1.0
    %v6759 = vadd.f32 %v6375, 1.0
    %v6760 = vadd.f32 %v6376, 1.0
    %v6761 = vadd.f32 %v6377, 1.0
    %v6762 = vadd.f32 %v6378, 1.0
    %v6763 = vadd.f32 %v6379, 1.0
    %v6764 = vadd.f32 %v6380, 1.0
    %v6765 = vadd.f32 %v6381, 1.0
    %v6766 = vadd.f32 %v6382, 1.0
    %v6767 = vadd.f32 %v6383, 1.0
    %v6768 = vadd.f32 %v6384, 1.0
    %v6769 = vadd.f32 %v6385, 1.0
    %v6770 = vadd.f32 %v6386, 1.0
    %v6771 = vadd.f32 %v6387, 1.0
    %v6772 = vadd.f32 %v6388, 1.0
    %v6773 = vadd.f32 %v6389, 1.0
    %v6774 = vadd.f32 %v6390, 1.0
    %v6775 = vadd.f32 %v6391, 1.0
    %v6776 = vadd.f32 %v6392, 1.0
    %v6777 = vadd.f32 %v6393, 1.0
    %v6778 = vadd.f32 %v6394, 1.0
    %v6779 = vadd.f32 %v6395, 1.0
    %v6780 = vadd.f32 %v6396, 1.0
    %v6781 = vadd.f32 %v6397, 1.0
    %v6782 = vadd.f32 %v6398, 1.0
    %v6783 = vadd.f32 %v6399, 1.0
    %v6784 = vadd.f32 %v6400, 1.0
    %v6785 = vadd.f32 %v6401, 1.0
    %v6786 = vadd.f32 %v6402, 1.0
    %v6787 = vadd.f32 %v6403, 1.0
    %v6788 = vadd.f32 %v6404, 1.0
    %v6789 = vadd.f32 %v6405, 1.0
    %v6790 = vadd.f32 %v6406, 1.0
    %v6791 = vadd.f32 %v6407, 1.0
    %v6792 = vadd.f32 %v6408, 1.0
    %v6793 = vadd.f32 %v6409, 1.0
    %v6794 = vadd.f32 %v6410, 1.0
    %v6795 = vadd.f32 %v6411, 1.0
    %v6796 = vadd.f32 %v6412, 1.0
    %v6797 = vadd.f32 %v6413, 1.0
    %v6798 = vadd.f32 %v6414, 1.0
    %v6799 = vadd.f32 %v6415, 1.0
    %v6800 = vadd.f32 %v6416, 1.0
    %v6801 = vadd.f32 %v6417, 1.0
    %v6802 = vmul.f32 %v5266, %v6418
    %v6803 = vmul.f32 %v5267, %v6419
    %v6804 = vmul.f32 %v5268, %v6420
    %v6805 = vmul.f32 %v5269, %v6421
    %v6806 = vmul.f32 %v5270, %v6422
    %v6807 = vmul.f32 %v5271, %v6423
    %v6808 = vmul.f32 %v5272, %v6424
    %v6809 = vmul.f32 %v5273, %v6425
    %v6810 = vmul.f32 %v5274, %v6426
    %v6811 = vmul.f32 %v5275, %v6427
    %v6812 = vmul.f32 %v5276, %v6428
    %v6813 = vmul.f32 %v5277, %v6429
    %v6814 = vmul.f32 %v5278, %v6430
    %v6815 = vmul.f32 %v5279, %v6431
    %v6816 = vmul.f32 %v5280, %v6432
    %v6817 = vmul.f32 %v5281, %v6433
    %v6818 = vmul.f32 %v5282, %v6434
    %v6819 = vmul.f32 %v5283, %v6435
    %v6820 = vmul.f32 %v5284, %v6436
    %v6821 = vmul.f32 %v5285, %v6437
    %v6822 = vmul.f32 %v5286, %v6438
    %v6823 = vmul.f32 %v5287, %v6439
    %v6824 = vmul.f32 %v5288, %v6440
    %v6825 = vmul.f32 %v5289, %v6441
    %v6826 = vmul.f32 %v5290, %v6442
    %v6827 = vmul.f32 %v5291, %v6443
    %v6828 = vmul.f32 %v5292, %v6444
    %v6829 = vmul.f32 %v5293, %v6445
    %v6830 = vmul.f32 %v5294, %v6446
    %v6831 = vmul.f32 %v5295, %v6447
    %v6832 = vmul.f32 %v5296, %v6448
    %v6833 = vmul.f32 %v5297, %v6449
    %v6834 = vmul.f32 %v5298, %v6450
    %v6835 = vmul.f32 %v5299, %v6451
    %v6836 = vmul.f32 %v5300, %v6452
    %v6837 = vmul.f32 %v5301, %v6453
    %v6838 = vmul.f32 %v5302, %v6454
    %v6839 = vmul.f32 %v5303, %v6455
    %v6840 = vmul.f32 %v5304, %v6456
    %v6841 = vmul.f32 %v5305, %v6457
    %v6842 = vmul.f32 %v5306, %v6458
    %v6843 = vmul.f32 %v5307, %v6459
    %v6844 = vmul.f32 %v5308, %v6460
    %v6845 = vmul.f32 %v5309, %v6461
    %v6846 = vmul.f32 %v5310, %v6462
    %v6847 = vmul.f32 %v5311, %v6463
    %v6848 = vmul.f32 %v5312, %v6464
    %v6849 = vmul.f32 %v5313, %v6465
    %v6850 = vmul.f32 %v5314, %v6466
    %v6851 = vmul.f32 %v5315, %v6467
    %v6852 = vmul.f32 %v5316, %v6468
    %v6853 = vmul.f32 %v5317, %v6469
    %v6854 = vmul.f32 %v5318, %v6470
    %v6855 = vmul.f32 %v5319, %v6471
    %v6856 = vmul.f32 %v5320, %v6472
    %v6857 = vmul.f32 %v5321, %v6473
    %v6858 = vmul.f32 %v5322, %v6474
    %v6859 = vmul.f32 %v5323, %v6475
    %v6860 = vmul.f32 %v5324, %v6476
    %v6861 = vmul.f32 %v5325, %v6477
    %v6862 = vmul.f32 %v5326, %v6478
    %v6863 = vmul.f32 %v5327, %v6479
    %v6864 = vmul.f32 %v5328, %v6480
    %v6865 = vmul.f32 %v5329, %v6481
    %v6866 = vmul.f32 %v5330, %v6482
    %v6867 = vmul.f32 %v5331, %v6483
    %v6868 = vmul.f32 %v5332, %v6484
    %v6869 = vmul.f32 %v5333, %v6485
    %v6870 = vmul.f32 %v5334, %v6486
    %v6871 = vmul.f32 %v5335, %v6487
    %v6872 = vmul.f32 %v5336, %v6488
    %v6873 = vmul.f32 %v5337, %v6489
    %v6874 = vmul.f32 %v5338, %v6490
    %v6875 = vmul.f32 %v5339, %v6491
    %v6876 = vmul.f32 %v5340, %v6492
    %v6877 = vmul.f32 %v5341, %v6493
    %v6878 = vmul.f32 %v5342, %v6494
    %v6879 = vmul.f32 %v5343, %v6495
    %v6880 = vmul.f32 %v5344, %v6496
    %v6881 = vmul.f32 %v5345, %v6497
    %v6882 = vmul.f32 %v5346, %v6498
    %v6883 = vmul.f32 %v5347, %v6499
    %v6884 = vmul.f32 %v5348, %v6500
    %v6885 = vmul.f32 %v5349, %v6501
    %v6886 = vmul.f32 %v5350, %v6502
    %v6887 = vmul.f32 %v5351, %v6503
    %v6888 = vmul.f32 %v5352, %v6504
    %v6889 = vmul.f32 %v5353, %v6505
    %v6890 = vmul.f32 %v5354, %v6506
    %v6891 = vmul.f32 %v5355, %v6507
    %v6892 = vmul.f32 %v5356, %v6508
    %v6893 = vmul.f32 %v5357, %v6509
    %v6894 = vmul.f32 %v5358, %v6510
    %v6895 = vmul.f32 %v5359, %v6511
    %v6896 = vmul.f32 %v5360, %v6512
    %v6897 = vmul.f32 %v5361, %v6513
    %v6898 = vmul.f32 %v5362, %v6514
    %v6899 = vmul.f32 %v5363, %v6515
    %v6900 = vmul.f32 %v5364, %v6516
    %v6901 = vmul.f32 %v5365, %v6517
    %v6902 = vmul.f32 %v5366, %v6518
    %v6903 = vmul.f32 %v5367, %v6519
    %v6904 = vmul.f32 %v5368, %v6520
    %v6905 = vmul.f32 %v5369, %v6521
    %v6906 = vmul.f32 %v5370, %v6522
    %v6907 = vmul.f32 %v5371, %v6523
    %v6908 = vmul.f32 %v5372, %v6524
    %v6909 = vmul.f32 %v5373, %v6525
    %v6910 = vmul.f32 %v5374, %v6526
    %v6911 = vmul.f32 %v5375, %v6527
    %v6912 = vmul.f32 %v5376, %v6528
    %v6913 = vmul.f32 %v5377, %v6529
    %v6914 = vmul.f32 %v5378, %v6530
    %v6915 = vmul.f32 %v5379, %v6531
    %v6916 = vmul.f32 %v5380, %v6532
    %v6917 = vmul.f32 %v5381, %v6533
    %v6918 = vmul.f32 %v5382, %v6534
    %v6919 = vmul.f32 %v5383, %v6535
    %v6920 = vmul.f32 %v5384, %v6536
    %v6921 = vmul.f32 %v5385, %v6537
    %v6922 = vmul.f32 %v5386, %v6538
    %v6923 = vmul.f32 %v5387, %v6539
    %v6924 = vmul.f32 %v5388, %v6540
    %v6925 = vmul.f32 %v5389, %v6541
    %v6926 = vmul.f32 %v5390, %v6542
    %v6927 = vmul.f32 %v5391, %v6543
    %v6928 = vmul.f32 %v5392, %v6544
    %v6929 = vmul.f32 %v5393, %v6545
    %v6930 = vmul.f32 %v5394, %v6546
    %v6931 = vmul.f32 %v5395, %v6547
    %v6932 = vmul.f32 %v5396, %v6548
    %v6933 = vmul.f32 %v5397, %v6549
    %v6934 = vmul.f32 %v5398, %v6550
    %v6935 = vmul.f32 %v5399, %v6551
    %v6936 = vmul.f32 %v5400, %v6552
    %v6937 = vmul.f32 %v5401, %v6553
    %v6938 = vmul.f32 %v5402, %v6554
    %v6939 = vmul.f32 %v5403, %v6555
    %v6940 = vmul.f32 %v5404, %v6556
    %v6941 = vmul.f32 %v5405, %v6557
    %v6942 = vmul.f32 %v5406, %v6558
    %v6943 = vmul.f32 %v5407, %v6559
    %v6944 = vmul.f32 %v5408, %v6560
    %v6945 = vmul.f32 %v5409, %v6561
    %v6946 = vmul.f32 %v5410, %v6562
    %v6947 = vmul.f32 %v5411, %v6563
    %v6948 = vmul.f32 %v5412, %v6564
    %v6949 = vmul.f32 %v5413, %v6565
    %v6950 = vmul.f32 %v5414, %v6566
    %v6951 = vmul.f32 %v5415, %v6567
    %v6952 = vmul.f32 %v5416, %v6568
    %v6953 = vmul.f32 %v5417, %v6569
    %v6954 = vmul.f32 %v5418, %v6570
    %v6955 = vmul.f32 %v5419, %v6571
    %v6956 = vmul.f32 %v5420, %v6572
    %v6957 = vmul.f32 %v5421, %v6573
    %v6958 = vmul.f32 %v5422, %v6574
    %v6959 = vmul.f32 %v5423, %v6575
    %v6960 = vmul.f32 %v5424, %v6576
    %v6961 = vmul.f32 %v5425, %v6577
    %v6962 = vmul.f32 %v5426, %v6578
    %v6963 = vmul.f32 %v5427, %v6579
    %v6964 = vmul.f32 %v5428, %v6580
    %v6965 = vmul.f32 %v5429, %v6581
    %v6966 = vmul.f32 %v5430, %v6582
    %v6967 = vmul.f32 %v5431, %v6583
    %v6968 = vmul.f32 %v5432, %v6584
    %v6969 = vmul.f32 %v5433, %v6585
    %v6970 = vmul.f32 %v5434, %v6586
    %v6971 = vmul.f32 %v5435, %v6587
    %v6972 = vmul.f32 %v5436, %v6588
    %v6973 = vmul.f32 %v5437, %v6589
    %v6974 = vmul.f32 %v5438, %v6590
    %v6975 = vmul.f32 %v5439, %v6591
    %v6976 = vmul.f32 %v5440, %v6592
    %v6977 = vmul.f32 %v5441, %v6593
    %v6978 = vmul.f32 %v5442, %v6594
    %v6979 = vmul.f32 %v5443, %v6595
    %v6980 = vmul.f32 %v5444, %v6596
    %v6981 = vmul.f32 %v5445, %v6597
    %v6982 = vmul.f32 %v5446, %v6598
    %v6983 = vmul.f32 %v5447, %v6599
    %v6984 = vmul.f32 %v5448, %v6600
    %v6985 = vmul.f32 %v5449, %v6601
    %v6986 = vmul.f32 %v5450, %v6602
    %v6987 = vmul.f32 %v5451, %v6603
    %v6988 = vmul.f32 %v5452, %v6604
    %v6989 = vmul.f32 %v5453, %v6605
    %v6990 = vmul.f32 %v5454, %v6606
    %v6991 = vmul.f32 %v5455, %v6607
    %v6992 = vmul.f32 %v5456, %v6608
    %v6993 = vmul.f32 %v5457, %v6609
    %v6994 = vmul.f32 %v5458, %v6610
    %v6995 = vmul.f32 %v5459, %v6611
    %v6996 = vmul.f32 %v5460, %v6612
    %v6997 = vmul.f32 %v5461, %v6613
    %v6998 = vmul.f32 %v5462, %v6614
    %v6999 = vmul.f32 %v5463, %v6615
    %v7000 = vmul.f32 %v5464, %v6616
    %v7001 = vmul.f32 %v5465, %v6617
    %v7002 = vmul.f32 %v5466, %v6618
    %v7003 = vmul.f32 %v5467, %v6619
    %v7004 = vmul.f32 %v5468, %v6620
    %v7005 = vmul.f32 %v5469, %v6621
    %v7006 = vmul.f32 %v5470, %v6622
    %v7007 = vmul.f32 %v5471, %v6623
    %v7008 = vmul.f32 %v5472, %v6624
    %v7009 = vmul.f32 %v5473, %v6625
    %v7010 = vmul.f32 %v5474, %v6626
    %v7011 = vmul.f32 %v5475, %v6627
    %v7012 = vmul.f32 %v5476, %v6628
    %v7013 = vmul.f32 %v5477, %v6629
    %v7014 = vmul.f32 %v5478, %v6630
    %v7015 = vmul.f32 %v5479, %v6631
    %v7016 = vmul.f32 %v5480, %v6632
    %v7017 = vmul.f32 %v5481, %v6633
    %v7018 = vmul.f32 %v5482, %v6634
    %v7019 = vmul.f32 %v5483, %v6635
    %v7020 = vmul.f32 %v5484, %v6636
    %v7021 = vmul.f32 %v5485, %v6637
    %v7022 = vmul.f32 %v5486, %v6638
    %v7023 = vmul.f32 %v5487, %v6639
    %v7024 = vmul.f32 %v5488, %v6640
    %v7025 = vmul.f32 %v5489, %v6641
    %v7026 = vmul.f32 %v5490, %v6642
    %v7027 = vmul.f32 %v5491, %v6643
    %v7028 = vmul.f32 %v5492, %v6644
    %v7029 = vmul.f32 %v5493, %v6645
    %v7030 = vmul.f32 %v5494, %v6646
    %v7031 = vmul.f32 %v5495, %v6647
    %v7032 = vmul.f32 %v5496, %v6648
    %v7033 = vmul.f32 %v5497, %v6649
    %v7034 = vmul.f32 %v5498, %v6650
    %v7035 = vmul.f32 %v5499, %v6651
    %v7036 = vmul.f32 %v5500, %v6652
    %v7037 = vmul.f32 %v5501, %v6653
    %v7038 = vmul.f32 %v5502, %v6654
    %v7039 = vmul.f32 %v5503, %v6655
    %v7040 = vmul.f32 %v5504, %v6656
    %v7041 = vmul.f32 %v5505, %v6657
    %v7042 = vmul.f32 %v5506, %v6658
    %v7043 = vmul.f32 %v5507, %v6659
    %v7044 = vmul.f32 %v5508, %v6660
    %v7045 = vmul.f32 %v5509, %v6661
    %v7046 = vmul.f32 %v5510, %v6662
    %v7047 = vmul.f32 %v5511, %v6663
    %v7048 = vmul.f32 %v5512, %v6664
    %v7049 = vmul.f32 %v5513, %v6665
    %v7050 = vmul.f32 %v5514, %v6666
    %v7051 = vmul.f32 %v5515, %v6667
    %v7052 = vmul.f32 %v5516, %v6668
    %v7053 = vmul.f32 %v5517, %v6669
    %v7054 = vmul.f32 %v5518, %v6670
    %v7055 = vmul.f32 %v5519, %v6671
    %v7056 = vmul.f32 %v5520, %v6672
    %v7057 = vmul.f32 %v5521, %v6673
    %v7058 = vmul.f32 %v5522, %v6674
    %v7059 = vmul.f32 %v5523, %v6675
    %v7060 = vmul.f32 %v5524, %v6676
    %v7061 = vmul.f32 %v5525, %v6677
    %v7062 = vmul.f32 %v5526, %v6678
    %v7063 = vmul.f32 %v5527, %v6679
    %v7064 = vmul.f32 %v5528, %v6680
    %v7065 = vmul.f32 %v5529, %v6681
    %v7066 = vmul.f32 %v5530, %v6682
    %v7067 = vmul.f32 %v5531, %v6683
    %v7068 = vmul.f32 %v5532, %v6684
    %v7069 = vmul.f32 %v5533, %v6685
    %v7070 = vmul.f32 %v5534, %v6686
    %v7071 = vmul.f32 %v5535, %v6687
    %v7072 = vmul.f32 %v5536, %v6688
    %v7073 = vmul.f32 %v5537, %v6689
    %v7074 = vmul.f32 %v5538, %v6690
    %v7075 = vmul.f32 %v5539, %v6691
    %v7076 = vmul.f32 %v5540, %v6692
    %v7077 = vmul.f32 %v5541, %v6693
    %v7078 = vmul.f32 %v5542, %v6694
    %v7079 = vmul.f32 %v5543, %v6695
    %v7080 = vmul.f32 %v5544, %v6696
    %v7081 = vmul.f32 %v5545, %v6697
    %v7082 = vmul.f32 %v5546, %v6698
    %v7083 = vmul.f32 %v5547, %v6699
    %v7084 = vmul.f32 %v5548, %v6700
    %v7085 = vmul.f32 %v5549, %v6701
    %v7086 = vmul.f32 %v5550, %v6702
    %v7087 = vmul.f32 %v5551, %v6703
    %v7088 = vmul.f32 %v5552, %v6704
    %v7089 = vmul.f32 %v5553, %v6705
    %v7090 = vmul.f32 %v5554, %v6706
    %v7091 = vmul.f32 %v5555, %v6707
    %v7092 = vmul.f32 %v5556, %v6708
    %v7093 = vmul.f32 %v5557, %v6709
    %v7094 = vmul.f32 %v5558, %v6710
    %v7095 = vmul.f32 %v5559, %v6711
    %v7096 = vmul.f32 %v5560, %v6712
    %v7097 = vmul.f32 %v5561, %v6713
    %v7098 = vmul.f32 %v5562, %v6714
    %v7099 = vmul.f32 %v5563, %v6715
    %v7100 = vmul.f32 %v5564, %v6716
    %v7101 = vmul.f32 %v5565, %v6717
    %v7102 = vmul.f32 %v5566, %v6718
    %v7103 = vmul.f32 %v5567, %v6719
    %v7104 = vmul.f32 %v5568, %v6720
    %v7105 = vmul.f32 %v5569, %v6721
    %v7106 = vmul.f32 %v5570, %v6722
    %v7107 = vmul.f32 %v5571, %v6723
    %v7108 = vmul.f32 %v5572, %v6724
    %v7109 = vmul.f32 %v5573, %v6725
    %v7110 = vmul.f32 %v5574, %v6726
    %v7111 = vmul.f32 %v5575, %v6727
    %v7112 = vmul.f32 %v5576, %v6728
    %v7113 = vmul.f32 %v5577, %v6729
    %v7114 = vmul.f32 %v5578, %v6730
    %v7115 = vmul.f32 %v5579, %v6731
    %v7116 = vmul.f32 %v5580, %v6732
    %v7117 = vmul.f32 %v5581, %v6733
    %v7118 = vmul.f32 %v5582, %v6734
    %v7119 = vmul.f32 %v5583, %v6735
    %v7120 = vmul.f32 %v5584, %v6736
    %v7121 = vmul.f32 %v5585, %v6737
    %v7122 = vmul.f32 %v5586, %v6738
    %v7123 = vmul.f32 %v5587, %v6739
    %v7124 = vmul.f32 %v5588, %v6740
    %v7125 = vmul.f32 %v5589, %v6741
    %v7126 = vmul.f32 %v5590, %v6742
    %v7127 = vmul.f32 %v5591, %v6743
    %v7128 = vmul.f32 %v5592, %v6744
    %v7129 = vmul.f32 %v5593, %v6745
    %v7130 = vmul.f32 %v5594, %v6746
    %v7131 = vmul.f32 %v5595, %v6747
    %v7132 = vmul.f32 %v5596, %v6748
    %v7133 = vmul.f32 %v5597, %v6749
    %v7134 = vmul.f32 %v5598, %v6750
    %v7135 = vmul.f32 %v5599, %v6751
    %v7136 = vmul.f32 %v5600, %v6752
    %v7137 = vmul.f32 %v5601, %v6753
    %v7138 = vmul.f32 %v5602, %v6754
    %v7139 = vmul.f32 %v5603, %v6755
    %v7140 = vmul.f32 %v5604, %v6756
    %v7141 = vmul.f32 %v5605, %v6757
    %v7142 = vmul.f32 %v5606, %v6758
    %v7143 = vmul.f32 %v5607, %v6759
    %v7144 = vmul.f32 %v5608, %v6760
    %v7145 = vmul.f32 %v5609, %v6761
    %v7146 = vmul.f32 %v5610, %v6762
    %v7147 = vmul.f32 %v5611, %v6763
    %v7148 = vmul.f32 %v5612, %v6764
    %v7149 = vmul.f32 %v5613, %v6765
    %v7150 = vmul.f32 %v5614, %v6766
    %v7151 = vmul.f32 %v5615, %v6767
    %v7152 = vmul.f32 %v5616, %v6768
    %v7153 = vmul.f32 %v5617, %v6769
    %v7154 = vmul.f32 %v5618, %v6770
    %v7155 = vmul.f32 %v5619, %v6771
    %v7156 = vmul.f32 %v5620, %v6772
    %v7157 = vmul.f32 %v5621, %v6773
    %v7158 = vmul.f32 %v5622, %v6774
    %v7159 = vmul.f32 %v5623, %v6775
    %v7160 = vmul.f32 %v5624, %v6776
    %v7161 = vmul.f32 %v5625, %v6777
    %v7162 = vmul.f32 %v5626, %v6778
    %v7163 = vmul.f32 %v5627, %v6779
    %v7164 = vmul.f32 %v5628, %v6780
    %v7165 = vmul.f32 %v5629, %v6781
    %v7166 = vmul.f32 %v5630, %v6782
    %v7167 = vmul.f32 %v5631, %v6783
    %v7168 = vmul.f32 %v5632, %v6784
    %v7169 = vmul.f32 %v5633, %v6785
    %v7170 = vmul.f32 %v5634, %v6786
    %v7171 = vmul.f32 %v5635, %v6787
    %v7172 = vmul.f32 %v5636, %v6788
    %v7173 = vmul.f32 %v5637, %v6789
    %v7174 = vmul.f32 %v5638, %v6790
    %v7175 = vmul.f32 %v5639, %v6791
    %v7176 = vmul.f32 %v5640, %v6792
    %v7177 = vmul.f32 %v5641, %v6793
    %v7178 = vmul.f32 %v5642, %v6794
    %v7179 = vmul.f32 %v5643, %v6795
    %v7180 = vmul.f32 %v5644, %v6796
    %v7181 = vmul.f32 %v5645, %v6797
    %v7182 = vmul.f32 %v5646, %v6798
    %v7183 = vmul.f32 %v5647, %v6799
    %v7184 = vmul.f32 %v5648, %v6800
    %v7185 = vmul.f32 %v5649, %v6801
    %v7186 = vpack.c.bf16 %v6814, %v6802
    %v7187 = vpack.c.bf16 %v6815, %v6803
    %v7188 = vpack.c.bf16 %v6816, %v6804
    %v7189 = vpack.c.bf16 %v6817, %v6805
    %v7190 = vpack.c.bf16 %v6818, %v6806
    %v7191 = vpack.c.bf16 %v6819, %v6807
    %v7192 = vpack.c.bf16 %v6820, %v6808
    %v7193 = vpack.c.bf16 %v6821, %v6809
    %v7194 = vpack.c.bf16 %v6822, %v6810
    %v7195 = vpack.c.bf16 %v6823, %v6811
    %v7196 = vpack.c.bf16 %v6824, %v6812
    %v7197 = vpack.c.bf16 %v6825, %v6813
    %v7198 = vpack.c.bf16 %v6838, %v6826
    %v7199 = vpack.c.bf16 %v6839, %v6827
    %v7200 = vpack.c.bf16 %v6840, %v6828
    %v7201 = vpack.c.bf16 %v6841, %v6829
    %v7202 = vpack.c.bf16 %v6842, %v6830
    %v7203 = vpack.c.bf16 %v6843, %v6831
    %v7204 = vpack.c.bf16 %v6844, %v6832
    %v7205 = vpack.c.bf16 %v6845, %v6833
    %v7206 = vpack.c.bf16 %v6846, %v6834
    %v7207 = vpack.c.bf16 %v6847, %v6835
    %v7208 = vpack.c.bf16 %v6848, %v6836
    %v7209 = vpack.c.bf16 %v6849, %v6837
    %v7210 = vpack.c.bf16 %v6862, %v6850
    %v7211 = vpack.c.bf16 %v6863, %v6851
    %v7212 = vpack.c.bf16 %v6864, %v6852
    %v7213 = vpack.c.bf16 %v6865, %v6853
    %v7214 = vpack.c.bf16 %v6866, %v6854
    %v7215 = vpack.c.bf16 %v6867, %v6855
    %v7216 = vpack.c.bf16 %v6868, %v6856
    %v7217 = vpack.c.bf16 %v6869, %v6857
    %v7218 = vpack.c.bf16 %v6870, %v6858
    %v7219 = vpack.c.bf16 %v6871, %v6859
    %v7220 = vpack.c.bf16 %v6872, %v6860
    %v7221 = vpack.c.bf16 %v6873, %v6861
    %v7222 = vpack.c.bf16 %v6886, %v6874
    %v7223 = vpack.c.bf16 %v6887, %v6875
    %v7224 = vpack.c.bf16 %v6888, %v6876
    %v7225 = vpack.c.bf16 %v6889, %v6877
    %v7226 = vpack.c.bf16 %v6890, %v6878
    %v7227 = vpack.c.bf16 %v6891, %v6879
    %v7228 = vpack.c.bf16 %v6892, %v6880
    %v7229 = vpack.c.bf16 %v6893, %v6881
    %v7230 = vpack.c.bf16 %v6894, %v6882
    %v7231 = vpack.c.bf16 %v6895, %v6883
    %v7232 = vpack.c.bf16 %v6896, %v6884
    %v7233 = vpack.c.bf16 %v6897, %v6885
    %v7234 = vpack.c.bf16 %v6910, %v6898
    %v7235 = vpack.c.bf16 %v6911, %v6899
    %v7236 = vpack.c.bf16 %v6912, %v6900
    %v7237 = vpack.c.bf16 %v6913, %v6901
    %v7238 = vpack.c.bf16 %v6914, %v6902
    %v7239 = vpack.c.bf16 %v6915, %v6903
    %v7240 = vpack.c.bf16 %v6916, %v6904
    %v7241 = vpack.c.bf16 %v6917, %v6905
    %v7242 = vpack.c.bf16 %v6918, %v6906
    %v7243 = vpack.c.bf16 %v6919, %v6907
    %v7244 = vpack.c.bf16 %v6920, %v6908
    %v7245 = vpack.c.bf16 %v6921, %v6909
    %v7246 = vpack.c.bf16 %v6934, %v6922
    %v7247 = vpack.c.bf16 %v6935, %v6923
    %v7248 = vpack.c.bf16 %v6936, %v6924
    %v7249 = vpack.c.bf16 %v6937, %v6925
    %v7250 = vpack.c.bf16 %v6938, %v6926
    %v7251 = vpack.c.bf16 %v6939, %v6927
    %v7252 = vpack.c.bf16 %v6940, %v6928
    %v7253 = vpack.c.bf16 %v6941, %v6929
    %v7254 = vpack.c.bf16 %v6942, %v6930
    %v7255 = vpack.c.bf16 %v6943, %v6931
    %v7256 = vpack.c.bf16 %v6944, %v6932
    %v7257 = vpack.c.bf16 %v6945, %v6933
    %v7258 = vpack.c.bf16 %v6958, %v6946
    %v7259 = vpack.c.bf16 %v6959, %v6947
    %v7260 = vpack.c.bf16 %v6960, %v6948
    %v7261 = vpack.c.bf16 %v6961, %v6949
    %v7262 = vpack.c.bf16 %v6962, %v6950
    %v7263 = vpack.c.bf16 %v6963, %v6951
    %v7264 = vpack.c.bf16 %v6964, %v6952
    %v7265 = vpack.c.bf16 %v6965, %v6953
    %v7266 = vpack.c.bf16 %v6966, %v6954
    %v7267 = vpack.c.bf16 %v6967, %v6955
    %v7268 = vpack.c.bf16 %v6968, %v6956
    %v7269 = vpack.c.bf16 %v6969, %v6957
    %v7270 = vpack.c.bf16 %v6982, %v6970
    %v7271 = vpack.c.bf16 %v6983, %v6971
    %v7272 = vpack.c.bf16 %v6984, %v6972
    %v7273 = vpack.c.bf16 %v6985, %v6973
    %v7274 = vpack.c.bf16 %v6986, %v6974
    %v7275 = vpack.c.bf16 %v6987, %v6975
    %v7276 = vpack.c.bf16 %v6988, %v6976
    %v7277 = vpack.c.bf16 %v6989, %v6977
    %v7278 = vpack.c.bf16 %v6990, %v6978
    %v7279 = vpack.c.bf16 %v6991, %v6979
    %v7280 = vpack.c.bf16 %v6992, %v6980
    %v7281 = vpack.c.bf16 %v6993, %v6981
    %v7282 = vpack.c.bf16 %v7006, %v6994
    %v7283 = vpack.c.bf16 %v7007, %v6995
    %v7284 = vpack.c.bf16 %v7008, %v6996
    %v7285 = vpack.c.bf16 %v7009, %v6997
    %v7286 = vpack.c.bf16 %v7010, %v6998
    %v7287 = vpack.c.bf16 %v7011, %v6999
    %v7288 = vpack.c.bf16 %v7012, %v7000
    %v7289 = vpack.c.bf16 %v7013, %v7001
    %v7290 = vpack.c.bf16 %v7014, %v7002
    %v7291 = vpack.c.bf16 %v7015, %v7003
    %v7292 = vpack.c.bf16 %v7016, %v7004
    %v7293 = vpack.c.bf16 %v7017, %v7005
    %v7294 = vpack.c.bf16 %v7030, %v7018
    %v7295 = vpack.c.bf16 %v7031, %v7019
    %v7296 = vpack.c.bf16 %v7032, %v7020
    %v7297 = vpack.c.bf16 %v7033, %v7021
    %v7298 = vpack.c.bf16 %v7034, %v7022
    %v7299 = vpack.c.bf16 %v7035, %v7023
    %v7300 = vpack.c.bf16 %v7036, %v7024
    %v7301 = vpack.c.bf16 %v7037, %v7025
    %v7302 = vpack.c.bf16 %v7038, %v7026
    %v7303 = vpack.c.bf16 %v7039, %v7027
    %v7304 = vpack.c.bf16 %v7040, %v7028
    %v7305 = vpack.c.bf16 %v7041, %v7029
    %v7306 = vpack.c.bf16 %v7054, %v7042
    %v7307 = vpack.c.bf16 %v7055, %v7043
    %v7308 = vpack.c.bf16 %v7056, %v7044
    %v7309 = vpack.c.bf16 %v7057, %v7045
    %v7310 = vpack.c.bf16 %v7058, %v7046
    %v7311 = vpack.c.bf16 %v7059, %v7047
    %v7312 = vpack.c.bf16 %v7060, %v7048
    %v7313 = vpack.c.bf16 %v7061, %v7049
    %v7314 = vpack.c.bf16 %v7062, %v7050
    %v7315 = vpack.c.bf16 %v7063, %v7051
    %v7316 = vpack.c.bf16 %v7064, %v7052
    %v7317 = vpack.c.bf16 %v7065, %v7053
    %v7318 = vpack.c.bf16 %v7078, %v7066
    %v7319 = vpack.c.bf16 %v7079, %v7067
    %v7320 = vpack.c.bf16 %v7080, %v7068
    %v7321 = vpack.c.bf16 %v7081, %v7069
    %v7322 = vpack.c.bf16 %v7082, %v7070
    %v7323 = vpack.c.bf16 %v7083, %v7071
    %v7324 = vpack.c.bf16 %v7084, %v7072
    %v7325 = vpack.c.bf16 %v7085, %v7073
    %v7326 = vpack.c.bf16 %v7086, %v7074
    %v7327 = vpack.c.bf16 %v7087, %v7075
    %v7328 = vpack.c.bf16 %v7088, %v7076
    %v7329 = vpack.c.bf16 %v7089, %v7077
    %v7330 = vpack.c.bf16 %v7102, %v7090
    %v7331 = vpack.c.bf16 %v7103, %v7091
    %v7332 = vpack.c.bf16 %v7104, %v7092
    %v7333 = vpack.c.bf16 %v7105, %v7093
    %v7334 = vpack.c.bf16 %v7106, %v7094
    %v7335 = vpack.c.bf16 %v7107, %v7095
    %v7336 = vpack.c.bf16 %v7108, %v7096
    %v7337 = vpack.c.bf16 %v7109, %v7097
    %v7338 = vpack.c.bf16 %v7110, %v7098
    %v7339 = vpack.c.bf16 %v7111, %v7099
    %v7340 = vpack.c.bf16 %v7112, %v7100
    %v7341 = vpack.c.bf16 %v7113, %v7101
    %v7342 = vpack.c.bf16 %v7126, %v7114
    %v7343 = vpack.c.bf16 %v7127, %v7115
    %v7344 = vpack.c.bf16 %v7128, %v7116
    %v7345 = vpack.c.bf16 %v7129, %v7117
    %v7346 = vpack.c.bf16 %v7130, %v7118
    %v7347 = vpack.c.bf16 %v7131, %v7119
    %v7348 = vpack.c.bf16 %v7132, %v7120
    %v7349 = vpack.c.bf16 %v7133, %v7121
    %v7350 = vpack.c.bf16 %v7134, %v7122
    %v7351 = vpack.c.bf16 %v7135, %v7123
    %v7352 = vpack.c.bf16 %v7136, %v7124
    %v7353 = vpack.c.bf16 %v7137, %v7125
    %v7354 = vpack.c.bf16 %v7150, %v7138
    %v7355 = vpack.c.bf16 %v7151, %v7139
    %v7356 = vpack.c.bf16 %v7152, %v7140
    %v7357 = vpack.c.bf16 %v7153, %v7141
    %v7358 = vpack.c.bf16 %v7154, %v7142
    %v7359 = vpack.c.bf16 %v7155, %v7143
    %v7360 = vpack.c.bf16 %v7156, %v7144
    %v7361 = vpack.c.bf16 %v7157, %v7145
    %v7362 = vpack.c.bf16 %v7158, %v7146
    %v7363 = vpack.c.bf16 %v7159, %v7147
    %v7364 = vpack.c.bf16 %v7160, %v7148
    %v7365 = vpack.c.bf16 %v7161, %v7149
    %v7366 = vpack.c.bf16 %v7174, %v7162
    %v7367 = vpack.c.bf16 %v7175, %v7163
    %v7368 = vpack.c.bf16 %v7176, %v7164
    %v7369 = vpack.c.bf16 %v7177, %v7165
    %v7370 = vpack.c.bf16 %v7178, %v7166
    %v7371 = vpack.c.bf16 %v7179, %v7167
    %v7372 = vpack.c.bf16 %v7180, %v7168
    %v7373 = vpack.c.bf16 %v7181, %v7169
    %v7374 = vpack.c.bf16 %v7182, %v7170
    %v7375 = vpack.c.bf16 %v7183, %v7171
    %v7376 = vpack.c.bf16 %v7184, %v7172
    %v7377 = vpack.c.bf16 %v7185, %v7173
    %v7378 = vld [vmem:[#allocation11] sm:$0xff]
    %v7379 = vld [vmem:[#allocation11 + $0x8] sm:$0xf]
    %v7380 = vld [vmem:[#allocation11 + $0xc] sm:$0xff]
    %v7381 = vld [vmem:[#allocation11 + $0x14] sm:$0xf]
    %v7382 = vld [vmem:[#allocation11 + $0x18] sm:$0xff]
    %v7383 = vld [vmem:[#allocation11 + $0x20] sm:$0xf]
    %v7384 = vld [vmem:[#allocation11 + $0x24] sm:$0xff]
    %v7385 = vld [vmem:[#allocation11 + $0x2c] sm:$0xf]
    %v7386 = vld [vmem:[#allocation11 + $0x30] sm:$0xff]
    %v7387 = vld [vmem:[#allocation11 + $0x38] sm:$0xf]
    %v7388 = vld [vmem:[#allocation11 + $0x3c] sm:$0xff]
    %v7389 = vld [vmem:[#allocation11 + $0x44] sm:$0xf]
    %v7390 = vld [vmem:[#allocation11 + $0x48] sm:$0xff]
    %v7391 = vld [vmem:[#allocation11 + $0x50] sm:$0xf]
    %v7392 = vld [vmem:[#allocation11 + $0x54] sm:$0xff]
    %v7393 = vld [vmem:[#allocation11 + $0x5c] sm:$0xf]
    %v7394 = vld [vmem:[#allocation11 + $0x60] sm:$0xff]
    %v7395 = vld [vmem:[#allocation11 + $0x68] sm:$0xf]
    %v7396 = vld [vmem:[#allocation11 + $0x6c] sm:$0xff]
    %v7397 = vld [vmem:[#allocation11 + $0x74] sm:$0xf]
    %v7398 = vld [vmem:[#allocation11 + $0x78] sm:$0xff]
    %v7399 = vld [vmem:[#allocation11 + $0x80] sm:$0xf]
    %v7400 = vld [vmem:[#allocation11 + $0x84] sm:$0xff]
    %v7401 = vld [vmem:[#allocation11 + $0x8c] sm:$0xf]
    %v7402 = vld [vmem:[#allocation11 + $0x90] sm:$0xff]
    %v7403 = vld [vmem:[#allocation11 + $0x98] sm:$0xf]
    %v7404 = vld [vmem:[#allocation11 + $0x9c] sm:$0xff]
    %v7405 = vld [vmem:[#allocation11 + $0xa4] sm:$0xf]
    %v7406 = vld [vmem:[#allocation11 + $0xa8] sm:$0xff]
    %v7407 = vld [vmem:[#allocation11 + $0xb0] sm:$0xf]
    %v7408 = vld [vmem:[#allocation11 + $0xb4] sm:$0xff]
    %v7409 = vld [vmem:[#allocation11 + $0xbc] sm:$0xf]
    %v7410 = vld [vmem:[#allocation11 + $0xc0] sm:$0xff]
    %v7411 = vld [vmem:[#allocation11 + $0xc8] sm:$0xf]
    %v7412 = vld [vmem:[#allocation11 + $0xcc] sm:$0xff]
    %v7413 = vld [vmem:[#allocation11 + $0xd4] sm:$0xf]
    %v7414 = vld [vmem:[#allocation11 + $0xd8] sm:$0xff]
    %v7415 = vld [vmem:[#allocation11 + $0xe0] sm:$0xf]
    %v7416 = vld [vmem:[#allocation11 + $0xe4] sm:$0xff]
    %v7417 = vld [vmem:[#allocation11 + $0xec] sm:$0xf]
    %v7418 = vld [vmem:[#allocation11 + $0xf0] sm:$0xff]
    %v7419 = vld [vmem:[#allocation11 + $0xf8] sm:$0xf]
    %v7420 = vld [vmem:[#allocation11 + $0xfc] sm:$0xff]
    %v7421 = vld [vmem:[#allocation11 + $0x104] sm:$0xf]
    %v7422 = vld [vmem:[#allocation11 + $0x108] sm:$0xff]
    %v7423 = vld [vmem:[#allocation11 + $0x110] sm:$0xf]
    %v7424 = vld [vmem:[#allocation11 + $0x114] sm:$0xff]
    %v7425 = vld [vmem:[#allocation11 + $0x11c] sm:$0xf]
    %v7426 = vld [vmem:[#allocation11 + $0x120] sm:$0xff]
    %v7427 = vld [vmem:[#allocation11 + $0x128] sm:$0xf]
    %v7428 = vld [vmem:[#allocation11 + $0x12c] sm:$0xff]
    %v7429 = vld [vmem:[#allocation11 + $0x134] sm:$0xf]
    %v7430 = vld [vmem:[#allocation11 + $0x138] sm:$0xff]
    %v7431 = vld [vmem:[#allocation11 + $0x140] sm:$0xf]
    %v7432 = vld [vmem:[#allocation11 + $0x144] sm:$0xff]
    %v7433 = vld [vmem:[#allocation11 + $0x14c] sm:$0xf]
    %v7434 = vld [vmem:[#allocation11 + $0x150] sm:$0xff]
    %v7435 = vld [vmem:[#allocation11 + $0x158] sm:$0xf]
    %v7436 = vld [vmem:[#allocation11 + $0x15c] sm:$0xff]
    %v7437 = vld [vmem:[#allocation11 + $0x164] sm:$0xf]
    %v7438 = vld [vmem:[#allocation11 + $0x168] sm:$0xff]
    %v7439 = vld [vmem:[#allocation11 + $0x170] sm:$0xf]
    %v7440 = vld [vmem:[#allocation11 + $0x174] sm:$0xff]
    %v7441 = vld [vmem:[#allocation11 + $0x17c] sm:$0xf]
    %v7442 = vld [vmem:[#allocation11 + $0x180] sm:$0xff]
    %v7443 = vld [vmem:[#allocation11 + $0x188] sm:$0xf]
    %v7444 = vld [vmem:[#allocation11 + $0x18c] sm:$0xff]
    %v7445 = vld [vmem:[#allocation11 + $0x194] sm:$0xf]
    %v7446 = vld [vmem:[#allocation11 + $0x198] sm:$0xff]
    %v7447 = vld [vmem:[#allocation11 + $0x1a0] sm:$0xf]
    %v7448 = vld [vmem:[#allocation11 + $0x1a4] sm:$0xff]
    %v7449 = vld [vmem:[#allocation11 + $0x1ac] sm:$0xf]
    %v7450 = vld [vmem:[#allocation11 + $0x1b0] sm:$0xff]
    %v7451 = vld [vmem:[#allocation11 + $0x1b8] sm:$0xf]
    %v7452 = vld [vmem:[#allocation11 + $0x1bc] sm:$0xff]
    %v7453 = vld [vmem:[#allocation11 + $0x1c4] sm:$0xf]
    %v7454 = vld [vmem:[#allocation11 + $0x1c8] sm:$0xff]
    %v7455 = vld [vmem:[#allocation11 + $0x1d0] sm:$0xf]
    %v7456 = vld [vmem:[#allocation11 + $0x1d4] sm:$0xff]
    %v7457 = vld [vmem:[#allocation11 + $0x1dc] sm:$0xf]
    %v7458 = vld [vmem:[#allocation11 + $0x1e0] sm:$0xff]
    %v7459 = vld [vmem:[#allocation11 + $0x1e8] sm:$0xf]
    %v7460 = vld [vmem:[#allocation11 + $0x1ec] sm:$0xff]
    %v7461 = vld [vmem:[#allocation11 + $0x1f4] sm:$0xf]
    %v7462 = vld [vmem:[#allocation11 + $0x1f8] sm:$0xff]
    %v7463 = vld [vmem:[#allocation11 + $0x200] sm:$0xf]
    %v7464 = vld [vmem:[#allocation11 + $0x204] sm:$0xff]
    %v7465 = vld [vmem:[#allocation11 + $0x20c] sm:$0xf]
    %v7466 = vld [vmem:[#allocation11 + $0x210] sm:$0xff]
    %v7467 = vld [vmem:[#allocation11 + $0x218] sm:$0xf]
    %v7468 = vld [vmem:[#allocation11 + $0x21c] sm:$0xff]
    %v7469 = vld [vmem:[#allocation11 + $0x224] sm:$0xf]
    %v7470 = vld [vmem:[#allocation11 + $0x228] sm:$0xff]
    %v7471 = vld [vmem:[#allocation11 + $0x230] sm:$0xf]
    %v7472 = vld [vmem:[#allocation11 + $0x234] sm:$0xff]
    %v7473 = vld [vmem:[#allocation11 + $0x23c] sm:$0xf]
    %v7474 = vld [vmem:[#allocation11 + $0x240] sm:$0xff]
    %v7475 = vld [vmem:[#allocation11 + $0x248] sm:$0xf]
    %v7476 = vld [vmem:[#allocation11 + $0x24c] sm:$0xff]
    %v7477 = vld [vmem:[#allocation11 + $0x254] sm:$0xf]
    %v7478 = vld [vmem:[#allocation11 + $0x258] sm:$0xff]
    %v7479 = vld [vmem:[#allocation11 + $0x260] sm:$0xf]
    %v7480 = vld [vmem:[#allocation11 + $0x264] sm:$0xff]
    %v7481 = vld [vmem:[#allocation11 + $0x26c] sm:$0xf]
    %v7482 = vld [vmem:[#allocation11 + $0x270] sm:$0xff]
    %v7483 = vld [vmem:[#allocation11 + $0x278] sm:$0xf]
    %v7484 = vld [vmem:[#allocation11 + $0x27c] sm:$0xff]
    %v7485 = vld [vmem:[#allocation11 + $0x284] sm:$0xf]
    %v7486 = vld [vmem:[#allocation11 + $0x288] sm:$0xff]
    %v7487 = vld [vmem:[#allocation11 + $0x290] sm:$0xf]
    %v7488 = vld [vmem:[#allocation11 + $0x294] sm:$0xff]
    %v7489 = vld [vmem:[#allocation11 + $0x29c] sm:$0xf]
    %v7490 = vld [vmem:[#allocation11 + $0x2a0] sm:$0xff]
    %v7491 = vld [vmem:[#allocation11 + $0x2a8] sm:$0xf]
    %v7492 = vld [vmem:[#allocation11 + $0x2ac] sm:$0xff]
    %v7493 = vld [vmem:[#allocation11 + $0x2b4] sm:$0xf]
    %v7494 = vld [vmem:[#allocation11 + $0x2b8] sm:$0xff]
    %v7495 = vld [vmem:[#allocation11 + $0x2c0] sm:$0xf]
    %v7496 = vld [vmem:[#allocation11 + $0x2c4] sm:$0xff]
    %v7497 = vld [vmem:[#allocation11 + $0x2cc] sm:$0xf]
    %v7498 = vld [vmem:[#allocation11 + $0x2d0] sm:$0xff]
    %v7499 = vld [vmem:[#allocation11 + $0x2d8] sm:$0xf]
    %v7500 = vld [vmem:[#allocation11 + $0x2dc] sm:$0xff]
    %v7501 = vld [vmem:[#allocation11 + $0x2e4] sm:$0xf]
    %v7502 = vld [vmem:[#allocation11 + $0x2e8] sm:$0xff]
    %v7503 = vld [vmem:[#allocation11 + $0x2f0] sm:$0xf]
    %v7504 = vld [vmem:[#allocation11 + $0x2f4] sm:$0xff]
    %v7505 = vld [vmem:[#allocation11 + $0x2fc] sm:$0xf]
    %v7506 = vld [vmem:[#allocation11 + $0x300] sm:$0xff]
    %v7507 = vld [vmem:[#allocation11 + $0x308] sm:$0xf]
    %v7508 = vld [vmem:[#allocation11 + $0x30c] sm:$0xff]
    %v7509 = vld [vmem:[#allocation11 + $0x314] sm:$0xf]
    %v7510 = vld [vmem:[#allocation11 + $0x318] sm:$0xff]
    %v7511 = vld [vmem:[#allocation11 + $0x320] sm:$0xf]
    %v7512 = vld [vmem:[#allocation11 + $0x324] sm:$0xff]
    %v7513 = vld [vmem:[#allocation11 + $0x32c] sm:$0xf]
    %v7514 = vld [vmem:[#allocation11 + $0x330] sm:$0xff]
    %v7515 = vld [vmem:[#allocation11 + $0x338] sm:$0xf]
    %v7516 = vld [vmem:[#allocation11 + $0x33c] sm:$0xff]
    %v7517 = vld [vmem:[#allocation11 + $0x344] sm:$0xf]
    %v7518 = vld [vmem:[#allocation11 + $0x348] sm:$0xff]
    %v7519 = vld [vmem:[#allocation11 + $0x350] sm:$0xf]
    %v7520 = vld [vmem:[#allocation11 + $0x354] sm:$0xff]
    %v7521 = vld [vmem:[#allocation11 + $0x35c] sm:$0xf]
    %v7522 = vld [vmem:[#allocation11 + $0x360] sm:$0xff]
    %v7523 = vld [vmem:[#allocation11 + $0x368] sm:$0xf]
    %v7524 = vld [vmem:[#allocation11 + $0x36c] sm:$0xff]
    %v7525 = vld [vmem:[#allocation11 + $0x374] sm:$0xf]
    %v7526 = vld [vmem:[#allocation11 + $0x378] sm:$0xff]
    %v7527 = vld [vmem:[#allocation11 + $0x380] sm:$0xf]
    %v7528 = vld [vmem:[#allocation11 + $0x384] sm:$0xff]
    %v7529 = vld [vmem:[#allocation11 + $0x38c] sm:$0xf]
    %v7530 = vld [vmem:[#allocation11 + $0x390] sm:$0xff]
    %v7531 = vld [vmem:[#allocation11 + $0x398] sm:$0xf]
    %v7532 = vld [vmem:[#allocation11 + $0x39c] sm:$0xff]
    %v7533 = vld [vmem:[#allocation11 + $0x3a4] sm:$0xf]
    %v7534 = vld [vmem:[#allocation11 + $0x3a8] sm:$0xff]
    %v7535 = vld [vmem:[#allocation11 + $0x3b0] sm:$0xf]
    %v7536 = vld [vmem:[#allocation11 + $0x3b4] sm:$0xff]
    %v7537 = vld [vmem:[#allocation11 + $0x3bc] sm:$0xf]
    %v7538 = vld [vmem:[#allocation11 + $0x3c0] sm:$0xff]
    %v7539 = vld [vmem:[#allocation11 + $0x3c8] sm:$0xf]
    %v7540 = vld [vmem:[#allocation11 + $0x3cc] sm:$0xff]
    %v7541 = vld [vmem:[#allocation11 + $0x3d4] sm:$0xf]
    %v7542 = vld [vmem:[#allocation11 + $0x3d8] sm:$0xff]
    %v7543 = vld [vmem:[#allocation11 + $0x3e0] sm:$0xf]
    %v7544 = vld [vmem:[#allocation11 + $0x3e4] sm:$0xff]
    %v7545 = vld [vmem:[#allocation11 + $0x3ec] sm:$0xf]
    %v7546 = vld [vmem:[#allocation11 + $0x3f0] sm:$0xff]
    %v7547 = vld [vmem:[#allocation11 + $0x3f8] sm:$0xf]
    %v7548 = vld [vmem:[#allocation11 + $0x3fc] sm:$0xff]
    %v7549 = vld [vmem:[#allocation11 + $0x404] sm:$0xf]
    %v7550 = vld [vmem:[#allocation11 + $0x408] sm:$0xff]
    %v7551 = vld [vmem:[#allocation11 + $0x410] sm:$0xf]
    %v7552 = vld [vmem:[#allocation11 + $0x414] sm:$0xff]
    %v7553 = vld [vmem:[#allocation11 + $0x41c] sm:$0xf]
    %v7554 = vld [vmem:[#allocation11 + $0x420] sm:$0xff]
    %v7555 = vld [vmem:[#allocation11 + $0x428] sm:$0xf]
    %v7556 = vld [vmem:[#allocation11 + $0x42c] sm:$0xff]
    %v7557 = vld [vmem:[#allocation11 + $0x434] sm:$0xf]
    %v7558 = vld [vmem:[#allocation11 + $0x438] sm:$0xff]
    %v7559 = vld [vmem:[#allocation11 + $0x440] sm:$0xf]
    %v7560 = vld [vmem:[#allocation11 + $0x444] sm:$0xff]
    %v7561 = vld [vmem:[#allocation11 + $0x44c] sm:$0xf]
    %v7562 = vld [vmem:[#allocation11 + $0x450] sm:$0xff]
    %v7563 = vld [vmem:[#allocation11 + $0x458] sm:$0xf]
    %v7564 = vld [vmem:[#allocation11 + $0x45c] sm:$0xff]
    %v7565 = vld [vmem:[#allocation11 + $0x464] sm:$0xf]
    %v7566 = vld [vmem:[#allocation11 + $0x468] sm:$0xff]
    %v7567 = vld [vmem:[#allocation11 + $0x470] sm:$0xf]
    %v7568 = vld [vmem:[#allocation11 + $0x474] sm:$0xff]
    %v7569 = vld [vmem:[#allocation11 + $0x47c] sm:$0xf]
    %v7570 = vld [vmem:[#allocation11 + $0x480] sm:$0xff]
    %v7571 = vld [vmem:[#allocation11 + $0x488] sm:$0xf]
    %v7572 = vld [vmem:[#allocation11 + $0x48c] sm:$0xff]
    %v7573 = vld [vmem:[#allocation11 + $0x494] sm:$0xf]
    %v7574 = vld [vmem:[#allocation11 + $0x498] sm:$0xff]
    %v7575 = vld [vmem:[#allocation11 + $0x4a0] sm:$0xf]
    %v7576 = vld [vmem:[#allocation11 + $0x4a4] sm:$0xff]
    %v7577 = vld [vmem:[#allocation11 + $0x4ac] sm:$0xf]
    %v7578 = vld [vmem:[#allocation11 + $0x4b0] sm:$0xff]
    %v7579 = vld [vmem:[#allocation11 + $0x4b8] sm:$0xf]
    %v7580 = vld [vmem:[#allocation11 + $0x4bc] sm:$0xff]
    %v7581 = vld [vmem:[#allocation11 + $0x4c4] sm:$0xf]
    %v7582 = vld [vmem:[#allocation11 + $0x4c8] sm:$0xff]
    %v7583 = vld [vmem:[#allocation11 + $0x4d0] sm:$0xf]
    %v7584 = vld [vmem:[#allocation11 + $0x4d4] sm:$0xff]
    %v7585 = vld [vmem:[#allocation11 + $0x4dc] sm:$0xf]
    %v7586 = vld [vmem:[#allocation11 + $0x4e0] sm:$0xff]
    %v7587 = vld [vmem:[#allocation11 + $0x4e8] sm:$0xf]
    %v7588 = vld [vmem:[#allocation11 + $0x4ec] sm:$0xff]
    %v7589 = vld [vmem:[#allocation11 + $0x4f4] sm:$0xf]
    %v7590 = vld [vmem:[#allocation11 + $0x4f8] sm:$0xff]
    %v7591 = vld [vmem:[#allocation11 + $0x500] sm:$0xf]
    %v7592 = vld [vmem:[#allocation11 + $0x504] sm:$0xff]
    %v7593 = vld [vmem:[#allocation11 + $0x50c] sm:$0xf]
    %v7594 = vld [vmem:[#allocation11 + $0x510] sm:$0xff]
    %v7595 = vld [vmem:[#allocation11 + $0x518] sm:$0xf]
    %v7596 = vld [vmem:[#allocation11 + $0x51c] sm:$0xff]
    %v7597 = vld [vmem:[#allocation11 + $0x524] sm:$0xf]
    %v7598 = vld [vmem:[#allocation11 + $0x528] sm:$0xff]
    %v7599 = vld [vmem:[#allocation11 + $0x530] sm:$0xf]
    %v7600 = vld [vmem:[#allocation11 + $0x534] sm:$0xff]
    %v7601 = vld [vmem:[#allocation11 + $0x53c] sm:$0xf]
    %v7602 = vld [vmem:[#allocation11 + $0x540] sm:$0xff]
    %v7603 = vld [vmem:[#allocation11 + $0x548] sm:$0xf]
    %v7604 = vld [vmem:[#allocation11 + $0x54c] sm:$0xff]
    %v7605 = vld [vmem:[#allocation11 + $0x554] sm:$0xf]
    %v7606 = vld [vmem:[#allocation11 + $0x558] sm:$0xff]
    %v7607 = vld [vmem:[#allocation11 + $0x560] sm:$0xf]
    %v7608 = vld [vmem:[#allocation11 + $0x564] sm:$0xff]
    %v7609 = vld [vmem:[#allocation11 + $0x56c] sm:$0xf]
    %v7610 = vld [vmem:[#allocation11 + $0x570] sm:$0xff]
    %v7611 = vld [vmem:[#allocation11 + $0x578] sm:$0xf]
    %v7612 = vld [vmem:[#allocation11 + $0x57c] sm:$0xff]
    %v7613 = vld [vmem:[#allocation11 + $0x584] sm:$0xf]
    %v7614 = vld [vmem:[#allocation11 + $0x588] sm:$0xff]
    %v7615 = vld [vmem:[#allocation11 + $0x590] sm:$0xf]
    %v7616 = vld [vmem:[#allocation11 + $0x594] sm:$0xff]
    %v7617 = vld [vmem:[#allocation11 + $0x59c] sm:$0xf]
    %v7618 = vld [vmem:[#allocation11 + $0x5a0] sm:$0xff]
    %v7619 = vld [vmem:[#allocation11 + $0x5a8] sm:$0xf]
    %v7620 = vld [vmem:[#allocation11 + $0x5ac] sm:$0xff]
    %v7621 = vld [vmem:[#allocation11 + $0x5b4] sm:$0xf]
    %v7622 = vld [vmem:[#allocation11 + $0x5b8] sm:$0xff]
    %v7623 = vld [vmem:[#allocation11 + $0x5c0] sm:$0xf]
    %v7624 = vld [vmem:[#allocation11 + $0x5c4] sm:$0xff]
    %v7625 = vld [vmem:[#allocation11 + $0x5cc] sm:$0xf]
    %v7626 = vld [vmem:[#allocation11 + $0x5d0] sm:$0xff]
    %v7627 = vld [vmem:[#allocation11 + $0x5d8] sm:$0xf]
    %v7628 = vld [vmem:[#allocation11 + $0x5dc] sm:$0xff]
    %v7629 = vld [vmem:[#allocation11 + $0x5e4] sm:$0xf]
    %v7630 = vld [vmem:[#allocation11 + $0x5e8] sm:$0xff]
    %v7631 = vld [vmem:[#allocation11 + $0x5f0] sm:$0xf]
    %v7632 = vld [vmem:[#allocation11 + $0x5f4] sm:$0xff]
    %v7633 = vld [vmem:[#allocation11 + $0x5fc] sm:$0xf]
    %v7634 = vld [vmem:[#allocation11 + $0x600] sm:$0xff]
    %v7635 = vld [vmem:[#allocation11 + $0x608] sm:$0xf]
    %v7636 = vld [vmem:[#allocation11 + $0x60c] sm:$0xff]
    %v7637 = vld [vmem:[#allocation11 + $0x614] sm:$0xf]
    %v7638 = vld [vmem:[#allocation11 + $0x618] sm:$0xff]
    %v7639 = vld [vmem:[#allocation11 + $0x620] sm:$0xf]
    %v7640 = vld [vmem:[#allocation11 + $0x624] sm:$0xff]
    %v7641 = vld [vmem:[#allocation11 + $0x62c] sm:$0xf]
    %v7642 = vld [vmem:[#allocation11 + $0x630] sm:$0xff]
    %v7643 = vld [vmem:[#allocation11 + $0x638] sm:$0xf]
    %v7644 = vld [vmem:[#allocation11 + $0x63c] sm:$0xff]
    %v7645 = vld [vmem:[#allocation11 + $0x644] sm:$0xf]
    %v7646 = vld [vmem:[#allocation11 + $0x648] sm:$0xff]
    %v7647 = vld [vmem:[#allocation11 + $0x650] sm:$0xf]
    %v7648 = vld [vmem:[#allocation11 + $0x654] sm:$0xff]
    %v7649 = vld [vmem:[#allocation11 + $0x65c] sm:$0xf]
    %v7650 = vld [vmem:[#allocation11 + $0x660] sm:$0xff]
    %v7651 = vld [vmem:[#allocation11 + $0x668] sm:$0xf]
    %v7652 = vld [vmem:[#allocation11 + $0x66c] sm:$0xff]
    %v7653 = vld [vmem:[#allocation11 + $0x674] sm:$0xf]
    %v7654 = vld [vmem:[#allocation11 + $0x678] sm:$0xff]
    %v7655 = vld [vmem:[#allocation11 + $0x680] sm:$0xf]
    %v7656 = vld [vmem:[#allocation11 + $0x684] sm:$0xff]
    %v7657 = vld [vmem:[#allocation11 + $0x68c] sm:$0xf]
    %v7658 = vld [vmem:[#allocation11 + $0x690] sm:$0xff]
    %v7659 = vld [vmem:[#allocation11 + $0x698] sm:$0xf]
    %v7660 = vld [vmem:[#allocation11 + $0x69c] sm:$0xff]
    %v7661 = vld [vmem:[#allocation11 + $0x6a4] sm:$0xf]
    %v7662 = vld [vmem:[#allocation11 + $0x6a8] sm:$0xff]
    %v7663 = vld [vmem:[#allocation11 + $0x6b0] sm:$0xf]
    %v7664 = vld [vmem:[#allocation11 + $0x6b4] sm:$0xff]
    %v7665 = vld [vmem:[#allocation11 + $0x6bc] sm:$0xf]
    %v7666 = vld [vmem:[#allocation11 + $0x6c0] sm:$0xff]
    %v7667 = vld [vmem:[#allocation11 + $0x6c8] sm:$0xf]
    %v7668 = vld [vmem:[#allocation11 + $0x6cc] sm:$0xff]
    %v7669 = vld [vmem:[#allocation11 + $0x6d4] sm:$0xf]
    %v7670 = vld [vmem:[#allocation11 + $0x6d8] sm:$0xff]
    %v7671 = vld [vmem:[#allocation11 + $0x6e0] sm:$0xf]
    %v7672 = vld [vmem:[#allocation11 + $0x6e4] sm:$0xff]
    %v7673 = vld [vmem:[#allocation11 + $0x6ec] sm:$0xf]
    %v7674 = vld [vmem:[#allocation11 + $0x6f0] sm:$0xff]
    %v7675 = vld [vmem:[#allocation11 + $0x6f8] sm:$0xf]
    %v7676 = vld [vmem:[#allocation11 + $0x6fc] sm:$0xff]
    %v7677 = vld [vmem:[#allocation11 + $0x704] sm:$0xf]
    %v7678 = vld [vmem:[#allocation11 + $0x708] sm:$0xff]
    %v7679 = vld [vmem:[#allocation11 + $0x710] sm:$0xf]
    %v7680 = vld [vmem:[#allocation11 + $0x714] sm:$0xff]
    %v7681 = vld [vmem:[#allocation11 + $0x71c] sm:$0xf]
    %v7682 = vld [vmem:[#allocation11 + $0x720] sm:$0xff]
    %v7683 = vld [vmem:[#allocation11 + $0x728] sm:$0xf]
    %v7684 = vld [vmem:[#allocation11 + $0x72c] sm:$0xff]
    %v7685 = vld [vmem:[#allocation11 + $0x734] sm:$0xf]
    %v7686 = vld [vmem:[#allocation11 + $0x738] sm:$0xff]
    %v7687 = vld [vmem:[#allocation11 + $0x740] sm:$0xf]
    %v7688 = vld [vmem:[#allocation11 + $0x744] sm:$0xff]
    %v7689 = vld [vmem:[#allocation11 + $0x74c] sm:$0xf]
    %v7690 = vld [vmem:[#allocation11 + $0x750] sm:$0xff]
    %v7691 = vld [vmem:[#allocation11 + $0x758] sm:$0xf]
    %v7692 = vld [vmem:[#allocation11 + $0x75c] sm:$0xff]
    %v7693 = vld [vmem:[#allocation11 + $0x764] sm:$0xf]
    %v7694 = vld [vmem:[#allocation11 + $0x768] sm:$0xff]
    %v7695 = vld [vmem:[#allocation11 + $0x770] sm:$0xf]
    %v7696 = vld [vmem:[#allocation11 + $0x774] sm:$0xff]
    %v7697 = vld [vmem:[#allocation11 + $0x77c] sm:$0xf]
    %v7698 = vld [vmem:[#allocation11 + $0x780] sm:$0xff]
    %v7699 = vld [vmem:[#allocation11 + $0x788] sm:$0xf]
    %v7700 = vld [vmem:[#allocation11 + $0x78c] sm:$0xff]
    %v7701 = vld [vmem:[#allocation11 + $0x794] sm:$0xf]
    %v7702 = vld [vmem:[#allocation11 + $0x798] sm:$0xff]
    %v7703 = vld [vmem:[#allocation11 + $0x7a0] sm:$0xf]
    %v7704 = vld [vmem:[#allocation11 + $0x7a4] sm:$0xff]
    %v7705 = vld [vmem:[#allocation11 + $0x7ac] sm:$0xf]
    %v7706 = vld [vmem:[#allocation11 + $0x7b0] sm:$0xff]
    %v7707 = vld [vmem:[#allocation11 + $0x7b8] sm:$0xf]
    %v7708 = vld [vmem:[#allocation11 + $0x7bc] sm:$0xff]
    %v7709 = vld [vmem:[#allocation11 + $0x7c4] sm:$0xf]
    %v7710 = vld [vmem:[#allocation11 + $0x7c8] sm:$0xff]
    %v7711 = vld [vmem:[#allocation11 + $0x7d0] sm:$0xf]
    %v7712 = vld [vmem:[#allocation11 + $0x7d4] sm:$0xff]
    %v7713 = vld [vmem:[#allocation11 + $0x7dc] sm:$0xf]
    %v7714 = vld [vmem:[#allocation11 + $0x7e0] sm:$0xff]
    %v7715 = vld [vmem:[#allocation11 + $0x7e8] sm:$0xf]
    %v7716 = vld [vmem:[#allocation11 + $0x7ec] sm:$0xff]
    %v7717 = vld [vmem:[#allocation11 + $0x7f4] sm:$0xf]
    %v7718 = vld [vmem:[#allocation11 + $0x7f8] sm:$0xff]
    %v7719 = vld [vmem:[#allocation11 + $0x800] sm:$0xf]
    %v7720 = vld [vmem:[#allocation11 + $0x804] sm:$0xff]
    %v7721 = vld [vmem:[#allocation11 + $0x80c] sm:$0xf]
    %v7722 = vld [vmem:[#allocation11 + $0x810] sm:$0xff]
    %v7723 = vld [vmem:[#allocation11 + $0x818] sm:$0xf]
    %v7724 = vld [vmem:[#allocation11 + $0x81c] sm:$0xff]
    %v7725 = vld [vmem:[#allocation11 + $0x824] sm:$0xf]
    %v7726 = vld [vmem:[#allocation11 + $0x828] sm:$0xff]
    %v7727 = vld [vmem:[#allocation11 + $0x830] sm:$0xf]
    %v7728 = vld [vmem:[#allocation11 + $0x834] sm:$0xff]
    %v7729 = vld [vmem:[#allocation11 + $0x83c] sm:$0xf]
    %v7730 = vld [vmem:[#allocation11 + $0x840] sm:$0xff]
    %v7731 = vld [vmem:[#allocation11 + $0x848] sm:$0xf]
    %v7732 = vld [vmem:[#allocation11 + $0x84c] sm:$0xff]
    %v7733 = vld [vmem:[#allocation11 + $0x854] sm:$0xf]
    %v7734 = vld [vmem:[#allocation11 + $0x858] sm:$0xff]
    %v7735 = vld [vmem:[#allocation11 + $0x860] sm:$0xf]
    %v7736 = vld [vmem:[#allocation11 + $0x864] sm:$0xff]
    %v7737 = vld [vmem:[#allocation11 + $0x86c] sm:$0xf]
    %v7738 = vld [vmem:[#allocation11 + $0x870] sm:$0xff]
    %v7739 = vld [vmem:[#allocation11 + $0x878] sm:$0xf]
    %v7740 = vld [vmem:[#allocation11 + $0x87c] sm:$0xff]
    %v7741 = vld [vmem:[#allocation11 + $0x884] sm:$0xf]
    %v7742 = vld [vmem:[#allocation11 + $0x888] sm:$0xff]
    %v7743 = vld [vmem:[#allocation11 + $0x890] sm:$0xf]
    %v7744 = vld [vmem:[#allocation11 + $0x894] sm:$0xff]
    %v7745 = vld [vmem:[#allocation11 + $0x89c] sm:$0xf]
    %v7746 = vld [vmem:[#allocation11 + $0x8a0] sm:$0xff]
    %v7747 = vld [vmem:[#allocation11 + $0x8a8] sm:$0xf]
    %v7748 = vld [vmem:[#allocation11 + $0x8ac] sm:$0xff]
    %v7749 = vld [vmem:[#allocation11 + $0x8b4] sm:$0xf]
    %v7750 = vld [vmem:[#allocation11 + $0x8b8] sm:$0xff]
    %v7751 = vld [vmem:[#allocation11 + $0x8c0] sm:$0xf]
    %v7752 = vld [vmem:[#allocation11 + $0x8c4] sm:$0xff]
    %v7753 = vld [vmem:[#allocation11 + $0x8cc] sm:$0xf]
    %v7754 = vld [vmem:[#allocation11 + $0x8d0] sm:$0xff]
    %v7755 = vld [vmem:[#allocation11 + $0x8d8] sm:$0xf]
    %v7756 = vld [vmem:[#allocation11 + $0x8dc] sm:$0xff]
    %v7757 = vld [vmem:[#allocation11 + $0x8e4] sm:$0xf]
    %v7758 = vld [vmem:[#allocation11 + $0x8e8] sm:$0xff]
    %v7759 = vld [vmem:[#allocation11 + $0x8f0] sm:$0xf]
    %v7760 = vld [vmem:[#allocation11 + $0x8f4] sm:$0xff]
    %v7761 = vld [vmem:[#allocation11 + $0x8fc] sm:$0xf]
    %v7762 = vld [vmem:[#allocation13] sm:$0x7]
    %v7764 = vlaneseq
    %v7765 = vshrl.u32 %v7764, 7
    %v7766 = vsub.s32 0, %v7765
    %v7767 = vrot.slane %v7762, %v7766
    %v7768 = vlaneseq
    %v7769 = vshrl.u32 %v7768, 7
    %v7770 = vsub.s32 1, %v7769
    %v7771 = vrot.slane %v7762, %v7770
    %v7772 = vlaneseq
    %v7773 = vshrl.u32 %v7772, 7
    %v7774 = vsub.s32 2, %v7773
    %v7775 = vrot.slane %v7762, %v7774
    %v8163 = vunpack.c.l.b16 %v7378
    %v8164 = vunpack.c.h.b16 %v7378
    %v8165 = vunpack.c.l.b16 %v7379
    %v8166 = vunpack.c.l.b16 %v7380
    %v8167 = vunpack.c.h.b16 %v7380
    %v8168 = vunpack.c.l.b16 %v7381
    %v8169 = vunpack.c.l.b16 %v7382
    %v8170 = vunpack.c.h.b16 %v7382
    %v8171 = vunpack.c.l.b16 %v7383
    %v8172 = vunpack.c.l.b16 %v7384
    %v8173 = vunpack.c.h.b16 %v7384
    %v8174 = vunpack.c.l.b16 %v7385
    %v8175 = vunpack.c.l.b16 %v7386
    %v8176 = vunpack.c.h.b16 %v7386
    %v8177 = vunpack.c.l.b16 %v7387
    %v8178 = vunpack.c.l.b16 %v7388
    %v8179 = vunpack.c.h.b16 %v7388
    %v8180 = vunpack.c.l.b16 %v7389
    %v8181 = vunpack.c.l.b16 %v7390
    %v8182 = vunpack.c.h.b16 %v7390
    %v8183 = vunpack.c.l.b16 %v7391
    %v8184 = vunpack.c.l.b16 %v7392
    %v8185 = vunpack.c.h.b16 %v7392
    %v8186 = vunpack.c.l.b16 %v7393
    %v8187 = vunpack.c.l.b16 %v7394
    %v8188 = vunpack.c.h.b16 %v7394
    %v8189 = vunpack.c.l.b16 %v7395
    %v8190 = vunpack.c.l.b16 %v7396
    %v8191 = vunpack.c.h.b16 %v7396
    %v8192 = vunpack.c.l.b16 %v7397
    %v8193 = vunpack.c.l.b16 %v7398
    %v8194 = vunpack.c.h.b16 %v7398
    %v8195 = vunpack.c.l.b16 %v7399
    %v8196 = vunpack.c.l.b16 %v7400
    %v8197 = vunpack.c.h.b16 %v7400
    %v8198 = vunpack.c.l.b16 %v7401
    %v8199 = vunpack.c.l.b16 %v7402
    %v8200 = vunpack.c.h.b16 %v7402
    %v8201 = vunpack.c.l.b16 %v7403
    %v8202 = vunpack.c.l.b16 %v7404
    %v8203 = vunpack.c.h.b16 %v7404
    %v8204 = vunpack.c.l.b16 %v7405
    %v8205 = vunpack.c.l.b16 %v7406
    %v8206 = vunpack.c.h.b16 %v7406
    %v8207 = vunpack.c.l.b16 %v7407
    %v8208 = vunpack.c.l.b16 %v7408
    %v8209 = vunpack.c.h.b16 %v7408
    %v8210 = vunpack.c.l.b16 %v7409
    %v8211 = vunpack.c.l.b16 %v7410
    %v8212 = vunpack.c.h.b16 %v7410
    %v8213 = vunpack.c.l.b16 %v7411
    %v8214 = vunpack.c.l.b16 %v7412
    %v8215 = vunpack.c.h.b16 %v7412
    %v8216 = vunpack.c.l.b16 %v7413
    %v8217 = vunpack.c.l.b16 %v7414
    %v8218 = vunpack.c.h.b16 %v7414
    %v8219 = vunpack.c.l.b16 %v7415
    %v8220 = vunpack.c.l.b16 %v7416
    %v8221 = vunpack.c.h.b16 %v7416
    %v8222 = vunpack.c.l.b16 %v7417
    %v8223 = vunpack.c.l.b16 %v7418
    %v8224 = vunpack.c.h.b16 %v7418
    %v8225 = vunpack.c.l.b16 %v7419
    %v8226 = vunpack.c.l.b16 %v7420
    %v8227 = vunpack.c.h.b16 %v7420
    %v8228 = vunpack.c.l.b16 %v7421
    %v8229 = vunpack.c.l.b16 %v7422
    %v8230 = vunpack.c.h.b16 %v7422
    %v8231 = vunpack.c.l.b16 %v7423
    %v8232 = vunpack.c.l.b16 %v7424
    %v8233 = vunpack.c.h.b16 %v7424
    %v8234 = vunpack.c.l.b16 %v7425
    %v8235 = vunpack.c.l.b16 %v7426
    %v8236 = vunpack.c.h.b16 %v7426
    %v8237 = vunpack.c.l.b16 %v7427
    %v8238 = vunpack.c.l.b16 %v7428
    %v8239 = vunpack.c.h.b16 %v7428
    %v8240 = vunpack.c.l.b16 %v7429
    %v8241 = vunpack.c.l.b16 %v7430
    %v8242 = vunpack.c.h.b16 %v7430
    %v8243 = vunpack.c.l.b16 %v7431
    %v8244 = vunpack.c.l.b16 %v7432
    %v8245 = vunpack.c.h.b16 %v7432
    %v8246 = vunpack.c.l.b16 %v7433
    %v8247 = vunpack.c.l.b16 %v7434
    %v8248 = vunpack.c.h.b16 %v7434
    %v8249 = vunpack.c.l.b16 %v7435
    %v8250 = vunpack.c.l.b16 %v7436
    %v8251 = vunpack.c.h.b16 %v7436
    %v8252 = vunpack.c.l.b16 %v7437
    %v8253 = vunpack.c.l.b16 %v7438
    %v8254 = vunpack.c.h.b16 %v7438
    %v8255 = vunpack.c.l.b16 %v7439
    %v8256 = vunpack.c.l.b16 %v7440
    %v8257 = vunpack.c.h.b16 %v7440
    %v8258 = vunpack.c.l.b16 %v7441
    %v8259 = vunpack.c.l.b16 %v7442
    %v8260 = vunpack.c.h.b16 %v7442
    %v8261 = vunpack.c.l.b16 %v7443
    %v8262 = vunpack.c.l.b16 %v7444
    %v8263 = vunpack.c.h.b16 %v7444
    %v8264 = vunpack.c.l.b16 %v7445
    %v8265 = vunpack.c.l.b16 %v7446
    %v8266 = vunpack.c.h.b16 %v7446
    %v8267 = vunpack.c.l.b16 %v7447
    %v8268 = vunpack.c.l.b16 %v7448
    %v8269 = vunpack.c.h.b16 %v7448
    %v8270 = vunpack.c.l.b16 %v7449
    %v8271 = vunpack.c.l.b16 %v7450
    %v8272 = vunpack.c.h.b16 %v7450
    %v8273 = vunpack.c.l.b16 %v7451
    %v8274 = vunpack.c.l.b16 %v7452
    %v8275 = vunpack.c.h.b16 %v7452
    %v8276 = vunpack.c.l.b16 %v7453
    %v8277 = vunpack.c.l.b16 %v7454
    %v8278 = vunpack.c.h.b16 %v7454
    %v8279 = vunpack.c.l.b16 %v7455
    %v8280 = vunpack.c.l.b16 %v7456
    %v8281 = vunpack.c.h.b16 %v7456
    %v8282 = vunpack.c.l.b16 %v7457
    %v8283 = vunpack.c.l.b16 %v7458
    %v8284 = vunpack.c.h.b16 %v7458
    %v8285 = vunpack.c.l.b16 %v7459
    %v8286 = vunpack.c.l.b16 %v7460
    %v8287 = vunpack.c.h.b16 %v7460
    %v8288 = vunpack.c.l.b16 %v7461
    %v8289 = vunpack.c.l.b16 %v7462
    %v8290 = vunpack.c.h.b16 %v7462
    %v8291 = vunpack.c.l.b16 %v7463
    %v8292 = vunpack.c.l.b16 %v7464
    %v8293 = vunpack.c.h.b16 %v7464
    %v8294 = vunpack.c.l.b16 %v7465
    %v8295 = vunpack.c.l.b16 %v7466
    %v8296 = vunpack.c.h.b16 %v7466
    %v8297 = vunpack.c.l.b16 %v7467
    %v8298 = vunpack.c.l.b16 %v7468
    %v8299 = vunpack.c.h.b16 %v7468
    %v8300 = vunpack.c.l.b16 %v7469
    %v8301 = vunpack.c.l.b16 %v7470
    %v8302 = vunpack.c.h.b16 %v7470
    %v8303 = vunpack.c.l.b16 %v7471
    %v8304 = vunpack.c.l.b16 %v7472
    %v8305 = vunpack.c.h.b16 %v7472
    %v8306 = vunpack.c.l.b16 %v7473
    %v8307 = vunpack.c.l.b16 %v7474
    %v8308 = vunpack.c.h.b16 %v7474
    %v8309 = vunpack.c.l.b16 %v7475
    %v8310 = vunpack.c.l.b16 %v7476
    %v8311 = vunpack.c.h.b16 %v7476
    %v8312 = vunpack.c.l.b16 %v7477
    %v8313 = vunpack.c.l.b16 %v7478
    %v8314 = vunpack.c.h.b16 %v7478
    %v8315 = vunpack.c.l.b16 %v7479
    %v8316 = vunpack.c.l.b16 %v7480
    %v8317 = vunpack.c.h.b16 %v7480
    %v8318 = vunpack.c.l.b16 %v7481
    %v8319 = vunpack.c.l.b16 %v7482
    %v8320 = vunpack.c.h.b16 %v7482
    %v8321 = vunpack.c.l.b16 %v7483
    %v8322 = vunpack.c.l.b16 %v7484
    %v8323 = vunpack.c.h.b16 %v7484
    %v8324 = vunpack.c.l.b16 %v7485
    %v8325 = vunpack.c.l.b16 %v7486
    %v8326 = vunpack.c.h.b16 %v7486
    %v8327 = vunpack.c.l.b16 %v7487
    %v8328 = vunpack.c.l.b16 %v7488
    %v8329 = vunpack.c.h.b16 %v7488
    %v8330 = vunpack.c.l.b16 %v7489
    %v8331 = vunpack.c.l.b16 %v7490
    %v8332 = vunpack.c.h.b16 %v7490
    %v8333 = vunpack.c.l.b16 %v7491
    %v8334 = vunpack.c.l.b16 %v7492
    %v8335 = vunpack.c.h.b16 %v7492
    %v8336 = vunpack.c.l.b16 %v7493
    %v8337 = vunpack.c.l.b16 %v7494
    %v8338 = vunpack.c.h.b16 %v7494
    %v8339 = vunpack.c.l.b16 %v7495
    %v8340 = vunpack.c.l.b16 %v7496
    %v8341 = vunpack.c.h.b16 %v7496
    %v8342 = vunpack.c.l.b16 %v7497
    %v8343 = vunpack.c.l.b16 %v7498
    %v8344 = vunpack.c.h.b16 %v7498
    %v8345 = vunpack.c.l.b16 %v7499
    %v8346 = vunpack.c.l.b16 %v7500
    %v8347 = vunpack.c.h.b16 %v7500
    %v8348 = vunpack.c.l.b16 %v7501
    %v8349 = vunpack.c.l.b16 %v7502
    %v8350 = vunpack.c.h.b16 %v7502
    %v8351 = vunpack.c.l.b16 %v7503
    %v8352 = vunpack.c.l.b16 %v7504
    %v8353 = vunpack.c.h.b16 %v7504
    %v8354 = vunpack.c.l.b16 %v7505
    %v8355 = vunpack.c.l.b16 %v7506
    %v8356 = vunpack.c.h.b16 %v7506
    %v8357 = vunpack.c.l.b16 %v7507
    %v8358 = vunpack.c.l.b16 %v7508
    %v8359 = vunpack.c.h.b16 %v7508
    %v8360 = vunpack.c.l.b16 %v7509
    %v8361 = vunpack.c.l.b16 %v7510
    %v8362 = vunpack.c.h.b16 %v7510
    %v8363 = vunpack.c.l.b16 %v7511
    %v8364 = vunpack.c.l.b16 %v7512
    %v8365 = vunpack.c.h.b16 %v7512
    %v8366 = vunpack.c.l.b16 %v7513
    %v8367 = vunpack.c.l.b16 %v7514
    %v8368 = vunpack.c.h.b16 %v7514
    %v8369 = vunpack.c.l.b16 %v7515
    %v8370 = vunpack.c.l.b16 %v7516
    %v8371 = vunpack.c.h.b16 %v7516
    %v8372 = vunpack.c.l.b16 %v7517
    %v8373 = vunpack.c.l.b16 %v7518
    %v8374 = vunpack.c.h.b16 %v7518
    %v8375 = vunpack.c.l.b16 %v7519
    %v8376 = vunpack.c.l.b16 %v7520
    %v8377 = vunpack.c.h.b16 %v7520
    %v8378 = vunpack.c.l.b16 %v7521
    %v8379 = vunpack.c.l.b16 %v7522
    %v8380 = vunpack.c.h.b16 %v7522
    %v8381 = vunpack.c.l.b16 %v7523
    %v8382 = vunpack.c.l.b16 %v7524
    %v8383 = vunpack.c.h.b16 %v7524
    %v8384 = vunpack.c.l.b16 %v7525
    %v8385 = vunpack.c.l.b16 %v7526
    %v8386 = vunpack.c.h.b16 %v7526
    %v8387 = vunpack.c.l.b16 %v7527
    %v8388 = vunpack.c.l.b16 %v7528
    %v8389 = vunpack.c.h.b16 %v7528
    %v8390 = vunpack.c.l.b16 %v7529
    %v8391 = vunpack.c.l.b16 %v7530
    %v8392 = vunpack.c.h.b16 %v7530
    %v8393 = vunpack.c.l.b16 %v7531
    %v8394 = vunpack.c.l.b16 %v7532
    %v8395 = vunpack.c.h.b16 %v7532
    %v8396 = vunpack.c.l.b16 %v7533
    %v8397 = vunpack.c.l.b16 %v7534
    %v8398 = vunpack.c.h.b16 %v7534
    %v8399 = vunpack.c.l.b16 %v7535
    %v8400 = vunpack.c.l.b16 %v7536
    %v8401 = vunpack.c.h.b16 %v7536
    %v8402 = vunpack.c.l.b16 %v7537
    %v8403 = vunpack.c.l.b16 %v7538
    %v8404 = vunpack.c.h.b16 %v7538
    %v8405 = vunpack.c.l.b16 %v7539
    %v8406 = vunpack.c.l.b16 %v7540
    %v8407 = vunpack.c.h.b16 %v7540
    %v8408 = vunpack.c.l.b16 %v7541
    %v8409 = vunpack.c.l.b16 %v7542
    %v8410 = vunpack.c.h.b16 %v7542
    %v8411 = vunpack.c.l.b16 %v7543
    %v8412 = vunpack.c.l.b16 %v7544
    %v8413 = vunpack.c.h.b16 %v7544
    %v8414 = vunpack.c.l.b16 %v7545
    %v8415 = vunpack.c.l.b16 %v7546
    %v8416 = vunpack.c.h.b16 %v7546
    %v8417 = vunpack.c.l.b16 %v7547
    %v8418 = vunpack.c.l.b16 %v7548
    %v8419 = vunpack.c.h.b16 %v7548
    %v8420 = vunpack.c.l.b16 %v7549
    %v8421 = vunpack.c.l.b16 %v7550
    %v8422 = vunpack.c.h.b16 %v7550
    %v8423 = vunpack.c.l.b16 %v7551
    %v8424 = vunpack.c.l.b16 %v7552
    %v8425 = vunpack.c.h.b16 %v7552
    %v8426 = vunpack.c.l.b16 %v7553
    %v8427 = vunpack.c.l.b16 %v7554
    %v8428 = vunpack.c.h.b16 %v7554
    %v8429 = vunpack.c.l.b16 %v7555
    %v8430 = vunpack.c.l.b16 %v7556
    %v8431 = vunpack.c.h.b16 %v7556
    %v8432 = vunpack.c.l.b16 %v7557
    %v8433 = vunpack.c.l.b16 %v7558
    %v8434 = vunpack.c.h.b16 %v7558
    %v8435 = vunpack.c.l.b16 %v7559
    %v8436 = vunpack.c.l.b16 %v7560
    %v8437 = vunpack.c.h.b16 %v7560
    %v8438 = vunpack.c.l.b16 %v7561
    %v8439 = vunpack.c.l.b16 %v7562
    %v8440 = vunpack.c.h.b16 %v7562
    %v8441 = vunpack.c.l.b16 %v7563
    %v8442 = vunpack.c.l.b16 %v7564
    %v8443 = vunpack.c.h.b16 %v7564
    %v8444 = vunpack.c.l.b16 %v7565
    %v8445 = vunpack.c.l.b16 %v7566
    %v8446 = vunpack.c.h.b16 %v7566
    %v8447 = vunpack.c.l.b16 %v7567
    %v8448 = vunpack.c.l.b16 %v7568
    %v8449 = vunpack.c.h.b16 %v7568
    %v8450 = vunpack.c.l.b16 %v7569
    %v8451 = vunpack.c.l.b16 %v7570
    %v8452 = vunpack.c.h.b16 %v7570
    %v8453 = vunpack.c.l.b16 %v7571
    %v8454 = vunpack.c.l.b16 %v7572
    %v8455 = vunpack.c.h.b16 %v7572
    %v8456 = vunpack.c.l.b16 %v7573
    %v8457 = vunpack.c.l.b16 %v7574
    %v8458 = vunpack.c.h.b16 %v7574
    %v8459 = vunpack.c.l.b16 %v7575
    %v8460 = vunpack.c.l.b16 %v7576
    %v8461 = vunpack.c.h.b16 %v7576
    %v8462 = vunpack.c.l.b16 %v7577
    %v8463 = vunpack.c.l.b16 %v7578
    %v8464 = vunpack.c.h.b16 %v7578
    %v8465 = vunpack.c.l.b16 %v7579
    %v8466 = vunpack.c.l.b16 %v7580
    %v8467 = vunpack.c.h.b16 %v7580
    %v8468 = vunpack.c.l.b16 %v7581
    %v8469 = vunpack.c.l.b16 %v7582
    %v8470 = vunpack.c.h.b16 %v7582
    %v8471 = vunpack.c.l.b16 %v7583
    %v8472 = vunpack.c.l.b16 %v7584
    %v8473 = vunpack.c.h.b16 %v7584
    %v8474 = vunpack.c.l.b16 %v7585
    %v8475 = vunpack.c.l.b16 %v7586
    %v8476 = vunpack.c.h.b16 %v7586
    %v8477 = vunpack.c.l.b16 %v7587
    %v8478 = vunpack.c.l.b16 %v7588
    %v8479 = vunpack.c.h.b16 %v7588
    %v8480 = vunpack.c.l.b16 %v7589
    %v8481 = vunpack.c.l.b16 %v7590
    %v8482 = vunpack.c.h.b16 %v7590
    %v8483 = vunpack.c.l.b16 %v7591
    %v8484 = vunpack.c.l.b16 %v7592
    %v8485 = vunpack.c.h.b16 %v7592
    %v8486 = vunpack.c.l.b16 %v7593
    %v8487 = vunpack.c.l.b16 %v7594
    %v8488 = vunpack.c.h.b16 %v7594
    %v8489 = vunpack.c.l.b16 %v7595
    %v8490 = vunpack.c.l.b16 %v7596
    %v8491 = vunpack.c.h.b16 %v7596
    %v8492 = vunpack.c.l.b16 %v7597
    %v8493 = vunpack.c.l.b16 %v7598
    %v8494 = vunpack.c.h.b16 %v7598
    %v8495 = vunpack.c.l.b16 %v7599
    %v8496 = vunpack.c.l.b16 %v7600
    %v8497 = vunpack.c.h.b16 %v7600
    %v8498 = vunpack.c.l.b16 %v7601
    %v8499 = vunpack.c.l.b16 %v7602
    %v8500 = vunpack.c.h.b16 %v7602
    %v8501 = vunpack.c.l.b16 %v7603
    %v8502 = vunpack.c.l.b16 %v7604
    %v8503 = vunpack.c.h.b16 %v7604
    %v8504 = vunpack.c.l.b16 %v7605
    %v8505 = vunpack.c.l.b16 %v7606
    %v8506 = vunpack.c.h.b16 %v7606
    %v8507 = vunpack.c.l.b16 %v7607
    %v8508 = vunpack.c.l.b16 %v7608
    %v8509 = vunpack.c.h.b16 %v7608
    %v8510 = vunpack.c.l.b16 %v7609
    %v8511 = vunpack.c.l.b16 %v7610
    %v8512 = vunpack.c.h.b16 %v7610
    %v8513 = vunpack.c.l.b16 %v7611
    %v8514 = vunpack.c.l.b16 %v7612
    %v8515 = vunpack.c.h.b16 %v7612
    %v8516 = vunpack.c.l.b16 %v7613
    %v8517 = vunpack.c.l.b16 %v7614
    %v8518 = vunpack.c.h.b16 %v7614
    %v8519 = vunpack.c.l.b16 %v7615
    %v8520 = vunpack.c.l.b16 %v7616
    %v8521 = vunpack.c.h.b16 %v7616
    %v8522 = vunpack.c.l.b16 %v7617
    %v8523 = vunpack.c.l.b16 %v7618
    %v8524 = vunpack.c.h.b16 %v7618
    %v8525 = vunpack.c.l.b16 %v7619
    %v8526 = vunpack.c.l.b16 %v7620
    %v8527 = vunpack.c.h.b16 %v7620
    %v8528 = vunpack.c.l.b16 %v7621
    %v8529 = vunpack.c.l.b16 %v7622
    %v8530 = vunpack.c.h.b16 %v7622
    %v8531 = vunpack.c.l.b16 %v7623
    %v8532 = vunpack.c.l.b16 %v7624
    %v8533 = vunpack.c.h.b16 %v7624
    %v8534 = vunpack.c.l.b16 %v7625
    %v8535 = vunpack.c.l.b16 %v7626
    %v8536 = vunpack.c.h.b16 %v7626
    %v8537 = vunpack.c.l.b16 %v7627
    %v8538 = vunpack.c.l.b16 %v7628
    %v8539 = vunpack.c.h.b16 %v7628
    %v8540 = vunpack.c.l.b16 %v7629
    %v8541 = vunpack.c.l.b16 %v7630
    %v8542 = vunpack.c.h.b16 %v7630
    %v8543 = vunpack.c.l.b16 %v7631
    %v8544 = vunpack.c.l.b16 %v7632
    %v8545 = vunpack.c.h.b16 %v7632
    %v8546 = vunpack.c.l.b16 %v7633
    %v8547 = vunpack.c.l.b16 %v7634
    %v8548 = vunpack.c.h.b16 %v7634
    %v8549 = vunpack.c.l.b16 %v7635
    %v8550 = vunpack.c.l.b16 %v7636
    %v8551 = vunpack.c.h.b16 %v7636
    %v8552 = vunpack.c.l.b16 %v7637
    %v8553 = vunpack.c.l.b16 %v7638
    %v8554 = vunpack.c.h.b16 %v7638
    %v8555 = vunpack.c.l.b16 %v7639
    %v8556 = vunpack.c.l.b16 %v7640
    %v8557 = vunpack.c.h.b16 %v7640
    %v8558 = vunpack.c.l.b16 %v7641
    %v8559 = vunpack.c.l.b16 %v7642
    %v8560 = vunpack.c.h.b16 %v7642
    %v8561 = vunpack.c.l.b16 %v7643
    %v8562 = vunpack.c.l.b16 %v7644
    %v8563 = vunpack.c.h.b16 %v7644
    %v8564 = vunpack.c.l.b16 %v7645
    %v8565 = vunpack.c.l.b16 %v7646
    %v8566 = vunpack.c.h.b16 %v7646
    %v8567 = vunpack.c.l.b16 %v7647
    %v8568 = vunpack.c.l.b16 %v7648
    %v8569 = vunpack.c.h.b16 %v7648
    %v8570 = vunpack.c.l.b16 %v7649
    %v8571 = vunpack.c.l.b16 %v7650
    %v8572 = vunpack.c.h.b16 %v7650
    %v8573 = vunpack.c.l.b16 %v7651
    %v8574 = vunpack.c.l.b16 %v7652
    %v8575 = vunpack.c.h.b16 %v7652
    %v8576 = vunpack.c.l.b16 %v7653
    %v8577 = vunpack.c.l.b16 %v7654
    %v8578 = vunpack.c.h.b16 %v7654
    %v8579 = vunpack.c.l.b16 %v7655
    %v8580 = vunpack.c.l.b16 %v7656
    %v8581 = vunpack.c.h.b16 %v7656
    %v8582 = vunpack.c.l.b16 %v7657
    %v8583 = vunpack.c.l.b16 %v7658
    %v8584 = vunpack.c.h.b16 %v7658
    %v8585 = vunpack.c.l.b16 %v7659
    %v8586 = vunpack.c.l.b16 %v7660
    %v8587 = vunpack.c.h.b16 %v7660
    %v8588 = vunpack.c.l.b16 %v7661
    %v8589 = vunpack.c.l.b16 %v7662
    %v8590 = vunpack.c.h.b16 %v7662
    %v8591 = vunpack.c.l.b16 %v7663
    %v8592 = vunpack.c.l.b16 %v7664
    %v8593 = vunpack.c.h.b16 %v7664
    %v8594 = vunpack.c.l.b16 %v7665
    %v8595 = vunpack.c.l.b16 %v7666
    %v8596 = vunpack.c.h.b16 %v7666
    %v8597 = vunpack.c.l.b16 %v7667
    %v8598 = vunpack.c.l.b16 %v7668
    %v8599 = vunpack.c.h.b16 %v7668
    %v8600 = vunpack.c.l.b16 %v7669
    %v8601 = vunpack.c.l.b16 %v7670
    %v8602 = vunpack.c.h.b16 %v7670
    %v8603 = vunpack.c.l.b16 %v7671
    %v8604 = vunpack.c.l.b16 %v7672
    %v8605 = vunpack.c.h.b16 %v7672
    %v8606 = vunpack.c.l.b16 %v7673
    %v8607 = vunpack.c.l.b16 %v7674
    %v8608 = vunpack.c.h.b16 %v7674
    %v8609 = vunpack.c.l.b16 %v7675
    %v8610 = vunpack.c.l.b16 %v7676
    %v8611 = vunpack.c.h.b16 %v7676
    %v8612 = vunpack.c.l.b16 %v7677
    %v8613 = vunpack.c.l.b16 %v7678
    %v8614 = vunpack.c.h.b16 %v7678
    %v8615 = vunpack.c.l.b16 %v7679
    %v8616 = vunpack.c.l.b16 %v7680
    %v8617 = vunpack.c.h.b16 %v7680
    %v8618 = vunpack.c.l.b16 %v7681
    %v8619 = vunpack.c.l.b16 %v7682
    %v8620 = vunpack.c.h.b16 %v7682
    %v8621 = vunpack.c.l.b16 %v7683
    %v8622 = vunpack.c.l.b16 %v7684
    %v8623 = vunpack.c.h.b16 %v7684
    %v8624 = vunpack.c.l.b16 %v7685
    %v8625 = vunpack.c.l.b16 %v7686
    %v8626 = vunpack.c.h.b16 %v7686
    %v8627 = vunpack.c.l.b16 %v7687
    %v8628 = vunpack.c.l.b16 %v7688
    %v8629 = vunpack.c.h.b16 %v7688
    %v8630 = vunpack.c.l.b16 %v7689
    %v8631 = vunpack.c.l.b16 %v7690
    %v8632 = vunpack.c.h.b16 %v7690
    %v8633 = vunpack.c.l.b16 %v7691
    %v8634 = vunpack.c.l.b16 %v7692
    %v8635 = vunpack.c.h.b16 %v7692
    %v8636 = vunpack.c.l.b16 %v7693
    %v8637 = vunpack.c.l.b16 %v7694
    %v8638 = vunpack.c.h.b16 %v7694
    %v8639 = vunpack.c.l.b16 %v7695
    %v8640 = vunpack.c.l.b16 %v7696
    %v8641 = vunpack.c.h.b16 %v7696
    %v8642 = vunpack.c.l.b16 %v7697
    %v8643 = vunpack.c.l.b16 %v7698
    %v8644 = vunpack.c.h.b16 %v7698
    %v8645 = vunpack.c.l.b16 %v7699
    %v8646 = vunpack.c.l.b16 %v7700
    %v8647 = vunpack.c.h.b16 %v7700
    %v8648 = vunpack.c.l.b16 %v7701
    %v8649 = vunpack.c.l.b16 %v7702
    %v8650 = vunpack.c.h.b16 %v7702
    %v8651 = vunpack.c.l.b16 %v7703
    %v8652 = vunpack.c.l.b16 %v7704
    %v8653 = vunpack.c.h.b16 %v7704
    %v8654 = vunpack.c.l.b16 %v7705
    %v8655 = vunpack.c.l.b16 %v7706
    %v8656 = vunpack.c.h.b16 %v7706
    %v8657 = vunpack.c.l.b16 %v7707
    %v8658 = vunpack.c.l.b16 %v7708
    %v8659 = vunpack.c.h.b16 %v7708
    %v8660 = vunpack.c.l.b16 %v7709
    %v8661 = vunpack.c.l.b16 %v7710
    %v8662 = vunpack.c.h.b16 %v7710
    %v8663 = vunpack.c.l.b16 %v7711
    %v8664 = vunpack.c.l.b16 %v7712
    %v8665 = vunpack.c.h.b16 %v7712
    %v8666 = vunpack.c.l.b16 %v7713
    %v8667 = vunpack.c.l.b16 %v7714
    %v8668 = vunpack.c.h.b16 %v7714
    %v8669 = vunpack.c.l.b16 %v7715
    %v8670 = vunpack.c.l.b16 %v7716
    %v8671 = vunpack.c.h.b16 %v7716
    %v8672 = vunpack.c.l.b16 %v7717
    %v8673 = vunpack.c.l.b16 %v7718
    %v8674 = vunpack.c.h.b16 %v7718
    %v8675 = vunpack.c.l.b16 %v7719
    %v8676 = vunpack.c.l.b16 %v7720
    %v8677 = vunpack.c.h.b16 %v7720
    %v8678 = vunpack.c.l.b16 %v7721
    %v8679 = vunpack.c.l.b16 %v7722
    %v8680 = vunpack.c.h.b16 %v7722
    %v8681 = vunpack.c.l.b16 %v7723
    %v8682 = vunpack.c.l.b16 %v7724
    %v8683 = vunpack.c.h.b16 %v7724
    %v8684 = vunpack.c.l.b16 %v7725
    %v8685 = vunpack.c.l.b16 %v7726
    %v8686 = vunpack.c.h.b16 %v7726
    %v8687 = vunpack.c.l.b16 %v7727
    %v8688 = vunpack.c.l.b16 %v7728
    %v8689 = vunpack.c.h.b16 %v7728
    %v8690 = vunpack.c.l.b16 %v7729
    %v8691 = vunpack.c.l.b16 %v7730
    %v8692 = vunpack.c.h.b16 %v7730
    %v8693 = vunpack.c.l.b16 %v7731
    %v8694 = vunpack.c.l.b16 %v7732
    %v8695 = vunpack.c.h.b16 %v7732
    %v8696 = vunpack.c.l.b16 %v7733
    %v8697 = vunpack.c.l.b16 %v7734
    %v8698 = vunpack.c.h.b16 %v7734
    %v8699 = vunpack.c.l.b16 %v7735
    %v8700 = vunpack.c.l.b16 %v7736
    %v8701 = vunpack.c.h.b16 %v7736
    %v8702 = vunpack.c.l.b16 %v7737
    %v8703 = vunpack.c.l.b16 %v7738
    %v8704 = vunpack.c.h.b16 %v7738
    %v8705 = vunpack.c.l.b16 %v7739
    %v8706 = vunpack.c.l.b16 %v7740
    %v8707 = vunpack.c.h.b16 %v7740
    %v8708 = vunpack.c.l.b16 %v7741
    %v8709 = vunpack.c.l.b16 %v7742
    %v8710 = vunpack.c.h.b16 %v7742
    %v8711 = vunpack.c.l.b16 %v7743
    %v8712 = vunpack.c.l.b16 %v7744
    %v8713 = vunpack.c.h.b16 %v7744
    %v8714 = vunpack.c.l.b16 %v7745
    %v8715 = vunpack.c.l.b16 %v7746
    %v8716 = vunpack.c.h.b16 %v7746
    %v8717 = vunpack.c.l.b16 %v7747
    %v8718 = vunpack.c.l.b16 %v7748
    %v8719 = vunpack.c.h.b16 %v7748
    %v8720 = vunpack.c.l.b16 %v7749
    %v8721 = vunpack.c.l.b16 %v7750
    %v8722 = vunpack.c.h.b16 %v7750
    %v8723 = vunpack.c.l.b16 %v7751
    %v8724 = vunpack.c.l.b16 %v7752
    %v8725 = vunpack.c.h.b16 %v7752
    %v8726 = vunpack.c.l.b16 %v7753
    %v8727 = vunpack.c.l.b16 %v7754
    %v8728 = vunpack.c.h.b16 %v7754
    %v8729 = vunpack.c.l.b16 %v7755
    %v8730 = vunpack.c.l.b16 %v7756
    %v8731 = vunpack.c.h.b16 %v7756
    %v8732 = vunpack.c.l.b16 %v7757
    %v8733 = vunpack.c.l.b16 %v7758
    %v8734 = vunpack.c.h.b16 %v7758
    %v8735 = vunpack.c.l.b16 %v7759
    %v8736 = vunpack.c.l.b16 %v7760
    %v8737 = vunpack.c.h.b16 %v7760
    %v8738 = vunpack.c.l.b16 %v7761
    %v8739 = vpack.c.b16 %v8166, %v8163
    %v8740 = vpack.c.b16 %v8167, %v8164
    %v8741 = vpack.c.b16 %v8168, %v8165
    %v8742 = vpack.c.b16 %v8172, %v8169
    %v8743 = vpack.c.b16 %v8173, %v8170
    %v8744 = vpack.c.b16 %v8174, %v8171
    %v8745 = vpack.c.b16 %v8178, %v8175
    %v8746 = vpack.c.b16 %v8179, %v8176
    %v8747 = vpack.c.b16 %v8180, %v8177
    %v8748 = vpack.c.b16 %v8184, %v8181
    %v8749 = vpack.c.b16 %v8185, %v8182
    %v8750 = vpack.c.b16 %v8186, %v8183
    %v8751 = vpack.c.b16 %v8190, %v8187
    %v8752 = vpack.c.b16 %v8191, %v8188
    %v8753 = vpack.c.b16 %v8192, %v8189
    %v8754 = vpack.c.b16 %v8196, %v8193
    %v8755 = vpack.c.b16 %v8197, %v8194
    %v8756 = vpack.c.b16 %v8198, %v8195
    %v8757 = vpack.c.b16 %v8202, %v8199
    %v8758 = vpack.c.b16 %v8203, %v8200
    %v8759 = vpack.c.b16 %v8204, %v8201
    %v8760 = vpack.c.b16 %v8208, %v8205
    %v8761 = vpack.c.b16 %v8209, %v8206
    %v8762 = vpack.c.b16 %v8210, %v8207
    %v8763 = vpack.c.b16 %v8214, %v8211
    %v8764 = vpack.c.b16 %v8215, %v8212
    %v8765 = vpack.c.b16 %v8216, %v8213
    %v8766 = vpack.c.b16 %v8220, %v8217
    %v8767 = vpack.c.b16 %v8221, %v8218
    %v8768 = vpack.c.b16 %v8222, %v8219
    %v8769 = vpack.c.b16 %v8226, %v8223
    %v8770 = vpack.c.b16 %v8227, %v8224
    %v8771 = vpack.c.b16 %v8228, %v8225
    %v8772 = vpack.c.b16 %v8232, %v8229
    %v8773 = vpack.c.b16 %v8233, %v8230
    %v8774 = vpack.c.b16 %v8234, %v8231
    %v8775 = vpack.c.b16 %v8238, %v8235
    %v8776 = vpack.c.b16 %v8239, %v8236
    %v8777 = vpack.c.b16 %v8240, %v8237
    %v8778 = vpack.c.b16 %v8244, %v8241
    %v8779 = vpack.c.b16 %v8245, %v8242
    %v8780 = vpack.c.b16 %v8246, %v8243
    %v8781 = vpack.c.b16 %v8250, %v8247
    %v8782 = vpack.c.b16 %v8251, %v8248
    %v8783 = vpack.c.b16 %v8252, %v8249
    %v8784 = vpack.c.b16 %v8256, %v8253
    %v8785 = vpack.c.b16 %v8257, %v8254
    %v8786 = vpack.c.b16 %v8258, %v8255
    %v8787 = vpack.c.b16 %v8262, %v8259
    %v8788 = vpack.c.b16 %v8263, %v8260
    %v8789 = vpack.c.b16 %v8264, %v8261
    %v8790 = vpack.c.b16 %v8268, %v8265
    %v8791 = vpack.c.b16 %v8269, %v8266
    %v8792 = vpack.c.b16 %v8270, %v8267
    %v8793 = vpack.c.b16 %v8274, %v8271
    %v8794 = vpack.c.b16 %v8275, %v8272
    %v8795 = vpack.c.b16 %v8276, %v8273
    %v8796 = vpack.c.b16 %v8280, %v8277
    %v8797 = vpack.c.b16 %v8281, %v8278
    %v8798 = vpack.c.b16 %v8282, %v8279
    %v8799 = vpack.c.b16 %v8286, %v8283
    %v8800 = vpack.c.b16 %v8287, %v8284
    %v8801 = vpack.c.b16 %v8288, %v8285
    %v8802 = vpack.c.b16 %v8292, %v8289
    %v8803 = vpack.c.b16 %v8293, %v8290
    %v8804 = vpack.c.b16 %v8294, %v8291
    %v8805 = vpack.c.b16 %v8298, %v8295
    %v8806 = vpack.c.b16 %v8299, %v8296
    %v8807 = vpack.c.b16 %v8300, %v8297
    %v8808 = vpack.c.b16 %v8304, %v8301
    %v8809 = vpack.c.b16 %v8305, %v8302
    %v8810 = vpack.c.b16 %v8306, %v8303
    %v8811 = vpack.c.b16 %v8310, %v8307
    %v8812 = vpack.c.b16 %v8311, %v8308
    %v8813 = vpack.c.b16 %v8312, %v8309
    %v8814 = vpack.c.b16 %v8316, %v8313
    %v8815 = vpack.c.b16 %v8317, %v8314
    %v8816 = vpack.c.b16 %v8318, %v8315
    %v8817 = vpack.c.b16 %v8322, %v8319
    %v8818 = vpack.c.b16 %v8323, %v8320
    %v8819 = vpack.c.b16 %v8324, %v8321
    %v8820 = vpack.c.b16 %v8328, %v8325
    %v8821 = vpack.c.b16 %v8329, %v8326
    %v8822 = vpack.c.b16 %v8330, %v8327
    %v8823 = vpack.c.b16 %v8334, %v8331
    %v8824 = vpack.c.b16 %v8335, %v8332
    %v8825 = vpack.c.b16 %v8336, %v8333
    %v8826 = vpack.c.b16 %v8340, %v8337
    %v8827 = vpack.c.b16 %v8341, %v8338
    %v8828 = vpack.c.b16 %v8342, %v8339
    %v8829 = vpack.c.b16 %v8346, %v8343
    %v8830 = vpack.c.b16 %v8347, %v8344
    %v8831 = vpack.c.b16 %v8348, %v8345
    %v8832 = vpack.c.b16 %v8352, %v8349
    %v8833 = vpack.c.b16 %v8353, %v8350
    %v8834 = vpack.c.b16 %v8354, %v8351
    %v8835 = vpack.c.b16 %v8358, %v8355
    %v8836 = vpack.c.b16 %v8359, %v8356
    %v8837 = vpack.c.b16 %v8360, %v8357
    %v8838 = vpack.c.b16 %v8364, %v8361
    %v8839 = vpack.c.b16 %v8365, %v8362
    %v8840 = vpack.c.b16 %v8366, %v8363
    %v8841 = vpack.c.b16 %v8370, %v8367
    %v8842 = vpack.c.b16 %v8371, %v8368
    %v8843 = vpack.c.b16 %v8372, %v8369
    %v8844 = vpack.c.b16 %v8376, %v8373
    %v8845 = vpack.c.b16 %v8377, %v8374
    %v8846 = vpack.c.b16 %v8378, %v8375
    %v8847 = vpack.c.b16 %v8382, %v8379
    %v8848 = vpack.c.b16 %v8383, %v8380
    %v8849 = vpack.c.b16 %v8384, %v8381
    %v8850 = vpack.c.b16 %v8388, %v8385
    %v8851 = vpack.c.b16 %v8389, %v8386
    %v8852 = vpack.c.b16 %v8390, %v8387
    %v8853 = vpack.c.b16 %v8394, %v8391
    %v8854 = vpack.c.b16 %v8395, %v8392
    %v8855 = vpack.c.b16 %v8396, %v8393
    %v8856 = vpack.c.b16 %v8400, %v8397
    %v8857 = vpack.c.b16 %v8401, %v8398
    %v8858 = vpack.c.b16 %v8402, %v8399
    %v8859 = vpack.c.b16 %v8406, %v8403
    %v8860 = vpack.c.b16 %v8407, %v8404
    %v8861 = vpack.c.b16 %v8408, %v8405
    %v8862 = vpack.c.b16 %v8412, %v8409
    %v8863 = vpack.c.b16 %v8413, %v8410
    %v8864 = vpack.c.b16 %v8414, %v8411
    %v8865 = vpack.c.b16 %v8418, %v8415
    %v8866 = vpack.c.b16 %v8419, %v8416
    %v8867 = vpack.c.b16 %v8420, %v8417
    %v8868 = vpack.c.b16 %v8424, %v8421
    %v8869 = vpack.c.b16 %v8425, %v8422
    %v8870 = vpack.c.b16 %v8426, %v8423
    %v8871 = vpack.c.b16 %v8430, %v8427
    %v8872 = vpack.c.b16 %v8431, %v8428
    %v8873 = vpack.c.b16 %v8432, %v8429
    %v8874 = vpack.c.b16 %v8436, %v8433
    %v8875 = vpack.c.b16 %v8437, %v8434
    %v8876 = vpack.c.b16 %v8438, %v8435
    %v8877 = vpack.c.b16 %v8442, %v8439
    %v8878 = vpack.c.b16 %v8443, %v8440
    %v8879 = vpack.c.b16 %v8444, %v8441
    %v8880 = vpack.c.b16 %v8448, %v8445
    %v8881 = vpack.c.b16 %v8449, %v8446
    %v8882 = vpack.c.b16 %v8450, %v8447
    %v8883 = vpack.c.b16 %v8454, %v8451
    %v8884 = vpack.c.b16 %v8455, %v8452
    %v8885 = vpack.c.b16 %v8456, %v8453
    %v8886 = vpack.c.b16 %v8460, %v8457
    %v8887 = vpack.c.b16 %v8461, %v8458
    %v8888 = vpack.c.b16 %v8462, %v8459
    %v8889 = vpack.c.b16 %v8466, %v8463
    %v8890 = vpack.c.b16 %v8467, %v8464
    %v8891 = vpack.c.b16 %v8468, %v8465
    %v8892 = vpack.c.b16 %v8472, %v8469
    %v8893 = vpack.c.b16 %v8473, %v8470
    %v8894 = vpack.c.b16 %v8474, %v8471
    %v8895 = vpack.c.b16 %v8478, %v8475
    %v8896 = vpack.c.b16 %v8479, %v8476
    %v8897 = vpack.c.b16 %v8480, %v8477
    %v8898 = vpack.c.b16 %v8484, %v8481
    %v8899 = vpack.c.b16 %v8485, %v8482
    %v8900 = vpack.c.b16 %v8486, %v8483
    %v8901 = vpack.c.b16 %v8490, %v8487
    %v8902 = vpack.c.b16 %v8491, %v8488
    %v8903 = vpack.c.b16 %v8492, %v8489
    %v8904 = vpack.c.b16 %v8496, %v8493
    %v8905 = vpack.c.b16 %v8497, %v8494
    %v8906 = vpack.c.b16 %v8498, %v8495
    %v8907 = vpack.c.b16 %v8502, %v8499
    %v8908 = vpack.c.b16 %v8503, %v8500
    %v8909 = vpack.c.b16 %v8504, %v8501
    %v8910 = vpack.c.b16 %v8508, %v8505
    %v8911 = vpack.c.b16 %v8509, %v8506
    %v8912 = vpack.c.b16 %v8510, %v8507
    %v8913 = vpack.c.b16 %v8514, %v8511
    %v8914 = vpack.c.b16 %v8515, %v8512
    %v8915 = vpack.c.b16 %v8516, %v8513
    %v8916 = vpack.c.b16 %v8520, %v8517
    %v8917 = vpack.c.b16 %v8521, %v8518
    %v8918 = vpack.c.b16 %v8522, %v8519
    %v8919 = vpack.c.b16 %v8526, %v8523
    %v8920 = vpack.c.b16 %v8527, %v8524
    %v8921 = vpack.c.b16 %v8528, %v8525
    %v8922 = vpack.c.b16 %v8532, %v8529
    %v8923 = vpack.c.b16 %v8533, %v8530
    %v8924 = vpack.c.b16 %v8534, %v8531
    %v8925 = vpack.c.b16 %v8538, %v8535
    %v8926 = vpack.c.b16 %v8539, %v8536
    %v8927 = vpack.c.b16 %v8540, %v8537
    %v8928 = vpack.c.b16 %v8544, %v8541
    %v8929 = vpack.c.b16 %v8545, %v8542
    %v8930 = vpack.c.b16 %v8546, %v8543
    %v8931 = vpack.c.b16 %v8550, %v8547
    %v8932 = vpack.c.b16 %v8551, %v8548
    %v8933 = vpack.c.b16 %v8552, %v8549
    %v8934 = vpack.c.b16 %v8556, %v8553
    %v8935 = vpack.c.b16 %v8557, %v8554
    %v8936 = vpack.c.b16 %v8558, %v8555
    %v8937 = vpack.c.b16 %v8562, %v8559
    %v8938 = vpack.c.b16 %v8563, %v8560
    %v8939 = vpack.c.b16 %v8564, %v8561
    %v8940 = vpack.c.b16 %v8568, %v8565
    %v8941 = vpack.c.b16 %v8569, %v8566
    %v8942 = vpack.c.b16 %v8570, %v8567
    %v8943 = vpack.c.b16 %v8574, %v8571
    %v8944 = vpack.c.b16 %v8575, %v8572
    %v8945 = vpack.c.b16 %v8576, %v8573
    %v8946 = vpack.c.b16 %v8580, %v8577
    %v8947 = vpack.c.b16 %v8581, %v8578
    %v8948 = vpack.c.b16 %v8582, %v8579
    %v8949 = vpack.c.b16 %v8586, %v8583
    %v8950 = vpack.c.b16 %v8587, %v8584
    %v8951 = vpack.c.b16 %v8588, %v8585
    %v8952 = vpack.c.b16 %v8592, %v8589
    %v8953 = vpack.c.b16 %v8593, %v8590
    %v8954 = vpack.c.b16 %v8594, %v8591
    %v8955 = vpack.c.b16 %v8598, %v8595
    %v8956 = vpack.c.b16 %v8599, %v8596
    %v8957 = vpack.c.b16 %v8600, %v8597
    %v8958 = vpack.c.b16 %v8604, %v8601
    %v8959 = vpack.c.b16 %v8605, %v8602
    %v8960 = vpack.c.b16 %v8606, %v8603
    %v8961 = vpack.c.b16 %v8610, %v8607
    %v8962 = vpack.c.b16 %v8611, %v8608
    %v8963 = vpack.c.b16 %v8612, %v8609
    %v8964 = vpack.c.b16 %v8616, %v8613
    %v8965 = vpack.c.b16 %v8617, %v8614
    %v8966 = vpack.c.b16 %v8618, %v8615
    %v8967 = vpack.c.b16 %v8622, %v8619
    %v8968 = vpack.c.b16 %v8623, %v8620
    %v8969 = vpack.c.b16 %v8624, %v8621
    %v8970 = vpack.c.b16 %v8628, %v8625
    %v8971 = vpack.c.b16 %v8629, %v8626
    %v8972 = vpack.c.b16 %v8630, %v8627
    %v8973 = vpack.c.b16 %v8634, %v8631
    %v8974 = vpack.c.b16 %v8635, %v8632
    %v8975 = vpack.c.b16 %v8636, %v8633
    %v8976 = vpack.c.b16 %v8640, %v8637
    %v8977 = vpack.c.b16 %v8641, %v8638
    %v8978 = vpack.c.b16 %v8642, %v8639
    %v8979 = vpack.c.b16 %v8646, %v8643
    %v8980 = vpack.c.b16 %v8647, %v8644
    %v8981 = vpack.c.b16 %v8648, %v8645
    %v8982 = vpack.c.b16 %v8652, %v8649
    %v8983 = vpack.c.b16 %v8653, %v8650
    %v8984 = vpack.c.b16 %v8654, %v8651
    %v8985 = vpack.c.b16 %v8658, %v8655
    %v8986 = vpack.c.b16 %v8659, %v8656
    %v8987 = vpack.c.b16 %v8660, %v8657
    %v8988 = vpack.c.b16 %v8664, %v8661
    %v8989 = vpack.c.b16 %v8665, %v8662
    %v8990 = vpack.c.b16 %v8666, %v8663
    %v8991 = vpack.c.b16 %v8670, %v8667
    %v8992 = vpack.c.b16 %v8671, %v8668
    %v8993 = vpack.c.b16 %v8672, %v8669
    %v8994 = vpack.c.b16 %v8676, %v8673
    %v8995 = vpack.c.b16 %v8677, %v8674
    %v8996 = vpack.c.b16 %v8678, %v8675
    %v8997 = vpack.c.b16 %v8682, %v8679
    %v8998 = vpack.c.b16 %v8683, %v8680
    %v8999 = vpack.c.b16 %v8684, %v8681
    %v9000 = vpack.c.b16 %v8688, %v8685
    %v9001 = vpack.c.b16 %v8689, %v8686
    %v9002 = vpack.c.b16 %v8690, %v8687
    %v9003 = vpack.c.b16 %v8694, %v8691
    %v9004 = vpack.c.b16 %v8695, %v8692
    %v9005 = vpack.c.b16 %v8696, %v8693
    %v9006 = vpack.c.b16 %v8700, %v8697
    %v9007 = vpack.c.b16 %v8701, %v8698
    %v9008 = vpack.c.b16 %v8702, %v8699
    %v9009 = vpack.c.b16 %v8706, %v8703
    %v9010 = vpack.c.b16 %v8707, %v8704
    %v9011 = vpack.c.b16 %v8708, %v8705
    %v9012 = vpack.c.b16 %v8712, %v8709
    %v9013 = vpack.c.b16 %v8713, %v8710
    %v9014 = vpack.c.b16 %v8714, %v8711
    %v9015 = vpack.c.b16 %v8718, %v8715
    %v9016 = vpack.c.b16 %v8719, %v8716
    %v9017 = vpack.c.b16 %v8720, %v8717
    %v9018 = vpack.c.b16 %v8724, %v8721
    %v9019 = vpack.c.b16 %v8725, %v8722
    %v9020 = vpack.c.b16 %v8726, %v8723
    %v9021 = vpack.c.b16 %v8730, %v8727
    %v9022 = vpack.c.b16 %v8731, %v8728
    %v9023 = vpack.c.b16 %v8732, %v8729
    %v9024 = vpack.c.b16 %v8736, %v8733
    %v9025 = vpack.c.b16 %v8737, %v8734
    %v9026 = vpack.c.b16 %v8738, %v8735
    %9315 = vmatprep.subr.bf16.mxu0 %v8740
    %9316 = vmatpush1.bf16.msra.mxu0 %v8739
    %9317 = vmatprep.subr.bf16.mxu0 %v8743
    %9318 = vmatpush1.bf16.msra.mxu0 %v8742
    %9319 = vmatprep.subr.bf16.mxu0 %v8746
    %9320 = vmatpush1.bf16.msra.mxu0 %v8745
    %9321 = vmatprep.subr.bf16.mxu0 %v8749
    %9322 = vmatpush1.bf16.msra.mxu0 %v8748
    %9323 = vmatprep.subr.bf16.mxu0 %v8752
    %9324 = vmatpush1.bf16.msra.mxu0 %v8751
    %9325 = vmatprep.subr.bf16.mxu0 %v8755
    %9326 = vmatpush1.bf16.msra.mxu0 %v8754
    %9327 = vmatprep.subr.bf16.mxu0 %v8758
    %9328 = vmatpush1.bf16.msra.mxu0 %v8757
    %9329 = vmatprep.subr.bf16.mxu0 %v8761
    %9330 = vmatpush1.bf16.msra.mxu0 %v8760
    %9331 = vmatprep.subr.bf16.mxu0 %v8764
    %9332 = vmatpush1.bf16.msra.mxu0 %v8763
    %9333 = vmatprep.subr.bf16.mxu0 %v8767
    %9334 = vmatpush1.bf16.msra.mxu0 %v8766
    %9335 = vmatprep.subr.bf16.mxu0 %v8770
    %9336 = vmatpush1.bf16.msra.mxu0 %v8769
    %9337 = vmatprep.subr.bf16.mxu0 %v8773
    %9338 = vmatpush1.bf16.msra.mxu0 %v8772
    %9339 = vmatprep.subr.bf16.mxu0 %v8776
    %9340 = vmatpush1.bf16.msra.mxu0 %v8775
    %9341 = vmatprep.subr.bf16.mxu0 %v8779
    %9342 = vmatpush1.bf16.msra.mxu0 %v8778
    %9343 = vmatprep.subr.bf16.mxu0 %v8782
    %9344 = vmatpush1.bf16.msra.mxu0 %v8781
    %9345 = vmatprep.subr.bf16.mxu0 %v8785
    %9346 = vmatpush1.bf16.msra.mxu0 %v8784
    %9347 = vmatprep.mubr.bf16.mxu0 %v7187
    %9348 = vmatmul.mubr.bf16.gmra.mrb[0].mxu0 %v7186
    %v9349 = vpop.f32.mrb[0].mxu0
    %v9350 = vadd.f32 %v7767, %v9349
    %v9351 = vpop.f32.mrb[0].mxu0
    %v9352 = vadd.f32 %v7771, %v9351
    %v9353 = vpop.f32.mrb[0].mxu0
    %v9354 = vadd.f32 %v7767, %v9353
    %v9355 = vpop.f32.mrb[0].mxu0
    %v9356 = vadd.f32 %v7771, %v9355
    %9357 = vmatprep.mubr.bf16.mxu0 %v7199
    %9358 = vmatmul.mubr.bf16.gmra.mrb[0].mxu0 %v7198
    %v9359 = vpop.f32.mrb[0].mxu0
    %v9360 = vadd.f32 %v7767, %v9359
    %v9361 = vpop.f32.mrb[0].mxu0
    %v9362 = vadd.f32 %v7771, %v9361
    %v9363 = vpop.f32.mrb[0].mxu0
    %v9364 = vadd.f32 %v7767, %v9363
    %v9365 = vpop.f32.mrb[0].mxu0
    %v9366 = vadd.f32 %v7771, %v9365
    %9367 = vmatprep.mubr.bf16.mxu0 %v7211
    %9368 = vmatmul.mubr.bf16.gmra.mrb[0].mxu0 %v7210
    %v9369 = vpop.f32.mrb[0].mxu0
    %v9370 = vadd.f32 %v7767, %v9369
    %v9371 = vpop.f32.mrb[0].mxu0
    %v9372 = vadd.f32 %v7771, %v9371
    %v9373 = vpop.f32.mrb[0].mxu0
    %v9374 = vadd.f32 %v7767, %v9373
    %v9375 = vpop.f32.mrb[0].mxu0
    %v9376 = vadd.f32 %v7771, %v9375
    %9377 = vmatprep.mubr.bf16.mxu0 %v7223
    %9378 = vmatmul.mubr.bf16.gmra.mrb[0].mxu0 %v7222
    %v9379 = vpop.f32.mrb[0].mxu0
    %v9380 = vadd.f32 %v7767, %v9379
    %v9381 = vpop.f32.mrb[0].mxu0
    %v9382 = vadd.f32 %v7771, %v9381
    %v9383 = vpop.f32.mrb[0].mxu0
    %v9384 = vadd.f32 %v7767, %v9383
    %v9385 = vpop.f32.mrb[0].mxu0
    %v9386 = vadd.f32 %v7771, %v9385
    %9387 = vmatprep.mubr.bf16.mxu0 %v7235
    %9388 = vmatmul.mubr.bf16.gmra.mrb[0].mxu0 %v7234
    %v9389 = vpop.f32.mrb[0].mxu0
    %v9390 = vadd.f32 %v7767, %v9389
    %v9391 = vpop.f32.mrb[0].mxu0
    %v9392 = vadd.f32 %v7771, %v9391
    %v9393 = vpop.f32.mrb[0].mxu0
    %v9394 = vadd.f32 %v7767, %v9393
    %v9395 = vpop.f32.mrb[0].mxu0
    %v9396 = vadd.f32 %v7771, %v9395
    %9397 = vmatprep.mubr.bf16.mxu0 %v7247
    %9398 = vmatmul.mubr.bf16.gmra.mrb[0].mxu0 %v7246
    %v9399 = vpop.f32.mrb[0].mxu0
    %v9400 = vadd.f32 %v7767, %v9399
    %v9401 = vpop.f32.mrb[0].mxu0
    %v9402 = vadd.f32 %v7771, %v9401
    %v9403 = vpop.f32.mrb[0].mxu0
    %v9404 = vadd.f32 %v7767, %v9403
    %v9405 = vpop.f32.mrb[0].mxu0
    %v9406 = vadd.f32 %v7771, %v9405
    %9407 = vmatprep.mubr.bf16.mxu0 %v7259
    %9408 = vmatmul.mubr.bf16.gmra.mrb[0].mxu0 %v7258
    %v9409 = vpop.f32.mrb[0].mxu0
    %v9410 = vadd.f32 %v7767, %v9409
    %v9411 = vpop.f32.mrb[0].mxu0
    %v9412 = vadd.f32 %v7771, %v9411
    %v9413 = vpop.f32.mrb[0].mxu0
    %v9414 = vadd.f32 %v7767, %v9413
    %v9415 = vpop.f32.mrb[0].mxu0
    %v9416 = vadd.f32 %v7771, %v9415
    %9417 = vmatprep.mubr.bf16.mxu0 %v7271
    %9418 = vmatmul.mubr.bf16.gmra.mrb[0].mxu0 %v7270
    %v9419 = vpop.f32.mrb[0].mxu0
    %v9420 = vadd.f32 %v7767, %v9419
    %v9421 = vpop.f32.mrb[0].mxu0
    %v9422 = vadd.f32 %v7771, %v9421
    %v9423 = vpop.f32.mrb[0].mxu0
    %v9424 = vadd.f32 %v7767, %v9423
    %v9425 = vpop.f32.mrb[0].mxu0
    %v9426 = vadd.f32 %v7771, %v9425
    %9427 = vmatprep.mubr.bf16.mxu0 %v7283
    %9428 = vmatmul.mubr.bf16.gmra.mrb[0].mxu0 %v7282
    %v9429 = vpop.f32.mrb[0].mxu0
    %v9430 = vadd.f32 %v7767, %v9429
    %v9431 = vpop.f32.mrb[0].mxu0
    %v9432 = vadd.f32 %v7771, %v9431
    %v9433 = vpop.f32.mrb[0].mxu0
    %v9434 = vadd.f32 %v7767, %v9433
    %v9435 = vpop.f32.mrb[0].mxu0
    %v9436 = vadd.f32 %v7771, %v9435
    %9437 = vmatprep.mubr.bf16.mxu0 %v7295
    %9438 = vmatmul.mubr.bf16.gmra.mrb[0].mxu0 %v7294
    %v9439 = vpop.f32.mrb[0].mxu0
    %v9440 = vadd.f32 %v7767, %v9439
    %v9441 = vpop.f32.mrb[0].mxu0
    %v9442 = vadd.f32 %v7771, %v9441
    %v9443 = vpop.f32.mrb[0].mxu0
    %v9444 = vadd.f32 %v7767, %v9443
    %v9445 = vpop.f32.mrb[0].mxu0
    %v9446 = vadd.f32 %v7771, %v9445
    %9447 = vmatprep.mubr.bf16.mxu0 %v7307
    %9448 = vmatmul.mubr.bf16.gmra.mrb[0].mxu0 %v7306
    %v9449 = vpop.f32.mrb[0].mxu0
    %v9450 = vadd.f32 %v7767, %v9449
    %v9451 = vpop.f32.mrb[0].mxu0
    %v9452 = vadd.f32 %v7771, %v9451
    %v9453 = vpop.f32.mrb[0].mxu0
    %v9454 = vadd.f32 %v7767, %v9453
    %v9455 = vpop.f32.mrb[0].mxu0
    %v9456 = vadd.f32 %v7771, %v9455
    %9457 = vmatprep.mubr.bf16.mxu0 %v7319
    %9458 = vmatmul.mubr.bf16.gmra.mrb[0].mxu0 %v7318
    %v9459 = vpop.f32.mrb[0].mxu0
    %v9460 = vadd.f32 %v7767, %v9459
    %v9461 = vpop.f32.mrb[0].mxu0
    %v9462 = vadd.f32 %v7771, %v9461
    %v9463 = vpop.f32.mrb[0].mxu0
    %v9464 = vadd.f32 %v7767, %v9463
    %v9465 = vpop.f32.mrb[0].mxu0
    %v9466 = vadd.f32 %v7771, %v9465
    %9467 = vmatprep.mubr.bf16.mxu0 %v7331
    %9468 = vmatmul.mubr.bf16.gmra.mrb[0].mxu0 %v7330
    %v9469 = vpop.f32.mrb[0].mxu0
    %v9470 = vadd.f32 %v7767, %v9469
    %v9471 = vpop.f32.mrb[0].mxu0
    %v9472 = vadd.f32 %v7771, %v9471
    %v9473 = vpop.f32.mrb[0].mxu0
    %v9474 = vadd.f32 %v7767, %v9473
    %v9475 = vpop.f32.mrb[0].mxu0
    %v9476 = vadd.f32 %v7771, %v9475
    %9477 = vmatprep.mubr.bf16.mxu0 %v7343
    %9478 = vmatmul.mubr.bf16.gmra.mrb[0].mxu0 %v7342
    %v9479 = vpop.f32.mrb[0].mxu0
    %v9480 = vadd.f32 %v7767, %v9479
    %v9481 = vpop.f32.mrb[0].mxu0
    %v9482 = vadd.f32 %v7771, %v9481
    %v9483 = vpop.f32.mrb[0].mxu0
    %v9484 = vadd.f32 %v7767, %v9483
    %v9485 = vpop.f32.mrb[0].mxu0
    %v9486 = vadd.f32 %v7771, %v9485
    %9487 = vmatprep.mubr.bf16.mxu0 %v7355
    %9488 = vmatmul.mubr.bf16.gmra.mrb[0].mxu0 %v7354
    %v9489 = vpop.f32.mrb[0].mxu0
    %v9490 = vadd.f32 %v7767, %v9489
    %v9491 = vpop.f32.mrb[0].mxu0
    %v9492 = vadd.f32 %v7771, %v9491
    %v9493 = vpop.f32.mrb[0].mxu0
    %v9494 = vadd.f32 %v7767, %v9493
    %v9495 = vpop.f32.mrb[0].mxu0
    %v9496 = vadd.f32 %v7771, %v9495
    %9497 = vmatprep.mubr.bf16.mxu0 %v7367
    %9498 = vmatmul.mubr.bf16.gmra.mrb[0].mxu0 %v7366
    %v9499 = vpop.f32.mrb[0].mxu0
    %v9500 = vadd.f32 %v7767, %v9499
    %v9501 = vpop.f32.mrb[0].mxu0
    %v9502 = vadd.f32 %v7771, %v9501
    %v9503 = vpop.f32.mrb[0].mxu0
    %v9504 = vadd.f32 %v7767, %v9503
    %v9505 = vpop.f32.mrb[0].mxu0
    %v9506 = vadd.f32 %v7771, %v9505
    %9507 = vdwg.mxu0
    %9508 = vmatprep.subr.bf16.mxu0 %v8788
    %9509 = vmatpush1.bf16.msra.mxu0 %v8787
    %9510 = vmatprep.subr.bf16.mxu0 %v8791
    %9511 = vmatpush1.bf16.msra.mxu0 %v8790
    %9512 = vmatprep.subr.bf16.mxu0 %v8794
    %9513 = vmatpush1.bf16.msra.mxu0 %v8793
    %9514 = vmatprep.subr.bf16.mxu0 %v8797
    %9515 = vmatpush1.bf16.msra.mxu0 %v8796
    %9516 = vmatprep.subr.bf16.mxu0 %v8800
    %9517 = vmatpush1.bf16.msra.mxu0 %v8799
    %9518 = vmatprep.subr.bf16.mxu0 %v8803
    %9519 = vmatpush1.bf16.msra.mxu0 %v8802
    %9520 = vmatprep.subr.bf16.mxu0 %v8806
    %9521 = vmatpush1.bf16.msra.mxu0 %v8805
    %9522 = vmatprep.subr.bf16.mxu0 %v8809
    %9523 = vmatpush1.bf16.msra.mxu0 %v8808
    %9524 = vmatprep.subr.bf16.mxu0 %v8812
    %9525 = vmatpush1.bf16.msra.mxu0 %v8811
    %9526 = vmatprep.subr.bf16.mxu0 %v8815
    %9527 = vmatpush1.bf16.msra.mxu0 %v8814
    %9528 = vmatprep.subr.bf16.mxu0 %v8818
    %9529 = vmatpush1.bf16.msra.mxu0 %v8817
    %9530 = vmatprep.subr.bf16.mxu0 %v8821
    %9531 = vmatpush1.bf16.msra.mxu0 %v8820
    %9532 = vmatprep.subr.bf16.mxu0 %v8824
    %9533 = vmatpush1.bf16.msra.mxu0 %v8823
    %9534 = vmatprep.subr.bf16.mxu0 %v8827
    %9535 = vmatpush1.bf16.msra.mxu0 %v8826
    %9536 = vmatprep.subr.bf16.mxu0 %v8830
    %9537 = vmatpush1.bf16.msra.mxu0 %v8829
    %9538 = vmatprep.subr.bf16.mxu0 %v8833
    %9539 = vmatpush1.bf16.msra.mxu0 %v8832
    %9540 = vmatprep.mubr.bf16.mxu0 %v7189
    %9541 = vmatmul.mubr.bf16.gmra.mrb[0].mxu0 %v7188
    %v9542 = vpop.f32.mrb[0].mxu0
    %v9543 = vadd.f32 %v9350, %v9542
    %v9544 = vpop.f32.mrb[0].mxu0
    %v9545 = vadd.f32 %v9352, %v9544
    %v9546 = vpop.f32.mrb[0].mxu0
    %v9547 = vadd.f32 %v9354, %v9546
    %v9548 = vpop.f32.mrb[0].mxu0
    %v9549 = vadd.f32 %v9356, %v9548
    %9550 = vmatprep.mubr.bf16.mxu0 %v7201
    %9551 = vmatmul.mubr.bf16.gmra.mrb[0].mxu0 %v7200
    %v9552 = vpop.f32.mrb[0].mxu0
    %v9553 = vadd.f32 %v9360, %v9552
    %v9554 = vpop.f32.mrb[0].mxu0
    %v9555 = vadd.f32 %v9362, %v9554
    %v9556 = vpop.f32.mrb[0].mxu0
    %v9557 = vadd.f32 %v9364, %v9556
    %v9558 = vpop.f32.mrb[0].mxu0
    %v9559 = vadd.f32 %v9366, %v9558
    %9560 = vmatprep.mubr.bf16.mxu0 %v7213
    %9561 = vmatmul.mubr.bf16.gmra.mrb[0].mxu0 %v7212
    %v9562 = vpop.f32.mrb[0].mxu0
    %v9563 = vadd.f32 %v9370, %v9562
    %v9564 = vpop.f32.mrb[0].mxu0
    %v9565 = vadd.f32 %v9372, %v9564
    %v9566 = vpop.f32.mrb[0].mxu0
    %v9567 = vadd.f32 %v9374, %v9566
    %v9568 = vpop.f32.mrb[0].mxu0
    %v9569 = vadd.f32 %v9376, %v9568
    %9570 = vmatprep.mubr.bf16.mxu0 %v7225
    %9571 = vmatmul.mubr.bf16.gmra.mrb[0].mxu0 %v7224
    %v9572 = vpop.f32.mrb[0].mxu0
    %v9573 = vadd.f32 %v9380, %v9572
    %v9574 = vpop.f32.mrb[0].mxu0
    %v9575 = vadd.f32 %v9382, %v9574
    %v9576 = vpop.f32.mrb[0].mxu0
    %v9577 = vadd.f32 %v9384, %v9576
    %v9578 = vpop.f32.mrb[0].mxu0
    %v9579 = vadd.f32 %v9386, %v9578
    %9580 = vmatprep.mubr.bf16.mxu0 %v7237
    %9581 = vmatmul.mubr.bf16.gmra.mrb[0].mxu0 %v7236
    %v9582 = vpop.f32.mrb[0].mxu0
    %v9583 = vadd.f32 %v9390, %v9582
    %v9584 = vpop.f32.mrb[0].mxu0
    %v9585 = vadd.f32 %v9392, %v9584
    %v9586 = vpop.f32.mrb[0].mxu0
    %v9587 = vadd.f32 %v9394, %v9586
    %v9588 = vpop.f32.mrb[0].mxu0
    %v9589 = vadd.f32 %v9396, %v9588
    %9590 = vmatprep.mubr.bf16.mxu0 %v7249
    %9591 = vmatmul.mubr.bf16.gmra.mrb[0].mxu0 %v7248
    %v9592 = vpop.f32.mrb[0].mxu0
    %v9593 = vadd.f32 %v9400, %v9592
    %v9594 = vpop.f32.mrb[0].mxu0
    %v9595 = vadd.f32 %v9402, %v9594
    %v9596 = vpop.f32.mrb[0].mxu0
    %v9597 = vadd.f32 %v9404, %v9596
    %v9598 = vpop.f32.mrb[0].mxu0
    %v9599 = vadd.f32 %v9406, %v9598
    %9600 = vmatprep.mubr.bf16.mxu0 %v7261
    %9601 = vmatmul.mubr.bf16.gmra.mrb[0].mxu0 %v7260
    %v9602 = vpop.f32.mrb[0].mxu0
    %v9603 = vadd.f32 %v9410, %v9602
    %v9604 = vpop.f32.mrb[0].mxu0
    %v9605 = vadd.f32 %v9412, %v9604
    %v9606 = vpop.f32.mrb[0].mxu0
    %v9607 = vadd.f32 %v9414, %v9606
    %v9608 = vpop.f32.mrb[0].mxu0
    %v9609 = vadd.f32 %v9416, %v9608
    %9610 = vmatprep.mubr.bf16.mxu0 %v7273
    %9611 = vmatmul.mubr.bf16.gmra.mrb[0].mxu0 %v7272
    %v9612 = vpop.f32.mrb[0].mxu0
    %v9613 = vadd.f32 %v9420, %v9612
    %v9614 = vpop.f32.mrb[0].mxu0
    %v9615 = vadd.f32 %v9422, %v9614
    %v9616 = vpop.f32.mrb[0].mxu0
    %v9617 = vadd.f32 %v9424, %v9616
    %v9618 = vpop.f32.mrb[0].mxu0
    %v9619 = vadd.f32 %v9426, %v9618
    %9620 = vmatprep.mubr.bf16.mxu0 %v7285
    %9621 = vmatmul.mubr.bf16.gmra.mrb[0].mxu0 %v7284
    %v9622 = vpop.f32.mrb[0].mxu0
    %v9623 = vadd.f32 %v9430, %v9622
    %v9624 = vpop.f32.mrb[0].mxu0
    %v9625 = vadd.f32 %v9432, %v9624
    %v9626 = vpop.f32.mrb[0].mxu0
    %v9627 = vadd.f32 %v9434, %v9626
    %v9628 = vpop.f32.mrb[0].mxu0
    %v9629 = vadd.f32 %v9436, %v9628
    %9630 = vmatprep.mubr.bf16.mxu0 %v7297
    %9631 = vmatmul.mubr.bf16.gmra.mrb[0].mxu0 %v7296
    %v9632 = vpop.f32.mrb[0].mxu0
    %v9633 = vadd.f32 %v9440, %v9632
    %v9634 = vpop.f32.mrb[0].mxu0
    %v9635 = vadd.f32 %v9442, %v9634
    %v9636 = vpop.f32.mrb[0].mxu0
    %v9637 = vadd.f32 %v9444, %v9636
    %v9638 = vpop.f32.mrb[0].mxu0
    %v9639 = vadd.f32 %v9446, %v9638
    %9640 = vmatprep.mubr.bf16.mxu0 %v7309
    %9641 = vmatmul.mubr.bf16.gmra.mrb[0].mxu0 %v7308
    %v9642 = vpop.f32.mrb[0].mxu0
    %v9643 = vadd.f32 %v9450, %v9642
    %v9644 = vpop.f32.mrb[0].mxu0
    %v9645 = vadd.f32 %v9452, %v9644
    %v9646 = vpop.f32.mrb[0].mxu0
    %v9647 = vadd.f32 %v9454, %v9646
    %v9648 = vpop.f32.mrb[0].mxu0
    %v9649 = vadd.f32 %v9456, %v9648
    %9650 = vmatprep.mubr.bf16.mxu0 %v7321
    %9651 = vmatmul.mubr.bf16.gmra.mrb[0].mxu0 %v7320
    %v9652 = vpop.f32.mrb[0].mxu0
    %v9653 = vadd.f32 %v9460, %v9652
    %v9654 = vpop.f32.mrb[0].mxu0
    %v9655 = vadd.f32 %v9462, %v9654
    %v9656 = vpop.f32.mrb[0].mxu0
    %v9657 = vadd.f32 %v9464, %v9656
    %v9658 = vpop.f32.mrb[0].mxu0
    %v9659 = vadd.f32 %v9466, %v9658
    %9660 = vmatprep.mubr.bf16.mxu0 %v7333
    %9661 = vmatmul.mubr.bf16.gmra.mrb[0].mxu0 %v7332
    %v9662 = vpop.f32.mrb[0].mxu0
    %v9663 = vadd.f32 %v9470, %v9662
    %v9664 = vpop.f32.mrb[0].mxu0
    %v9665 = vadd.f32 %v9472, %v9664
    %v9666 = vpop.f32.mrb[0].mxu0
    %v9667 = vadd.f32 %v9474, %v9666
    %v9668 = vpop.f32.mrb[0].mxu0
    %v9669 = vadd.f32 %v9476, %v9668
    %9670 = vmatprep.mubr.bf16.mxu0 %v7345
    %9671 = vmatmul.mubr.bf16.gmra.mrb[0].mxu0 %v7344
    %v9672 = vpop.f32.mrb[0].mxu0
    %v9673 = vadd.f32 %v9480, %v9672
    %v9674 = vpop.f32.mrb[0].mxu0
    %v9675 = vadd.f32 %v9482, %v9674
    %v9676 = vpop.f32.mrb[0].mxu0
    %v9677 = vadd.f32 %v9484, %v9676
    %v9678 = vpop.f32.mrb[0].mxu0
    %v9679 = vadd.f32 %v9486, %v9678
    %9680 = vmatprep.mubr.bf16.mxu0 %v7357
    %9681 = vmatmul.mubr.bf16.gmra.mrb[0].mxu0 %v7356
    %v9682 = vpop.f32.mrb[0].mxu0
    %v9683 = vadd.f32 %v9490, %v9682
    %v9684 = vpop.f32.mrb[0].mxu0
    %v9685 = vadd.f32 %v9492, %v9684
    %v9686 = vpop.f32.mrb[0].mxu0
    %v9687 = vadd.f32 %v9494, %v9686
    %v9688 = vpop.f32.mrb[0].mxu0
    %v9689 = vadd.f32 %v9496, %v9688
    %9690 = vmatprep.mubr.bf16.mxu0 %v7369
    %9691 = vmatmul.mubr.bf16.gmra.mrb[0].mxu0 %v7368
    %v9692 = vpop.f32.mrb[0].mxu0
    %v9693 = vadd.f32 %v9500, %v9692
    %v9694 = vpop.f32.mrb[0].mxu0
    %v9695 = vadd.f32 %v9502, %v9694
    %v9696 = vpop.f32.mrb[0].mxu0
    %v9697 = vadd.f32 %v9504, %v9696
    %v9698 = vpop.f32.mrb[0].mxu0
    %v9699 = vadd.f32 %v9506, %v9698
    %9700 = vdwg.mxu0
    %9701 = vmatprep.subr.bf16.mxu0 %v8836
    %9702 = vmatpush1.bf16.msra.mxu0 %v8835
    %9703 = vmatprep.subr.bf16.mxu0 %v8839
    %9704 = vmatpush1.bf16.msra.mxu0 %v8838
    %9705 = vmatprep.subr.bf16.mxu0 %v8842
    %9706 = vmatpush1.bf16.msra.mxu0 %v8841
    %9707 = vmatprep.subr.bf16.mxu0 %v8845
    %9708 = vmatpush1.bf16.msra.mxu0 %v8844
    %9709 = vmatprep.subr.bf16.mxu0 %v8848
    %9710 = vmatpush1.bf16.msra.mxu0 %v8847
    %9711 = vmatprep.subr.bf16.mxu0 %v8851
    %9712 = vmatpush1.bf16.msra.mxu0 %v8850
    %9713 = vmatprep.subr.bf16.mxu0 %v8854
    %9714 = vmatpush1.bf16.msra.mxu0 %v8853
    %9715 = vmatprep.subr.bf16.mxu0 %v8857
    %9716 = vmatpush1.bf16.msra.mxu0 %v8856
    %9717 = vmatprep.subr.bf16.mxu0 %v8860
    %9718 = vmatpush1.bf16.msra.mxu0 %v8859
    %9719 = vmatprep.subr.bf16.mxu0 %v8863
    %9720 = vmatpush1.bf16.msra.mxu0 %v8862
    %9721 = vmatprep.subr.bf16.mxu0 %v8866
    %9722 = vmatpush1.bf16.msra.mxu0 %v8865
    %9723 = vmatprep.subr.bf16.mxu0 %v8869
    %9724 = vmatpush1.bf16.msra.mxu0 %v8868
    %9725 = vmatprep.subr.bf16.mxu0 %v8872
    %9726 = vmatpush1.bf16.msra.mxu0 %v8871
    %9727 = vmatprep.subr.bf16.mxu0 %v8875
    %9728 = vmatpush1.bf16.msra.mxu0 %v8874
    %9729 = vmatprep.subr.bf16.mxu0 %v8878
    %9730 = vmatpush1.bf16.msra.mxu0 %v8877
    %9731 = vmatprep.subr.bf16.mxu0 %v8881
    %9732 = vmatpush1.bf16.msra.mxu0 %v8880
    %9733 = vmatprep.mubr.bf16.mxu0 %v7191
    %9734 = vmatmul.mubr.bf16.gmra.mrb[0].mxu0 %v7190
    %v9735 = vpop.f32.mrb[0].mxu0
    %v9736 = vadd.f32 %v9543, %v9735
    %v9737 = vpop.f32.mrb[0].mxu0
    %v9738 = vadd.f32 %v9545, %v9737
    %v9739 = vpop.f32.mrb[0].mxu0
    %v9740 = vadd.f32 %v9547, %v9739
    %v9741 = vpop.f32.mrb[0].mxu0
    %v9742 = vadd.f32 %v9549, %v9741
    %9743 = vmatprep.mubr.bf16.mxu0 %v7203
    %9744 = vmatmul.mubr.bf16.gmra.mrb[0].mxu0 %v7202
    %v9745 = vpop.f32.mrb[0].mxu0
    %v9746 = vadd.f32 %v9553, %v9745
    %v9747 = vpop.f32.mrb[0].mxu0
    %v9748 = vadd.f32 %v9555, %v9747
    %v9749 = vpop.f32.mrb[0].mxu0
    %v9750 = vadd.f32 %v9557, %v9749
    %v9751 = vpop.f32.mrb[0].mxu0
    %v9752 = vadd.f32 %v9559, %v9751
    %9753 = vmatprep.mubr.bf16.mxu0 %v7215
    %9754 = vmatmul.mubr.bf16.gmra.mrb[0].mxu0 %v7214
    %v9755 = vpop.f32.mrb[0].mxu0
    %v9756 = vadd.f32 %v9563, %v9755
    %v9757 = vpop.f32.mrb[0].mxu0
    %v9758 = vadd.f32 %v9565, %v9757
    %v9759 = vpop.f32.mrb[0].mxu0
    %v9760 = vadd.f32 %v9567, %v9759
    %v9761 = vpop.f32.mrb[0].mxu0
    %v9762 = vadd.f32 %v9569, %v9761
    %9763 = vmatprep.mubr.bf16.mxu0 %v7227
    %9764 = vmatmul.mubr.bf16.gmra.mrb[0].mxu0 %v7226
    %v9765 = vpop.f32.mrb[0].mxu0
    %v9766 = vadd.f32 %v9573, %v9765
    %v9767 = vpop.f32.mrb[0].mxu0
    %v9768 = vadd.f32 %v9575, %v9767
    %v9769 = vpop.f32.mrb[0].mxu0
    %v9770 = vadd.f32 %v9577, %v9769
    %v9771 = vpop.f32.mrb[0].mxu0
    %v9772 = vadd.f32 %v9579, %v9771
    %9773 = vmatprep.mubr.bf16.mxu0 %v7239
    %9774 = vmatmul.mubr.bf16.gmra.mrb[0].mxu0 %v7238
    %v9775 = vpop.f32.mrb[0].mxu0
    %v9776 = vadd.f32 %v9583, %v9775
    %v9777 = vpop.f32.mrb[0].mxu0
    %v9778 = vadd.f32 %v9585, %v9777
    %v9779 = vpop.f32.mrb[0].mxu0
    %v9780 = vadd.f32 %v9587, %v9779
    %v9781 = vpop.f32.mrb[0].mxu0
    %v9782 = vadd.f32 %v9589, %v9781
    %9783 = vmatprep.mubr.bf16.mxu0 %v7251
    %9784 = vmatmul.mubr.bf16.gmra.mrb[0].mxu0 %v7250
    %v9785 = vpop.f32.mrb[0].mxu0
    %v9786 = vadd.f32 %v9593, %v9785
    %v9787 = vpop.f32.mrb[0].mxu0
    %v9788 = vadd.f32 %v9595, %v9787
    %v9789 = vpop.f32.mrb[0].mxu0
    %v9790 = vadd.f32 %v9597, %v9789
    %v9791 = vpop.f32.mrb[0].mxu0
    %v9792 = vadd.f32 %v9599, %v9791
    %9793 = vmatprep.mubr.bf16.mxu0 %v7263
    %9794 = vmatmul.mubr.bf16.gmra.mrb[0].mxu0 %v7262
    %v9795 = vpop.f32.mrb[0].mxu0
    %v9796 = vadd.f32 %v9603, %v9795
    %v9797 = vpop.f32.mrb[0].mxu0
    %v9798 = vadd.f32 %v9605, %v9797
    %v9799 = vpop.f32.mrb[0].mxu0
    %v9800 = vadd.f32 %v9607, %v9799
    %v9801 = vpop.f32.mrb[0].mxu0
    %v9802 = vadd.f32 %v9609, %v9801
    %9803 = vmatprep.mubr.bf16.mxu0 %v7275
    %9804 = vmatmul.mubr.bf16.gmra.mrb[0].mxu0 %v7274
    %v9805 = vpop.f32.mrb[0].mxu0
    %v9806 = vadd.f32 %v9613, %v9805
    %v9807 = vpop.f32.mrb[0].mxu0
    %v9808 = vadd.f32 %v9615, %v9807
    %v9809 = vpop.f32.mrb[0].mxu0
    %v9810 = vadd.f32 %v9617, %v9809
    %v9811 = vpop.f32.mrb[0].mxu0
    %v9812 = vadd.f32 %v9619, %v9811
    %9813 = vmatprep.mubr.bf16.mxu0 %v7287
    %9814 = vmatmul.mubr.bf16.gmra.mrb[0].mxu0 %v7286
    %v9815 = vpop.f32.mrb[0].mxu0
    %v9816 = vadd.f32 %v9623, %v9815
    %v9817 = vpop.f32.mrb[0].mxu0
    %v9818 = vadd.f32 %v9625, %v9817
    %v9819 = vpop.f32.mrb[0].mxu0
    %v9820 = vadd.f32 %v9627, %v9819
    %v9821 = vpop.f32.mrb[0].mxu0
    %v9822 = vadd.f32 %v9629, %v9821
    %9823 = vmatprep.mubr.bf16.mxu0 %v7299
    %9824 = vmatmul.mubr.bf16.gmra.mrb[0].mxu0 %v7298
    %v9825 = vpop.f32.mrb[0].mxu0
    %v9826 = vadd.f32 %v9633, %v9825
    %v9827 = vpop.f32.mrb[0].mxu0
    %v9828 = vadd.f32 %v9635, %v9827
    %v9829 = vpop.f32.mrb[0].mxu0
    %v9830 = vadd.f32 %v9637, %v9829
    %v9831 = vpop.f32.mrb[0].mxu0
    %v9832 = vadd.f32 %v9639, %v9831
    %9833 = vmatprep.mubr.bf16.mxu0 %v7311
    %9834 = vmatmul.mubr.bf16.gmra.mrb[0].mxu0 %v7310
    %v9835 = vpop.f32.mrb[0].mxu0
    %v9836 = vadd.f32 %v9643, %v9835
    %v9837 = vpop.f32.mrb[0].mxu0
    %v9838 = vadd.f32 %v9645, %v9837
    %v9839 = vpop.f32.mrb[0].mxu0
    %v9840 = vadd.f32 %v9647, %v9839
    %v9841 = vpop.f32.mrb[0].mxu0
    %v9842 = vadd.f32 %v9649, %v9841
    %9843 = vmatprep.mubr.bf16.mxu0 %v7323
    %9844 = vmatmul.mubr.bf16.gmra.mrb[0].mxu0 %v7322
    %v9845 = vpop.f32.mrb[0].mxu0
    %v9846 = vadd.f32 %v9653, %v9845
    %v9847 = vpop.f32.mrb[0].mxu0
    %v9848 = vadd.f32 %v9655, %v9847
    %v9849 = vpop.f32.mrb[0].mxu0
    %v9850 = vadd.f32 %v9657, %v9849
    %v9851 = vpop.f32.mrb[0].mxu0
    %v9852 = vadd.f32 %v9659, %v9851
    %9853 = vmatprep.mubr.bf16.mxu0 %v7335
    %9854 = vmatmul.mubr.bf16.gmra.mrb[0].mxu0 %v7334
    %v9855 = vpop.f32.mrb[0].mxu0
    %v9856 = vadd.f32 %v9663, %v9855
    %v9857 = vpop.f32.mrb[0].mxu0
    %v9858 = vadd.f32 %v9665, %v9857
    %v9859 = vpop.f32.mrb[0].mxu0
    %v9860 = vadd.f32 %v9667, %v9859
    %v9861 = vpop.f32.mrb[0].mxu0
    %v9862 = vadd.f32 %v9669, %v9861
    %9863 = vmatprep.mubr.bf16.mxu0 %v7347
    %9864 = vmatmul.mubr.bf16.gmra.mrb[0].mxu0 %v7346
    %v9865 = vpop.f32.mrb[0].mxu0
    %v9866 = vadd.f32 %v9673, %v9865
    %v9867 = vpop.f32.mrb[0].mxu0
    %v9868 = vadd.f32 %v9675, %v9867
    %v9869 = vpop.f32.mrb[0].mxu0
    %v9870 = vadd.f32 %v9677, %v9869
    %v9871 = vpop.f32.mrb[0].mxu0
    %v9872 = vadd.f32 %v9679, %v9871
    %9873 = vmatprep.mubr.bf16.mxu0 %v7359
    %9874 = vmatmul.mubr.bf16.gmra.mrb[0].mxu0 %v7358
    %v9875 = vpop.f32.mrb[0].mxu0
    %v9876 = vadd.f32 %v9683, %v9875
    %v9877 = vpop.f32.mrb[0].mxu0
    %v9878 = vadd.f32 %v9685, %v9877
    %v9879 = vpop.f32.mrb[0].mxu0
    %v9880 = vadd.f32 %v9687, %v9879
    %v9881 = vpop.f32.mrb[0].mxu0
    %v9882 = vadd.f32 %v9689, %v9881
    %9883 = vmatprep.mubr.bf16.mxu0 %v7371
    %9884 = vmatmul.mubr.bf16.gmra.mrb[0].mxu0 %v7370
    %v9885 = vpop.f32.mrb[0].mxu0
    %v9886 = vadd.f32 %v9693, %v9885
    %v9887 = vpop.f32.mrb[0].mxu0
    %v9888 = vadd.f32 %v9695, %v9887
    %v9889 = vpop.f32.mrb[0].mxu0
    %v9890 = vadd.f32 %v9697, %v9889
    %v9891 = vpop.f32.mrb[0].mxu0
    %v9892 = vadd.f32 %v9699, %v9891
    %9893 = vdwg.mxu0
    %9894 = vmatprep.subr.bf16.mxu0 %v8884
    %9895 = vmatpush1.bf16.msra.mxu0 %v8883
    %9896 = vmatprep.subr.bf16.mxu0 %v8887
    %9897 = vmatpush1.bf16.msra.mxu0 %v8886
    %9898 = vmatprep.subr.bf16.mxu0 %v8890
    %9899 = vmatpush1.bf16.msra.mxu0 %v8889
    %9900 = vmatprep.subr.bf16.mxu0 %v8893
    %9901 = vmatpush1.bf16.msra.mxu0 %v8892
    %9902 = vmatprep.subr.bf16.mxu0 %v8896
    %9903 = vmatpush1.bf16.msra.mxu0 %v8895
    %9904 = vmatprep.subr.bf16.mxu0 %v8899
    %9905 = vmatpush1.bf16.msra.mxu0 %v8898
    %9906 = vmatprep.subr.bf16.mxu0 %v8902
    %9907 = vmatpush1.bf16.msra.mxu0 %v8901
    %9908 = vmatprep.subr.bf16.mxu0 %v8905
    %9909 = vmatpush1.bf16.msra.mxu0 %v8904
    %9910 = vmatprep.subr.bf16.mxu0 %v8908
    %9911 = vmatpush1.bf16.msra.mxu0 %v8907
    %9912 = vmatprep.subr.bf16.mxu0 %v8911
    %9913 = vmatpush1.bf16.msra.mxu0 %v8910
    %9914 = vmatprep.subr.bf16.mxu0 %v8914
    %9915 = vmatpush1.bf16.msra.mxu0 %v8913
    %9916 = vmatprep.subr.bf16.mxu0 %v8917
    %9917 = vmatpush1.bf16.msra.mxu0 %v8916
    %9918 = vmatprep.subr.bf16.mxu0 %v8920
    %9919 = vmatpush1.bf16.msra.mxu0 %v8919
    %9920 = vmatprep.subr.bf16.mxu0 %v8923
    %9921 = vmatpush1.bf16.msra.mxu0 %v8922
    %9922 = vmatprep.subr.bf16.mxu0 %v8926
    %9923 = vmatpush1.bf16.msra.mxu0 %v8925
    %9924 = vmatprep.subr.bf16.mxu0 %v8929
    %9925 = vmatpush1.bf16.msra.mxu0 %v8928
    %9926 = vmatprep.mubr.bf16.mxu0 %v7193
    %9927 = vmatmul.mubr.bf16.gmra.mrb[0].mxu0 %v7192
    %v9928 = vpop.f32.mrb[0].mxu0
    %v9929 = vadd.f32 %v9736, %v9928
    %v9930 = vpop.f32.mrb[0].mxu0
    %v9931 = vadd.f32 %v9738, %v9930
    %v9932 = vpop.f32.mrb[0].mxu0
    %v9933 = vadd.f32 %v9740, %v9932
    %v9934 = vpop.f32.mrb[0].mxu0
    %v9935 = vadd.f32 %v9742, %v9934
    %9936 = vmatprep.mubr.bf16.mxu0 %v7205
    %9937 = vmatmul.mubr.bf16.gmra.mrb[0].mxu0 %v7204
    %v9938 = vpop.f32.mrb[0].mxu0
    %v9939 = vadd.f32 %v9746, %v9938
    %v9940 = vpop.f32.mrb[0].mxu0
    %v9941 = vadd.f32 %v9748, %v9940
    %v9942 = vpop.f32.mrb[0].mxu0
    %v9943 = vadd.f32 %v9750, %v9942
    %v9944 = vpop.f32.mrb[0].mxu0
    %v9945 = vadd.f32 %v9752, %v9944
    %9946 = vmatprep.mubr.bf16.mxu0 %v7217
    %9947 = vmatmul.mubr.bf16.gmra.mrb[0].mxu0 %v7216
    %v9948 = vpop.f32.mrb[0].mxu0
    %v9949 = vadd.f32 %v9756, %v9948
    %v9950 = vpop.f32.mrb[0].mxu0
    %v9951 = vadd.f32 %v9758, %v9950
    %v9952 = vpop.f32.mrb[0].mxu0
    %v9953 = vadd.f32 %v9760, %v9952
    %v9954 = vpop.f32.mrb[0].mxu0
    %v9955 = vadd.f32 %v9762, %v9954
    %9956 = vmatprep.mubr.bf16.mxu0 %v7229
    %9957 = vmatmul.mubr.bf16.gmra.mrb[0].mxu0 %v7228
    %v9958 = vpop.f32.mrb[0].mxu0
    %v9959 = vadd.f32 %v9766, %v9958
    %v9960 = vpop.f32.mrb[0].mxu0
    %v9961 = vadd.f32 %v9768, %v9960
    %v9962 = vpop.f32.mrb[0].mxu0
    %v9963 = vadd.f32 %v9770, %v9962
    %v9964 = vpop.f32.mrb[0].mxu0
    %v9965 = vadd.f32 %v9772, %v9964
    %9966 = vmatprep.mubr.bf16.mxu0 %v7241
    %9967 = vmatmul.mubr.bf16.gmra.mrb[0].mxu0 %v7240
    %v9968 = vpop.f32.mrb[0].mxu0
    %v9969 = vadd.f32 %v9776, %v9968
    %v9970 = vpop.f32.mrb[0].mxu0
    %v9971 = vadd.f32 %v9778, %v9970
    %v9972 = vpop.f32.mrb[0].mxu0
    %v9973 = vadd.f32 %v9780, %v9972
    %v9974 = vpop.f32.mrb[0].mxu0
    %v9975 = vadd.f32 %v9782, %v9974
    %9976 = vmatprep.mubr.bf16.mxu0 %v7253
    %9977 = vmatmul.mubr.bf16.gmra.mrb[0].mxu0 %v7252
    %v9978 = vpop.f32.mrb[0].mxu0
    %v9979 = vadd.f32 %v9786, %v9978
    %v9980 = vpop.f32.mrb[0].mxu0
    %v9981 = vadd.f32 %v9788, %v9980
    %v9982 = vpop.f32.mrb[0].mxu0
    %v9983 = vadd.f32 %v9790, %v9982
    %v9984 = vpop.f32.mrb[0].mxu0
    %v9985 = vadd.f32 %v9792, %v9984
    %9986 = vmatprep.mubr.bf16.mxu0 %v7265
    %9987 = vmatmul.mubr.bf16.gmra.mrb[0].mxu0 %v7264
    %v9988 = vpop.f32.mrb[0].mxu0
    %v9989 = vadd.f32 %v9796, %v9988
    %v9990 = vpop.f32.mrb[0].mxu0
    %v9991 = vadd.f32 %v9798, %v9990
    %v9992 = vpop.f32.mrb[0].mxu0
    %v9993 = vadd.f32 %v9800, %v9992
    %v9994 = vpop.f32.mrb[0].mxu0
    %v9995 = vadd.f32 %v9802, %v9994
    %9996 = vmatprep.mubr.bf16.mxu0 %v7277
    %9997 = vmatmul.mubr.bf16.gmra.mrb[0].mxu0 %v7276
    %v9998 = vpop.f32.mrb[0].mxu0
    %v9999 = vadd.f32 %v9806, %v9998
    %v10000 = vpop.f32.mrb[0].mxu0
    %v10001 = vadd.f32 %v9808, %v10000
    %v10002 = vpop.f32.mrb[0].mxu0
    %v10003 = vadd.f32 %v9810, %v10002
    %v10004 = vpop.f32.mrb[0].mxu0
    %v10005 = vadd.f32 %v9812, %v10004
    %10006 = vmatprep.mubr.bf16.mxu0 %v7289
    %10007 = vmatmul.mubr.bf16.gmra.mrb[0].mxu0 %v7288
    %v10008 = vpop.f32.mrb[0].mxu0
    %v10009 = vadd.f32 %v9816, %v10008
    %v10010 = vpop.f32.mrb[0].mxu0
    %v10011 = vadd.f32 %v9818, %v10010
    %v10012 = vpop.f32.mrb[0].mxu0
    %v10013 = vadd.f32 %v9820, %v10012
    %v10014 = vpop.f32.mrb[0].mxu0
    %v10015 = vadd.f32 %v9822, %v10014
    %10016 = vmatprep.mubr.bf16.mxu0 %v7301
    %10017 = vmatmul.mubr.bf16.gmra.mrb[0].mxu0 %v7300
    %v10018 = vpop.f32.mrb[0].mxu0
    %v10019 = vadd.f32 %v9826, %v10018
    %v10020 = vpop.f32.mrb[0].mxu0
    %v10021 = vadd.f32 %v9828, %v10020
    %v10022 = vpop.f32.mrb[0].mxu0
    %v10023 = vadd.f32 %v9830, %v10022
    %v10024 = vpop.f32.mrb[0].mxu0
    %v10025 = vadd.f32 %v9832, %v10024
    %10026 = vmatprep.mubr.bf16.mxu0 %v7313
    %10027 = vmatmul.mubr.bf16.gmra.mrb[0].mxu0 %v7312
    %v10028 = vpop.f32.mrb[0].mxu0
    %v10029 = vadd.f32 %v9836, %v10028
    %v10030 = vpop.f32.mrb[0].mxu0
    %v10031 = vadd.f32 %v9838, %v10030
    %v10032 = vpop.f32.mrb[0].mxu0
    %v10033 = vadd.f32 %v9840, %v10032
    %v10034 = vpop.f32.mrb[0].mxu0
    %v10035 = vadd.f32 %v9842, %v10034
    %10036 = vmatprep.mubr.bf16.mxu0 %v7325
    %10037 = vmatmul.mubr.bf16.gmra.mrb[0].mxu0 %v7324
    %v10038 = vpop.f32.mrb[0].mxu0
    %v10039 = vadd.f32 %v9846, %v10038
    %v10040 = vpop.f32.mrb[0].mxu0
    %v10041 = vadd.f32 %v9848, %v10040
    %v10042 = vpop.f32.mrb[0].mxu0
    %v10043 = vadd.f32 %v9850, %v10042
    %v10044 = vpop.f32.mrb[0].mxu0
    %v10045 = vadd.f32 %v9852, %v10044
    %10046 = vmatprep.mubr.bf16.mxu0 %v7337
    %10047 = vmatmul.mubr.bf16.gmra.mrb[0].mxu0 %v7336
    %v10048 = vpop.f32.mrb[0].mxu0
    %v10049 = vadd.f32 %v9856, %v10048
    %v10050 = vpop.f32.mrb[0].mxu0
    %v10051 = vadd.f32 %v9858, %v10050
    %v10052 = vpop.f32.mrb[0].mxu0
    %v10053 = vadd.f32 %v9860, %v10052
    %v10054 = vpop.f32.mrb[0].mxu0
    %v10055 = vadd.f32 %v9862, %v10054
    %10056 = vmatprep.mubr.bf16.mxu0 %v7349
    %10057 = vmatmul.mubr.bf16.gmra.mrb[0].mxu0 %v7348
    %v10058 = vpop.f32.mrb[0].mxu0
    %v10059 = vadd.f32 %v9866, %v10058
    %v10060 = vpop.f32.mrb[0].mxu0
    %v10061 = vadd.f32 %v9868, %v10060
    %v10062 = vpop.f32.mrb[0].mxu0
    %v10063 = vadd.f32 %v9870, %v10062
    %v10064 = vpop.f32.mrb[0].mxu0
    %v10065 = vadd.f32 %v9872, %v10064
    %10066 = vmatprep.mubr.bf16.mxu0 %v7361
    %10067 = vmatmul.mubr.bf16.gmra.mrb[0].mxu0 %v7360
    %v10068 = vpop.f32.mrb[0].mxu0
    %v10069 = vadd.f32 %v9876, %v10068
    %v10070 = vpop.f32.mrb[0].mxu0
    %v10071 = vadd.f32 %v9878, %v10070
    %v10072 = vpop.f32.mrb[0].mxu0
    %v10073 = vadd.f32 %v9880, %v10072
    %v10074 = vpop.f32.mrb[0].mxu0
    %v10075 = vadd.f32 %v9882, %v10074
    %10076 = vmatprep.mubr.bf16.mxu0 %v7373
    %10077 = vmatmul.mubr.bf16.gmra.mrb[0].mxu0 %v7372
    %v10078 = vpop.f32.mrb[0].mxu0
    %v10079 = vadd.f32 %v9886, %v10078
    %v10080 = vpop.f32.mrb[0].mxu0
    %v10081 = vadd.f32 %v9888, %v10080
    %v10082 = vpop.f32.mrb[0].mxu0
    %v10083 = vadd.f32 %v9890, %v10082
    %v10084 = vpop.f32.mrb[0].mxu0
    %v10085 = vadd.f32 %v9892, %v10084
    %10086 = vdwg.mxu0
    %10087 = vmatprep.subr.bf16.mxu0 %v8932
    %10088 = vmatpush1.bf16.msra.mxu0 %v8931
    %10089 = vmatprep.subr.bf16.mxu0 %v8935
    %10090 = vmatpush1.bf16.msra.mxu0 %v8934
    %10091 = vmatprep.subr.bf16.mxu0 %v8938
    %10092 = vmatpush1.bf16.msra.mxu0 %v8937
    %10093 = vmatprep.subr.bf16.mxu0 %v8941
    %10094 = vmatpush1.bf16.msra.mxu0 %v8940
    %10095 = vmatprep.subr.bf16.mxu0 %v8944
    %10096 = vmatpush1.bf16.msra.mxu0 %v8943
    %10097 = vmatprep.subr.bf16.mxu0 %v8947
    %10098 = vmatpush1.bf16.msra.mxu0 %v8946
    %10099 = vmatprep.subr.bf16.mxu0 %v8950
    %10100 = vmatpush1.bf16.msra.mxu0 %v8949
    %10101 = vmatprep.subr.bf16.mxu0 %v8953
    %10102 = vmatpush1.bf16.msra.mxu0 %v8952
    %10103 = vmatprep.subr.bf16.mxu0 %v8956
    %10104 = vmatpush1.bf16.msra.mxu0 %v8955
    %10105 = vmatprep.subr.bf16.mxu0 %v8959
    %10106 = vmatpush1.bf16.msra.mxu0 %v8958
    %10107 = vmatprep.subr.bf16.mxu0 %v8962
    %10108 = vmatpush1.bf16.msra.mxu0 %v8961
    %10109 = vmatprep.subr.bf16.mxu0 %v8965
    %10110 = vmatpush1.bf16.msra.mxu0 %v8964
    %10111 = vmatprep.subr.bf16.mxu0 %v8968
    %10112 = vmatpush1.bf16.msra.mxu0 %v8967
    %10113 = vmatprep.subr.bf16.mxu0 %v8971
    %10114 = vmatpush1.bf16.msra.mxu0 %v8970
    %10115 = vmatprep.subr.bf16.mxu0 %v8974
    %10116 = vmatpush1.bf16.msra.mxu0 %v8973
    %10117 = vmatprep.subr.bf16.mxu0 %v8977
    %10118 = vmatpush1.bf16.msra.mxu0 %v8976
    %10119 = vmatprep.mubr.bf16.mxu0 %v7195
    %10120 = vmatmul.mubr.bf16.gmra.mrb[0].mxu0 %v7194
    %v10121 = vpop.f32.mrb[0].mxu0
    %v10122 = vadd.f32 %v9929, %v10121
    %v10123 = vpop.f32.mrb[0].mxu0
    %v10124 = vadd.f32 %v9931, %v10123
    %v10125 = vpop.f32.mrb[0].mxu0
    %v10126 = vadd.f32 %v9933, %v10125
    %v10127 = vpop.f32.mrb[0].mxu0
    %v10128 = vadd.f32 %v9935, %v10127
    %10129 = vmatprep.mubr.bf16.mxu0 %v7207
    %10130 = vmatmul.mubr.bf16.gmra.mrb[0].mxu0 %v7206
    %v10131 = vpop.f32.mrb[0].mxu0
    %v10132 = vadd.f32 %v9939, %v10131
    %v10133 = vpop.f32.mrb[0].mxu0
    %v10134 = vadd.f32 %v9941, %v10133
    %v10135 = vpop.f32.mrb[0].mxu0
    %v10136 = vadd.f32 %v9943, %v10135
    %v10137 = vpop.f32.mrb[0].mxu0
    %v10138 = vadd.f32 %v9945, %v10137
    %10139 = vmatprep.mubr.bf16.mxu0 %v7219
    %10140 = vmatmul.mubr.bf16.gmra.mrb[0].mxu0 %v7218
    %v10141 = vpop.f32.mrb[0].mxu0
    %v10142 = vadd.f32 %v9949, %v10141
    %v10143 = vpop.f32.mrb[0].mxu0
    %v10144 = vadd.f32 %v9951, %v10143
    %v10145 = vpop.f32.mrb[0].mxu0
    %v10146 = vadd.f32 %v9953, %v10145
    %v10147 = vpop.f32.mrb[0].mxu0
    %v10148 = vadd.f32 %v9955, %v10147
    %10149 = vmatprep.mubr.bf16.mxu0 %v7231
    %10150 = vmatmul.mubr.bf16.gmra.mrb[0].mxu0 %v7230
    %v10151 = vpop.f32.mrb[0].mxu0
    %v10152 = vadd.f32 %v9959, %v10151
    %v10153 = vpop.f32.mrb[0].mxu0
    %v10154 = vadd.f32 %v9961, %v10153
    %v10155 = vpop.f32.mrb[0].mxu0
    %v10156 = vadd.f32 %v9963, %v10155
    %v10157 = vpop.f32.mrb[0].mxu0
    %v10158 = vadd.f32 %v9965, %v10157
    %10159 = vmatprep.mubr.bf16.mxu0 %v7243
    %10160 = vmatmul.mubr.bf16.gmra.mrb[0].mxu0 %v7242
    %v10161 = vpop.f32.mrb[0].mxu0
    %v10162 = vadd.f32 %v9969, %v10161
    %v10163 = vpop.f32.mrb[0].mxu0
    %v10164 = vadd.f32 %v9971, %v10163
    %v10165 = vpop.f32.mrb[0].mxu0
    %v10166 = vadd.f32 %v9973, %v10165
    %v10167 = vpop.f32.mrb[0].mxu0
    %v10168 = vadd.f32 %v9975, %v10167
    %10169 = vmatprep.mubr.bf16.mxu0 %v7255
    %10170 = vmatmul.mubr.bf16.gmra.mrb[0].mxu0 %v7254
    %v10171 = vpop.f32.mrb[0].mxu0
    %v10172 = vadd.f32 %v9979, %v10171
    %v10173 = vpop.f32.mrb[0].mxu0
    %v10174 = vadd.f32 %v9981, %v10173
    %v10175 = vpop.f32.mrb[0].mxu0
    %v10176 = vadd.f32 %v9983, %v10175
    %v10177 = vpop.f32.mrb[0].mxu0
    %v10178 = vadd.f32 %v9985, %v10177
    %10179 = vmatprep.mubr.bf16.mxu0 %v7267
    %10180 = vmatmul.mubr.bf16.gmra.mrb[0].mxu0 %v7266
    %v10181 = vpop.f32.mrb[0].mxu0
    %v10182 = vadd.f32 %v9989, %v10181
    %v10183 = vpop.f32.mrb[0].mxu0
    %v10184 = vadd.f32 %v9991, %v10183
    %v10185 = vpop.f32.mrb[0].mxu0
    %v10186 = vadd.f32 %v9993, %v10185
    %v10187 = vpop.f32.mrb[0].mxu0
    %v10188 = vadd.f32 %v9995, %v10187
    %10189 = vmatprep.mubr.bf16.mxu0 %v7279
    %10190 = vmatmul.mubr.bf16.gmra.mrb[0].mxu0 %v7278
    %v10191 = vpop.f32.mrb[0].mxu0
    %v10192 = vadd.f32 %v9999, %v10191
    %v10193 = vpop.f32.mrb[0].mxu0
    %v10194 = vadd.f32 %v10001, %v10193
    %v10195 = vpop.f32.mrb[0].mxu0
    %v10196 = vadd.f32 %v10003, %v10195
    %v10197 = vpop.f32.mrb[0].mxu0
    %v10198 = vadd.f32 %v10005, %v10197
    %10199 = vmatprep.mubr.bf16.mxu0 %v7291
    %10200 = vmatmul.mubr.bf16.gmra.mrb[0].mxu0 %v7290
    %v10201 = vpop.f32.mrb[0].mxu0
    %v10202 = vadd.f32 %v10009, %v10201
    %v10203 = vpop.f32.mrb[0].mxu0
    %v10204 = vadd.f32 %v10011, %v10203
    %v10205 = vpop.f32.mrb[0].mxu0
    %v10206 = vadd.f32 %v10013, %v10205
    %v10207 = vpop.f32.mrb[0].mxu0
    %v10208 = vadd.f32 %v10015, %v10207
    %10209 = vmatprep.mubr.bf16.mxu0 %v7303
    %10210 = vmatmul.mubr.bf16.gmra.mrb[0].mxu0 %v7302
    %v10211 = vpop.f32.mrb[0].mxu0
    %v10212 = vadd.f32 %v10019, %v10211
    %v10213 = vpop.f32.mrb[0].mxu0
    %v10214 = vadd.f32 %v10021, %v10213
    %v10215 = vpop.f32.mrb[0].mxu0
    %v10216 = vadd.f32 %v10023, %v10215
    %v10217 = vpop.f32.mrb[0].mxu0
    %v10218 = vadd.f32 %v10025, %v10217
    %10219 = vmatprep.mubr.bf16.mxu0 %v7315
    %10220 = vmatmul.mubr.bf16.gmra.mrb[0].mxu0 %v7314
    %v10221 = vpop.f32.mrb[0].mxu0
    %v10222 = vadd.f32 %v10029, %v10221
    %v10223 = vpop.f32.mrb[0].mxu0
    %v10224 = vadd.f32 %v10031, %v10223
    %v10225 = vpop.f32.mrb[0].mxu0
    %v10226 = vadd.f32 %v10033, %v10225
    %v10227 = vpop.f32.mrb[0].mxu0
    %v10228 = vadd.f32 %v10035, %v10227
    %10229 = vmatprep.mubr.bf16.mxu0 %v7327
    %10230 = vmatmul.mubr.bf16.gmra.mrb[0].mxu0 %v7326
    %v10231 = vpop.f32.mrb[0].mxu0
    %v10232 = vadd.f32 %v10039, %v10231
    %v10233 = vpop.f32.mrb[0].mxu0
    %v10234 = vadd.f32 %v10041, %v10233
    %v10235 = vpop.f32.mrb[0].mxu0
    %v10236 = vadd.f32 %v10043, %v10235
    %v10237 = vpop.f32.mrb[0].mxu0
    %v10238 = vadd.f32 %v10045, %v10237
    %10239 = vmatprep.mubr.bf16.mxu0 %v7339
    %10240 = vmatmul.mubr.bf16.gmra.mrb[0].mxu0 %v7338
    %v10241 = vpop.f32.mrb[0].mxu0
    %v10242 = vadd.f32 %v10049, %v10241
    %v10243 = vpop.f32.mrb[0].mxu0
    %v10244 = vadd.f32 %v10051, %v10243
    %v10245 = vpop.f32.mrb[0].mxu0
    %v10246 = vadd.f32 %v10053, %v10245
    %v10247 = vpop.f32.mrb[0].mxu0
    %v10248 = vadd.f32 %v10055, %v10247
    %10249 = vmatprep.mubr.bf16.mxu0 %v7351
    %10250 = vmatmul.mubr.bf16.gmra.mrb[0].mxu0 %v7350
    %v10251 = vpop.f32.mrb[0].mxu0
    %v10252 = vadd.f32 %v10059, %v10251
    %v10253 = vpop.f32.mrb[0].mxu0
    %v10254 = vadd.f32 %v10061, %v10253
    %v10255 = vpop.f32.mrb[0].mxu0
    %v10256 = vadd.f32 %v10063, %v10255
    %v10257 = vpop.f32.mrb[0].mxu0
    %v10258 = vadd.f32 %v10065, %v10257
    %10259 = vmatprep.mubr.bf16.mxu0 %v7363
    %10260 = vmatmul.mubr.bf16.gmra.mrb[0].mxu0 %v7362
    %v10261 = vpop.f32.mrb[0].mxu0
    %v10262 = vadd.f32 %v10069, %v10261
    %v10263 = vpop.f32.mrb[0].mxu0
    %v10264 = vadd.f32 %v10071, %v10263
    %v10265 = vpop.f32.mrb[0].mxu0
    %v10266 = vadd.f32 %v10073, %v10265
    %v10267 = vpop.f32.mrb[0].mxu0
    %v10268 = vadd.f32 %v10075, %v10267
    %10269 = vmatprep.mubr.bf16.mxu0 %v7375
    %10270 = vmatmul.mubr.bf16.gmra.mrb[0].mxu0 %v7374
    %v10271 = vpop.f32.mrb[0].mxu0
    %v10272 = vadd.f32 %v10079, %v10271
    %v10273 = vpop.f32.mrb[0].mxu0
    %v10274 = vadd.f32 %v10081, %v10273
    %v10275 = vpop.f32.mrb[0].mxu0
    %v10276 = vadd.f32 %v10083, %v10275
    %v10277 = vpop.f32.mrb[0].mxu0
    %v10278 = vadd.f32 %v10085, %v10277
    %10279 = vdwg.mxu0
    %10280 = vmatprep.subr.bf16.mxu0 %v8980
    %10281 = vmatpush1.bf16.msra.mxu0 %v8979
    %10282 = vmatprep.subr.bf16.mxu0 %v8983
    %10283 = vmatpush1.bf16.msra.mxu0 %v8982
    %10284 = vmatprep.subr.bf16.mxu0 %v8986
    %10285 = vmatpush1.bf16.msra.mxu0 %v8985
    %10286 = vmatprep.subr.bf16.mxu0 %v8989
    %10287 = vmatpush1.bf16.msra.mxu0 %v8988
    %10288 = vmatprep.subr.bf16.mxu0 %v8992
    %10289 = vmatpush1.bf16.msra.mxu0 %v8991
    %10290 = vmatprep.subr.bf16.mxu0 %v8995
    %10291 = vmatpush1.bf16.msra.mxu0 %v8994
    %10292 = vmatprep.subr.bf16.mxu0 %v8998
    %10293 = vmatpush1.bf16.msra.mxu0 %v8997
    %10294 = vmatprep.subr.bf16.mxu0 %v9001
    %10295 = vmatpush1.bf16.msra.mxu0 %v9000
    %10296 = vmatprep.subr.bf16.mxu0 %v9004
    %10297 = vmatpush1.bf16.msra.mxu0 %v9003
    %10298 = vmatprep.subr.bf16.mxu0 %v9007
    %10299 = vmatpush1.bf16.msra.mxu0 %v9006
    %10300 = vmatprep.subr.bf16.mxu0 %v9010
    %10301 = vmatpush1.bf16.msra.mxu0 %v9009
    %10302 = vmatprep.subr.bf16.mxu0 %v9013
    %10303 = vmatpush1.bf16.msra.mxu0 %v9012
    %10304 = vmatprep.subr.bf16.mxu0 %v9016
    %10305 = vmatpush1.bf16.msra.mxu0 %v9015
    %10306 = vmatprep.subr.bf16.mxu0 %v9019
    %10307 = vmatpush1.bf16.msra.mxu0 %v9018
    %10308 = vmatprep.subr.bf16.mxu0 %v9022
    %10309 = vmatpush1.bf16.msra.mxu0 %v9021
    %10310 = vmatprep.subr.bf16.mxu0 %v9025
    %10311 = vmatpush1.bf16.msra.mxu0 %v9024
    %10312 = vmatprep.mubr.bf16.mxu0 %v7197
    %10313 = vmatmul.mubr.bf16.gmra.mrb[0].mxu0 %v7196
    %v10314 = vpop.f32.mrb[0].mxu0
    %v10315 = vadd.f32 %v10122, %v10314
    %v10316 = vpop.f32.mrb[0].mxu0
    %v10317 = vadd.f32 %v10124, %v10316
    %v10318 = vpop.f32.mrb[0].mxu0
    %v10319 = vadd.f32 %v10126, %v10318
    %v10320 = vpop.f32.mrb[0].mxu0
    %v10321 = vadd.f32 %v10128, %v10320
    %10322 = vmatprep.mubr.bf16.mxu0 %v7209
    %10323 = vmatmul.mubr.bf16.gmra.mrb[0].mxu0 %v7208
    %v10324 = vpop.f32.mrb[0].mxu0
    %v10325 = vadd.f32 %v10132, %v10324
    %v10326 = vpop.f32.mrb[0].mxu0
    %v10327 = vadd.f32 %v10134, %v10326
    %v10328 = vpop.f32.mrb[0].mxu0
    %v10329 = vadd.f32 %v10136, %v10328
    %v10330 = vpop.f32.mrb[0].mxu0
    %v10331 = vadd.f32 %v10138, %v10330
    %10332 = vmatprep.mubr.bf16.mxu0 %v7221
    %10333 = vmatmul.mubr.bf16.gmra.mrb[0].mxu0 %v7220
    %v10334 = vpop.f32.mrb[0].mxu0
    %v10335 = vadd.f32 %v10142, %v10334
    %v10336 = vpop.f32.mrb[0].mxu0
    %v10337 = vadd.f32 %v10144, %v10336
    %v10338 = vpop.f32.mrb[0].mxu0
    %v10339 = vadd.f32 %v10146, %v10338
    %v10340 = vpop.f32.mrb[0].mxu0
    %v10341 = vadd.f32 %v10148, %v10340
    %10342 = vmatprep.mubr.bf16.mxu0 %v7233
    %10343 = vmatmul.mubr.bf16.gmra.mrb[0].mxu0 %v7232
    %v10344 = vpop.f32.mrb[0].mxu0
    %v10345 = vadd.f32 %v10152, %v10344
    %v10346 = vpop.f32.mrb[0].mxu0
    %v10347 = vadd.f32 %v10154, %v10346
    %v10348 = vpop.f32.mrb[0].mxu0
    %v10349 = vadd.f32 %v10156, %v10348
    %v10350 = vpop.f32.mrb[0].mxu0
    %v10351 = vadd.f32 %v10158, %v10350
    %10352 = vmatprep.mubr.bf16.mxu0 %v7245
    %10353 = vmatmul.mubr.bf16.gmra.mrb[0].mxu0 %v7244
    %v10354 = vpop.f32.mrb[0].mxu0
    %v10355 = vadd.f32 %v10162, %v10354
    %v10356 = vpop.f32.mrb[0].mxu0
    %v10357 = vadd.f32 %v10164, %v10356
    %v10358 = vpop.f32.mrb[0].mxu0
    %v10359 = vadd.f32 %v10166, %v10358
    %v10360 = vpop.f32.mrb[0].mxu0
    %v10361 = vadd.f32 %v10168, %v10360
    %10362 = vmatprep.mubr.bf16.mxu0 %v7257
    %10363 = vmatmul.mubr.bf16.gmra.mrb[0].mxu0 %v7256
    %v10364 = vpop.f32.mrb[0].mxu0
    %v10365 = vadd.f32 %v10172, %v10364
    %v10366 = vpop.f32.mrb[0].mxu0
    %v10367 = vadd.f32 %v10174, %v10366
    %v10368 = vpop.f32.mrb[0].mxu0
    %v10369 = vadd.f32 %v10176, %v10368
    %v10370 = vpop.f32.mrb[0].mxu0
    %v10371 = vadd.f32 %v10178, %v10370
    %10372 = vmatprep.mubr.bf16.mxu0 %v7269
    %10373 = vmatmul.mubr.bf16.gmra.mrb[0].mxu0 %v7268
    %v10374 = vpop.f32.mrb[0].mxu0
    %v10375 = vadd.f32 %v10182, %v10374
    %v10376 = vpop.f32.mrb[0].mxu0
    %v10377 = vadd.f32 %v10184, %v10376
    %v10378 = vpop.f32.mrb[0].mxu0
    %v10379 = vadd.f32 %v10186, %v10378
    %v10380 = vpop.f32.mrb[0].mxu0
    %v10381 = vadd.f32 %v10188, %v10380
    %10382 = vmatprep.mubr.bf16.mxu0 %v7281
    %10383 = vmatmul.mubr.bf16.gmra.mrb[0].mxu0 %v7280
    %v10384 = vpop.f32.mrb[0].mxu0
    %v10385 = vadd.f32 %v10192, %v10384
    %v10386 = vpop.f32.mrb[0].mxu0
    %v10387 = vadd.f32 %v10194, %v10386
    %v10388 = vpop.f32.mrb[0].mxu0
    %v10389 = vadd.f32 %v10196, %v10388
    %v10390 = vpop.f32.mrb[0].mxu0
    %v10391 = vadd.f32 %v10198, %v10390
    %10392 = vmatprep.mubr.bf16.mxu0 %v7293
    %10393 = vmatmul.mubr.bf16.gmra.mrb[0].mxu0 %v7292
    %v10394 = vpop.f32.mrb[0].mxu0
    %v10395 = vadd.f32 %v10202, %v10394
    %v10396 = vpop.f32.mrb[0].mxu0
    %v10397 = vadd.f32 %v10204, %v10396
    %v10398 = vpop.f32.mrb[0].mxu0
    %v10399 = vadd.f32 %v10206, %v10398
    %v10400 = vpop.f32.mrb[0].mxu0
    %v10401 = vadd.f32 %v10208, %v10400
    %10402 = vmatprep.mubr.bf16.mxu0 %v7305
    %10403 = vmatmul.mubr.bf16.gmra.mrb[0].mxu0 %v7304
    %v10404 = vpop.f32.mrb[0].mxu0
    %v10405 = vadd.f32 %v10212, %v10404
    %v10406 = vpop.f32.mrb[0].mxu0
    %v10407 = vadd.f32 %v10214, %v10406
    %v10408 = vpop.f32.mrb[0].mxu0
    %v10409 = vadd.f32 %v10216, %v10408
    %v10410 = vpop.f32.mrb[0].mxu0
    %v10411 = vadd.f32 %v10218, %v10410
    %10412 = vmatprep.mubr.bf16.mxu0 %v7317
    %10413 = vmatmul.mubr.bf16.gmra.mrb[0].mxu0 %v7316
    %v10414 = vpop.f32.mrb[0].mxu0
    %v10415 = vadd.f32 %v10222, %v10414
    %v10416 = vpop.f32.mrb[0].mxu0
    %v10417 = vadd.f32 %v10224, %v10416
    %v10418 = vpop.f32.mrb[0].mxu0
    %v10419 = vadd.f32 %v10226, %v10418
    %v10420 = vpop.f32.mrb[0].mxu0
    %v10421 = vadd.f32 %v10228, %v10420
    %10422 = vmatprep.mubr.bf16.mxu0 %v7329
    %10423 = vmatmul.mubr.bf16.gmra.mrb[0].mxu0 %v7328
    %v10424 = vpop.f32.mrb[0].mxu0
    %v10425 = vadd.f32 %v10232, %v10424
    %v10426 = vpop.f32.mrb[0].mxu0
    %v10427 = vadd.f32 %v10234, %v10426
    %v10428 = vpop.f32.mrb[0].mxu0
    %v10429 = vadd.f32 %v10236, %v10428
    %v10430 = vpop.f32.mrb[0].mxu0
    %v10431 = vadd.f32 %v10238, %v10430
    %10432 = vmatprep.mubr.bf16.mxu0 %v7341
    %10433 = vmatmul.mubr.bf16.gmra.mrb[0].mxu0 %v7340
    %v10434 = vpop.f32.mrb[0].mxu0
    %v10435 = vadd.f32 %v10242, %v10434
    %v10436 = vpop.f32.mrb[0].mxu0
    %v10437 = vadd.f32 %v10244, %v10436
    %v10438 = vpop.f32.mrb[0].mxu0
    %v10439 = vadd.f32 %v10246, %v10438
    %v10440 = vpop.f32.mrb[0].mxu0
    %v10441 = vadd.f32 %v10248, %v10440
    %10442 = vmatprep.mubr.bf16.mxu0 %v7353
    %10443 = vmatmul.mubr.bf16.gmra.mrb[0].mxu0 %v7352
    %v10444 = vpop.f32.mrb[0].mxu0
    %v10445 = vadd.f32 %v10252, %v10444
    %v10446 = vpop.f32.mrb[0].mxu0
    %v10447 = vadd.f32 %v10254, %v10446
    %v10448 = vpop.f32.mrb[0].mxu0
    %v10449 = vadd.f32 %v10256, %v10448
    %v10450 = vpop.f32.mrb[0].mxu0
    %v10451 = vadd.f32 %v10258, %v10450
    %10452 = vmatprep.mubr.bf16.mxu0 %v7365
    %10453 = vmatmul.mubr.bf16.gmra.mrb[0].mxu0 %v7364
    %v10454 = vpop.f32.mrb[0].mxu0
    %v10455 = vadd.f32 %v10262, %v10454
    %v10456 = vpop.f32.mrb[0].mxu0
    %v10457 = vadd.f32 %v10264, %v10456
    %v10458 = vpop.f32.mrb[0].mxu0
    %v10459 = vadd.f32 %v10266, %v10458
    %v10460 = vpop.f32.mrb[0].mxu0
    %v10461 = vadd.f32 %v10268, %v10460
    %10462 = vmatprep.mubr.bf16.mxu0 %v7377
    %10463 = vmatmul.mubr.bf16.gmra.mrb[0].mxu0 %v7376
    %v10464 = vpop.f32.mrb[0].mxu0
    %v10465 = vadd.f32 %v10272, %v10464
    %v10466 = vpop.f32.mrb[0].mxu0
    %v10467 = vadd.f32 %v10274, %v10466
    %v10468 = vpop.f32.mrb[0].mxu0
    %v10469 = vadd.f32 %v10276, %v10468
    %v10470 = vpop.f32.mrb[0].mxu0
    %v10471 = vadd.f32 %v10278, %v10470
    %10472 = vdwg.mxu0
    %10473 = vmatprep.subr.bf16.mxu0 0
    %10474 = vmatpush1.bf16.msra.mxu0 %v8741
    %10475 = vmatprep.subr.bf16.mxu0 0
    %10476 = vmatpush1.bf16.msra.mxu0 %v8744
    %10477 = vmatprep.subr.bf16.mxu0 0
    %10478 = vmatpush1.bf16.msra.mxu0 %v8747
    %10479 = vmatprep.subr.bf16.mxu0 0
    %10480 = vmatpush1.bf16.msra.mxu0 %v8750
    %10481 = vmatprep.subr.bf16.mxu0 0
    %10482 = vmatpush1.bf16.msra.mxu0 %v8753
    %10483 = vmatprep.subr.bf16.mxu0 0
    %10484 = vmatpush1.bf16.msra.mxu0 %v8756
    %10485 = vmatprep.subr.bf16.mxu0 0
    %10486 = vmatpush1.bf16.msra.mxu0 %v8759
    %10487 = vmatprep.subr.bf16.mxu0 0
    %10488 = vmatpush1.bf16.msra.mxu0 %v8762
    %10489 = vmatprep.subr.bf16.mxu0 0
    %10490 = vmatpush1.bf16.msra.mxu0 %v8765
    %10491 = vmatprep.subr.bf16.mxu0 0
    %10492 = vmatpush1.bf16.msra.mxu0 %v8768
    %10493 = vmatprep.subr.bf16.mxu0 0
    %10494 = vmatpush1.bf16.msra.mxu0 %v8771
    %10495 = vmatprep.subr.bf16.mxu0 0
    %10496 = vmatpush1.bf16.msra.mxu0 %v8774
    %10497 = vmatprep.subr.bf16.mxu0 0
    %10498 = vmatpush1.bf16.msra.mxu0 %v8777
    %10499 = vmatprep.subr.bf16.mxu0 0
    %10500 = vmatpush1.bf16.msra.mxu0 %v8780
    %10501 = vmatprep.subr.bf16.mxu0 0
    %10502 = vmatpush1.bf16.msra.mxu0 %v8783
    %10503 = vmatprep.subr.bf16.mxu0 0
    %10504 = vmatpush1.bf16.msra.mxu0 %v8786
    %10505 = vmatprep.mubr.bf16.mxu0 %v7187
    %10506 = vmatmul.mubr.bf16.gmra.mrb[0].mxu0 %v7186
    %v10507 = vpop.f32.mrb[0].mxu0
    %v10508 = vadd.f32 %v7775, %v10507
    %v10509 = vpop.f32.mrb[0].mxu0
    %v10510 = vpop.f32.mrb[0].mxu0
    %v10511 = vadd.f32 %v7775, %v10510
    %v10512 = vpop.f32.mrb[0].mxu0
    %10513 = vmatprep.mubr.bf16.mxu0 %v7199
    %10514 = vmatmul.mubr.bf16.gmra.mrb[0].mxu0 %v7198
    %v10515 = vpop.f32.mrb[0].mxu0
    %v10516 = vadd.f32 %v7775, %v10515
    %v10517 = vpop.f32.mrb[0].mxu0
    %v10518 = vpop.f32.mrb[0].mxu0
    %v10519 = vadd.f32 %v7775, %v10518
    %v10520 = vpop.f32.mrb[0].mxu0
    %10521 = vmatprep.mubr.bf16.mxu0 %v7211
    %10522 = vmatmul.mubr.bf16.gmra.mrb[0].mxu0 %v7210
    %v10523 = vpop.f32.mrb[0].mxu0
    %v10524 = vadd.f32 %v7775, %v10523
    %v10525 = vpop.f32.mrb[0].mxu0
    %v10526 = vpop.f32.mrb[0].mxu0
    %v10527 = vadd.f32 %v7775, %v10526
    %v10528 = vpop.f32.mrb[0].mxu0
    %10529 = vmatprep.mubr.bf16.mxu0 %v7223
    %10530 = vmatmul.mubr.bf16.gmra.mrb[0].mxu0 %v7222
    %v10531 = vpop.f32.mrb[0].mxu0
    %v10532 = vadd.f32 %v7775, %v10531
    %v10533 = vpop.f32.mrb[0].mxu0
    %v10534 = vpop.f32.mrb[0].mxu0
    %v10535 = vadd.f32 %v7775, %v10534
    %v10536 = vpop.f32.mrb[0].mxu0
    %10537 = vmatprep.mubr.bf16.mxu0 %v7235
    %10538 = vmatmul.mubr.bf16.gmra.mrb[0].mxu0 %v7234
    %v10539 = vpop.f32.mrb[0].mxu0
    %v10540 = vadd.f32 %v7775, %v10539
    %v10541 = vpop.f32.mrb[0].mxu0
    %v10542 = vpop.f32.mrb[0].mxu0
    %v10543 = vadd.f32 %v7775, %v10542
    %v10544 = vpop.f32.mrb[0].mxu0
    %10545 = vmatprep.mubr.bf16.mxu0 %v7247
    %10546 = vmatmul.mubr.bf16.gmra.mrb[0].mxu0 %v7246
    %v10547 = vpop.f32.mrb[0].mxu0
    %v10548 = vadd.f32 %v7775, %v10547
    %v10549 = vpop.f32.mrb[0].mxu0
    %v10550 = vpop.f32.mrb[0].mxu0
    %v10551 = vadd.f32 %v7775, %v10550
    %v10552 = vpop.f32.mrb[0].mxu0
    %10553 = vmatprep.mubr.bf16.mxu0 %v7259
    %10554 = vmatmul.mubr.bf16.gmra.mrb[0].mxu0 %v7258
    %v10555 = vpop.f32.mrb[0].mxu0
    %v10556 = vadd.f32 %v7775, %v10555
    %v10557 = vpop.f32.mrb[0].mxu0
    %v10558 = vpop.f32.mrb[0].mxu0
    %v10559 = vadd.f32 %v7775, %v10558
    %v10560 = vpop.f32.mrb[0].mxu0
    %10561 = vmatprep.mubr.bf16.mxu0 %v7271
    %10562 = vmatmul.mubr.bf16.gmra.mrb[0].mxu0 %v7270
    %v10563 = vpop.f32.mrb[0].mxu0
    %v10564 = vadd.f32 %v7775, %v10563
    %v10565 = vpop.f32.mrb[0].mxu0
    %v10566 = vpop.f32.mrb[0].mxu0
    %v10567 = vadd.f32 %v7775, %v10566
    %v10568 = vpop.f32.mrb[0].mxu0
    %10569 = vmatprep.mubr.bf16.mxu0 %v7283
    %10570 = vmatmul.mubr.bf16.gmra.mrb[0].mxu0 %v7282
    %v10571 = vpop.f32.mrb[0].mxu0
    %v10572 = vadd.f32 %v7775, %v10571
    %v10573 = vpop.f32.mrb[0].mxu0
    %v10574 = vpop.f32.mrb[0].mxu0
    %v10575 = vadd.f32 %v7775, %v10574
    %v10576 = vpop.f32.mrb[0].mxu0
    %10577 = vmatprep.mubr.bf16.mxu0 %v7295
    %10578 = vmatmul.mubr.bf16.gmra.mrb[0].mxu0 %v7294
    %v10579 = vpop.f32.mrb[0].mxu0
    %v10580 = vadd.f32 %v7775, %v10579
    %v10581 = vpop.f32.mrb[0].mxu0
    %v10582 = vpop.f32.mrb[0].mxu0
    %v10583 = vadd.f32 %v7775, %v10582
    %v10584 = vpop.f32.mrb[0].mxu0
    %10585 = vmatprep.mubr.bf16.mxu0 %v7307
    %10586 = vmatmul.mubr.bf16.gmra.mrb[0].mxu0 %v7306
    %v10587 = vpop.f32.mrb[0].mxu0
    %v10588 = vadd.f32 %v7775, %v10587
    %v10589 = vpop.f32.mrb[0].mxu0
    %v10590 = vpop.f32.mrb[0].mxu0
    %v10591 = vadd.f32 %v7775, %v10590
    %v10592 = vpop.f32.mrb[0].mxu0
    %10593 = vmatprep.mubr.bf16.mxu0 %v7319
    %10594 = vmatmul.mubr.bf16.gmra.mrb[0].mxu0 %v7318
    %v10595 = vpop.f32.mrb[0].mxu0
    %v10596 = vadd.f32 %v7775, %v10595
    %v10597 = vpop.f32.mrb[0].mxu0
    %v10598 = vpop.f32.mrb[0].mxu0
    %v10599 = vadd.f32 %v7775, %v10598
    %v10600 = vpop.f32.mrb[0].mxu0
    %10601 = vmatprep.mubr.bf16.mxu0 %v7331
    %10602 = vmatmul.mubr.bf16.gmra.mrb[0].mxu0 %v7330
    %v10603 = vpop.f32.mrb[0].mxu0
    %v10604 = vadd.f32 %v7775, %v10603
    %v10605 = vpop.f32.mrb[0].mxu0
    %v10606 = vpop.f32.mrb[0].mxu0
    %v10607 = vadd.f32 %v7775, %v10606
    %v10608 = vpop.f32.mrb[0].mxu0
    %10609 = vmatprep.mubr.bf16.mxu0 %v7343
    %10610 = vmatmul.mubr.bf16.gmra.mrb[0].mxu0 %v7342
    %v10611 = vpop.f32.mrb[0].mxu0
    %v10612 = vadd.f32 %v7775, %v10611
    %v10613 = vpop.f32.mrb[0].mxu0
    %v10614 = vpop.f32.mrb[0].mxu0
    %v10615 = vadd.f32 %v7775, %v10614
    %v10616 = vpop.f32.mrb[0].mxu0
    %10617 = vmatprep.mubr.bf16.mxu0 %v7355
    %10618 = vmatmul.mubr.bf16.gmra.mrb[0].mxu0 %v7354
    %v10619 = vpop.f32.mrb[0].mxu0
    %v10620 = vadd.f32 %v7775, %v10619
    %v10621 = vpop.f32.mrb[0].mxu0
    %v10622 = vpop.f32.mrb[0].mxu0
    %v10623 = vadd.f32 %v7775, %v10622
    %v10624 = vpop.f32.mrb[0].mxu0
    %10625 = vmatprep.mubr.bf16.mxu0 %v7367
    %10626 = vmatmul.mubr.bf16.gmra.mrb[0].mxu0 %v7366
    %v10627 = vpop.f32.mrb[0].mxu0
    %v10628 = vadd.f32 %v7775, %v10627
    %v10629 = vpop.f32.mrb[0].mxu0
    %v10630 = vpop.f32.mrb[0].mxu0
    %v10631 = vadd.f32 %v7775, %v10630
    %v10632 = vpop.f32.mrb[0].mxu0
    %10633 = vdwg.mxu0
    %10634 = vmatprep.subr.bf16.mxu0 0
    %10635 = vmatpush1.bf16.msra.mxu0 %v8789
    %10636 = vmatprep.subr.bf16.mxu0 0
    %10637 = vmatpush1.bf16.msra.mxu0 %v8792
    %10638 = vmatprep.subr.bf16.mxu0 0
    %10639 = vmatpush1.bf16.msra.mxu0 %v8795
    %10640 = vmatprep.subr.bf16.mxu0 0
    %10641 = vmatpush1.bf16.msra.mxu0 %v8798
    %10642 = vmatprep.subr.bf16.mxu0 0
    %10643 = vmatpush1.bf16.msra.mxu0 %v8801
    %10644 = vmatprep.subr.bf16.mxu0 0
    %10645 = vmatpush1.bf16.msra.mxu0 %v8804
    %10646 = vmatprep.subr.bf16.mxu0 0
    %10647 = vmatpush1.bf16.msra.mxu0 %v8807
    %10648 = vmatprep.subr.bf16.mxu0 0
    %10649 = vmatpush1.bf16.msra.mxu0 %v8810
    %10650 = vmatprep.subr.bf16.mxu0 0
    %10651 = vmatpush1.bf16.msra.mxu0 %v8813
    %10652 = vmatprep.subr.bf16.mxu0 0
    %10653 = vmatpush1.bf16.msra.mxu0 %v8816
    %10654 = vmatprep.subr.bf16.mxu0 0
    %10655 = vmatpush1.bf16.msra.mxu0 %v8819
    %10656 = vmatprep.subr.bf16.mxu0 0
    %10657 = vmatpush1.bf16.msra.mxu0 %v8822
    %10658 = vmatprep.subr.bf16.mxu0 0
    %10659 = vmatpush1.bf16.msra.mxu0 %v8825
    %10660 = vmatprep.subr.bf16.mxu0 0
    %10661 = vmatpush1.bf16.msra.mxu0 %v8828
    %10662 = vmatprep.subr.bf16.mxu0 0
    %10663 = vmatpush1.bf16.msra.mxu0 %v8831
    %10664 = vmatprep.subr.bf16.mxu0 0
    %10665 = vmatpush1.bf16.msra.mxu0 %v8834
    %10666 = vmatprep.mubr.bf16.mxu0 %v7189
    %10667 = vmatmul.mubr.bf16.gmra.mrb[0].mxu0 %v7188
    %v10668 = vpop.f32.mrb[0].mxu0
    %v10669 = vadd.f32 %v10508, %v10668
    %v10670 = vpop.f32.mrb[0].mxu0
    %v10671 = vpop.f32.mrb[0].mxu0
    %v10672 = vadd.f32 %v10511, %v10671
    %v10673 = vpop.f32.mrb[0].mxu0
    %10674 = vmatprep.mubr.bf16.mxu0 %v7201
    %10675 = vmatmul.mubr.bf16.gmra.mrb[0].mxu0 %v7200
    %v10676 = vpop.f32.mrb[0].mxu0
    %v10677 = vadd.f32 %v10516, %v10676
    %v10678 = vpop.f32.mrb[0].mxu0
    %v10679 = vpop.f32.mrb[0].mxu0
    %v10680 = vadd.f32 %v10519, %v10679
    %v10681 = vpop.f32.mrb[0].mxu0
    %10682 = vmatprep.mubr.bf16.mxu0 %v7213
    %10683 = vmatmul.mubr.bf16.gmra.mrb[0].mxu0 %v7212
    %v10684 = vpop.f32.mrb[0].mxu0
    %v10685 = vadd.f32 %v10524, %v10684
    %v10686 = vpop.f32.mrb[0].mxu0
    %v10687 = vpop.f32.mrb[0].mxu0
    %v10688 = vadd.f32 %v10527, %v10687
    %v10689 = vpop.f32.mrb[0].mxu0
    %10690 = vmatprep.mubr.bf16.mxu0 %v7225
    %10691 = vmatmul.mubr.bf16.gmra.mrb[0].mxu0 %v7224
    %v10692 = vpop.f32.mrb[0].mxu0
    %v10693 = vadd.f32 %v10532, %v10692
    %v10694 = vpop.f32.mrb[0].mxu0
    %v10695 = vpop.f32.mrb[0].mxu0
    %v10696 = vadd.f32 %v10535, %v10695
    %v10697 = vpop.f32.mrb[0].mxu0
    %10698 = vmatprep.mubr.bf16.mxu0 %v7237
    %10699 = vmatmul.mubr.bf16.gmra.mrb[0].mxu0 %v7236
    %v10700 = vpop.f32.mrb[0].mxu0
    %v10701 = vadd.f32 %v10540, %v10700
    %v10702 = vpop.f32.mrb[0].mxu0
    %v10703 = vpop.f32.mrb[0].mxu0
    %v10704 = vadd.f32 %v10543, %v10703
    %v10705 = vpop.f32.mrb[0].mxu0
    %10706 = vmatprep.mubr.bf16.mxu0 %v7249
    %10707 = vmatmul.mubr.bf16.gmra.mrb[0].mxu0 %v7248
    %v10708 = vpop.f32.mrb[0].mxu0
    %v10709 = vadd.f32 %v10548, %v10708
    %v10710 = vpop.f32.mrb[0].mxu0
    %v10711 = vpop.f32.mrb[0].mxu0
    %v10712 = vadd.f32 %v10551, %v10711
    %v10713 = vpop.f32.mrb[0].mxu0
    %10714 = vmatprep.mubr.bf16.mxu0 %v7261
    %10715 = vmatmul.mubr.bf16.gmra.mrb[0].mxu0 %v7260
    %v10716 = vpop.f32.mrb[0].mxu0
    %v10717 = vadd.f32 %v10556, %v10716
    %v10718 = vpop.f32.mrb[0].mxu0
    %v10719 = vpop.f32.mrb[0].mxu0
    %v10720 = vadd.f32 %v10559, %v10719
    %v10721 = vpop.f32.mrb[0].mxu0
    %10722 = vmatprep.mubr.bf16.mxu0 %v7273
    %10723 = vmatmul.mubr.bf16.gmra.mrb[0].mxu0 %v7272
    %v10724 = vpop.f32.mrb[0].mxu0
    %v10725 = vadd.f32 %v10564, %v10724
    %v10726 = vpop.f32.mrb[0].mxu0
    %v10727 = vpop.f32.mrb[0].mxu0
    %v10728 = vadd.f32 %v10567, %v10727
    %v10729 = vpop.f32.mrb[0].mxu0
    %10730 = vmatprep.mubr.bf16.mxu0 %v7285
    %10731 = vmatmul.mubr.bf16.gmra.mrb[0].mxu0 %v7284
    %v10732 = vpop.f32.mrb[0].mxu0
    %v10733 = vadd.f32 %v10572, %v10732
    %v10734 = vpop.f32.mrb[0].mxu0
    %v10735 = vpop.f32.mrb[0].mxu0
    %v10736 = vadd.f32 %v10575, %v10735
    %v10737 = vpop.f32.mrb[0].mxu0
    %10738 = vmatprep.mubr.bf16.mxu0 %v7297
    %10739 = vmatmul.mubr.bf16.gmra.mrb[0].mxu0 %v7296
    %v10740 = vpop.f32.mrb[0].mxu0
    %v10741 = vadd.f32 %v10580, %v10740
    %v10742 = vpop.f32.mrb[0].mxu0
    %v10743 = vpop.f32.mrb[0].mxu0
    %v10744 = vadd.f32 %v10583, %v10743
    %v10745 = vpop.f32.mrb[0].mxu0
    %10746 = vmatprep.mubr.bf16.mxu0 %v7309
    %10747 = vmatmul.mubr.bf16.gmra.mrb[0].mxu0 %v7308
    %v10748 = vpop.f32.mrb[0].mxu0
    %v10749 = vadd.f32 %v10588, %v10748
    %v10750 = vpop.f32.mrb[0].mxu0
    %v10751 = vpop.f32.mrb[0].mxu0
    %v10752 = vadd.f32 %v10591, %v10751
    %v10753 = vpop.f32.mrb[0].mxu0
    %10754 = vmatprep.mubr.bf16.mxu0 %v7321
    %10755 = vmatmul.mubr.bf16.gmra.mrb[0].mxu0 %v7320
    %v10756 = vpop.f32.mrb[0].mxu0
    %v10757 = vadd.f32 %v10596, %v10756
    %v10758 = vpop.f32.mrb[0].mxu0
    %v10759 = vpop.f32.mrb[0].mxu0
    %v10760 = vadd.f32 %v10599, %v10759
    %v10761 = vpop.f32.mrb[0].mxu0
    %10762 = vmatprep.mubr.bf16.mxu0 %v7333
    %10763 = vmatmul.mubr.bf16.gmra.mrb[0].mxu0 %v7332
    %v10764 = vpop.f32.mrb[0].mxu0
    %v10765 = vadd.f32 %v10604, %v10764
    %v10766 = vpop.f32.mrb[0].mxu0
    %v10767 = vpop.f32.mrb[0].mxu0
    %v10768 = vadd.f32 %v10607, %v10767
    %v10769 = vpop.f32.mrb[0].mxu0
    %10770 = vmatprep.mubr.bf16.mxu0 %v7345
    %10771 = vmatmul.mubr.bf16.gmra.mrb[0].mxu0 %v7344
    %v10772 = vpop.f32.mrb[0].mxu0
    %v10773 = vadd.f32 %v10612, %v10772
    %v10774 = vpop.f32.mrb[0].mxu0
    %v10775 = vpop.f32.mrb[0].mxu0
    %v10776 = vadd.f32 %v10615, %v10775
    %v10777 = vpop.f32.mrb[0].mxu0
    %10778 = vmatprep.mubr.bf16.mxu0 %v7357
    %10779 = vmatmul.mubr.bf16.gmra.mrb[0].mxu0 %v7356
    %v10780 = vpop.f32.mrb[0].mxu0
    %v10781 = vadd.f32 %v10620, %v10780
    %v10782 = vpop.f32.mrb[0].mxu0
    %v10783 = vpop.f32.mrb[0].mxu0
    %v10784 = vadd.f32 %v10623, %v10783
    %v10785 = vpop.f32.mrb[0].mxu0
    %10786 = vmatprep.mubr.bf16.mxu0 %v7369
    %10787 = vmatmul.mubr.bf16.gmra.mrb[0].mxu0 %v7368
    %v10788 = vpop.f32.mrb[0].mxu0
    %v10789 = vadd.f32 %v10628, %v10788
    %v10790 = vpop.f32.mrb[0].mxu0
    %v10791 = vpop.f32.mrb[0].mxu0
    %v10792 = vadd.f32 %v10631, %v10791
    %v10793 = vpop.f32.mrb[0].mxu0
    %10794 = vdwg.mxu0
    %10795 = vmatprep.subr.bf16.mxu0 0
    %10796 = vmatpush1.bf16.msra.mxu0 %v8837
    %10797 = vmatprep.subr.bf16.mxu0 0
    %10798 = vmatpush1.bf16.msra.mxu0 %v8840
    %10799 = vmatprep.subr.bf16.mxu0 0
    %10800 = vmatpush1.bf16.msra.mxu0 %v8843
    %10801 = vmatprep.subr.bf16.mxu0 0
    %10802 = vmatpush1.bf16.msra.mxu0 %v8846
    %10803 = vmatprep.subr.bf16.mxu0 0
    %10804 = vmatpush1.bf16.msra.mxu0 %v8849
    %10805 = vmatprep.subr.bf16.mxu0 0
    %10806 = vmatpush1.bf16.msra.mxu0 %v8852
    %10807 = vmatprep.subr.bf16.mxu0 0
    %10808 = vmatpush1.bf16.msra.mxu0 %v8855
    %10809 = vmatprep.subr.bf16.mxu0 0
    %10810 = vmatpush1.bf16.msra.mxu0 %v8858
    %10811 = vmatprep.subr.bf16.mxu0 0
    %10812 = vmatpush1.bf16.msra.mxu0 %v8861
    %10813 = vmatprep.subr.bf16.mxu0 0
    %10814 = vmatpush1.bf16.msra.mxu0 %v8864
    %10815 = vmatprep.subr.bf16.mxu0 0
    %10816 = vmatpush1.bf16.msra.mxu0 %v8867
    %10817 = vmatprep.subr.bf16.mxu0 0
    %10818 = vmatpush1.bf16.msra.mxu0 %v8870
    %10819 = vmatprep.subr.bf16.mxu0 0
    %10820 = vmatpush1.bf16.msra.mxu0 %v8873
    %10821 = vmatprep.subr.bf16.mxu0 0
    %10822 = vmatpush1.bf16.msra.mxu0 %v8876
    %10823 = vmatprep.subr.bf16.mxu0 0
    %10824 = vmatpush1.bf16.msra.mxu0 %v8879
    %10825 = vmatprep.subr.bf16.mxu0 0
    %10826 = vmatpush1.bf16.msra.mxu0 %v8882
    %10827 = vmatprep.mubr.bf16.mxu0 %v7191
    %10828 = vmatmul.mubr.bf16.gmra.mrb[0].mxu0 %v7190
    %v10829 = vpop.f32.mrb[0].mxu0
    %v10830 = vadd.f32 %v10669, %v10829
    %v10831 = vpop.f32.mrb[0].mxu0
    %v10832 = vpop.f32.mrb[0].mxu0
    %v10833 = vadd.f32 %v10672, %v10832
    %v10834 = vpop.f32.mrb[0].mxu0
    %10835 = vmatprep.mubr.bf16.mxu0 %v7203
    %10836 = vmatmul.mubr.bf16.gmra.mrb[0].mxu0 %v7202
    %v10837 = vpop.f32.mrb[0].mxu0
    %v10838 = vadd.f32 %v10677, %v10837
    %v10839 = vpop.f32.mrb[0].mxu0
    %v10840 = vpop.f32.mrb[0].mxu0
    %v10841 = vadd.f32 %v10680, %v10840
    %v10842 = vpop.f32.mrb[0].mxu0
    %10843 = vmatprep.mubr.bf16.mxu0 %v7215
    %10844 = vmatmul.mubr.bf16.gmra.mrb[0].mxu0 %v7214
    %v10845 = vpop.f32.mrb[0].mxu0
    %v10846 = vadd.f32 %v10685, %v10845
    %v10847 = vpop.f32.mrb[0].mxu0
    %v10848 = vpop.f32.mrb[0].mxu0
    %v10849 = vadd.f32 %v10688, %v10848
    %v10850 = vpop.f32.mrb[0].mxu0
    %10851 = vmatprep.mubr.bf16.mxu0 %v7227
    %10852 = vmatmul.mubr.bf16.gmra.mrb[0].mxu0 %v7226
    %v10853 = vpop.f32.mrb[0].mxu0
    %v10854 = vadd.f32 %v10693, %v10853
    %v10855 = vpop.f32.mrb[0].mxu0
    %v10856 = vpop.f32.mrb[0].mxu0
    %v10857 = vadd.f32 %v10696, %v10856
    %v10858 = vpop.f32.mrb[0].mxu0
    %10859 = vmatprep.mubr.bf16.mxu0 %v7239
    %10860 = vmatmul.mubr.bf16.gmra.mrb[0].mxu0 %v7238
    %v10861 = vpop.f32.mrb[0].mxu0
    %v10862 = vadd.f32 %v10701, %v10861
    %v10863 = vpop.f32.mrb[0].mxu0
    %v10864 = vpop.f32.mrb[0].mxu0
    %v10865 = vadd.f32 %v10704, %v10864
    %v10866 = vpop.f32.mrb[0].mxu0
    %10867 = vmatprep.mubr.bf16.mxu0 %v7251
    %10868 = vmatmul.mubr.bf16.gmra.mrb[0].mxu0 %v7250
    %v10869 = vpop.f32.mrb[0].mxu0
    %v10870 = vadd.f32 %v10709, %v10869
    %v10871 = vpop.f32.mrb[0].mxu0
    %v10872 = vpop.f32.mrb[0].mxu0
    %v10873 = vadd.f32 %v10712, %v10872
    %v10874 = vpop.f32.mrb[0].mxu0
    %10875 = vmatprep.mubr.bf16.mxu0 %v7263
    %10876 = vmatmul.mubr.bf16.gmra.mrb[0].mxu0 %v7262
    %v10877 = vpop.f32.mrb[0].mxu0
    %v10878 = vadd.f32 %v10717, %v10877
    %v10879 = vpop.f32.mrb[0].mxu0
    %v10880 = vpop.f32.mrb[0].mxu0
    %v10881 = vadd.f32 %v10720, %v10880
    %v10882 = vpop.f32.mrb[0].mxu0
    %10883 = vmatprep.mubr.bf16.mxu0 %v7275
    %10884 = vmatmul.mubr.bf16.gmra.mrb[0].mxu0 %v7274
    %v10885 = vpop.f32.mrb[0].mxu0
    %v10886 = vadd.f32 %v10725, %v10885
    %v10887 = vpop.f32.mrb[0].mxu0
    %v10888 = vpop.f32.mrb[0].mxu0
    %v10889 = vadd.f32 %v10728, %v10888
    %v10890 = vpop.f32.mrb[0].mxu0
    %10891 = vmatprep.mubr.bf16.mxu0 %v7287
    %10892 = vmatmul.mubr.bf16.gmra.mrb[0].mxu0 %v7286
    %v10893 = vpop.f32.mrb[0].mxu0
    %v10894 = vadd.f32 %v10733, %v10893
    %v10895 = vpop.f32.mrb[0].mxu0
    %v10896 = vpop.f32.mrb[0].mxu0
    %v10897 = vadd.f32 %v10736, %v10896
    %v10898 = vpop.f32.mrb[0].mxu0
    %10899 = vmatprep.mubr.bf16.mxu0 %v7299
    %10900 = vmatmul.mubr.bf16.gmra.mrb[0].mxu0 %v7298
    %v10901 = vpop.f32.mrb[0].mxu0
    %v10902 = vadd.f32 %v10741, %v10901
    %v10903 = vpop.f32.mrb[0].mxu0
    %v10904 = vpop.f32.mrb[0].mxu0
    %v10905 = vadd.f32 %v10744, %v10904
    %v10906 = vpop.f32.mrb[0].mxu0
    %10907 = vmatprep.mubr.bf16.mxu0 %v7311
    %10908 = vmatmul.mubr.bf16.gmra.mrb[0].mxu0 %v7310
    %v10909 = vpop.f32.mrb[0].mxu0
    %v10910 = vadd.f32 %v10749, %v10909
    %v10911 = vpop.f32.mrb[0].mxu0
    %v10912 = vpop.f32.mrb[0].mxu0
    %v10913 = vadd.f32 %v10752, %v10912
    %v10914 = vpop.f32.mrb[0].mxu0
    %10915 = vmatprep.mubr.bf16.mxu0 %v7323
    %10916 = vmatmul.mubr.bf16.gmra.mrb[0].mxu0 %v7322
    %v10917 = vpop.f32.mrb[0].mxu0
    %v10918 = vadd.f32 %v10757, %v10917
    %v10919 = vpop.f32.mrb[0].mxu0
    %v10920 = vpop.f32.mrb[0].mxu0
    %v10921 = vadd.f32 %v10760, %v10920
    %v10922 = vpop.f32.mrb[0].mxu0
    %10923 = vmatprep.mubr.bf16.mxu0 %v7335
    %10924 = vmatmul.mubr.bf16.gmra.mrb[0].mxu0 %v7334
    %v10925 = vpop.f32.mrb[0].mxu0
    %v10926 = vadd.f32 %v10765, %v10925
    %v10927 = vpop.f32.mrb[0].mxu0
    %v10928 = vpop.f32.mrb[0].mxu0
    %v10929 = vadd.f32 %v10768, %v10928
    %v10930 = vpop.f32.mrb[0].mxu0
    %10931 = vmatprep.mubr.bf16.mxu0 %v7347
    %10932 = vmatmul.mubr.bf16.gmra.mrb[0].mxu0 %v7346
    %v10933 = vpop.f32.mrb[0].mxu0
    %v10934 = vadd.f32 %v10773, %v10933
    %v10935 = vpop.f32.mrb[0].mxu0
    %v10936 = vpop.f32.mrb[0].mxu0
    %v10937 = vadd.f32 %v10776, %v10936
    %v10938 = vpop.f32.mrb[0].mxu0
    %10939 = vmatprep.mubr.bf16.mxu0 %v7359
    %10940 = vmatmul.mubr.bf16.gmra.mrb[0].mxu0 %v7358
    %v10941 = vpop.f32.mrb[0].mxu0
    %v10942 = vadd.f32 %v10781, %v10941
    %v10943 = vpop.f32.mrb[0].mxu0
    %v10944 = vpop.f32.mrb[0].mxu0
    %v10945 = vadd.f32 %v10784, %v10944
    %v10946 = vpop.f32.mrb[0].mxu0
    %10947 = vmatprep.mubr.bf16.mxu0 %v7371
    %10948 = vmatmul.mubr.bf16.gmra.mrb[0].mxu0 %v7370
    %v10949 = vpop.f32.mrb[0].mxu0
    %v10950 = vadd.f32 %v10789, %v10949
    %v10951 = vpop.f32.mrb[0].mxu0
    %v10952 = vpop.f32.mrb[0].mxu0
    %v10953 = vadd.f32 %v10792, %v10952
    %v10954 = vpop.f32.mrb[0].mxu0
    %10955 = vdwg.mxu0
    %10956 = vmatprep.subr.bf16.mxu0 0
    %10957 = vmatpush1.bf16.msra.mxu0 %v8885
    %10958 = vmatprep.subr.bf16.mxu0 0
    %10959 = vmatpush1.bf16.msra.mxu0 %v8888
    %10960 = vmatprep.subr.bf16.mxu0 0
    %10961 = vmatpush1.bf16.msra.mxu0 %v8891
    %10962 = vmatprep.subr.bf16.mxu0 0
    %10963 = vmatpush1.bf16.msra.mxu0 %v8894
    %10964 = vmatprep.subr.bf16.mxu0 0
    %10965 = vmatpush1.bf16.msra.mxu0 %v8897
    %10966 = vmatprep.subr.bf16.mxu0 0
    %10967 = vmatpush1.bf16.msra.mxu0 %v8900
    %10968 = vmatprep.subr.bf16.mxu0 0
    %10969 = vmatpush1.bf16.msra.mxu0 %v8903
    %10970 = vmatprep.subr.bf16.mxu0 0
    %10971 = vmatpush1.bf16.msra.mxu0 %v8906
    %10972 = vmatprep.subr.bf16.mxu0 0
    %10973 = vmatpush1.bf16.msra.mxu0 %v8909
    %10974 = vmatprep.subr.bf16.mxu0 0
    %10975 = vmatpush1.bf16.msra.mxu0 %v8912
    %10976 = vmatprep.subr.bf16.mxu0 0
    %10977 = vmatpush1.bf16.msra.mxu0 %v8915
    %10978 = vmatprep.subr.bf16.mxu0 0
    %10979 = vmatpush1.bf16.msra.mxu0 %v8918
    %10980 = vmatprep.subr.bf16.mxu0 0
    %10981 = vmatpush1.bf16.msra.mxu0 %v8921
    %10982 = vmatprep.subr.bf16.mxu0 0
    %10983 = vmatpush1.bf16.msra.mxu0 %v8924
    %10984 = vmatprep.subr.bf16.mxu0 0
    %10985 = vmatpush1.bf16.msra.mxu0 %v8927
    %10986 = vmatprep.subr.bf16.mxu0 0
    %10987 = vmatpush1.bf16.msra.mxu0 %v8930
    %10988 = vmatprep.mubr.bf16.mxu0 %v7193
    %10989 = vmatmul.mubr.bf16.gmra.mrb[0].mxu0 %v7192
    %v10990 = vpop.f32.mrb[0].mxu0
    %v10991 = vadd.f32 %v10830, %v10990
    %v10992 = vpop.f32.mrb[0].mxu0
    %v10993 = vpop.f32.mrb[0].mxu0
    %v10994 = vadd.f32 %v10833, %v10993
    %v10995 = vpop.f32.mrb[0].mxu0
    %10996 = vmatprep.mubr.bf16.mxu0 %v7205
    %10997 = vmatmul.mubr.bf16.gmra.mrb[0].mxu0 %v7204
    %v10998 = vpop.f32.mrb[0].mxu0
    %v10999 = vadd.f32 %v10838, %v10998
    %v11000 = vpop.f32.mrb[0].mxu0
    %v11001 = vpop.f32.mrb[0].mxu0
    %v11002 = vadd.f32 %v10841, %v11001
    %v11003 = vpop.f32.mrb[0].mxu0
    %11004 = vmatprep.mubr.bf16.mxu0 %v7217
    %11005 = vmatmul.mubr.bf16.gmra.mrb[0].mxu0 %v7216
    %v11006 = vpop.f32.mrb[0].mxu0
    %v11007 = vadd.f32 %v10846, %v11006
    %v11008 = vpop.f32.mrb[0].mxu0
    %v11009 = vpop.f32.mrb[0].mxu0
    %v11010 = vadd.f32 %v10849, %v11009
    %v11011 = vpop.f32.mrb[0].mxu0
    %11012 = vmatprep.mubr.bf16.mxu0 %v7229
    %11013 = vmatmul.mubr.bf16.gmra.mrb[0].mxu0 %v7228
    %v11014 = vpop.f32.mrb[0].mxu0
    %v11015 = vadd.f32 %v10854, %v11014
    %v11016 = vpop.f32.mrb[0].mxu0
    %v11017 = vpop.f32.mrb[0].mxu0
    %v11018 = vadd.f32 %v10857, %v11017
    %v11019 = vpop.f32.mrb[0].mxu0
    %11020 = vmatprep.mubr.bf16.mxu0 %v7241
    %11021 = vmatmul.mubr.bf16.gmra.mrb[0].mxu0 %v7240
    %v11022 = vpop.f32.mrb[0].mxu0
    %v11023 = vadd.f32 %v10862, %v11022
    %v11024 = vpop.f32.mrb[0].mxu0
    %v11025 = vpop.f32.mrb[0].mxu0
    %v11026 = vadd.f32 %v10865, %v11025
    %v11027 = vpop.f32.mrb[0].mxu0
    %11028 = vmatprep.mubr.bf16.mxu0 %v7253
    %11029 = vmatmul.mubr.bf16.gmra.mrb[0].mxu0 %v7252
    %v11030 = vpop.f32.mrb[0].mxu0
    %v11031 = vadd.f32 %v10870, %v11030
    %v11032 = vpop.f32.mrb[0].mxu0
    %v11033 = vpop.f32.mrb[0].mxu0
    %v11034 = vadd.f32 %v10873, %v11033
    %v11035 = vpop.f32.mrb[0].mxu0
    %11036 = vmatprep.mubr.bf16.mxu0 %v7265
    %11037 = vmatmul.mubr.bf16.gmra.mrb[0].mxu0 %v7264
    %v11038 = vpop.f32.mrb[0].mxu0
    %v11039 = vadd.f32 %v10878, %v11038
    %v11040 = vpop.f32.mrb[0].mxu0
    %v11041 = vpop.f32.mrb[0].mxu0
    %v11042 = vadd.f32 %v10881, %v11041
    %v11043 = vpop.f32.mrb[0].mxu0
    %11044 = vmatprep.mubr.bf16.mxu0 %v7277
    %11045 = vmatmul.mubr.bf16.gmra.mrb[0].mxu0 %v7276
    %v11046 = vpop.f32.mrb[0].mxu0
    %v11047 = vadd.f32 %v10886, %v11046
    %v11048 = vpop.f32.mrb[0].mxu0
    %v11049 = vpop.f32.mrb[0].mxu0
    %v11050 = vadd.f32 %v10889, %v11049
    %v11051 = vpop.f32.mrb[0].mxu0
    %11052 = vmatprep.mubr.bf16.mxu0 %v7289
    %11053 = vmatmul.mubr.bf16.gmra.mrb[0].mxu0 %v7288
    %v11054 = vpop.f32.mrb[0].mxu0
    %v11055 = vadd.f32 %v10894, %v11054
    %v11056 = vpop.f32.mrb[0].mxu0
    %v11057 = vpop.f32.mrb[0].mxu0
    %v11058 = vadd.f32 %v10897, %v11057
    %v11059 = vpop.f32.mrb[0].mxu0
    %11060 = vmatprep.mubr.bf16.mxu0 %v7301
    %11061 = vmatmul.mubr.bf16.gmra.mrb[0].mxu0 %v7300
    %v11062 = vpop.f32.mrb[0].mxu0
    %v11063 = vadd.f32 %v10902, %v11062
    %v11064 = vpop.f32.mrb[0].mxu0
    %v11065 = vpop.f32.mrb[0].mxu0
    %v11066 = vadd.f32 %v10905, %v11065
    %v11067 = vpop.f32.mrb[0].mxu0
    %11068 = vmatprep.mubr.bf16.mxu0 %v7313
    %11069 = vmatmul.mubr.bf16.gmra.mrb[0].mxu0 %v7312
    %v11070 = vpop.f32.mrb[0].mxu0
    %v11071 = vadd.f32 %v10910, %v11070
    %v11072 = vpop.f32.mrb[0].mxu0
    %v11073 = vpop.f32.mrb[0].mxu0
    %v11074 = vadd.f32 %v10913, %v11073
    %v11075 = vpop.f32.mrb[0].mxu0
    %11076 = vmatprep.mubr.bf16.mxu0 %v7325
    %11077 = vmatmul.mubr.bf16.gmra.mrb[0].mxu0 %v7324
    %v11078 = vpop.f32.mrb[0].mxu0
    %v11079 = vadd.f32 %v10918, %v11078
    %v11080 = vpop.f32.mrb[0].mxu0
    %v11081 = vpop.f32.mrb[0].mxu0
    %v11082 = vadd.f32 %v10921, %v11081
    %v11083 = vpop.f32.mrb[0].mxu0
    %11084 = vmatprep.mubr.bf16.mxu0 %v7337
    %11085 = vmatmul.mubr.bf16.gmra.mrb[0].mxu0 %v7336
    %v11086 = vpop.f32.mrb[0].mxu0
    %v11087 = vadd.f32 %v10926, %v11086
    %v11088 = vpop.f32.mrb[0].mxu0
    %v11089 = vpop.f32.mrb[0].mxu0
    %v11090 = vadd.f32 %v10929, %v11089
    %v11091 = vpop.f32.mrb[0].mxu0
    %11092 = vmatprep.mubr.bf16.mxu0 %v7349
    %11093 = vmatmul.mubr.bf16.gmra.mrb[0].mxu0 %v7348
    %v11094 = vpop.f32.mrb[0].mxu0
    %v11095 = vadd.f32 %v10934, %v11094
    %v11096 = vpop.f32.mrb[0].mxu0
    %v11097 = vpop.f32.mrb[0].mxu0
    %v11098 = vadd.f32 %v10937, %v11097
    %v11099 = vpop.f32.mrb[0].mxu0
    %11100 = vmatprep.mubr.bf16.mxu0 %v7361
    %11101 = vmatmul.mubr.bf16.gmra.mrb[0].mxu0 %v7360
    %v11102 = vpop.f32.mrb[0].mxu0
    %v11103 = vadd.f32 %v10942, %v11102
    %v11104 = vpop.f32.mrb[0].mxu0
    %v11105 = vpop.f32.mrb[0].mxu0
    %v11106 = vadd.f32 %v10945, %v11105
    %v11107 = vpop.f32.mrb[0].mxu0
    %11108 = vmatprep.mubr.bf16.mxu0 %v7373
    %11109 = vmatmul.mubr.bf16.gmra.mrb[0].mxu0 %v7372
    %v11110 = vpop.f32.mrb[0].mxu0
    %v11111 = vadd.f32 %v10950, %v11110
    %v11112 = vpop.f32.mrb[0].mxu0
    %v11113 = vpop.f32.mrb[0].mxu0
    %v11114 = vadd.f32 %v10953, %v11113
    %v11115 = vpop.f32.mrb[0].mxu0
    %11116 = vdwg.mxu0
    %11117 = vmatprep.subr.bf16.mxu0 0
    %11118 = vmatpush1.bf16.msra.mxu0 %v8933
    %11119 = vmatprep.subr.bf16.mxu0 0
    %11120 = vmatpush1.bf16.msra.mxu0 %v8936
    %11121 = vmatprep.subr.bf16.mxu0 0
    %11122 = vmatpush1.bf16.msra.mxu0 %v8939
    %11123 = vmatprep.subr.bf16.mxu0 0
    %11124 = vmatpush1.bf16.msra.mxu0 %v8942
    %11125 = vmatprep.subr.bf16.mxu0 0
    %11126 = vmatpush1.bf16.msra.mxu0 %v8945
    %11127 = vmatprep.subr.bf16.mxu0 0
    %11128 = vmatpush1.bf16.msra.mxu0 %v8948
    %11129 = vmatprep.subr.bf16.mxu0 0
    %11130 = vmatpush1.bf16.msra.mxu0 %v8951
    %11131 = vmatprep.subr.bf16.mxu0 0
    %11132 = vmatpush1.bf16.msra.mxu0 %v8954
    %11133 = vmatprep.subr.bf16.mxu0 0
    %11134 = vmatpush1.bf16.msra.mxu0 %v8957
    %11135 = vmatprep.subr.bf16.mxu0 0
    %11136 = vmatpush1.bf16.msra.mxu0 %v8960
    %11137 = vmatprep.subr.bf16.mxu0 0
    %11138 = vmatpush1.bf16.msra.mxu0 %v8963
    %11139 = vmatprep.subr.bf16.mxu0 0
    %11140 = vmatpush1.bf16.msra.mxu0 %v8966
    %11141 = vmatprep.subr.bf16.mxu0 0
    %11142 = vmatpush1.bf16.msra.mxu0 %v8969
    %11143 = vmatprep.subr.bf16.mxu0 0
    %11144 = vmatpush1.bf16.msra.mxu0 %v8972
    %11145 = vmatprep.subr.bf16.mxu0 0
    %11146 = vmatpush1.bf16.msra.mxu0 %v8975
    %11147 = vmatprep.subr.bf16.mxu0 0
    %11148 = vmatpush1.bf16.msra.mxu0 %v8978
    %11149 = vmatprep.mubr.bf16.mxu0 %v7195
    %11150 = vmatmul.mubr.bf16.gmra.mrb[0].mxu0 %v7194
    %v11151 = vpop.f32.mrb[0].mxu0
    %v11152 = vadd.f32 %v10991, %v11151
    %v11153 = vpop.f32.mrb[0].mxu0
    %v11154 = vpop.f32.mrb[0].mxu0
    %v11155 = vadd.f32 %v10994, %v11154
    %v11156 = vpop.f32.mrb[0].mxu0
    %11157 = vmatprep.mubr.bf16.mxu0 %v7207
    %11158 = vmatmul.mubr.bf16.gmra.mrb[0].mxu0 %v7206
    %v11159 = vpop.f32.mrb[0].mxu0
    %v11160 = vadd.f32 %v10999, %v11159
    %v11161 = vpop.f32.mrb[0].mxu0
    %v11162 = vpop.f32.mrb[0].mxu0
    %v11163 = vadd.f32 %v11002, %v11162
    %v11164 = vpop.f32.mrb[0].mxu0
    %11165 = vmatprep.mubr.bf16.mxu0 %v7219
    %11166 = vmatmul.mubr.bf16.gmra.mrb[0].mxu0 %v7218
    %v11167 = vpop.f32.mrb[0].mxu0
    %v11168 = vadd.f32 %v11007, %v11167
    %v11169 = vpop.f32.mrb[0].mxu0
    %v11170 = vpop.f32.mrb[0].mxu0
    %v11171 = vadd.f32 %v11010, %v11170
    %v11172 = vpop.f32.mrb[0].mxu0
    %11173 = vmatprep.mubr.bf16.mxu0 %v7231
    %11174 = vmatmul.mubr.bf16.gmra.mrb[0].mxu0 %v7230
    %v11175 = vpop.f32.mrb[0].mxu0
    %v11176 = vadd.f32 %v11015, %v11175
    %v11177 = vpop.f32.mrb[0].mxu0
    %v11178 = vpop.f32.mrb[0].mxu0
    %v11179 = vadd.f32 %v11018, %v11178
    %v11180 = vpop.f32.mrb[0].mxu0
    %11181 = vmatprep.mubr.bf16.mxu0 %v7243
    %11182 = vmatmul.mubr.bf16.gmra.mrb[0].mxu0 %v7242
    %v11183 = vpop.f32.mrb[0].mxu0
    %v11184 = vadd.f32 %v11023, %v11183
    %v11185 = vpop.f32.mrb[0].mxu0
    %v11186 = vpop.f32.mrb[0].mxu0
    %v11187 = vadd.f32 %v11026, %v11186
    %v11188 = vpop.f32.mrb[0].mxu0
    %11189 = vmatprep.mubr.bf16.mxu0 %v7255
    %11190 = vmatmul.mubr.bf16.gmra.mrb[0].mxu0 %v7254
    %v11191 = vpop.f32.mrb[0].mxu0
    %v11192 = vadd.f32 %v11031, %v11191
    %v11193 = vpop.f32.mrb[0].mxu0
    %v11194 = vpop.f32.mrb[0].mxu0
    %v11195 = vadd.f32 %v11034, %v11194
    %v11196 = vpop.f32.mrb[0].mxu0
    %11197 = vmatprep.mubr.bf16.mxu0 %v7267
    %11198 = vmatmul.mubr.bf16.gmra.mrb[0].mxu0 %v7266
    %v11199 = vpop.f32.mrb[0].mxu0
    %v11200 = vadd.f32 %v11039, %v11199
    %v11201 = vpop.f32.mrb[0].mxu0
    %v11202 = vpop.f32.mrb[0].mxu0
    %v11203 = vadd.f32 %v11042, %v11202
    %v11204 = vpop.f32.mrb[0].mxu0
    %11205 = vmatprep.mubr.bf16.mxu0 %v7279
    %11206 = vmatmul.mubr.bf16.gmra.mrb[0].mxu0 %v7278
    %v11207 = vpop.f32.mrb[0].mxu0
    %v11208 = vadd.f32 %v11047, %v11207
    %v11209 = vpop.f32.mrb[0].mxu0
    %v11210 = vpop.f32.mrb[0].mxu0
    %v11211 = vadd.f32 %v11050, %v11210
    %v11212 = vpop.f32.mrb[0].mxu0
    %11213 = vmatprep.mubr.bf16.mxu0 %v7291
    %11214 = vmatmul.mubr.bf16.gmra.mrb[0].mxu0 %v7290
    %v11215 = vpop.f32.mrb[0].mxu0
    %v11216 = vadd.f32 %v11055, %v11215
    %v11217 = vpop.f32.mrb[0].mxu0
    %v11218 = vpop.f32.mrb[0].mxu0
    %v11219 = vadd.f32 %v11058, %v11218
    %v11220 = vpop.f32.mrb[0].mxu0
    %11221 = vmatprep.mubr.bf16.mxu0 %v7303
    %11222 = vmatmul.mubr.bf16.gmra.mrb[0].mxu0 %v7302
    %v11223 = vpop.f32.mrb[0].mxu0
    %v11224 = vadd.f32 %v11063, %v11223
    %v11225 = vpop.f32.mrb[0].mxu0
    %v11226 = vpop.f32.mrb[0].mxu0
    %v11227 = vadd.f32 %v11066, %v11226
    %v11228 = vpop.f32.mrb[0].mxu0
    %11229 = vmatprep.mubr.bf16.mxu0 %v7315
    %11230 = vmatmul.mubr.bf16.gmra.mrb[0].mxu0 %v7314
    %v11231 = vpop.f32.mrb[0].mxu0
    %v11232 = vadd.f32 %v11071, %v11231
    %v11233 = vpop.f32.mrb[0].mxu0
    %v11234 = vpop.f32.mrb[0].mxu0
    %v11235 = vadd.f32 %v11074, %v11234
    %v11236 = vpop.f32.mrb[0].mxu0
    %11237 = vmatprep.mubr.bf16.mxu0 %v7327
    %11238 = vmatmul.mubr.bf16.gmra.mrb[0].mxu0 %v7326
    %v11239 = vpop.f32.mrb[0].mxu0
    %v11240 = vadd.f32 %v11079, %v11239
    %v11241 = vpop.f32.mrb[0].mxu0
    %v11242 = vpop.f32.mrb[0].mxu0
    %v11243 = vadd.f32 %v11082, %v11242
    %v11244 = vpop.f32.mrb[0].mxu0
    %11245 = vmatprep.mubr.bf16.mxu0 %v7339
    %11246 = vmatmul.mubr.bf16.gmra.mrb[0].mxu0 %v7338
    %v11247 = vpop.f32.mrb[0].mxu0
    %v11248 = vadd.f32 %v11087, %v11247
    %v11249 = vpop.f32.mrb[0].mxu0
    %v11250 = vpop.f32.mrb[0].mxu0
    %v11251 = vadd.f32 %v11090, %v11250
    %v11252 = vpop.f32.mrb[0].mxu0
    %11253 = vmatprep.mubr.bf16.mxu0 %v7351
    %11254 = vmatmul.mubr.bf16.gmra.mrb[0].mxu0 %v7350
    %v11255 = vpop.f32.mrb[0].mxu0
    %v11256 = vadd.f32 %v11095, %v11255
    %v11257 = vpop.f32.mrb[0].mxu0
    %v11258 = vpop.f32.mrb[0].mxu0
    %v11259 = vadd.f32 %v11098, %v11258
    %v11260 = vpop.f32.mrb[0].mxu0
    %11261 = vmatprep.mubr.bf16.mxu0 %v7363
    %11262 = vmatmul.mubr.bf16.gmra.mrb[0].mxu0 %v7362
    %v11263 = vpop.f32.mrb[0].mxu0
    %v11264 = vadd.f32 %v11103, %v11263
    %v11265 = vpop.f32.mrb[0].mxu0
    %v11266 = vpop.f32.mrb[0].mxu0
    %v11267 = vadd.f32 %v11106, %v11266
    %v11268 = vpop.f32.mrb[0].mxu0
    %11269 = vmatprep.mubr.bf16.mxu0 %v7375
    %11270 = vmatmul.mubr.bf16.gmra.mrb[0].mxu0 %v7374
    %v11271 = vpop.f32.mrb[0].mxu0
    %v11272 = vadd.f32 %v11111, %v11271
    %v11273 = vpop.f32.mrb[0].mxu0
    %v11274 = vpop.f32.mrb[0].mxu0
    %v11275 = vadd.f32 %v11114, %v11274
    %v11276 = vpop.f32.mrb[0].mxu0
    %11277 = vdwg.mxu0
    %11278 = vmatprep.subr.bf16.mxu0 0
    %11279 = vmatpush1.bf16.msra.mxu0 %v8981
    %11280 = vmatprep.subr.bf16.mxu0 0
    %11281 = vmatpush1.bf16.msra.mxu0 %v8984
    %11282 = vmatprep.subr.bf16.mxu0 0
    %11283 = vmatpush1.bf16.msra.mxu0 %v8987
    %11284 = vmatprep.subr.bf16.mxu0 0
    %11285 = vmatpush1.bf16.msra.mxu0 %v8990
    %11286 = vmatprep.subr.bf16.mxu0 0
    %11287 = vmatpush1.bf16.msra.mxu0 %v8993
    %11288 = vmatprep.subr.bf16.mxu0 0
    %11289 = vmatpush1.bf16.msra.mxu0 %v8996
    %11290 = vmatprep.subr.bf16.mxu0 0
    %11291 = vmatpush1.bf16.msra.mxu0 %v8999
    %11292 = vmatprep.subr.bf16.mxu0 0
    %11293 = vmatpush1.bf16.msra.mxu0 %v9002
    %11294 = vmatprep.subr.bf16.mxu0 0
    %11295 = vmatpush1.bf16.msra.mxu0 %v9005
    %11296 = vmatprep.subr.bf16.mxu0 0
    %11297 = vmatpush1.bf16.msra.mxu0 %v9008
    %11298 = vmatprep.subr.bf16.mxu0 0
    %11299 = vmatpush1.bf16.msra.mxu0 %v9011
    %11300 = vmatprep.subr.bf16.mxu0 0
    %11301 = vmatpush1.bf16.msra.mxu0 %v9014
    %11302 = vmatprep.subr.bf16.mxu0 0
    %11303 = vmatpush1.bf16.msra.mxu0 %v9017
    %11304 = vmatprep.subr.bf16.mxu0 0
    %11305 = vmatpush1.bf16.msra.mxu0 %v9020
    %11306 = vmatprep.subr.bf16.mxu0 0
    %11307 = vmatpush1.bf16.msra.mxu0 %v9023
    %11308 = vmatprep.subr.bf16.mxu0 0
    %11309 = vmatpush1.bf16.msra.mxu0 %v9026
    %11310 = vmatprep.mubr.bf16.mxu0 %v7197
    %11311 = vmatmul.mubr.bf16.gmra.mrb[0].mxu0 %v7196
    %v11312 = vpop.f32.mrb[0].mxu0
    %v11313 = vadd.f32 %v11152, %v11312
    %v11314 = vpop.f32.mrb[0].mxu0
    %v11315 = vpop.f32.mrb[0].mxu0
    %v11316 = vadd.f32 %v11155, %v11315
    %v11317 = vpop.f32.mrb[0].mxu0
    %11318 = vmatprep.mubr.bf16.mxu0 %v7209
    %11319 = vmatmul.mubr.bf16.gmra.mrb[0].mxu0 %v7208
    %v11320 = vpop.f32.mrb[0].mxu0
    %v11321 = vadd.f32 %v11160, %v11320
    %v11322 = vpop.f32.mrb[0].mxu0
    %v11323 = vpop.f32.mrb[0].mxu0
    %v11324 = vadd.f32 %v11163, %v11323
    %v11325 = vpop.f32.mrb[0].mxu0
    %11326 = vmatprep.mubr.bf16.mxu0 %v7221
    %11327 = vmatmul.mubr.bf16.gmra.mrb[0].mxu0 %v7220
    %v11328 = vpop.f32.mrb[0].mxu0
    %v11329 = vadd.f32 %v11168, %v11328
    %v11330 = vpop.f32.mrb[0].mxu0
    %v11331 = vpop.f32.mrb[0].mxu0
    %v11332 = vadd.f32 %v11171, %v11331
    %v11333 = vpop.f32.mrb[0].mxu0
    %11334 = vmatprep.mubr.bf16.mxu0 %v7233
    %11335 = vmatmul.mubr.bf16.gmra.mrb[0].mxu0 %v7232
    %v11336 = vpop.f32.mrb[0].mxu0
    %v11337 = vadd.f32 %v11176, %v11336
    %v11338 = vpop.f32.mrb[0].mxu0
    %v11339 = vpop.f32.mrb[0].mxu0
    %v11340 = vadd.f32 %v11179, %v11339
    %v11341 = vpop.f32.mrb[0].mxu0
    %11342 = vmatprep.mubr.bf16.mxu0 %v7245
    %11343 = vmatmul.mubr.bf16.gmra.mrb[0].mxu0 %v7244
    %v11344 = vpop.f32.mrb[0].mxu0
    %v11345 = vadd.f32 %v11184, %v11344
    %v11346 = vpop.f32.mrb[0].mxu0
    %v11347 = vpop.f32.mrb[0].mxu0
    %v11348 = vadd.f32 %v11187, %v11347
    %v11349 = vpop.f32.mrb[0].mxu0
    %11350 = vmatprep.mubr.bf16.mxu0 %v7257
    %11351 = vmatmul.mubr.bf16.gmra.mrb[0].mxu0 %v7256
    %v11352 = vpop.f32.mrb[0].mxu0
    %v11353 = vadd.f32 %v11192, %v11352
    %v11354 = vpop.f32.mrb[0].mxu0
    %v11355 = vpop.f32.mrb[0].mxu0
    %v11356 = vadd.f32 %v11195, %v11355
    %v11357 = vpop.f32.mrb[0].mxu0
    %11358 = vmatprep.mubr.bf16.mxu0 %v7269
    %11359 = vmatmul.mubr.bf16.gmra.mrb[0].mxu0 %v7268
    %v11360 = vpop.f32.mrb[0].mxu0
    %v11361 = vadd.f32 %v11200, %v11360
    %v11362 = vpop.f32.mrb[0].mxu0
    %v11363 = vpop.f32.mrb[0].mxu0
    %v11364 = vadd.f32 %v11203, %v11363
    %v11365 = vpop.f32.mrb[0].mxu0
    %11366 = vmatprep.mubr.bf16.mxu0 %v7281
    %11367 = vmatmul.mubr.bf16.gmra.mrb[0].mxu0 %v7280
    %v11368 = vpop.f32.mrb[0].mxu0
    %v11369 = vadd.f32 %v11208, %v11368
    %v11370 = vpop.f32.mrb[0].mxu0
    %v11371 = vpop.f32.mrb[0].mxu0
    %v11372 = vadd.f32 %v11211, %v11371
    %v11373 = vpop.f32.mrb[0].mxu0
    %11374 = vmatprep.mubr.bf16.mxu0 %v7293
    %11375 = vmatmul.mubr.bf16.gmra.mrb[0].mxu0 %v7292
    %v11376 = vpop.f32.mrb[0].mxu0
    %v11377 = vadd.f32 %v11216, %v11376
    %v11378 = vpop.f32.mrb[0].mxu0
    %v11379 = vpop.f32.mrb[0].mxu0
    %v11380 = vadd.f32 %v11219, %v11379
    %v11381 = vpop.f32.mrb[0].mxu0
    %11382 = vmatprep.mubr.bf16.mxu0 %v7305
    %11383 = vmatmul.mubr.bf16.gmra.mrb[0].mxu0 %v7304
    %v11384 = vpop.f32.mrb[0].mxu0
    %v11385 = vadd.f32 %v11224, %v11384
    %v11386 = vpop.f32.mrb[0].mxu0
    %v11387 = vpop.f32.mrb[0].mxu0
    %v11388 = vadd.f32 %v11227, %v11387
    %v11389 = vpop.f32.mrb[0].mxu0
    %11390 = vmatprep.mubr.bf16.mxu0 %v7317
    %11391 = vmatmul.mubr.bf16.gmra.mrb[0].mxu0 %v7316
    %v11392 = vpop.f32.mrb[0].mxu0
    %v11393 = vadd.f32 %v11232, %v11392
    %v11394 = vpop.f32.mrb[0].mxu0
    %v11395 = vpop.f32.mrb[0].mxu0
    %v11396 = vadd.f32 %v11235, %v11395
    %v11397 = vpop.f32.mrb[0].mxu0
    %11398 = vmatprep.mubr.bf16.mxu0 %v7329
    %11399 = vmatmul.mubr.bf16.gmra.mrb[0].mxu0 %v7328
    %v11400 = vpop.f32.mrb[0].mxu0
    %v11401 = vadd.f32 %v11240, %v11400
    %v11402 = vpop.f32.mrb[0].mxu0
    %v11403 = vpop.f32.mrb[0].mxu0
    %v11404 = vadd.f32 %v11243, %v11403
    %v11405 = vpop.f32.mrb[0].mxu0
    %11406 = vmatprep.mubr.bf16.mxu0 %v7341
    %11407 = vmatmul.mubr.bf16.gmra.mrb[0].mxu0 %v7340
    %v11408 = vpop.f32.mrb[0].mxu0
    %v11409 = vadd.f32 %v11248, %v11408
    %v11410 = vpop.f32.mrb[0].mxu0
    %v11411 = vpop.f32.mrb[0].mxu0
    %v11412 = vadd.f32 %v11251, %v11411
    %v11413 = vpop.f32.mrb[0].mxu0
    %11414 = vmatprep.mubr.bf16.mxu0 %v7353
    %11415 = vmatmul.mubr.bf16.gmra.mrb[0].mxu0 %v7352
    %v11416 = vpop.f32.mrb[0].mxu0
    %v11417 = vadd.f32 %v11256, %v11416
    %v11418 = vpop.f32.mrb[0].mxu0
    %v11419 = vpop.f32.mrb[0].mxu0
    %v11420 = vadd.f32 %v11259, %v11419
    %v11421 = vpop.f32.mrb[0].mxu0
    %11422 = vmatprep.mubr.bf16.mxu0 %v7365
    %11423 = vmatmul.mubr.bf16.gmra.mrb[0].mxu0 %v7364
    %v11424 = vpop.f32.mrb[0].mxu0
    %v11425 = vadd.f32 %v11264, %v11424
    %v11426 = vpop.f32.mrb[0].mxu0
    %v11427 = vpop.f32.mrb[0].mxu0
    %v11428 = vadd.f32 %v11267, %v11427
    %v11429 = vpop.f32.mrb[0].mxu0
    %11430 = vmatprep.mubr.bf16.mxu0 %v7377
    %11431 = vmatmul.mubr.bf16.gmra.mrb[0].mxu0 %v7376
    %v11432 = vpop.f32.mrb[0].mxu0
    %v11433 = vadd.f32 %v11272, %v11432
    %v11434 = vpop.f32.mrb[0].mxu0
    %v11435 = vpop.f32.mrb[0].mxu0
    %v11436 = vadd.f32 %v11275, %v11435
    %v11437 = vpop.f32.mrb[0].mxu0
    %11438 = vdwg.mxu0
    %11439 = vst [vmem:[#allocation14] sm:$0xff] %v10315
    %11440 = vst [vmem:[#allocation14 + $0x8] sm:$0xff] %v10317
    %11441 = vst [vmem:[#allocation14 + $0x10] sm:$0xff] %v11313
    %11442 = vst [vmem:[#allocation14 + $0x18] sm:$0xff] %v10319
    %11443 = vst [vmem:[#allocation14 + $0x20] sm:$0xff] %v10321
    %11444 = vst [vmem:[#allocation14 + $0x28] sm:$0xff] %v11316
    %11445 = vst [vmem:[#allocation14 + $0x30] sm:$0xff] %v10325
    %11446 = vst [vmem:[#allocation14 + $0x38] sm:$0xff] %v10327
    %11447 = vst [vmem:[#allocation14 + $0x40] sm:$0xff] %v11321
    %11448 = vst [vmem:[#allocation14 + $0x48] sm:$0xff] %v10329
    %11449 = vst [vmem:[#allocation14 + $0x50] sm:$0xff] %v10331
    %11450 = vst [vmem:[#allocation14 + $0x58] sm:$0xff] %v11324
    %11451 = vst [vmem:[#allocation14 + $0x60] sm:$0xff] %v10335
    %11452 = vst [vmem:[#allocation14 + $0x68] sm:$0xff] %v10337
    %11453 = vst [vmem:[#allocation14 + $0x70] sm:$0xff] %v11329
    %11454 = vst [vmem:[#allocation14 + $0x78] sm:$0xff] %v10339
    %11455 = vst [vmem:[#allocation14 + $0x80] sm:$0xff] %v10341
    %11456 = vst [vmem:[#allocation14 + $0x88] sm:$0xff] %v11332
    %11457 = vst [vmem:[#allocation14 + $0x90] sm:$0xff] %v10345
    %11458 = vst [vmem:[#allocation14 + $0x98] sm:$0xff] %v10347
    %11459 = vst [vmem:[#allocation14 + $0xa0] sm:$0xff] %v11337
    %11460 = vst [vmem:[#allocation14 + $0xa8] sm:$0xff] %v10349
    %11461 = vst [vmem:[#allocation14 + $0xb0] sm:$0xff] %v10351
    %11462 = vst [vmem:[#allocation14 + $0xb8] sm:$0xff] %v11340
    %11463 = vst [vmem:[#allocation14 + $0xc0] sm:$0xff] %v10355
    %11464 = vst [vmem:[#allocation14 + $0xc8] sm:$0xff] %v10357
    %11465 = vst [vmem:[#allocation14 + $0xd0] sm:$0xff] %v11345
    %11466 = vst [vmem:[#allocation14 + $0xd8] sm:$0xff] %v10359
    %11467 = vst [vmem:[#allocation14 + $0xe0] sm:$0xff] %v10361
    %11468 = vst [vmem:[#allocation14 + $0xe8] sm:$0xff] %v11348
    %11469 = vst [vmem:[#allocation14 + $0xf0] sm:$0xff] %v10365
    %11470 = vst [vmem:[#allocation14 + $0xf8] sm:$0xff] %v10367
    %11471 = vst [vmem:[#allocation14 + $0x100] sm:$0xff] %v11353
    %11472 = vst [vmem:[#allocation14 + $0x108] sm:$0xff] %v10369
    %11473 = vst [vmem:[#allocation14 + $0x110] sm:$0xff] %v10371
    %11474 = vst [vmem:[#allocation14 + $0x118] sm:$0xff] %v11356
    %11475 = vst [vmem:[#allocation14 + $0x120] sm:$0xff] %v10375
    %11476 = vst [vmem:[#allocation14 + $0x128] sm:$0xff] %v10377
    %11477 = vst [vmem:[#allocation14 + $0x130] sm:$0xff] %v11361
    %11478 = vst [vmem:[#allocation14 + $0x138] sm:$0xff] %v10379
    %11479 = vst [vmem:[#allocation14 + $0x140] sm:$0xff] %v10381
    %11480 = vst [vmem:[#allocation14 + $0x148] sm:$0xff] %v11364
    %11481 = vst [vmem:[#allocation14 + $0x150] sm:$0xff] %v10385
    %11482 = vst [vmem:[#allocation14 + $0x158] sm:$0xff] %v10387
    %11483 = vst [vmem:[#allocation14 + $0x160] sm:$0xff] %v11369
    %11484 = vst [vmem:[#allocation14 + $0x168] sm:$0xff] %v10389
    %11485 = vst [vmem:[#allocation14 + $0x170] sm:$0xff] %v10391
    %11486 = vst [vmem:[#allocation14 + $0x178] sm:$0xff] %v11372
    %11487 = vst [vmem:[#allocation14 + $0x180] sm:$0xff] %v10395
    %11488 = vst [vmem:[#allocation14 + $0x188] sm:$0xff] %v10397
    %11489 = vst [vmem:[#allocation14 + $0x190] sm:$0xff] %v11377
    %11490 = vst [vmem:[#allocation14 + $0x198] sm:$0xff] %v10399
    %11491 = vst [vmem:[#allocation14 + $0x1a0] sm:$0xff] %v10401
    %11492 = vst [vmem:[#allocation14 + $0x1a8] sm:$0xff] %v11380
    %11493 = vst [vmem:[#allocation14 + $0x1b0] sm:$0xff] %v10405
    %11494 = vst [vmem:[#allocation14 + $0x1b8] sm:$0xff] %v10407
    %11495 = vst [vmem:[#allocation14 + $0x1c0] sm:$0xff] %v11385
    %11496 = vst [vmem:[#allocation14 + $0x1c8] sm:$0xff] %v10409
    %11497 = vst [vmem:[#allocation14 + $0x1d0] sm:$0xff] %v10411
    %11498 = vst [vmem:[#allocation14 + $0x1d8] sm:$0xff] %v11388
    %11499 = vst [vmem:[#allocation14 + $0x1e0] sm:$0xff] %v10415
    %11500 = vst [vmem:[#allocation14 + $0x1e8] sm:$0xff] %v10417
    %11501 = vst [vmem:[#allocation14 + $0x1f0] sm:$0xff] %v11393
    %11502 = vst [vmem:[#allocation14 + $0x1f8] sm:$0xff] %v10419
    %11503 = vst [vmem:[#allocation14 + $0x200] sm:$0xff] %v10421
    %11504 = vst [vmem:[#allocation14 + $0x208] sm:$0xff] %v11396
    %11505 = vst [vmem:[#allocation14 + $0x210] sm:$0xff] %v10425
    %11506 = vst [vmem:[#allocation14 + $0x218] sm:$0xff] %v10427
    %11507 = vst [vmem:[#allocation14 + $0x220] sm:$0xff] %v11401
    %11508 = vst [vmem:[#allocation14 + $0x228] sm:$0xff] %v10429
    %11509 = vst [vmem:[#allocation14 + $0x230] sm:$0xff] %v10431
    %11510 = vst [vmem:[#allocation14 + $0x238] sm:$0xff] %v11404
    %11511 = vst [vmem:[#allocation14 + $0x240] sm:$0xff] %v10435
    %11512 = vst [vmem:[#allocation14 + $0x248] sm:$0xff] %v10437
    %11513 = vst [vmem:[#allocation14 + $0x250] sm:$0xff] %v11409
    %11514 = vst [vmem:[#allocation14 + $0x258] sm:$0xff] %v10439
    %11515 = vst [vmem:[#allocation14 + $0x260] sm:$0xff] %v10441
    %11516 = vst [vmem:[#allocation14 + $0x268] sm:$0xff] %v11412
    %11517 = vst [vmem:[#allocation14 + $0x270] sm:$0xff] %v10445
    %11518 = vst [vmem:[#allocation14 + $0x278] sm:$0xff] %v10447
    %11519 = vst [vmem:[#allocation14 + $0x280] sm:$0xff] %v11417
    %11520 = vst [vmem:[#allocation14 + $0x288] sm:$0xff] %v10449
    %11521 = vst [vmem:[#allocation14 + $0x290] sm:$0xff] %v10451
    %11522 = vst [vmem:[#allocation14 + $0x298] sm:$0xff] %v11420
    %11523 = vst [vmem:[#allocation14 + $0x2a0] sm:$0xff] %v10455
    %11524 = vst [vmem:[#allocation14 + $0x2a8] sm:$0xff] %v10457
    %11525 = vst [vmem:[#allocation14 + $0x2b0] sm:$0xff] %v11425
    %11526 = vst [vmem:[#allocation14 + $0x2b8] sm:$0xff] %v10459
    %11527 = vst [vmem:[#allocation14 + $0x2c0] sm:$0xff] %v10461
    %11528 = vst [vmem:[#allocation14 + $0x2c8] sm:$0xff] %v11428
    %11529 = vst [vmem:[#allocation14 + $0x2d0] sm:$0xff] %v10465
    %11530 = vst [vmem:[#allocation14 + $0x2d8] sm:$0xff] %v10467
    %11531 = vst [vmem:[#allocation14 + $0x2e0] sm:$0xff] %v11433
    %11532 = vst [vmem:[#allocation14 + $0x2e8] sm:$0xff] %v10469
    %11533 = vst [vmem:[#allocation14 + $0x2f0] sm:$0xff] %v10471
    %11534 = vst [vmem:[#allocation14 + $0x2f8] sm:$0xff] %v11436
    // Predicated region
    $region58: #{tpu_custom_call.1} parent=1 // pred_check
      _
    $region59: #{tpu_custom_call.1} parent=1 // pred_check_branch
      %11536 = sbr.rel (0) target = $region61
    $region60: #{tpu_custom_call.1} parent=1 // pred_region
      %s11538 = ssub.s32 12288, 12288
      %11539 = vsyncadd [#allocation4], %s11538
      %s11540 = sshll.u32 [#allocation14], 4
      %s11541 = int_to_ptr.vmem [resolvable:$true] %s11540
      %11546 = dma.vmem_to_hbm [thread:$0]  %s11541, 12288, %s7, [#allocation4], 384, 384, 24
    $region61: #{tpu_custom_call.1} parent=1 // pred_fallthru
      _
    // Predicated region
    $region62: #{tpu_custom_call.1} parent=1 // pred_check
      _
    $region63: #{tpu_custom_call.1} parent=1 // pred_check_branch
      %11548 = sbr.rel (0) target = $region65
    $region64: #{tpu_custom_call.1} parent=1 // pred_region
      %11549 = dma.done [#allocation4], 12288
    $region65: #{tpu_custom_call.1} parent=1 // pred_fallthru
      _
    %11550 = vsyncpa [#allocation3], 1
    %11551 = vsyncpa [#allocation6], 1
    %11552 = vsyncpa [#allocation9], 1
    %11553 = vsyncpa [#allocation12], 1
    %11554 = vsyncpa [#allocation4], 1

</llo_original>
